<compile_context>
chip_gen: v7x
topology: tpu7x:2x2x1
jax: 0.10.0
libtpu: 0.0.40
codegen_flags: <defaults>
</compile_context>

<pallas_src>
from functools import partial as _fpartial

import numpy as np
import jax
import jax.numpy as jnp
from jax import lax
from jax.experimental import pallas as pl
from jax.experimental.pallas import tpu as pltpu

IN_CH = 3
BASE = 16
LATENT_CH = 4
N_RES = 4
IMG_HW = 16
SD_SCALE = 0.18215  # ldm get_first_stage_encoding scale factor (stand-in)
IN_EPS = 1e-5
B_TILE = 2          # batch samples per grid step (raise to 8-16 for real batches)


# ----------------------------------------------------------------------------
# Raw (PyTorch-layout) stand-in encoder parameters
# ----------------------------------------------------------------------------
def init_raw_params(key, in_ch=IN_CH, base=BASE, latent_ch=LATENT_CH):
    params = {}
    cnt = [0]

    def nk():
        cnt[0] += 1
        return jax.random.fold_in(key, cnt[0])

    def conv_p(cin, cout, k=3):
        w = jax.random.normal(nk(), (cout, cin, k, k), jnp.float32) * 0.05
        b = jax.random.normal(nk(), (cout,), jnp.float32) * 0.01
        return w, b

    chans = [(in_ch, base), (base, 2 * base), (2 * base, 4 * base)]
    for i, (ci, co) in enumerate(chans):
        params[f"enc{i}_w"], params[f"enc{i}_b"] = conv_p(ci, co)
    for i in range(N_RES):
        w1, b1 = conv_p(4 * base, 4 * base)
        w2, b2 = conv_p(4 * base, 4 * base)
        params[f"res{i}"] = dict(w1=w1, b1=b1, w2=w2, b2=b2)
    params["latent_w"], params["latent_b"] = conv_p(4 * base, latent_ch)
    return params


# ----------------------------------------------------------------------------
# Host-side weight repacking.
#
# G = 2*B_TILE sample blocks (x blocks then y blocks) are stacked along the
# sublane axis.  A 3x3 conv (stride s, pad 1) on the stacked channels-last
# slab A[(g,h), w*Cin+ci] becomes
#     rows = S_stack @ A                (one matmul; S is block-diag over g)
#     O    = concat_kh(rows_kh) @ M + B (kh folded into the contraction dim)
# Zero padding is implicit (out-of-range rows/cols never contribute).
# InstanceNorm pooling uses a block-diagonal row pool Pr (all-ones blocks,
# also does the broadcast-back) and a channel pool C with 1/(Ho*Wo) folded in.
# ----------------------------------------------------------------------------
def pack_params(raw, b_tile, in_ch=IN_CH, latent_ch=LATENT_CH):
    G = 2 * b_tile
    flat = []

    def add(a):
        flat.append(a)
        return len(flat) - 1

    s_cache = {}
    pool_cache = {}

    def pack_conv(w, b, hin, win, stride):
        w = np.asarray(w, np.float32)
        b = np.asarray(b, np.float32)
        cout, cin = w.shape[0], w.shape[1]
        ho = (hin - 1) // stride + 1
        wo = (win - 1) // stride + 1
        skey = (hin, stride)
        if skey not in s_cache:
            blocks, identity = [], []
            for kh in range(3):
                S = np.zeros((ho, hin), np.float32)
                for r in range(ho):
                    h_src = stride * r + kh - 1
                    if 0 <= h_src < hin:
                        S[r, h_src] = 1.0
                is_id = (ho == hin) and np.array_equal(
                    S, np.eye(hin, dtype=np.float32))
                identity.append(bool(is_id))
                if not is_id:
                    blocks.append(np.kron(np.eye(G, dtype=np.float32), S))
            s_stack = np.concatenate(blocks, axis=0)
            s_cache[skey] = (add(jnp.asarray(s_stack, dtype=jnp.bfloat16)),
                             tuple(identity))
        s_idx, identity = s_cache[skey]
        # kh folded into the contraction dim: one (3*Win*Cin, Wo*Cout) matrix.
        M = np.zeros((3 * win * cin, wo * cout), np.float32)
        for kh in range(3):
            for kw in range(3):
                for c in range(wo):
                    w_src = stride * c + kw - 1
                    if 0 <= w_src < win:
                        r0 = kh * win * cin + w_src * cin
                        M[r0:r0 + cin, c * cout:(c + 1) * cout] = \
                            w[:, :, kh, kw].T
        B = np.tile(b[None, :], (wo, 1)).reshape(1, wo * cout)
        desc = dict(s=s_idx, identity=identity, rows=G * ho,
                    m=add(jnp.asarray(M, dtype=jnp.bfloat16)),
                    b=add(jnp.asarray(B, dtype=jnp.float32)),
                    cout=cout)
        return desc, ho, wo

    def pack_inorm(ho, wo, cout):
        key = (ho, wo, cout)
        if key not in pool_cache:
            wc = wo * cout
            inv_n = 1.0 / float(ho * wo)
            Pr = np.kron(np.eye(G, dtype=np.float32),
                         np.ones((ho, ho), np.float32))
            ii = np.arange(wc)[:, None]
            jj = np.arange(wc)[None, :]
            C = np.where((ii % cout) == (jj % cout), inv_n, 0.0)
            pool_cache[key] = dict(
                pr=add(jnp.asarray(Pr, dtype=jnp.bfloat16)),
                c=add(jnp.asarray(C.astype(np.float32), dtype=jnp.bfloat16)),
                wc=wc)
        return pool_cache[key]

    h = w = IMG_HW
    enc = []
    for i in range(3):
        cd, h, w = pack_conv(raw[f"enc{i}_w"], raw[f"enc{i}_b"], h, w, 2)
        enc.append((cd, pack_inorm(h, w, cd["cout"])))
    res = []
    for i in range(N_RES):
        c1, h, w = pack_conv(raw[f"res{i}"]["w1"], raw[f"res{i}"]["b1"], h, w, 1)
        n1 = pack_inorm(h, w, c1["cout"])
        c2, h, w = pack_conv(raw[f"res{i}"]["w2"], raw[f"res{i}"]["b2"], h, w, 1)
        n2 = pack_inorm(h, w, c2["cout"])
        res.append(((c1, n1), (c2, n2)))
    lat, h, w = pack_conv(raw["latent_w"], raw["latent_b"], h, w, 1)
    # Epilogue reducer: per latent position, sum of channel squares (once).
    Q = np.zeros((w * latent_ch, w), np.float32)
    for j in range(w * latent_ch):
        Q[j, j // latent_ch] = 1.0
    structure = dict(enc=enc, res=res, lat=lat,
                     q=add(jnp.asarray(Q, dtype=jnp.float32)),
                     lat_hw=(h, w), b_tile=b_tile, G=G)
    return flat, structure


# ----------------------------------------------------------------------------
# Fused Pallas kernel: one encode of the stacked (x, y, batch-tile) slab plus
# the per-sample channel-norm epilogue.  Everything stays in VMEM.
# ----------------------------------------------------------------------------
def _build_kernel(structure):
    enc, res, lat = structure["enc"], structure["res"], structure["lat"]
    lat_h, lat_w = structure["lat_hw"]
    b_tile = structure["b_tile"]
    q_idx = structure["q"]

    def kernel(img_ref, *rest):
        out_ref = rest[-1]
        prefs = rest[:-1]

        def conv(a, d):
            # a: (G*Hin, Win*Cin) f32  ->  (G*Ho, Wo*Cout) f32
            ab = a.astype(jnp.bfloat16)
            r = d["rows"]
            shifted = jnp.dot(prefs[d["s"]][...], ab,
                              preferred_element_type=jnp.float32
                              ).astype(jnp.bfloat16)
            pieces, k = [], 0
            for kh in range(3):
                if d["identity"][kh]:
                    pieces.append(ab)
                else:
                    pieces.append(shifted[k * r:(k + 1) * r, :])
                    k += 1
            rows = jnp.concatenate(pieces, axis=1)      # (G*Ho, 3*Win*Cin)
            out = jnp.dot(rows, prefs[d["m"]][...],
                          preferred_element_type=jnp.float32)
            return out + prefs[d["b"]][...]

        def inorm(v, nd, relu):
            # InstanceNorm2d(affine=False): per sample-block, per channel.
            # Mean then centered variance (avoids E[x^2]-m^2 cancellation).
            pr = prefs[nd["pr"]][...]
            cp = prefs[nd["c"]][...]
            mean = jnp.dot(
                jnp.dot(pr, v.astype(jnp.bfloat16),
                        preferred_element_type=jnp.float32
                        ).astype(jnp.bfloat16),
                cp, preferred_element_type=jnp.float32)
            vc = v - mean
            var = jnp.dot(
                jnp.dot(pr, (vc * vc).astype(jnp.bfloat16),
                        preferred_element_type=jnp.float32
                        ).astype(jnp.bfloat16),
                cp, preferred_element_type=jnp.float32)
            out = vc * lax.rsqrt(var + IN_EPS)
            return jnp.maximum(out, 0.0) if relu else out

        def encode(a):
            h = a
            for cd, nd in enc:                  # 3x (conv s=2 -> IN -> ReLU)
                h = inorm(conv(h, cd), nd, relu=True)
            for (c1, n1), (c2, n2) in res:      # residual blocks
                t = inorm(conv(h, c1), n1, relu=True)
                t = inorm(conv(t, c2), n2, relu=False)
                h = h + t
            return SD_SCALE * conv(h, lat)      # latent projection

        z = encode(img_ref[0].astype(jnp.float32))  # (G*lat_h, lat_w*C_lat)
        half = b_tile * lat_h
        diff = z[:half, :] - z[half:, :]            # zx - zy per sample block
        sumsq = jnp.dot(diff * diff, prefs[q_idx][...],
                        preferred_element_type=jnp.float32)  # (half, lat_w)
        norms = jnp.sqrt(sumsq)                     # per-position channel norm
        total = jnp.sum(norms, axis=(0, 1), keepdims=True)
        out_ref[...] = jnp.broadcast_to(total, out_ref.shape).astype(
            out_ref.dtype)

    return kernel


def _zero_map(i, nd):
    return (0,) * nd


def build_forward(flat, structure, img_hw=IMG_HW, in_ch=IN_CH):
    kernel = _build_kernel(structure)
    lat_h, lat_w = structure["lat_hw"]
    b_tile, G = structure["b_tile"], structure["G"]
    H = W = img_hw

    img_spec = pl.BlockSpec((1, G * H, W * in_ch), lambda i: (i, 0, 0))
    param_specs = [pl.BlockSpec(p.shape, _fpartial(_zero_map, nd=p.ndim))
                   for p in flat]

    def to_slab(img):                   # NCHW -> channels-last (N, H, W*C)
        n, c, h, w = img.shape
        return img.transpose(0, 2, 3, 1).reshape(n, h, w * c)

    def forward(x, target_info):
        n = x.shape[0]
        n_pad = pl.cdiv(n, b_tile) * b_tile
        xs = to_slab(x.astype(jnp.float32))
        ys = to_slab(target_info.astype(jnp.float32))
        if n_pad != n:                  # identical zero pads contribute 0 loss
            pad = jnp.zeros((n_pad - n,) + xs.shape[1:], xs.dtype)
            xs = jnp.concatenate([xs, pad], axis=0)
            ys = jnp.concatenate([ys, pad], axis=0)
        n_steps = n_pad // b_tile
        xs = xs.reshape(n_steps, b_tile, H, W * in_ch)
        ys = ys.reshape(n_steps, b_tile, H, W * in_ch)
        stacked = jnp.concatenate([xs, ys], axis=1)    # x blocks then y blocks
        stacked = stacked.reshape(n_steps, G * H, W * in_ch)

        partial_sums = pl.pallas_call(
            kernel,
            out_shape=jax.ShapeDtypeStruct((n_steps, 8, 128), jnp.float32),
            grid_spec=pltpu.PrefetchScalarGridSpec(
                num_scalar_prefetch=0,
                grid=(n_steps,),
                in_specs=[img_spec] + param_specs,
                out_specs=pl.BlockSpec((1, 8, 128), lambda i: (i, 0, 0)),
            ),
            compiler_params=pltpu.CompilerParams(
                dimension_semantics=("parallel",)),
        )(stacked, *flat)
        per_step = partial_sums[:, 0, 0]     # sum_{samples,h,w} ||zx - zy||_2
        # loss_semantic is 0 (no_loss=True in get_encodings); only the
        # textural loss is returned, matching forward(..., components=False).
        return jnp.sum(per_step) / (n * lat_h * lat_w)

    return forward


# ----------------------------------------------------------------------------
# Pure-JAX reference (same stand-in encoder, f32 end-to-end)
# ----------------------------------------------------------------------------
def reference_forward(raw, x, y):
    def conv(v, w, b, stride):
        out = lax.conv_general_dilated(
            v, w, (stride, stride), ((1, 1), (1, 1)),
            dimension_numbers=("NCHW", "OIHW", "NCHW"),
            precision=lax.Precision.HIGHEST)
        return out + b.reshape(1, -1, 1, 1)

    def inorm(v, relu):
        m = jnp.mean(v, axis=(2, 3), keepdims=True)
        var = jnp.mean((v - m) ** 2, axis=(2, 3), keepdims=True)
        o = (v - m) * lax.rsqrt(var + IN_EPS)
        return jnp.maximum(o, 0.0) if relu else o

    def encode(v):
        h = v
        for i in range(3):
            h = inorm(conv(h, raw[f"enc{i}_w"], raw[f"enc{i}_b"], 2), True)
        for i in range(N_RES):
            p = raw[f"res{i}"]
            t = inorm(conv(h, p["w1"], p["b1"], 1), True)
            t = inorm(conv(t, p["w2"], p["b2"], 1), False)
            h = h + t
        return SD_SCALE * conv(h, raw["latent_w"], raw["latent_b"], 1)

    zx, zy = encode(x), encode(y)
    return jnp.mean(jnp.sqrt(jnp.sum((zx - zy) ** 2, axis=1)))


# ----------------------------------------------------------------------------
if __name__ == "__main__":
    key = jax.random.PRNGKey(0)
    kx, ky, kp = jax.random.split(key, 3)

    N, C, H, W = 4, IN_CH, IMG_HW, IMG_HW
    x = jax.random.normal(kx, (N, C, H, W), jnp.float32)
    target = jax.random.normal(ky, (N, C, H, W), jnp.float32)

    raw = init_raw_params(kp)
    flat, structure = pack_params(raw, B_TILE)

    fwd = jax.jit(build_forward(flat, structure))
    loss = jax.block_until_ready(fwd(x, target))

    assert loss.shape == ()
    assert bool(jnp.isfinite(loss))

    ref = jax.block_until_ready(
        jax.jit(lambda a, b: reference_forward(raw, a, b))(x, target))
    assert abs(float(loss) - float(ref)) <= 5e-2 * abs(float(ref)) + 5e-2, (
        float(loss), float(ref))

    print("KERNEL_OK")
</pallas_src>

<mosaic_0001>
module attributes {stable_mosaic.version = 11 : i64} {
  func.func @kernel(%arg0: i32, %arg1: memref<1x64x48xf32, #tpu.memory_space<vmem>>, %arg2: memref<96x64xbf16, #tpu.memory_space<vmem>>, %arg3: memref<144x128xbf16, #tpu.memory_space<vmem>>, %arg4: memref<1x128xf32, #tpu.memory_space<vmem>>, %arg5: memref<32x32xbf16, #tpu.memory_space<vmem>>, %arg6: memref<128x128xbf16, #tpu.memory_space<vmem>>, %arg7: memref<48x32xbf16, #tpu.memory_space<vmem>>, %arg8: memref<384x128xbf16, #tpu.memory_space<vmem>>, %arg9: memref<1x128xf32, #tpu.memory_space<vmem>>, %arg10: memref<16x16xbf16, #tpu.memory_space<vmem>>, %arg11: memref<128x128xbf16, #tpu.memory_space<vmem>>, %arg12: memref<24x16xbf16, #tpu.memory_space<vmem>>, %arg13: memref<384x128xbf16, #tpu.memory_space<vmem>>, %arg14: memref<1x128xf32, #tpu.memory_space<vmem>>, %arg15: memref<8x8xbf16, #tpu.memory_space<vmem>>, %arg16: memref<128x128xbf16, #tpu.memory_space<vmem>>, %arg17: memref<16x8xbf16, #tpu.memory_space<vmem>>, %arg18: memref<384x128xbf16, #tpu.memory_space<vmem>>, %arg19: memref<1x128xf32, #tpu.memory_space<vmem>>, %arg20: memref<384x128xbf16, #tpu.memory_space<vmem>>, %arg21: memref<1x128xf32, #tpu.memory_space<vmem>>, %arg22: memref<384x128xbf16, #tpu.memory_space<vmem>>, %arg23: memref<1x128xf32, #tpu.memory_space<vmem>>, %arg24: memref<384x128xbf16, #tpu.memory_space<vmem>>, %arg25: memref<1x128xf32, #tpu.memory_space<vmem>>, %arg26: memref<384x128xbf16, #tpu.memory_space<vmem>>, %arg27: memref<1x128xf32, #tpu.memory_space<vmem>>, %arg28: memref<384x128xbf16, #tpu.memory_space<vmem>>, %arg29: memref<1x128xf32, #tpu.memory_space<vmem>>, %arg30: memref<384x128xbf16, #tpu.memory_space<vmem>>, %arg31: memref<1x128xf32, #tpu.memory_space<vmem>>, %arg32: memref<384x128xbf16, #tpu.memory_space<vmem>>, %arg33: memref<1x128xf32, #tpu.memory_space<vmem>>, %arg34: memref<384x8xbf16, #tpu.memory_space<vmem>>, %arg35: memref<1x8xf32, #tpu.memory_space<vmem>>, %arg36: memref<8x2xf32, #tpu.memory_space<vmem>>, %arg37: memref<1x8x128xf32, #tpu.memory_space<vmem>>) attributes {dimension_semantics = [#tpu.dimension_semantics<parallel>], iteration_bounds = array<i64: 2>, scalar_prefetch = 0 : i64, scratch_operands = 0 : i64, tpu.core_type = #tpu.core_type<tc>, window_params = [{transform_indices = @transform_0, window_bounds = array<i64: 1, 64, 48>}, {pipeline_mode = #tpu.pipeline_mode<synchronous>, transform_indices = @transform_1, window_bounds = array<i64: 96, 64>}, {pipeline_mode = #tpu.pipeline_mode<synchronous>, transform_indices = @transform_2, window_bounds = array<i64: 144, 128>}, {pipeline_mode = #tpu.pipeline_mode<synchronous>, transform_indices = @transform_3, window_bounds = array<i64: 1, 128>}, {pipeline_mode = #tpu.pipeline_mode<synchronous>, transform_indices = @transform_4, window_bounds = array<i64: 32, 32>}, {pipeline_mode = #tpu.pipeline_mode<synchronous>, transform_indices = @transform_5, window_bounds = array<i64: 128, 128>}, {pipeline_mode = #tpu.pipeline_mode<synchronous>, transform_indices = @transform_6, window_bounds = array<i64: 48, 32>}, {pipeline_mode = #tpu.pipeline_mode<synchronous>, transform_indices = @transform_7, window_bounds = array<i64: 384, 128>}, {pipeline_mode = #tpu.pipeline_mode<synchronous>, transform_indices = @transform_8, window_bounds = array<i64: 1, 128>}, {pipeline_mode = #tpu.pipeline_mode<synchronous>, transform_indices = @transform_9, window_bounds = array<i64: 16, 16>}, {pipeline_mode = #tpu.pipeline_mode<synchronous>, transform_indices = @transform_10, window_bounds = array<i64: 128, 128>}, {pipeline_mode = #tpu.pipeline_mode<synchronous>, transform_indices = @transform_11, window_bounds = array<i64: 24, 16>}, {pipeline_mode = #tpu.pipeline_mode<synchronous>, transform_indices = @transform_12, window_bounds = array<i64: 384, 128>}, {pipeline_mode = #tpu.pipeline_mode<synchronous>, transform_indices = @transform_13, window_bounds = array<i64: 1, 128>}, {pipeline_mode = #tpu.pipeline_mode<synchronous>, transform_indices = @transform_14, window_bounds = array<i64: 8, 8>}, {pipeline_mode = #tpu.pipeline_mode<synchronous>, transform_indices = @transform_15, window_bounds = array<i64: 128, 128>}, {pipeline_mode = #tpu.pipeline_mode<synchronous>, transform_indices = @transform_16, window_bounds = array<i64: 16, 8>}, {pipeline_mode = #tpu.pipeline_mode<synchronous>, transform_indices = @transform_17, window_bounds = array<i64: 384, 128>}, {pipeline_mode = #tpu.pipeline_mode<synchronous>, transform_indices = @transform_18, window_bounds = array<i64: 1, 128>}, {pipeline_mode = #tpu.pipeline_mode<synchronous>, transform_indices = @transform_19, window_bounds = array<i64: 384, 128>}, {pipeline_mode = #tpu.pipeline_mode<synchronous>, transform_indices = @transform_20, window_bounds = array<i64: 1, 128>}, {pipeline_mode = #tpu.pipeline_mode<synchronous>, transform_indices = @transform_21, window_bounds = array<i64: 384, 128>}, {pipeline_mode = #tpu.pipeline_mode<synchronous>, transform_indices = @transform_22, window_bounds = array<i64: 1, 128>}, {pipeline_mode = #tpu.pipeline_mode<synchronous>, transform_indices = @transform_23, window_bounds = array<i64: 384, 128>}, {pipeline_mode = #tpu.pipeline_mode<synchronous>, transform_indices = @transform_24, window_bounds = array<i64: 1, 128>}, {pipeline_mode = #tpu.pipeline_mode<synchronous>, transform_indices = @transform_25, window_bounds = array<i64: 384, 128>}, {pipeline_mode = #tpu.pipeline_mode<synchronous>, transform_indices = @transform_26, window_bounds = array<i64: 1, 128>}, {pipeline_mode = #tpu.pipeline_mode<synchronous>, transform_indices = @transform_27, window_bounds = array<i64: 384, 128>}, {pipeline_mode = #tpu.pipeline_mode<synchronous>, transform_indices = @transform_28, window_bounds = array<i64: 1, 128>}, {pipeline_mode = #tpu.pipeline_mode<synchronous>, transform_indices = @transform_29, window_bounds = array<i64: 384, 128>}, {pipeline_mode = #tpu.pipeline_mode<synchronous>, transform_indices = @transform_30, window_bounds = array<i64: 1, 128>}, {pipeline_mode = #tpu.pipeline_mode<synchronous>, transform_indices = @transform_31, window_bounds = array<i64: 384, 128>}, {pipeline_mode = #tpu.pipeline_mode<synchronous>, transform_indices = @transform_32, window_bounds = array<i64: 1, 128>}, {pipeline_mode = #tpu.pipeline_mode<synchronous>, transform_indices = @transform_33, window_bounds = array<i64: 384, 8>}, {pipeline_mode = #tpu.pipeline_mode<synchronous>, transform_indices = @transform_34, window_bounds = array<i64: 1, 8>}, {pipeline_mode = #tpu.pipeline_mode<synchronous>, transform_indices = @transform_35, window_bounds = array<i64: 8, 2>}, {transform_indices = @transform_36, window_bounds = array<i64: 1, 8, 128>}]} {
    %c0 = arith.constant 0 : index
    %c0_0 = arith.constant 0 : index
    %c0_1 = arith.constant 0 : index
    %0 = vector.load %arg1[%c0, %c0_0, %c0_1] : memref<1x64x48xf32, #tpu.memory_space<vmem>>, vector<1x64x48xf32>
    %1 = vector.shape_cast %0 : vector<1x64x48xf32> to vector<64x48xf32>
    %2 = arith.truncf %1 : vector<64x48xf32> to vector<64x48xbf16>
    %c0_2 = arith.constant 0 : index
    %c0_3 = arith.constant 0 : index
    %3 = vector.load %arg2[%c0_2, %c0_3] : memref<96x64xbf16, #tpu.memory_space<vmem>>, vector<96x64xbf16>
    %cst = arith.constant dense<0.000000e+00> : vector<96x48xf32>
    %4 = tpu.matmul %3, %2, %cst {dimension_numbers = #tpu.dot_dimension_numbers<[1], [0], [0], [1], [0, 0, 1, 1], [], []>} : vector<96x64xbf16>, vector<64x48xbf16>, vector<96x48xf32> -> vector<96x48xf32>
    %5 = arith.truncf %4 : vector<96x48xf32> to vector<96x48xbf16>
    %6 = vector.extract_strided_slice %5 {offsets = [0, 0], sizes = [32, 48], strides = [1, 1]} : vector<96x48xbf16> to vector<32x48xbf16>
    %7 = vector.extract_strided_slice %5 {offsets = [32, 0], sizes = [32, 48], strides = [1, 1]} : vector<96x48xbf16> to vector<32x48xbf16>
    %8 = vector.extract_strided_slice %5 {offsets = [64, 0], sizes = [32, 48], strides = [1, 1]} : vector<96x48xbf16> to vector<32x48xbf16>
    %9 = tpu.concatenate %6, %7, %8 in 1 : vector<32x48xbf16>, vector<32x48xbf16>, vector<32x48xbf16> -> vector<32x144xbf16>
    %c0_4 = arith.constant 0 : index
    %c0_5 = arith.constant 0 : index
    %10 = vector.load %arg3[%c0_4, %c0_5] : memref<144x128xbf16, #tpu.memory_space<vmem>>, vector<144x128xbf16>
    %cst_6 = arith.constant dense<0.000000e+00> : vector<32x128xf32>
    %11 = tpu.matmul %9, %10, %cst_6 {dimension_numbers = #tpu.dot_dimension_numbers<[1], [0], [0], [1], [0, 0, 1, 1], [], []>} : vector<32x144xbf16>, vector<144x128xbf16>, vector<32x128xf32> -> vector<32x128xf32>
    %c0_7 = arith.constant 0 : index
    %c0_8 = arith.constant 0 : index
    %12 = vector.load %arg4[%c0_7, %c0_8] : memref<1x128xf32, #tpu.memory_space<vmem>>, vector<1x128xf32>
    %13 = vector.broadcast %12 : vector<1x128xf32> to vector<32x128xf32>
    %14 = arith.addf %11, %13 : vector<32x128xf32>
    %c0_9 = arith.constant 0 : index
    %c0_10 = arith.constant 0 : index
    %15 = vector.load %arg5[%c0_9, %c0_10] : memref<32x32xbf16, #tpu.memory_space<vmem>>, vector<32x32xbf16>
    %c0_11 = arith.constant 0 : index
    %c0_12 = arith.constant 0 : index
    %16 = vector.load %arg6[%c0_11, %c0_12] : memref<128x128xbf16, #tpu.memory_space<vmem>>, vector<128x128xbf16>
    %17 = arith.truncf %14 : vector<32x128xf32> to vector<32x128xbf16>
    %cst_13 = arith.constant dense<0.000000e+00> : vector<32x128xf32>
    %18 = tpu.matmul %15, %17, %cst_13 {dimension_numbers = #tpu.dot_dimension_numbers<[1], [0], [0], [1], [0, 0, 1, 1], [], []>} : vector<32x32xbf16>, vector<32x128xbf16>, vector<32x128xf32> -> vector<32x128xf32>
    %19 = arith.truncf %18 : vector<32x128xf32> to vector<32x128xbf16>
    %cst_14 = arith.constant dense<0.000000e+00> : vector<32x128xf32>
    %20 = tpu.matmul %19, %16, %cst_14 {dimension_numbers = #tpu.dot_dimension_numbers<[1], [0], [0], [1], [0, 0, 1, 1], [], []>} : vector<32x128xbf16>, vector<128x128xbf16>, vector<32x128xf32> -> vector<32x128xf32>
    %21 = arith.subf %14, %20 : vector<32x128xf32>
    %22 = arith.mulf %21, %21 : vector<32x128xf32>
    %23 = arith.truncf %22 : vector<32x128xf32> to vector<32x128xbf16>
    %cst_15 = arith.constant dense<0.000000e+00> : vector<32x128xf32>
    %24 = tpu.matmul %15, %23, %cst_15 {dimension_numbers = #tpu.dot_dimension_numbers<[1], [0], [0], [1], [0, 0, 1, 1], [], []>} : vector<32x32xbf16>, vector<32x128xbf16>, vector<32x128xf32> -> vector<32x128xf32>
    %25 = arith.truncf %24 : vector<32x128xf32> to vector<32x128xbf16>
    %cst_16 = arith.constant dense<0.000000e+00> : vector<32x128xf32>
    %26 = tpu.matmul %25, %16, %cst_16 {dimension_numbers = #tpu.dot_dimension_numbers<[1], [0], [0], [1], [0, 0, 1, 1], [], []>} : vector<32x128xbf16>, vector<128x128xbf16>, vector<32x128xf32> -> vector<32x128xf32>
    %cst_17 = arith.constant 9.99999974E-6 : f32
    %27 = vector.broadcast %cst_17 : f32 to vector<32x128xf32>
    %28 = arith.addf %26, %27 : vector<32x128xf32>
    %29 = math.rsqrt %28 : vector<32x128xf32>
    %30 = arith.mulf %21, %29 : vector<32x128xf32>
    %cst_18 = arith.constant 0.000000e+00 : f32
    %31 = vector.broadcast %cst_18 : f32 to vector<32x128xf32>
    %32 = arith.maximumf %30, %31 : vector<32x128xf32>
    %33 = arith.truncf %32 : vector<32x128xf32> to vector<32x128xbf16>
    %c0_19 = arith.constant 0 : index
    %c0_20 = arith.constant 0 : index
    %34 = vector.load %arg7[%c0_19, %c0_20] : memref<48x32xbf16, #tpu.memory_space<vmem>>, vector<48x32xbf16>
    %cst_21 = arith.constant dense<0.000000e+00> : vector<48x128xf32>
    %35 = tpu.matmul %34, %33, %cst_21 {dimension_numbers = #tpu.dot_dimension_numbers<[1], [0], [0], [1], [0, 0, 1, 1], [], []>} : vector<48x32xbf16>, vector<32x128xbf16>, vector<48x128xf32> -> vector<48x128xf32>
    %36 = arith.truncf %35 : vector<48x128xf32> to vector<48x128xbf16>
    %37 = vector.extract_strided_slice %36 {offsets = [0, 0], sizes = [16, 128], strides = [1, 1]} : vector<48x128xbf16> to vector<16x128xbf16>
    %38 = vector.extract_strided_slice %36 {offsets = [16, 0], sizes = [16, 128], strides = [1, 1]} : vector<48x128xbf16> to vector<16x128xbf16>
    %39 = vector.extract_strided_slice %36 {offsets = [32, 0], sizes = [16, 128], strides = [1, 1]} : vector<48x128xbf16> to vector<16x128xbf16>
    %40 = tpu.concatenate %37, %38, %39 in 1 : vector<16x128xbf16>, vector<16x128xbf16>, vector<16x128xbf16> -> vector<16x384xbf16>
    %c0_22 = arith.constant 0 : index
    %c0_23 = arith.constant 0 : index
    %41 = vector.load %arg8[%c0_22, %c0_23] : memref<384x128xbf16, #tpu.memory_space<vmem>>, vector<384x128xbf16>
    %cst_24 = arith.constant dense<0.000000e+00> : vector<16x128xf32>
    %42 = tpu.matmul %40, %41, %cst_24 {dimension_numbers = #tpu.dot_dimension_numbers<[1], [0], [0], [1], [0, 0, 1, 1], [], []>} : vector<16x384xbf16>, vector<384x128xbf16>, vector<16x128xf32> -> vector<16x128xf32>
    %c0_25 = arith.constant 0 : index
    %c0_26 = arith.constant 0 : index
    %43 = vector.load %arg9[%c0_25, %c0_26] : memref<1x128xf32, #tpu.memory_space<vmem>>, vector<1x128xf32>
    %44 = vector.broadcast %43 : vector<1x128xf32> to vector<16x128xf32>
    %45 = arith.addf %42, %44 : vector<16x128xf32>
    %c0_27 = arith.constant 0 : index
    %c0_28 = arith.constant 0 : index
    %46 = vector.load %arg10[%c0_27, %c0_28] : memref<16x16xbf16, #tpu.memory_space<vmem>>, vector<16x16xbf16>
    %c0_29 = arith.constant 0 : index
    %c0_30 = arith.constant 0 : index
    %47 = vector.load %arg11[%c0_29, %c0_30] : memref<128x128xbf16, #tpu.memory_space<vmem>>, vector<128x128xbf16>
    %48 = arith.truncf %45 : vector<16x128xf32> to vector<16x128xbf16>
    %cst_31 = arith.constant dense<0.000000e+00> : vector<16x128xf32>
    %49 = tpu.matmul %46, %48, %cst_31 {dimension_numbers = #tpu.dot_dimension_numbers<[1], [0], [0], [1], [0, 0, 1, 1], [], []>} : vector<16x16xbf16>, vector<16x128xbf16>, vector<16x128xf32> -> vector<16x128xf32>
    %50 = arith.truncf %49 : vector<16x128xf32> to vector<16x128xbf16>
    %cst_32 = arith.constant dense<0.000000e+00> : vector<16x128xf32>
    %51 = tpu.matmul %50, %47, %cst_32 {dimension_numbers = #tpu.dot_dimension_numbers<[1], [0], [0], [1], [0, 0, 1, 1], [], []>} : vector<16x128xbf16>, vector<128x128xbf16>, vector<16x128xf32> -> vector<16x128xf32>
    %52 = arith.subf %45, %51 : vector<16x128xf32>
    %53 = arith.mulf %52, %52 : vector<16x128xf32>
    %54 = arith.truncf %53 : vector<16x128xf32> to vector<16x128xbf16>
    %cst_33 = arith.constant dense<0.000000e+00> : vector<16x128xf32>
    %55 = tpu.matmul %46, %54, %cst_33 {dimension_numbers = #tpu.dot_dimension_numbers<[1], [0], [0], [1], [0, 0, 1, 1], [], []>} : vector<16x16xbf16>, vector<16x128xbf16>, vector<16x128xf32> -> vector<16x128xf32>
    %56 = arith.truncf %55 : vector<16x128xf32> to vector<16x128xbf16>
    %cst_34 = arith.constant dense<0.000000e+00> : vector<16x128xf32>
    %57 = tpu.matmul %56, %47, %cst_34 {dimension_numbers = #tpu.dot_dimension_numbers<[1], [0], [0], [1], [0, 0, 1, 1], [], []>} : vector<16x128xbf16>, vector<128x128xbf16>, vector<16x128xf32> -> vector<16x128xf32>
    %cst_35 = arith.constant 9.99999974E-6 : f32
    %58 = vector.broadcast %cst_35 : f32 to vector<16x128xf32>
    %59 = arith.addf %57, %58 : vector<16x128xf32>
    %60 = math.rsqrt %59 : vector<16x128xf32>
    %61 = arith.mulf %52, %60 : vector<16x128xf32>
    %cst_36 = arith.constant 0.000000e+00 : f32
    %62 = vector.broadcast %cst_36 : f32 to vector<16x128xf32>
    %63 = arith.maximumf %61, %62 : vector<16x128xf32>
    %64 = arith.truncf %63 : vector<16x128xf32> to vector<16x128xbf16>
    %c0_37 = arith.constant 0 : index
    %c0_38 = arith.constant 0 : index
    %65 = vector.load %arg12[%c0_37, %c0_38] : memref<24x16xbf16, #tpu.memory_space<vmem>>, vector<24x16xbf16>
    %cst_39 = arith.constant dense<0.000000e+00> : vector<24x128xf32>
    %66 = tpu.matmul %65, %64, %cst_39 {dimension_numbers = #tpu.dot_dimension_numbers<[1], [0], [0], [1], [0, 0, 1, 1], [], []>} : vector<24x16xbf16>, vector<16x128xbf16>, vector<24x128xf32> -> vector<24x128xf32>
    %67 = arith.truncf %66 : vector<24x128xf32> to vector<24x128xbf16>
    %68 = vector.extract_strided_slice %67 {offsets = [0, 0], sizes = [8, 128], strides = [1, 1]} : vector<24x128xbf16> to vector<8x128xbf16>
    %69 = vector.extract_strided_slice %67 {offsets = [8, 0], sizes = [8, 128], strides = [1, 1]} : vector<24x128xbf16> to vector<8x128xbf16>
    %70 = vector.extract_strided_slice %67 {offsets = [16, 0], sizes = [8, 128], strides = [1, 1]} : vector<24x128xbf16> to vector<8x128xbf16>
    %71 = tpu.concatenate %68, %69, %70 in 1 : vector<8x128xbf16>, vector<8x128xbf16>, vector<8x128xbf16> -> vector<8x384xbf16>
    %c0_40 = arith.constant 0 : index
    %c0_41 = arith.constant 0 : index
    %72 = vector.load %arg13[%c0_40, %c0_41] : memref<384x128xbf16, #tpu.memory_space<vmem>>, vector<384x128xbf16>
    %cst_42 = arith.constant dense<0.000000e+00> : vector<8x128xf32>
    %73 = tpu.matmul %71, %72, %cst_42 {dimension_numbers = #tpu.dot_dimension_numbers<[1], [0], [0], [1], [0, 0, 1, 1], [], []>} : vector<8x384xbf16>, vector<384x128xbf16>, vector<8x128xf32> -> vector<8x128xf32>
    %c0_43 = arith.constant 0 : index
    %c0_44 = arith.constant 0 : index
    %74 = vector.load %arg14[%c0_43, %c0_44] : memref<1x128xf32, #tpu.memory_space<vmem>>, vector<1x128xf32>
    %75 = vector.broadcast %74 : vector<1x128xf32> to vector<8x128xf32>
    %76 = arith.addf %73, %75 : vector<8x128xf32>
    %c0_45 = arith.constant 0 : index
    %c0_46 = arith.constant 0 : index
    %77 = vector.load %arg15[%c0_45, %c0_46] : memref<8x8xbf16, #tpu.memory_space<vmem>>, vector<8x8xbf16>
    %c0_47 = arith.constant 0 : index
    %c0_48 = arith.constant 0 : index
    %78 = vector.load %arg16[%c0_47, %c0_48] : memref<128x128xbf16, #tpu.memory_space<vmem>>, vector<128x128xbf16>
    %79 = arith.truncf %76 : vector<8x128xf32> to vector<8x128xbf16>
    %cst_49 = arith.constant dense<0.000000e+00> : vector<8x128xf32>
    %80 = tpu.matmul %77, %79, %cst_49 {dimension_numbers = #tpu.dot_dimension_numbers<[1], [0], [0], [1], [0, 0, 1, 1], [], []>} : vector<8x8xbf16>, vector<8x128xbf16>, vector<8x128xf32> -> vector<8x128xf32>
    %81 = arith.truncf %80 : vector<8x128xf32> to vector<8x128xbf16>
    %cst_50 = arith.constant dense<0.000000e+00> : vector<8x128xf32>
    %82 = tpu.matmul %81, %78, %cst_50 {dimension_numbers = #tpu.dot_dimension_numbers<[1], [0], [0], [1], [0, 0, 1, 1], [], []>} : vector<8x128xbf16>, vector<128x128xbf16>, vector<8x128xf32> -> vector<8x128xf32>
    %83 = arith.subf %76, %82 : vector<8x128xf32>
    %84 = arith.mulf %83, %83 : vector<8x128xf32>
    %85 = arith.truncf %84 : vector<8x128xf32> to vector<8x128xbf16>
    %cst_51 = arith.constant dense<0.000000e+00> : vector<8x128xf32>
    %86 = tpu.matmul %77, %85, %cst_51 {dimension_numbers = #tpu.dot_dimension_numbers<[1], [0], [0], [1], [0, 0, 1, 1], [], []>} : vector<8x8xbf16>, vector<8x128xbf16>, vector<8x128xf32> -> vector<8x128xf32>
    %87 = arith.truncf %86 : vector<8x128xf32> to vector<8x128xbf16>
    %cst_52 = arith.constant dense<0.000000e+00> : vector<8x128xf32>
    %88 = tpu.matmul %87, %78, %cst_52 {dimension_numbers = #tpu.dot_dimension_numbers<[1], [0], [0], [1], [0, 0, 1, 1], [], []>} : vector<8x128xbf16>, vector<128x128xbf16>, vector<8x128xf32> -> vector<8x128xf32>
    %cst_53 = arith.constant 9.99999974E-6 : f32
    %89 = vector.broadcast %cst_53 : f32 to vector<8x128xf32>
    %90 = arith.addf %88, %89 : vector<8x128xf32>
    %91 = math.rsqrt %90 : vector<8x128xf32>
    %92 = arith.mulf %83, %91 : vector<8x128xf32>
    %cst_54 = arith.constant 0.000000e+00 : f32
    %93 = vector.broadcast %cst_54 : f32 to vector<8x128xf32>
    %94 = arith.maximumf %92, %93 : vector<8x128xf32>
    %95 = arith.truncf %94 : vector<8x128xf32> to vector<8x128xbf16>
    %c0_55 = arith.constant 0 : index
    %c0_56 = arith.constant 0 : index
    %96 = vector.load %arg17[%c0_55, %c0_56] : memref<16x8xbf16, #tpu.memory_space<vmem>>, vector<16x8xbf16>
    %cst_57 = arith.constant dense<0.000000e+00> : vector<16x128xf32>
    %97 = tpu.matmul %96, %95, %cst_57 {dimension_numbers = #tpu.dot_dimension_numbers<[1], [0], [0], [1], [0, 0, 1, 1], [], []>} : vector<16x8xbf16>, vector<8x128xbf16>, vector<16x128xf32> -> vector<16x128xf32>
    %98 = arith.truncf %97 : vector<16x128xf32> to vector<16x128xbf16>
    %99 = vector.extract_strided_slice %98 {offsets = [0, 0], sizes = [8, 128], strides = [1, 1]} : vector<16x128xbf16> to vector<8x128xbf16>
    %100 = vector.extract_strided_slice %98 {offsets = [8, 0], sizes = [8, 128], strides = [1, 1]} : vector<16x128xbf16> to vector<8x128xbf16>
    %101 = tpu.concatenate %99, %95, %100 in 1 : vector<8x128xbf16>, vector<8x128xbf16>, vector<8x128xbf16> -> vector<8x384xbf16>
    %c0_58 = arith.constant 0 : index
    %c0_59 = arith.constant 0 : index
    %102 = vector.load %arg18[%c0_58, %c0_59] : memref<384x128xbf16, #tpu.memory_space<vmem>>, vector<384x128xbf16>
    %cst_60 = arith.constant dense<0.000000e+00> : vector<8x128xf32>
    %103 = tpu.matmul %101, %102, %cst_60 {dimension_numbers = #tpu.dot_dimension_numbers<[1], [0], [0], [1], [0, 0, 1, 1], [], []>} : vector<8x384xbf16>, vector<384x128xbf16>, vector<8x128xf32> -> vector<8x128xf32>
    %c0_61 = arith.constant 0 : index
    %c0_62 = arith.constant 0 : index
    %104 = vector.load %arg19[%c0_61, %c0_62] : memref<1x128xf32, #tpu.memory_space<vmem>>, vector<1x128xf32>
    %105 = vector.broadcast %104 : vector<1x128xf32> to vector<8x128xf32>
    %106 = arith.addf %103, %105 : vector<8x128xf32>
    %c0_63 = arith.constant 0 : index
    %c0_64 = arith.constant 0 : index
    %107 = vector.load %arg15[%c0_63, %c0_64] : memref<8x8xbf16, #tpu.memory_space<vmem>>, vector<8x8xbf16>
    %c0_65 = arith.constant 0 : index
    %c0_66 = arith.constant 0 : index
    %108 = vector.load %arg16[%c0_65, %c0_66] : memref<128x128xbf16, #tpu.memory_space<vmem>>, vector<128x128xbf16>
    %109 = arith.truncf %106 : vector<8x128xf32> to vector<8x128xbf16>
    %cst_67 = arith.constant dense<0.000000e+00> : vector<8x128xf32>
    %110 = tpu.matmul %107, %109, %cst_67 {dimension_numbers = #tpu.dot_dimension_numbers<[1], [0], [0], [1], [0, 0, 1, 1], [], []>} : vector<8x8xbf16>, vector<8x128xbf16>, vector<8x128xf32> -> vector<8x128xf32>
    %111 = arith.truncf %110 : vector<8x128xf32> to vector<8x128xbf16>
    %cst_68 = arith.constant dense<0.000000e+00> : vector<8x128xf32>
    %112 = tpu.matmul %111, %108, %cst_68 {dimension_numbers = #tpu.dot_dimension_numbers<[1], [0], [0], [1], [0, 0, 1, 1], [], []>} : vector<8x128xbf16>, vector<128x128xbf16>, vector<8x128xf32> -> vector<8x128xf32>
    %113 = arith.subf %106, %112 : vector<8x128xf32>
    %114 = arith.mulf %113, %113 : vector<8x128xf32>
    %115 = arith.truncf %114 : vector<8x128xf32> to vector<8x128xbf16>
    %cst_69 = arith.constant dense<0.000000e+00> : vector<8x128xf32>
    %116 = tpu.matmul %107, %115, %cst_69 {dimension_numbers = #tpu.dot_dimension_numbers<[1], [0], [0], [1], [0, 0, 1, 1], [], []>} : vector<8x8xbf16>, vector<8x128xbf16>, vector<8x128xf32> -> vector<8x128xf32>
    %117 = arith.truncf %116 : vector<8x128xf32> to vector<8x128xbf16>
    %cst_70 = arith.constant dense<0.000000e+00> : vector<8x128xf32>
    %118 = tpu.matmul %117, %108, %cst_70 {dimension_numbers = #tpu.dot_dimension_numbers<[1], [0], [0], [1], [0, 0, 1, 1], [], []>} : vector<8x128xbf16>, vector<128x128xbf16>, vector<8x128xf32> -> vector<8x128xf32>
    %cst_71 = arith.constant 9.99999974E-6 : f32
    %119 = vector.broadcast %cst_71 : f32 to vector<8x128xf32>
    %120 = arith.addf %118, %119 : vector<8x128xf32>
    %121 = math.rsqrt %120 : vector<8x128xf32>
    %122 = arith.mulf %113, %121 : vector<8x128xf32>
    %cst_72 = arith.constant 0.000000e+00 : f32
    %123 = vector.broadcast %cst_72 : f32 to vector<8x128xf32>
    %124 = arith.maximumf %122, %123 : vector<8x128xf32>
    %125 = arith.truncf %124 : vector<8x128xf32> to vector<8x128xbf16>
    %c0_73 = arith.constant 0 : index
    %c0_74 = arith.constant 0 : index
    %126 = vector.load %arg17[%c0_73, %c0_74] : memref<16x8xbf16, #tpu.memory_space<vmem>>, vector<16x8xbf16>
    %cst_75 = arith.constant dense<0.000000e+00> : vector<16x128xf32>
    %127 = tpu.matmul %126, %125, %cst_75 {dimension_numbers = #tpu.dot_dimension_numbers<[1], [0], [0], [1], [0, 0, 1, 1], [], []>} : vector<16x8xbf16>, vector<8x128xbf16>, vector<16x128xf32> -> vector<16x128xf32>
    %128 = arith.truncf %127 : vector<16x128xf32> to vector<16x128xbf16>
    %129 = vector.extract_strided_slice %128 {offsets = [0, 0], sizes = [8, 128], strides = [1, 1]} : vector<16x128xbf16> to vector<8x128xbf16>
    %130 = vector.extract_strided_slice %128 {offsets = [8, 0], sizes = [8, 128], strides = [1, 1]} : vector<16x128xbf16> to vector<8x128xbf16>
    %131 = tpu.concatenate %129, %125, %130 in 1 : vector<8x128xbf16>, vector<8x128xbf16>, vector<8x128xbf16> -> vector<8x384xbf16>
    %c0_76 = arith.constant 0 : index
    %c0_77 = arith.constant 0 : index
    %132 = vector.load %arg20[%c0_76, %c0_77] : memref<384x128xbf16, #tpu.memory_space<vmem>>, vector<384x128xbf16>
    %cst_78 = arith.constant dense<0.000000e+00> : vector<8x128xf32>
    %133 = tpu.matmul %131, %132, %cst_78 {dimension_numbers = #tpu.dot_dimension_numbers<[1], [0], [0], [1], [0, 0, 1, 1], [], []>} : vector<8x384xbf16>, vector<384x128xbf16>, vector<8x128xf32> -> vector<8x128xf32>
    %c0_79 = arith.constant 0 : index
    %c0_80 = arith.constant 0 : index
    %134 = vector.load %arg21[%c0_79, %c0_80] : memref<1x128xf32, #tpu.memory_space<vmem>>, vector<1x128xf32>
    %135 = vector.broadcast %134 : vector<1x128xf32> to vector<8x128xf32>
    %136 = arith.addf %133, %135 : vector<8x128xf32>
    %c0_81 = arith.constant 0 : index
    %c0_82 = arith.constant 0 : index
    %137 = vector.load %arg15[%c0_81, %c0_82] : memref<8x8xbf16, #tpu.memory_space<vmem>>, vector<8x8xbf16>
    %c0_83 = arith.constant 0 : index
    %c0_84 = arith.constant 0 : index
    %138 = vector.load %arg16[%c0_83, %c0_84] : memref<128x128xbf16, #tpu.memory_space<vmem>>, vector<128x128xbf16>
    %139 = arith.truncf %136 : vector<8x128xf32> to vector<8x128xbf16>
    %cst_85 = arith.constant dense<0.000000e+00> : vector<8x128xf32>
    %140 = tpu.matmul %137, %139, %cst_85 {dimension_numbers = #tpu.dot_dimension_numbers<[1], [0], [0], [1], [0, 0, 1, 1], [], []>} : vector<8x8xbf16>, vector<8x128xbf16>, vector<8x128xf32> -> vector<8x128xf32>
    %141 = arith.truncf %140 : vector<8x128xf32> to vector<8x128xbf16>
    %cst_86 = arith.constant dense<0.000000e+00> : vector<8x128xf32>
    %142 = tpu.matmul %141, %138, %cst_86 {dimension_numbers = #tpu.dot_dimension_numbers<[1], [0], [0], [1], [0, 0, 1, 1], [], []>} : vector<8x128xbf16>, vector<128x128xbf16>, vector<8x128xf32> -> vector<8x128xf32>
    %143 = arith.subf %136, %142 : vector<8x128xf32>
    %144 = arith.mulf %143, %143 : vector<8x128xf32>
    %145 = arith.truncf %144 : vector<8x128xf32> to vector<8x128xbf16>
    %cst_87 = arith.constant dense<0.000000e+00> : vector<8x128xf32>
    %146 = tpu.matmul %137, %145, %cst_87 {dimension_numbers = #tpu.dot_dimension_numbers<[1], [0], [0], [1], [0, 0, 1, 1], [], []>} : vector<8x8xbf16>, vector<8x128xbf16>, vector<8x128xf32> -> vector<8x128xf32>
    %147 = arith.truncf %146 : vector<8x128xf32> to vector<8x128xbf16>
    %cst_88 = arith.constant dense<0.000000e+00> : vector<8x128xf32>
    %148 = tpu.matmul %147, %138, %cst_88 {dimension_numbers = #tpu.dot_dimension_numbers<[1], [0], [0], [1], [0, 0, 1, 1], [], []>} : vector<8x128xbf16>, vector<128x128xbf16>, vector<8x128xf32> -> vector<8x128xf32>
    %cst_89 = arith.constant 9.99999974E-6 : f32
    %149 = vector.broadcast %cst_89 : f32 to vector<8x128xf32>
    %150 = arith.addf %148, %149 : vector<8x128xf32>
    %151 = math.rsqrt %150 : vector<8x128xf32>
    %152 = arith.mulf %143, %151 : vector<8x128xf32>
    %153 = arith.addf %94, %152 : vector<8x128xf32>
    %154 = arith.truncf %153 : vector<8x128xf32> to vector<8x128xbf16>
    %c0_90 = arith.constant 0 : index
    %c0_91 = arith.constant 0 : index
    %155 = vector.load %arg17[%c0_90, %c0_91] : memref<16x8xbf16, #tpu.memory_space<vmem>>, vector<16x8xbf16>
    %cst_92 = arith.constant dense<0.000000e+00> : vector<16x128xf32>
    %156 = tpu.matmul %155, %154, %cst_92 {dimension_numbers = #tpu.dot_dimension_numbers<[1], [0], [0], [1], [0, 0, 1, 1], [], []>} : vector<16x8xbf16>, vector<8x128xbf16>, vector<16x128xf32> -> vector<16x128xf32>
    %157 = arith.truncf %156 : vector<16x128xf32> to vector<16x128xbf16>
    %158 = vector.extract_strided_slice %157 {offsets = [0, 0], sizes = [8, 128], strides = [1, 1]} : vector<16x128xbf16> to vector<8x128xbf16>
    %159 = vector.extract_strided_slice %157 {offsets = [8, 0], sizes = [8, 128], strides = [1, 1]} : vector<16x128xbf16> to vector<8x128xbf16>
    %160 = tpu.concatenate %158, %154, %159 in 1 : vector<8x128xbf16>, vector<8x128xbf16>, vector<8x128xbf16> -> vector<8x384xbf16>
    %c0_93 = arith.constant 0 : index
    %c0_94 = arith.constant 0 : index
    %161 = vector.load %arg22[%c0_93, %c0_94] : memref<384x128xbf16, #tpu.memory_space<vmem>>, vector<384x128xbf16>
    %cst_95 = arith.constant dense<0.000000e+00> : vector<8x128xf32>
    %162 = tpu.matmul %160, %161, %cst_95 {dimension_numbers = #tpu.dot_dimension_numbers<[1], [0], [0], [1], [0, 0, 1, 1], [], []>} : vector<8x384xbf16>, vector<384x128xbf16>, vector<8x128xf32> -> vector<8x128xf32>
    %c0_96 = arith.constant 0 : index
    %c0_97 = arith.constant 0 : index
    %163 = vector.load %arg23[%c0_96, %c0_97] : memref<1x128xf32, #tpu.memory_space<vmem>>, vector<1x128xf32>
    %164 = vector.broadcast %163 : vector<1x128xf32> to vector<8x128xf32>
    %165 = arith.addf %162, %164 : vector<8x128xf32>
    %c0_98 = arith.constant 0 : index
    %c0_99 = arith.constant 0 : index
    %166 = vector.load %arg15[%c0_98, %c0_99] : memref<8x8xbf16, #tpu.memory_space<vmem>>, vector<8x8xbf16>
    %c0_100 = arith.constant 0 : index
    %c0_101 = arith.constant 0 : index
    %167 = vector.load %arg16[%c0_100, %c0_101] : memref<128x128xbf16, #tpu.memory_space<vmem>>, vector<128x128xbf16>
    %168 = arith.truncf %165 : vector<8x128xf32> to vector<8x128xbf16>
    %cst_102 = arith.constant dense<0.000000e+00> : vector<8x128xf32>
    %169 = tpu.matmul %166, %168, %cst_102 {dimension_numbers = #tpu.dot_dimension_numbers<[1], [0], [0], [1], [0, 0, 1, 1], [], []>} : vector<8x8xbf16>, vector<8x128xbf16>, vector<8x128xf32> -> vector<8x128xf32>
    %170 = arith.truncf %169 : vector<8x128xf32> to vector<8x128xbf16>
    %cst_103 = arith.constant dense<0.000000e+00> : vector<8x128xf32>
    %171 = tpu.matmul %170, %167, %cst_103 {dimension_numbers = #tpu.dot_dimension_numbers<[1], [0], [0], [1], [0, 0, 1, 1], [], []>} : vector<8x128xbf16>, vector<128x128xbf16>, vector<8x128xf32> -> vector<8x128xf32>
    %172 = arith.subf %165, %171 : vector<8x128xf32>
    %173 = arith.mulf %172, %172 : vector<8x128xf32>
    %174 = arith.truncf %173 : vector<8x128xf32> to vector<8x128xbf16>
    %cst_104 = arith.constant dense<0.000000e+00> : vector<8x128xf32>
    %175 = tpu.matmul %166, %174, %cst_104 {dimension_numbers = #tpu.dot_dimension_numbers<[1], [0], [0], [1], [0, 0, 1, 1], [], []>} : vector<8x8xbf16>, vector<8x128xbf16>, vector<8x128xf32> -> vector<8x128xf32>
    %176 = arith.truncf %175 : vector<8x128xf32> to vector<8x128xbf16>
    %cst_105 = arith.constant dense<0.000000e+00> : vector<8x128xf32>
    %177 = tpu.matmul %176, %167, %cst_105 {dimension_numbers = #tpu.dot_dimension_numbers<[1], [0], [0], [1], [0, 0, 1, 1], [], []>} : vector<8x128xbf16>, vector<128x128xbf16>, vector<8x128xf32> -> vector<8x128xf32>
    %cst_106 = arith.constant 9.99999974E-6 : f32
    %178 = vector.broadcast %cst_106 : f32 to vector<8x128xf32>
    %179 = arith.addf %177, %178 : vector<8x128xf32>
    %180 = math.rsqrt %179 : vector<8x128xf32>
    %181 = arith.mulf %172, %180 : vector<8x128xf32>
    %cst_107 = arith.constant 0.000000e+00 : f32
    %182 = vector.broadcast %cst_107 : f32 to vector<8x128xf32>
    %183 = arith.maximumf %181, %182 : vector<8x128xf32>
    %184 = arith.truncf %183 : vector<8x128xf32> to vector<8x128xbf16>
    %c0_108 = arith.constant 0 : index
    %c0_109 = arith.constant 0 : index
    %185 = vector.load %arg17[%c0_108, %c0_109] : memref<16x8xbf16, #tpu.memory_space<vmem>>, vector<16x8xbf16>
    %cst_110 = arith.constant dense<0.000000e+00> : vector<16x128xf32>
    %186 = tpu.matmul %185, %184, %cst_110 {dimension_numbers = #tpu.dot_dimension_numbers<[1], [0], [0], [1], [0, 0, 1, 1], [], []>} : vector<16x8xbf16>, vector<8x128xbf16>, vector<16x128xf32> -> vector<16x128xf32>
    %187 = arith.truncf %186 : vector<16x128xf32> to vector<16x128xbf16>
    %188 = vector.extract_strided_slice %187 {offsets = [0, 0], sizes = [8, 128], strides = [1, 1]} : vector<16x128xbf16> to vector<8x128xbf16>
    %189 = vector.extract_strided_slice %187 {offsets = [8, 0], sizes = [8, 128], strides = [1, 1]} : vector<16x128xbf16> to vector<8x128xbf16>
    %190 = tpu.concatenate %188, %184, %189 in 1 : vector<8x128xbf16>, vector<8x128xbf16>, vector<8x128xbf16> -> vector<8x384xbf16>
    %c0_111 = arith.constant 0 : index
    %c0_112 = arith.constant 0 : index
    %191 = vector.load %arg24[%c0_111, %c0_112] : memref<384x128xbf16, #tpu.memory_space<vmem>>, vector<384x128xbf16>
    %cst_113 = arith.constant dense<0.000000e+00> : vector<8x128xf32>
    %192 = tpu.matmul %190, %191, %cst_113 {dimension_numbers = #tpu.dot_dimension_numbers<[1], [0], [0], [1], [0, 0, 1, 1], [], []>} : vector<8x384xbf16>, vector<384x128xbf16>, vector<8x128xf32> -> vector<8x128xf32>
    %c0_114 = arith.constant 0 : index
    %c0_115 = arith.constant 0 : index
    %193 = vector.load %arg25[%c0_114, %c0_115] : memref<1x128xf32, #tpu.memory_space<vmem>>, vector<1x128xf32>
    %194 = vector.broadcast %193 : vector<1x128xf32> to vector<8x128xf32>
    %195 = arith.addf %192, %194 : vector<8x128xf32>
    %c0_116 = arith.constant 0 : index
    %c0_117 = arith.constant 0 : index
    %196 = vector.load %arg15[%c0_116, %c0_117] : memref<8x8xbf16, #tpu.memory_space<vmem>>, vector<8x8xbf16>
    %c0_118 = arith.constant 0 : index
    %c0_119 = arith.constant 0 : index
    %197 = vector.load %arg16[%c0_118, %c0_119] : memref<128x128xbf16, #tpu.memory_space<vmem>>, vector<128x128xbf16>
    %198 = arith.truncf %195 : vector<8x128xf32> to vector<8x128xbf16>
    %cst_120 = arith.constant dense<0.000000e+00> : vector<8x128xf32>
    %199 = tpu.matmul %196, %198, %cst_120 {dimension_numbers = #tpu.dot_dimension_numbers<[1], [0], [0], [1], [0, 0, 1, 1], [], []>} : vector<8x8xbf16>, vector<8x128xbf16>, vector<8x128xf32> -> vector<8x128xf32>
    %200 = arith.truncf %199 : vector<8x128xf32> to vector<8x128xbf16>
    %cst_121 = arith.constant dense<0.000000e+00> : vector<8x128xf32>
    %201 = tpu.matmul %200, %197, %cst_121 {dimension_numbers = #tpu.dot_dimension_numbers<[1], [0], [0], [1], [0, 0, 1, 1], [], []>} : vector<8x128xbf16>, vector<128x128xbf16>, vector<8x128xf32> -> vector<8x128xf32>
    %202 = arith.subf %195, %201 : vector<8x128xf32>
    %203 = arith.mulf %202, %202 : vector<8x128xf32>
    %204 = arith.truncf %203 : vector<8x128xf32> to vector<8x128xbf16>
    %cst_122 = arith.constant dense<0.000000e+00> : vector<8x128xf32>
    %205 = tpu.matmul %196, %204, %cst_122 {dimension_numbers = #tpu.dot_dimension_numbers<[1], [0], [0], [1], [0, 0, 1, 1], [], []>} : vector<8x8xbf16>, vector<8x128xbf16>, vector<8x128xf32> -> vector<8x128xf32>
    %206 = arith.truncf %205 : vector<8x128xf32> to vector<8x128xbf16>
    %cst_123 = arith.constant dense<0.000000e+00> : vector<8x128xf32>
    %207 = tpu.matmul %206, %197, %cst_123 {dimension_numbers = #tpu.dot_dimension_numbers<[1], [0], [0], [1], [0, 0, 1, 1], [], []>} : vector<8x128xbf16>, vector<128x128xbf16>, vector<8x128xf32> -> vector<8x128xf32>
    %cst_124 = arith.constant 9.99999974E-6 : f32
    %208 = vector.broadcast %cst_124 : f32 to vector<8x128xf32>
    %209 = arith.addf %207, %208 : vector<8x128xf32>
    %210 = math.rsqrt %209 : vector<8x128xf32>
    %211 = arith.mulf %202, %210 : vector<8x128xf32>
    %212 = arith.addf %153, %211 : vector<8x128xf32>
    %213 = arith.truncf %212 : vector<8x128xf32> to vector<8x128xbf16>
    %c0_125 = arith.constant 0 : index
    %c0_126 = arith.constant 0 : index
    %214 = vector.load %arg17[%c0_125, %c0_126] : memref<16x8xbf16, #tpu.memory_space<vmem>>, vector<16x8xbf16>
    %cst_127 = arith.constant dense<0.000000e+00> : vector<16x128xf32>
    %215 = tpu.matmul %214, %213, %cst_127 {dimension_numbers = #tpu.dot_dimension_numbers<[1], [0], [0], [1], [0, 0, 1, 1], [], []>} : vector<16x8xbf16>, vector<8x128xbf16>, vector<16x128xf32> -> vector<16x128xf32>
    %216 = arith.truncf %215 : vector<16x128xf32> to vector<16x128xbf16>
    %217 = vector.extract_strided_slice %216 {offsets = [0, 0], sizes = [8, 128], strides = [1, 1]} : vector<16x128xbf16> to vector<8x128xbf16>
    %218 = vector.extract_strided_slice %216 {offsets = [8, 0], sizes = [8, 128], strides = [1, 1]} : vector<16x128xbf16> to vector<8x128xbf16>
    %219 = tpu.concatenate %217, %213, %218 in 1 : vector<8x128xbf16>, vector<8x128xbf16>, vector<8x128xbf16> -> vector<8x384xbf16>
    %c0_128 = arith.constant 0 : index
    %c0_129 = arith.constant 0 : index
    %220 = vector.load %arg26[%c0_128, %c0_129] : memref<384x128xbf16, #tpu.memory_space<vmem>>, vector<384x128xbf16>
    %cst_130 = arith.constant dense<0.000000e+00> : vector<8x128xf32>
    %221 = tpu.matmul %219, %220, %cst_130 {dimension_numbers = #tpu.dot_dimension_numbers<[1], [0], [0], [1], [0, 0, 1, 1], [], []>} : vector<8x384xbf16>, vector<384x128xbf16>, vector<8x128xf32> -> vector<8x128xf32>
    %c0_131 = arith.constant 0 : index
    %c0_132 = arith.constant 0 : index
    %222 = vector.load %arg27[%c0_131, %c0_132] : memref<1x128xf32, #tpu.memory_space<vmem>>, vector<1x128xf32>
    %223 = vector.broadcast %222 : vector<1x128xf32> to vector<8x128xf32>
    %224 = arith.addf %221, %223 : vector<8x128xf32>
    %c0_133 = arith.constant 0 : index
    %c0_134 = arith.constant 0 : index
    %225 = vector.load %arg15[%c0_133, %c0_134] : memref<8x8xbf16, #tpu.memory_space<vmem>>, vector<8x8xbf16>
    %c0_135 = arith.constant 0 : index
    %c0_136 = arith.constant 0 : index
    %226 = vector.load %arg16[%c0_135, %c0_136] : memref<128x128xbf16, #tpu.memory_space<vmem>>, vector<128x128xbf16>
    %227 = arith.truncf %224 : vector<8x128xf32> to vector<8x128xbf16>
    %cst_137 = arith.constant dense<0.000000e+00> : vector<8x128xf32>
    %228 = tpu.matmul %225, %227, %cst_137 {dimension_numbers = #tpu.dot_dimension_numbers<[1], [0], [0], [1], [0, 0, 1, 1], [], []>} : vector<8x8xbf16>, vector<8x128xbf16>, vector<8x128xf32> -> vector<8x128xf32>
    %229 = arith.truncf %228 : vector<8x128xf32> to vector<8x128xbf16>
    %cst_138 = arith.constant dense<0.000000e+00> : vector<8x128xf32>
    %230 = tpu.matmul %229, %226, %cst_138 {dimension_numbers = #tpu.dot_dimension_numbers<[1], [0], [0], [1], [0, 0, 1, 1], [], []>} : vector<8x128xbf16>, vector<128x128xbf16>, vector<8x128xf32> -> vector<8x128xf32>
    %231 = arith.subf %224, %230 : vector<8x128xf32>
    %232 = arith.mulf %231, %231 : vector<8x128xf32>
    %233 = arith.truncf %232 : vector<8x128xf32> to vector<8x128xbf16>
    %cst_139 = arith.constant dense<0.000000e+00> : vector<8x128xf32>
    %234 = tpu.matmul %225, %233, %cst_139 {dimension_numbers = #tpu.dot_dimension_numbers<[1], [0], [0], [1], [0, 0, 1, 1], [], []>} : vector<8x8xbf16>, vector<8x128xbf16>, vector<8x128xf32> -> vector<8x128xf32>
    %235 = arith.truncf %234 : vector<8x128xf32> to vector<8x128xbf16>
    %cst_140 = arith.constant dense<0.000000e+00> : vector<8x128xf32>
    %236 = tpu.matmul %235, %226, %cst_140 {dimension_numbers = #tpu.dot_dimension_numbers<[1], [0], [0], [1], [0, 0, 1, 1], [], []>} : vector<8x128xbf16>, vector<128x128xbf16>, vector<8x128xf32> -> vector<8x128xf32>
    %cst_141 = arith.constant 9.99999974E-6 : f32
    %237 = vector.broadcast %cst_141 : f32 to vector<8x128xf32>
    %238 = arith.addf %236, %237 : vector<8x128xf32>
    %239 = math.rsqrt %238 : vector<8x128xf32>
    %240 = arith.mulf %231, %239 : vector<8x128xf32>
    %cst_142 = arith.constant 0.000000e+00 : f32
    %241 = vector.broadcast %cst_142 : f32 to vector<8x128xf32>
    %242 = arith.maximumf %240, %241 : vector<8x128xf32>
    %243 = arith.truncf %242 : vector<8x128xf32> to vector<8x128xbf16>
    %c0_143 = arith.constant 0 : index
    %c0_144 = arith.constant 0 : index
    %244 = vector.load %arg17[%c0_143, %c0_144] : memref<16x8xbf16, #tpu.memory_space<vmem>>, vector<16x8xbf16>
    %cst_145 = arith.constant dense<0.000000e+00> : vector<16x128xf32>
    %245 = tpu.matmul %244, %243, %cst_145 {dimension_numbers = #tpu.dot_dimension_numbers<[1], [0], [0], [1], [0, 0, 1, 1], [], []>} : vector<16x8xbf16>, vector<8x128xbf16>, vector<16x128xf32> -> vector<16x128xf32>
    %246 = arith.truncf %245 : vector<16x128xf32> to vector<16x128xbf16>
    %247 = vector.extract_strided_slice %246 {offsets = [0, 0], sizes = [8, 128], strides = [1, 1]} : vector<16x128xbf16> to vector<8x128xbf16>
    %248 = vector.extract_strided_slice %246 {offsets = [8, 0], sizes = [8, 128], strides = [1, 1]} : vector<16x128xbf16> to vector<8x128xbf16>
    %249 = tpu.concatenate %247, %243, %248 in 1 : vector<8x128xbf16>, vector<8x128xbf16>, vector<8x128xbf16> -> vector<8x384xbf16>
    %c0_146 = arith.constant 0 : index
    %c0_147 = arith.constant 0 : index
    %250 = vector.load %arg28[%c0_146, %c0_147] : memref<384x128xbf16, #tpu.memory_space<vmem>>, vector<384x128xbf16>
    %cst_148 = arith.constant dense<0.000000e+00> : vector<8x128xf32>
    %251 = tpu.matmul %249, %250, %cst_148 {dimension_numbers = #tpu.dot_dimension_numbers<[1], [0], [0], [1], [0, 0, 1, 1], [], []>} : vector<8x384xbf16>, vector<384x128xbf16>, vector<8x128xf32> -> vector<8x128xf32>
    %c0_149 = arith.constant 0 : index
    %c0_150 = arith.constant 0 : index
    %252 = vector.load %arg29[%c0_149, %c0_150] : memref<1x128xf32, #tpu.memory_space<vmem>>, vector<1x128xf32>
    %253 = vector.broadcast %252 : vector<1x128xf32> to vector<8x128xf32>
    %254 = arith.addf %251, %253 : vector<8x128xf32>
    %c0_151 = arith.constant 0 : index
    %c0_152 = arith.constant 0 : index
    %255 = vector.load %arg15[%c0_151, %c0_152] : memref<8x8xbf16, #tpu.memory_space<vmem>>, vector<8x8xbf16>
    %c0_153 = arith.constant 0 : index
    %c0_154 = arith.constant 0 : index
    %256 = vector.load %arg16[%c0_153, %c0_154] : memref<128x128xbf16, #tpu.memory_space<vmem>>, vector<128x128xbf16>
    %257 = arith.truncf %254 : vector<8x128xf32> to vector<8x128xbf16>
    %cst_155 = arith.constant dense<0.000000e+00> : vector<8x128xf32>
    %258 = tpu.matmul %255, %257, %cst_155 {dimension_numbers = #tpu.dot_dimension_numbers<[1], [0], [0], [1], [0, 0, 1, 1], [], []>} : vector<8x8xbf16>, vector<8x128xbf16>, vector<8x128xf32> -> vector<8x128xf32>
    %259 = arith.truncf %258 : vector<8x128xf32> to vector<8x128xbf16>
    %cst_156 = arith.constant dense<0.000000e+00> : vector<8x128xf32>
    %260 = tpu.matmul %259, %256, %cst_156 {dimension_numbers = #tpu.dot_dimension_numbers<[1], [0], [0], [1], [0, 0, 1, 1], [], []>} : vector<8x128xbf16>, vector<128x128xbf16>, vector<8x128xf32> -> vector<8x128xf32>
    %261 = arith.subf %254, %260 : vector<8x128xf32>
    %262 = arith.mulf %261, %261 : vector<8x128xf32>
    %263 = arith.truncf %262 : vector<8x128xf32> to vector<8x128xbf16>
    %cst_157 = arith.constant dense<0.000000e+00> : vector<8x128xf32>
    %264 = tpu.matmul %255, %263, %cst_157 {dimension_numbers = #tpu.dot_dimension_numbers<[1], [0], [0], [1], [0, 0, 1, 1], [], []>} : vector<8x8xbf16>, vector<8x128xbf16>, vector<8x128xf32> -> vector<8x128xf32>
    %265 = arith.truncf %264 : vector<8x128xf32> to vector<8x128xbf16>
    %cst_158 = arith.constant dense<0.000000e+00> : vector<8x128xf32>
    %266 = tpu.matmul %265, %256, %cst_158 {dimension_numbers = #tpu.dot_dimension_numbers<[1], [0], [0], [1], [0, 0, 1, 1], [], []>} : vector<8x128xbf16>, vector<128x128xbf16>, vector<8x128xf32> -> vector<8x128xf32>
    %cst_159 = arith.constant 9.99999974E-6 : f32
    %267 = vector.broadcast %cst_159 : f32 to vector<8x128xf32>
    %268 = arith.addf %266, %267 : vector<8x128xf32>
    %269 = math.rsqrt %268 : vector<8x128xf32>
    %270 = arith.mulf %261, %269 : vector<8x128xf32>
    %271 = arith.addf %212, %270 : vector<8x128xf32>
    %272 = arith.truncf %271 : vector<8x128xf32> to vector<8x128xbf16>
    %c0_160 = arith.constant 0 : index
    %c0_161 = arith.constant 0 : index
    %273 = vector.load %arg17[%c0_160, %c0_161] : memref<16x8xbf16, #tpu.memory_space<vmem>>, vector<16x8xbf16>
    %cst_162 = arith.constant dense<0.000000e+00> : vector<16x128xf32>
    %274 = tpu.matmul %273, %272, %cst_162 {dimension_numbers = #tpu.dot_dimension_numbers<[1], [0], [0], [1], [0, 0, 1, 1], [], []>} : vector<16x8xbf16>, vector<8x128xbf16>, vector<16x128xf32> -> vector<16x128xf32>
    %275 = arith.truncf %274 : vector<16x128xf32> to vector<16x128xbf16>
    %276 = vector.extract_strided_slice %275 {offsets = [0, 0], sizes = [8, 128], strides = [1, 1]} : vector<16x128xbf16> to vector<8x128xbf16>
    %277 = vector.extract_strided_slice %275 {offsets = [8, 0], sizes = [8, 128], strides = [1, 1]} : vector<16x128xbf16> to vector<8x128xbf16>
    %278 = tpu.concatenate %276, %272, %277 in 1 : vector<8x128xbf16>, vector<8x128xbf16>, vector<8x128xbf16> -> vector<8x384xbf16>
    %c0_163 = arith.constant 0 : index
    %c0_164 = arith.constant 0 : index
    %279 = vector.load %arg30[%c0_163, %c0_164] : memref<384x128xbf16, #tpu.memory_space<vmem>>, vector<384x128xbf16>
    %cst_165 = arith.constant dense<0.000000e+00> : vector<8x128xf32>
    %280 = tpu.matmul %278, %279, %cst_165 {dimension_numbers = #tpu.dot_dimension_numbers<[1], [0], [0], [1], [0, 0, 1, 1], [], []>} : vector<8x384xbf16>, vector<384x128xbf16>, vector<8x128xf32> -> vector<8x128xf32>
    %c0_166 = arith.constant 0 : index
    %c0_167 = arith.constant 0 : index
    %281 = vector.load %arg31[%c0_166, %c0_167] : memref<1x128xf32, #tpu.memory_space<vmem>>, vector<1x128xf32>
    %282 = vector.broadcast %281 : vector<1x128xf32> to vector<8x128xf32>
    %283 = arith.addf %280, %282 : vector<8x128xf32>
    %c0_168 = arith.constant 0 : index
    %c0_169 = arith.constant 0 : index
    %284 = vector.load %arg15[%c0_168, %c0_169] : memref<8x8xbf16, #tpu.memory_space<vmem>>, vector<8x8xbf16>
    %c0_170 = arith.constant 0 : index
    %c0_171 = arith.constant 0 : index
    %285 = vector.load %arg16[%c0_170, %c0_171] : memref<128x128xbf16, #tpu.memory_space<vmem>>, vector<128x128xbf16>
    %286 = arith.truncf %283 : vector<8x128xf32> to vector<8x128xbf16>
    %cst_172 = arith.constant dense<0.000000e+00> : vector<8x128xf32>
    %287 = tpu.matmul %284, %286, %cst_172 {dimension_numbers = #tpu.dot_dimension_numbers<[1], [0], [0], [1], [0, 0, 1, 1], [], []>} : vector<8x8xbf16>, vector<8x128xbf16>, vector<8x128xf32> -> vector<8x128xf32>
    %288 = arith.truncf %287 : vector<8x128xf32> to vector<8x128xbf16>
    %cst_173 = arith.constant dense<0.000000e+00> : vector<8x128xf32>
    %289 = tpu.matmul %288, %285, %cst_173 {dimension_numbers = #tpu.dot_dimension_numbers<[1], [0], [0], [1], [0, 0, 1, 1], [], []>} : vector<8x128xbf16>, vector<128x128xbf16>, vector<8x128xf32> -> vector<8x128xf32>
    %290 = arith.subf %283, %289 : vector<8x128xf32>
    %291 = arith.mulf %290, %290 : vector<8x128xf32>
    %292 = arith.truncf %291 : vector<8x128xf32> to vector<8x128xbf16>
    %cst_174 = arith.constant dense<0.000000e+00> : vector<8x128xf32>
    %293 = tpu.matmul %284, %292, %cst_174 {dimension_numbers = #tpu.dot_dimension_numbers<[1], [0], [0], [1], [0, 0, 1, 1], [], []>} : vector<8x8xbf16>, vector<8x128xbf16>, vector<8x128xf32> -> vector<8x128xf32>
    %294 = arith.truncf %293 : vector<8x128xf32> to vector<8x128xbf16>
    %cst_175 = arith.constant dense<0.000000e+00> : vector<8x128xf32>
    %295 = tpu.matmul %294, %285, %cst_175 {dimension_numbers = #tpu.dot_dimension_numbers<[1], [0], [0], [1], [0, 0, 1, 1], [], []>} : vector<8x128xbf16>, vector<128x128xbf16>, vector<8x128xf32> -> vector<8x128xf32>
    %cst_176 = arith.constant 9.99999974E-6 : f32
    %296 = vector.broadcast %cst_176 : f32 to vector<8x128xf32>
    %297 = arith.addf %295, %296 : vector<8x128xf32>
    %298 = math.rsqrt %297 : vector<8x128xf32>
    %299 = arith.mulf %290, %298 : vector<8x128xf32>
    %cst_177 = arith.constant 0.000000e+00 : f32
    %300 = vector.broadcast %cst_177 : f32 to vector<8x128xf32>
    %301 = arith.maximumf %299, %300 : vector<8x128xf32>
    %302 = arith.truncf %301 : vector<8x128xf32> to vector<8x128xbf16>
    %c0_178 = arith.constant 0 : index
    %c0_179 = arith.constant 0 : index
    %303 = vector.load %arg17[%c0_178, %c0_179] : memref<16x8xbf16, #tpu.memory_space<vmem>>, vector<16x8xbf16>
    %cst_180 = arith.constant dense<0.000000e+00> : vector<16x128xf32>
    %304 = tpu.matmul %303, %302, %cst_180 {dimension_numbers = #tpu.dot_dimension_numbers<[1], [0], [0], [1], [0, 0, 1, 1], [], []>} : vector<16x8xbf16>, vector<8x128xbf16>, vector<16x128xf32> -> vector<16x128xf32>
    %305 = arith.truncf %304 : vector<16x128xf32> to vector<16x128xbf16>
    %306 = vector.extract_strided_slice %305 {offsets = [0, 0], sizes = [8, 128], strides = [1, 1]} : vector<16x128xbf16> to vector<8x128xbf16>
    %307 = vector.extract_strided_slice %305 {offsets = [8, 0], sizes = [8, 128], strides = [1, 1]} : vector<16x128xbf16> to vector<8x128xbf16>
    %308 = tpu.concatenate %306, %302, %307 in 1 : vector<8x128xbf16>, vector<8x128xbf16>, vector<8x128xbf16> -> vector<8x384xbf16>
    %c0_181 = arith.constant 0 : index
    %c0_182 = arith.constant 0 : index
    %309 = vector.load %arg32[%c0_181, %c0_182] : memref<384x128xbf16, #tpu.memory_space<vmem>>, vector<384x128xbf16>
    %cst_183 = arith.constant dense<0.000000e+00> : vector<8x128xf32>
    %310 = tpu.matmul %308, %309, %cst_183 {dimension_numbers = #tpu.dot_dimension_numbers<[1], [0], [0], [1], [0, 0, 1, 1], [], []>} : vector<8x384xbf16>, vector<384x128xbf16>, vector<8x128xf32> -> vector<8x128xf32>
    %c0_184 = arith.constant 0 : index
    %c0_185 = arith.constant 0 : index
    %311 = vector.load %arg33[%c0_184, %c0_185] : memref<1x128xf32, #tpu.memory_space<vmem>>, vector<1x128xf32>
    %312 = vector.broadcast %311 : vector<1x128xf32> to vector<8x128xf32>
    %313 = arith.addf %310, %312 : vector<8x128xf32>
    %c0_186 = arith.constant 0 : index
    %c0_187 = arith.constant 0 : index
    %314 = vector.load %arg15[%c0_186, %c0_187] : memref<8x8xbf16, #tpu.memory_space<vmem>>, vector<8x8xbf16>
    %c0_188 = arith.constant 0 : index
    %c0_189 = arith.constant 0 : index
    %315 = vector.load %arg16[%c0_188, %c0_189] : memref<128x128xbf16, #tpu.memory_space<vmem>>, vector<128x128xbf16>
    %316 = arith.truncf %313 : vector<8x128xf32> to vector<8x128xbf16>
    %cst_190 = arith.constant dense<0.000000e+00> : vector<8x128xf32>
    %317 = tpu.matmul %314, %316, %cst_190 {dimension_numbers = #tpu.dot_dimension_numbers<[1], [0], [0], [1], [0, 0, 1, 1], [], []>} : vector<8x8xbf16>, vector<8x128xbf16>, vector<8x128xf32> -> vector<8x128xf32>
    %318 = arith.truncf %317 : vector<8x128xf32> to vector<8x128xbf16>
    %cst_191 = arith.constant dense<0.000000e+00> : vector<8x128xf32>
    %319 = tpu.matmul %318, %315, %cst_191 {dimension_numbers = #tpu.dot_dimension_numbers<[1], [0], [0], [1], [0, 0, 1, 1], [], []>} : vector<8x128xbf16>, vector<128x128xbf16>, vector<8x128xf32> -> vector<8x128xf32>
    %320 = arith.subf %313, %319 : vector<8x128xf32>
    %321 = arith.mulf %320, %320 : vector<8x128xf32>
    %322 = arith.truncf %321 : vector<8x128xf32> to vector<8x128xbf16>
    %cst_192 = arith.constant dense<0.000000e+00> : vector<8x128xf32>
    %323 = tpu.matmul %314, %322, %cst_192 {dimension_numbers = #tpu.dot_dimension_numbers<[1], [0], [0], [1], [0, 0, 1, 1], [], []>} : vector<8x8xbf16>, vector<8x128xbf16>, vector<8x128xf32> -> vector<8x128xf32>
    %324 = arith.truncf %323 : vector<8x128xf32> to vector<8x128xbf16>
    %cst_193 = arith.constant dense<0.000000e+00> : vector<8x128xf32>
    %325 = tpu.matmul %324, %315, %cst_193 {dimension_numbers = #tpu.dot_dimension_numbers<[1], [0], [0], [1], [0, 0, 1, 1], [], []>} : vector<8x128xbf16>, vector<128x128xbf16>, vector<8x128xf32> -> vector<8x128xf32>
    %cst_194 = arith.constant 9.99999974E-6 : f32
    %326 = vector.broadcast %cst_194 : f32 to vector<8x128xf32>
    %327 = arith.addf %325, %326 : vector<8x128xf32>
    %328 = math.rsqrt %327 : vector<8x128xf32>
    %329 = arith.mulf %320, %328 : vector<8x128xf32>
    %330 = arith.addf %271, %329 : vector<8x128xf32>
    %331 = arith.truncf %330 : vector<8x128xf32> to vector<8x128xbf16>
    %c0_195 = arith.constant 0 : index
    %c0_196 = arith.constant 0 : index
    %332 = vector.load %arg17[%c0_195, %c0_196] : memref<16x8xbf16, #tpu.memory_space<vmem>>, vector<16x8xbf16>
    %cst_197 = arith.constant dense<0.000000e+00> : vector<16x128xf32>
    %333 = tpu.matmul %332, %331, %cst_197 {dimension_numbers = #tpu.dot_dimension_numbers<[1], [0], [0], [1], [0, 0, 1, 1], [], []>} : vector<16x8xbf16>, vector<8x128xbf16>, vector<16x128xf32> -> vector<16x128xf32>
    %334 = arith.truncf %333 : vector<16x128xf32> to vector<16x128xbf16>
    %335 = vector.extract_strided_slice %334 {offsets = [0, 0], sizes = [8, 128], strides = [1, 1]} : vector<16x128xbf16> to vector<8x128xbf16>
    %336 = vector.extract_strided_slice %334 {offsets = [8, 0], sizes = [8, 128], strides = [1, 1]} : vector<16x128xbf16> to vector<8x128xbf16>
    %337 = tpu.concatenate %335, %331, %336 in 1 : vector<8x128xbf16>, vector<8x128xbf16>, vector<8x128xbf16> -> vector<8x384xbf16>
    %c0_198 = arith.constant 0 : index
    %c0_199 = arith.constant 0 : index
    %338 = vector.load %arg34[%c0_198, %c0_199] : memref<384x8xbf16, #tpu.memory_space<vmem>>, vector<384x8xbf16>
    %cst_200 = arith.constant dense<0.000000e+00> : vector<8x8xf32>
    %339 = tpu.matmul %337, %338, %cst_200 {dimension_numbers = #tpu.dot_dimension_numbers<[1], [0], [0], [1], [0, 0, 1, 1], [], []>} : vector<8x384xbf16>, vector<384x8xbf16>, vector<8x8xf32> -> vector<8x8xf32>
    %c0_201 = arith.constant 0 : index
    %c0_202 = arith.constant 0 : index
    %340 = vector.load %arg35[%c0_201, %c0_202] : memref<1x8xf32, #tpu.memory_space<vmem>>, vector<1x8xf32>
    %341 = vector.broadcast %340 : vector<1x8xf32> to vector<8x8xf32>
    %342 = arith.addf %339, %341 : vector<8x8xf32>
    %cst_203 = arith.constant 1.821500e-01 : f32
    %343 = vector.broadcast %cst_203 : f32 to vector<8x8xf32>
    %344 = arith.mulf %343, %342 : vector<8x8xf32>
    %345 = vector.extract_strided_slice %344 {offsets = [0, 0], sizes = [4, 8], strides = [1, 1]} : vector<8x8xf32> to vector<4x8xf32>
    %346 = vector.extract_strided_slice %344 {offsets = [4, 0], sizes = [4, 8], strides = [1, 1]} : vector<8x8xf32> to vector<4x8xf32>
    %347 = arith.subf %345, %346 : vector<4x8xf32>
    %348 = arith.mulf %347, %347 : vector<4x8xf32>
    %c0_204 = arith.constant 0 : index
    %c0_205 = arith.constant 0 : index
    %349 = vector.load %arg36[%c0_204, %c0_205] : memref<8x2xf32, #tpu.memory_space<vmem>>, vector<8x2xf32>
    %cst_206 = arith.constant dense<0.000000e+00> : vector<4x2xf32>
    %350 = tpu.matmul %348, %349, %cst_206 {dimension_numbers = #tpu.dot_dimension_numbers<[1], [0], [0], [1], [0, 0, 1, 1], [], []>} : vector<4x8xf32>, vector<8x2xf32>, vector<4x2xf32> -> vector<4x2xf32>
    %351 = math.sqrt %350 : vector<4x2xf32>
    %352 = vector.shape_cast %351 : vector<4x2xf32> to vector<1x4x2xf32>
    %cst_207 = arith.constant dense<0.000000e+00> : vector<1xf32>
    %353 = vector.multi_reduction <add>, %352, %cst_207 [1, 2] : vector<1x4x2xf32> to vector<1xf32>
    %354 = vector.shape_cast %353 : vector<1xf32> to vector<1x1x1xf32>
    %355 = vector.extract %354[0, 0, 0] : f32 from vector<1x1x1xf32>
    %356 = vector.broadcast %355 : f32 to vector<1x1xf32>
    %357 = vector.shape_cast %356 : vector<1x1xf32> to vector<1x1x1xf32>
    %358 = vector.broadcast %357 : vector<1x1x1xf32> to vector<1x8x128xf32>
    %c0_208 = arith.constant 0 : index
    %c0_209 = arith.constant 0 : index
    %c0_210 = arith.constant 0 : index
    %359 = vector.load %arg37[%c0_208, %c0_209, %c0_210] : memref<1x8x128xf32, #tpu.memory_space<vmem>>, vector<1x8x128xf32>
    tpu.vector_store %arg37[%c0_208, %c0_209, %c0_210], %358 {strides = array<i32>} : memref<1x8x128xf32, #tpu.memory_space<vmem>>, vector<1x8x128xf32>,
    return
  }
  func.func @transform_0(%arg0: i32) -> (i32, i32, i32) {
    %c0_i32 = arith.constant 0 : i32
    %c0_i32_0 = arith.constant 0 : i32
    %c0_i32_1 = arith.constant 0 : i32
    return %arg0, %c0_i32, %c0_i32_0 : i32, i32, i32
  }
  func.func @transform_1(%arg0: i32) -> (i32, i32) {
    %c0_i32 = arith.constant 0 : i32
    %c0_i32_0 = arith.constant 0 : i32
    %c0_i32_1 = arith.constant 0 : i32
    return %c0_i32, %c0_i32_0 : i32, i32
  }
  func.func @transform_2(%arg0: i32) -> (i32, i32) {
    %c0_i32 = arith.constant 0 : i32
    %c0_i32_0 = arith.constant 0 : i32
    %c0_i32_1 = arith.constant 0 : i32
    return %c0_i32, %c0_i32_0 : i32, i32
  }
  func.func @transform_3(%arg0: i32) -> (i32, i32) {
    %c0_i32 = arith.constant 0 : i32
    %c0_i32_0 = arith.constant 0 : i32
    %c0_i32_1 = arith.constant 0 : i32
    return %c0_i32, %c0_i32_0 : i32, i32
  }
  func.func @transform_4(%arg0: i32) -> (i32, i32) {
    %c0_i32 = arith.constant 0 : i32
    %c0_i32_0 = arith.constant 0 : i32
    %c0_i32_1 = arith.constant 0 : i32
    return %c0_i32, %c0_i32_0 : i32, i32
  }
  func.func @transform_5(%arg0: i32) -> (i32, i32) {
    %c0_i32 = arith.constant 0 : i32
    %c0_i32_0 = arith.constant 0 : i32
    %c0_i32_1 = arith.constant 0 : i32
    return %c0_i32, %c0_i32_0 : i32, i32
  }
  func.func @transform_6(%arg0: i32) -> (i32, i32) {
    %c0_i32 = arith.constant 0 : i32
    %c0_i32_0 = arith.constant 0 : i32
    %c0_i32_1 = arith.constant 0 : i32
    return %c0_i32, %c0_i32_0 : i32, i32
  }
  func.func @transform_7(%arg0: i32) -> (i32, i32) {
    %c0_i32 = arith.constant 0 : i32
    %c0_i32_0 = arith.constant 0 : i32
    %c0_i32_1 = arith.constant 0 : i32
    return %c0_i32, %c0_i32_0 : i32, i32
  }
  func.func @transform_8(%arg0: i32) -> (i32, i32) {
    %c0_i32 = arith.constant 0 : i32
    %c0_i32_0 = arith.constant 0 : i32
    %c0_i32_1 = arith.constant 0 : i32
    return %c0_i32, %c0_i32_0 : i32, i32
  }
  func.func @transform_9(%arg0: i32) -> (i32, i32) {
    %c0_i32 = arith.constant 0 : i32
    %c0_i32_0 = arith.constant 0 : i32
    %c0_i32_1 = arith.constant 0 : i32
    return %c0_i32, %c0_i32_0 : i32, i32
  }
  func.func @transform_10(%arg0: i32) -> (i32, i32) {
    %c0_i32 = arith.constant 0 : i32
    %c0_i32_0 = arith.constant 0 : i32
    %c0_i32_1 = arith.constant 0 : i32
    return %c0_i32, %c0_i32_0 : i32, i32
  }
  func.func @transform_11(%arg0: i32) -> (i32, i32) {
    %c0_i32 = arith.constant 0 : i32
    %c0_i32_0 = arith.constant 0 : i32
    %c0_i32_1 = arith.constant 0 : i32
    return %c0_i32, %c0_i32_0 : i32, i32
  }
  func.func @transform_12(%arg0: i32) -> (i32, i32) {
    %c0_i32 = arith.constant 0 : i32
    %c0_i32_0 = arith.constant 0 : i32
    %c0_i32_1 = arith.constant 0 : i32
    return %c0_i32, %c0_i32_0 : i32, i32
  }
  func.func @transform_13(%arg0: i32) -> (i32, i32) {
    %c0_i32 = arith.constant 0 : i32
    %c0_i32_0 = arith.constant 0 : i32
    %c0_i32_1 = arith.constant 0 : i32
    return %c0_i32, %c0_i32_0 : i32, i32
  }
  func.func @transform_14(%arg0: i32) -> (i32, i32) {
    %c0_i32 = arith.constant 0 : i32
    %c0_i32_0 = arith.constant 0 : i32
    %c0_i32_1 = arith.constant 0 : i32
    return %c0_i32, %c0_i32_0 : i32, i32
  }
  func.func @transform_15(%arg0: i32) -> (i32, i32) {
    %c0_i32 = arith.constant 0 : i32
    %c0_i32_0 = arith.constant 0 : i32
    %c0_i32_1 = arith.constant 0 : i32
    return %c0_i32, %c0_i32_0 : i32, i32
  }
  func.func @transform_16(%arg0: i32) -> (i32, i32) {
    %c0_i32 = arith.constant 0 : i32
    %c0_i32_0 = arith.constant 0 : i32
    %c0_i32_1 = arith.constant 0 : i32
    return %c0_i32, %c0_i32_0 : i32, i32
  }
  func.func @transform_17(%arg0: i32) -> (i32, i32) {
    %c0_i32 = arith.constant 0 : i32
    %c0_i32_0 = arith.constant 0 : i32
    %c0_i32_1 = arith.constant 0 : i32
    return %c0_i32, %c0_i32_0 : i32, i32
  }
  func.func @transform_18(%arg0: i32) -> (i32, i32) {
    %c0_i32 = arith.constant 0 : i32
    %c0_i32_0 = arith.constant 0 : i32
    %c0_i32_1 = arith.constant 0 : i32
    return %c0_i32, %c0_i32_0 : i32, i32
  }
  func.func @transform_19(%arg0: i32) -> (i32, i32) {
    %c0_i32 = arith.constant 0 : i32
    %c0_i32_0 = arith.constant 0 : i32
    %c0_i32_1 = arith.constant 0 : i32
    return %c0_i32, %c0_i32_0 : i32, i32
  }
  func.func @transform_20(%arg0: i32) -> (i32, i32) {
    %c0_i32 = arith.constant 0 : i32
    %c0_i32_0 = arith.constant 0 : i32
    %c0_i32_1 = arith.constant 0 : i32
    return %c0_i32, %c0_i32_0 : i32, i32
  }
  func.func @transform_21(%arg0: i32) -> (i32, i32) {
    %c0_i32 = arith.constant 0 : i32
    %c0_i32_0 = arith.constant 0 : i32
    %c0_i32_1 = arith.constant 0 : i32
    return %c0_i32, %c0_i32_0 : i32, i32
  }
  func.func @transform_22(%arg0: i32) -> (i32, i32) {
    %c0_i32 = arith.constant 0 : i32
    %c0_i32_0 = arith.constant 0 : i32
    %c0_i32_1 = arith.constant 0 : i32
    return %c0_i32, %c0_i32_0 : i32, i32
  }
  func.func @transform_23(%arg0: i32) -> (i32, i32) {
    %c0_i32 = arith.constant 0 : i32
    %c0_i32_0 = arith.constant 0 : i32
    %c0_i32_1 = arith.constant 0 : i32
    return %c0_i32, %c0_i32_0 : i32, i32
  }
  func.func @transform_24(%arg0: i32) -> (i32, i32) {
    %c0_i32 = arith.constant 0 : i32
    %c0_i32_0 = arith.constant 0 : i32
    %c0_i32_1 = arith.constant 0 : i32
    return %c0_i32, %c0_i32_0 : i32, i32
  }
  func.func @transform_25(%arg0: i32) -> (i32, i32) {
    %c0_i32 = arith.constant 0 : i32
    %c0_i32_0 = arith.constant 0 : i32
    %c0_i32_1 = arith.constant 0 : i32
    return %c0_i32, %c0_i32_0 : i32, i32
  }
  func.func @transform_26(%arg0: i32) -> (i32, i32) {
    %c0_i32 = arith.constant 0 : i32
    %c0_i32_0 = arith.constant 0 : i32
    %c0_i32_1 = arith.constant 0 : i32
    return %c0_i32, %c0_i32_0 : i32, i32
  }
  func.func @transform_27(%arg0: i32) -> (i32, i32) {
    %c0_i32 = arith.constant 0 : i32
    %c0_i32_0 = arith.constant 0 : i32
    %c0_i32_1 = arith.constant 0 : i32
    return %c0_i32, %c0_i32_0 : i32, i32
  }
  func.func @transform_28(%arg0: i32) -> (i32, i32) {
    %c0_i32 = arith.constant 0 : i32
    %c0_i32_0 = arith.constant 0 : i32
    %c0_i32_1 = arith.constant 0 : i32
    return %c0_i32, %c0_i32_0 : i32, i32
  }
  func.func @transform_29(%arg0: i32) -> (i32, i32) {
    %c0_i32 = arith.constant 0 : i32
    %c0_i32_0 = arith.constant 0 : i32
    %c0_i32_1 = arith.constant 0 : i32
    return %c0_i32, %c0_i32_0 : i32, i32
  }
  func.func @transform_30(%arg0: i32) -> (i32, i32) {
    %c0_i32 = arith.constant 0 : i32
    %c0_i32_0 = arith.constant 0 : i32
    %c0_i32_1 = arith.constant 0 : i32
    return %c0_i32, %c0_i32_0 : i32, i32
  }
  func.func @transform_31(%arg0: i32) -> (i32, i32) {
    %c0_i32 = arith.constant 0 : i32
    %c0_i32_0 = arith.constant 0 : i32
    %c0_i32_1 = arith.constant 0 : i32
    return %c0_i32, %c0_i32_0 : i32, i32
  }
  func.func @transform_32(%arg0: i32) -> (i32, i32) {
    %c0_i32 = arith.constant 0 : i32
    %c0_i32_0 = arith.constant 0 : i32
    %c0_i32_1 = arith.constant 0 : i32
    return %c0_i32, %c0_i32_0 : i32, i32
  }
  func.func @transform_33(%arg0: i32) -> (i32, i32) {
    %c0_i32 = arith.constant 0 : i32
    %c0_i32_0 = arith.constant 0 : i32
    %c0_i32_1 = arith.constant 0 : i32
    return %c0_i32, %c0_i32_0 : i32, i32
  }
  func.func @transform_34(%arg0: i32) -> (i32, i32) {
    %c0_i32 = arith.constant 0 : i32
    %c0_i32_0 = arith.constant 0 : i32
    %c0_i32_1 = arith.constant 0 : i32
    return %c0_i32, %c0_i32_0 : i32, i32
  }
  func.func @transform_35(%arg0: i32) -> (i32, i32) {
    %c0_i32 = arith.constant 0 : i32
    %c0_i32_0 = arith.constant 0 : i32
    %c0_i32_1 = arith.constant 0 : i32
    return %c0_i32, %c0_i32_0 : i32, i32
  }
  func.func @transform_36(%arg0: i32) -> (i32, i32, i32) {
    %c0_i32 = arith.constant 0 : i32
    %c0_i32_0 = arith.constant 0 : i32
    %c0_i32_1 = arith.constant 0 : i32
    return %arg0, %c0_i32, %c0_i32_0 : i32, i32, i32
  }
}

</mosaic_0001>

<llo_original>
// kernel: forward.1
$region0: #{forward.1}
  #allocation0 [shape = 'u32[]', space=smem, size = 0x4, offset = 0x4, fixed_abs, tag = 'smem constant byte address 0x4 - core index']
  #allocation1 [shape = 'u32[144,128]{1,0:T(1,128)}', space=vmem, size = 0x12000, scoped, tag = 'internal scratch']
  %s0 = inlined_call_operand.smem [shape: u32[37], index: -1, kind: input, shape index: {}]
  %s1 = sld [smem:[%s0]]
  %s2 = scalar_lea.smem %s0, 1
  %s3 = sld [smem:[%s2]]
  %s4 = scalar_lea.smem %s0, 2
  %s5 = sld [smem:[%s4]]
  %s6 = scalar_lea.smem %s0, 3
  %s7 = sld [smem:[%s6]]
  %s8 = scalar_lea.smem %s0, 4
  %s9 = sld [smem:[%s8]]
  %s10 = scalar_lea.smem %s0, 5
  %s11 = sld [smem:[%s10]]
  %s12 = scalar_lea.smem %s0, 6
  %s13 = sld [smem:[%s12]]
  %s14 = scalar_lea.smem %s0, 7
  %s15 = sld [smem:[%s14]]
  %s16 = scalar_lea.smem %s0, 8
  %s17 = sld [smem:[%s16]]
  %s18 = scalar_lea.smem %s0, 9
  %s19 = sld [smem:[%s18]]
  %s20 = scalar_lea.smem %s0, 10
  %s21 = sld [smem:[%s20]]
  %s22 = scalar_lea.smem %s0, 11
  %s23 = sld [smem:[%s22]]
  %s24 = scalar_lea.smem %s0, 12
  %s25 = sld [smem:[%s24]]
  %s26 = scalar_lea.smem %s0, 13
  %s27 = sld [smem:[%s26]]
  %s28 = scalar_lea.smem %s0, 14
  %s29 = sld [smem:[%s28]]
  %s30 = scalar_lea.smem %s0, 15
  %s31 = sld [smem:[%s30]]
  %s32 = scalar_lea.smem %s0, 16
  %s33 = sld [smem:[%s32]]
  %s34 = scalar_lea.smem %s0, 17
  %s35 = sld [smem:[%s34]]
  %s36 = scalar_lea.smem %s0, 18
  %s37 = sld [smem:[%s36]]
  %s38 = scalar_lea.smem %s0, 19
  %s39 = sld [smem:[%s38]]
  %s40 = scalar_lea.smem %s0, 20
  %s41 = sld [smem:[%s40]]
  %s42 = scalar_lea.smem %s0, 21
  %s43 = sld [smem:[%s42]]
  %s44 = scalar_lea.smem %s0, 22
  %s45 = sld [smem:[%s44]]
  %s46 = scalar_lea.smem %s0, 23
  %s47 = sld [smem:[%s46]]
  %s48 = scalar_lea.smem %s0, 24
  %s49 = sld [smem:[%s48]]
  %s50 = scalar_lea.smem %s0, 25
  %s51 = sld [smem:[%s50]]
  %s52 = scalar_lea.smem %s0, 26
  %s53 = sld [smem:[%s52]]
  %s54 = scalar_lea.smem %s0, 27
  %s55 = sld [smem:[%s54]]
  %s56 = scalar_lea.smem %s0, 28
  %s57 = sld [smem:[%s56]]
  %s58 = scalar_lea.smem %s0, 29
  %s59 = sld [smem:[%s58]]
  %s60 = scalar_lea.smem %s0, 30
  %s61 = sld [smem:[%s60]]
  %s62 = scalar_lea.smem %s0, 31
  %s63 = sld [smem:[%s62]]
  %s64 = scalar_lea.smem %s0, 32
  %s65 = sld [smem:[%s64]]
  %s66 = scalar_lea.smem %s0, 33
  %s67 = sld [smem:[%s66]]
  %s68 = scalar_lea.smem %s0, 34
  %s69 = sld [smem:[%s68]]
  %s70 = scalar_lea.smem %s0, 35
  %s71 = sld [smem:[%s70]]
  %s72 = scalar_lea.smem %s0, 36
  %s73 = sld [smem:[%s72]]
  %s74 = sld [smem:[#allocation0]]
  $region281: #{forward.1} parent=0
    _
  %s76 = ssub.s32 1, %s74
  %s77 = scalar_select 0, %s76, %s74
  $region1: #{forward.1} parent=0
    #allocation2 [shape = 'u8[24576]{0}', space=vmem, size = 0x6000, scoped, tag = 'input window, operand 1, single buffered']
    #allocation3 [shape = 's32[2]{0}', space=sflag, size = 0x8, scoped, tag = 'scoped memory for forward.1']
    #allocation4 [shape = 'u8[36864]{0}', space=vmem, size = 0x9000, scoped, tag = 'input window, operand 2, single buffered']
    #allocation5 [shape = 's32[1]{0}', space=sflag, size = 0x4, scoped, tag = 'scoped memory for forward.1']
    #allocation6 [shape = 'u8[512]{0}', space=vmem, size = 0x400, scoped, tag = 'input window, operand 3, single buffered']
    #allocation7 [shape = 'u8[8192]{0}', space=vmem, size = 0x2000, scoped, tag = 'input window, operand 4, single buffered']
    #allocation8 [shape = 's32[1]{0}', space=sflag, size = 0x4, scoped, tag = 'scoped memory for forward.1']
    #allocation9 [shape = 'u8[32768]{0}', space=vmem, size = 0x8000, scoped, tag = 'input window, operand 5, single buffered']
    #allocation10 [shape = 'u8[12288]{0}', space=vmem, size = 0x3000, scoped, tag = 'input window, operand 6, single buffered']
    #allocation11 [shape = 's32[1]{0}', space=sflag, size = 0x4, scoped, tag = 'scoped memory for forward.1']
    #allocation12 [shape = 'u8[98304]{0}', space=vmem, size = 0x18000, scoped, tag = 'input window, operand 7, single buffered']
    #allocation13 [shape = 'u8[512]{0}', space=vmem, size = 0x400, scoped, tag = 'input window, operand 8, single buffered']
    #allocation14 [shape = 's32[1]{0}', space=sflag, size = 0x4, scoped, tag = 'scoped memory for forward.1']
    #allocation15 [shape = 'u8[4096]{0}', space=vmem, size = 0x1000, scoped, tag = 'input window, operand 9, single buffered']
    #allocation16 [shape = 'u8[32768]{0}', space=vmem, size = 0x8000, scoped, tag = 'input window, operand 10, single buffered']
    #allocation17 [shape = 's32[1]{0}', space=sflag, size = 0x4, scoped, tag = 'scoped memory for forward.1']
    #allocation18 [shape = 'u8[6144]{0}', space=vmem, size = 0x1800, scoped, tag = 'input window, operand 11, single buffered']
    #allocation19 [shape = 'u8[98304]{0}', space=vmem, size = 0x18000, scoped, tag = 'input window, operand 12, single buffered']
    #allocation20 [shape = 's32[1]{0}', space=sflag, size = 0x4, scoped, tag = 'scoped memory for forward.1']
    #allocation21 [shape = 'u8[512]{0}', space=vmem, size = 0x400, scoped, tag = 'input window, operand 13, single buffered']
    #allocation22 [shape = 'u8[2048]{0}', space=vmem, size = 0x800, scoped, tag = 'input window, operand 14, single buffered']
    #allocation23 [shape = 's32[1]{0}', space=sflag, size = 0x4, scoped, tag = 'scoped memory for forward.1']
    #allocation24 [shape = 'u8[32768]{0}', space=vmem, size = 0x8000, scoped, tag = 'input window, operand 15, single buffered']
    #allocation25 [shape = 'u8[98304]{0}', space=vmem, size = 0x18000, scoped, tag = 'input window, operand 17, single buffered']
    #allocation26 [shape = 's32[1]{0}', space=sflag, size = 0x4, scoped, tag = 'scoped memory for forward.1']
    #allocation27 [shape = 'u8[512]{0}', space=vmem, size = 0x400, scoped, tag = 'input window, operand 18, single buffered']
    #allocation28 [shape = 'u8[512]{0}', space=vmem, size = 0x400, scoped, tag = 'input window, operand 20, single buffered']
    #allocation29 [shape = 's32[1]{0}', space=sflag, size = 0x4, scoped, tag = 'scoped memory for forward.1']
    #allocation30 [shape = 'u8[512]{0}', space=vmem, size = 0x400, scoped, tag = 'input window, operand 22, single buffered']
    #allocation31 [shape = 'u8[512]{0}', space=vmem, size = 0x400, scoped, tag = 'input window, operand 24, single buffered']
    #allocation32 [shape = 's32[1]{0}', space=sflag, size = 0x4, scoped, tag = 'scoped memory for forward.1']
    #allocation33 [shape = 'u8[512]{0}', space=vmem, size = 0x400, scoped, tag = 'input window, operand 26, single buffered']
    #allocation34 [shape = 'u8[512]{0}', space=vmem, size = 0x400, scoped, tag = 'input window, operand 28, single buffered']
    #allocation35 [shape = 's32[1]{0}', space=sflag, size = 0x4, scoped, tag = 'scoped memory for forward.1']
    #allocation36 [shape = 'u8[512]{0}', space=vmem, size = 0x400, scoped, tag = 'input window, operand 30, single buffered']
    #allocation37 [shape = 'u8[512]{0}', space=vmem, size = 0x400, scoped, tag = 'input window, operand 32, single buffered']
    #allocation38 [shape = 's32[1]{0}', space=sflag, size = 0x4, scoped, tag = 'scoped memory for forward.1']
    #allocation39 [shape = 'u8[512]{0}', space=vmem, size = 0x400, scoped, tag = 'input window, operand 34, single buffered']
    #allocation40 [shape = 'u8[4096]{0}', space=vmem, size = 0x1000, scoped, tag = 'input window, operand 35, single buffered']
    #allocation41 [shape = 's32[1]{0}', space=sflag, size = 0x4, scoped, tag = 'scoped memory for forward.1']
    %78 = vsyncpa [#allocation3], 0
    %79 = vsyncpa [#allocation5], 0
    %80 = vsyncpa [#allocation8], 0
    %81 = vsyncpa [#allocation11], 0
    %82 = vsyncpa [#allocation14], 0
    %83 = vsyncpa [#allocation17], 0
    %84 = vsyncpa [#allocation20], 0
    %85 = vsyncpa [#allocation23], 0
    %86 = vsyncpa [#allocation26], 0
    %87 = vsyncpa [#allocation29], 0
    %88 = vsyncpa [#allocation32], 0
    %89 = vsyncpa [#allocation35], 0
    %90 = vsyncpa [#allocation38], 0
    %91 = vsyncpa [#allocation41], 0
    loop: start=0, step=1, limit=4
    $region2: #{forward.1} parent=1 // loop_pre_header
      _
    $region3: #{forward.1} parent=1 // loop_header
      %s93 = sphi 0, %s97
      %p94 = scmp.ge.s32.totalorder %s93, 4
      %s103 = sphi 0, %s105
      %s106 = sphi 0, %s103
      %s107 = sphi 0, %s106
      %s123 = sphi 0, %s107
      %s127 = sphi 0, %s127
      %s129 = sphi 0, %s127
      %s130 = sphi 0, %s129
      %s144 = sphi 0, %s130
      %s148 = sphi 0, %s148
      %s150 = sphi 0, %s148
      %s151 = sphi 0, %s150
      %s165 = sphi 0, %s151
      %s169 = sphi 0, %s169
      %s171 = sphi 0, %s169
      %s172 = sphi 0, %s171
      %s186 = sphi 0, %s172
      %s190 = sphi 0, %s190
      %s192 = sphi 0, %s190
      %s193 = sphi 0, %s192
      %s207 = sphi 0, %s193
      %s211 = sphi 0, %s211
      %s213 = sphi 0, %s211
      %s214 = sphi 0, %s213
      %s228 = sphi 0, %s214
      %s232 = sphi 0, %s232
      %s234 = sphi 0, %s232
      %s235 = sphi 0, %s234
      %s249 = sphi 0, %s235
      %s253 = sphi 0, %s253
      %s255 = sphi 0, %s253
      %s256 = sphi 0, %s255
      %s270 = sphi 0, %s256
      %s274 = sphi 0, %s274
      %s276 = sphi 0, %s274
      %s277 = sphi 0, %s276
      %s291 = sphi 0, %s277
      %s295 = sphi 0, %s295
      %s297 = sphi 0, %s295
      %s298 = sphi 0, %s297
      %s312 = sphi 0, %s298
      %s316 = sphi 0, %s316
      %s318 = sphi 0, %s316
      %s319 = sphi 0, %s318
      %s333 = sphi 0, %s319
      %s337 = sphi 0, %s337
      %s339 = sphi 0, %s337
      %s340 = sphi 0, %s339
      %s354 = sphi 0, %s340
      %s358 = sphi 0, %s358
      %s360 = sphi 0, %s358
      %s361 = sphi 0, %s360
      %s375 = sphi 0, %s361
      %s379 = sphi 0, %s379
      %s381 = sphi 0, %s379
      %s382 = sphi 0, %s381
      %s396 = sphi 0, %s382
      %s400 = sphi 0, %s400
      %s402 = sphi 0, %s400
      %s403 = sphi 0, %s402
      %s417 = sphi 0, %s403
      %s421 = sphi 0, %s421
      %s423 = sphi 0, %s421
      %s424 = sphi 0, %s423
      %s438 = sphi 0, %s424
      %s442 = sphi 0, %s442
      %s444 = sphi 0, %s442
      %s445 = sphi 0, %s444
      %s459 = sphi 0, %s445
      %s463 = sphi 0, %s463
      %s465 = sphi 0, %s463
      %s466 = sphi 0, %s465
      %s480 = sphi 0, %s466
      %s484 = sphi 0, %s484
      %s486 = sphi 0, %s484
      %s487 = sphi 0, %s486
      %s501 = sphi 0, %s487
      %s505 = sphi 0, %s505
      %s507 = sphi 0, %s505
      %s508 = sphi 0, %s507
      %s522 = sphi 0, %s508
      %s526 = sphi 0, %s526
      %s528 = sphi 0, %s526
      %s529 = sphi 0, %s528
      %s543 = sphi 0, %s529
      %s547 = sphi 0, %s547
      %s549 = sphi 0, %s547
      %s550 = sphi 0, %s549
      %s564 = sphi 0, %s550
      %s568 = sphi 0, %s568
      %s570 = sphi 0, %s568
      %s571 = sphi 0, %s570
      %s585 = sphi 0, %s571
      %s589 = sphi 0, %s589
      %s591 = sphi 0, %s589
      %s592 = sphi 0, %s591
      %s606 = sphi 0, %s592
      %s610 = sphi 0, %s610
      %s612 = sphi 0, %s610
      %s613 = sphi 0, %s612
      %s627 = sphi 0, %s613
      %s631 = sphi 0, %s631
      %s633 = sphi 0, %s631
      %s634 = sphi 0, %s633
      %s648 = sphi 0, %s634
      %s652 = sphi 0, %s652
      %s654 = sphi 0, %s652
      %s655 = sphi 0, %s654
      %s669 = sphi 0, %s655
      %s673 = sphi 0, %s673
      %s675 = sphi 0, %s673
      %s676 = sphi 0, %s675
      %s690 = sphi 0, %s676
      %s694 = sphi 0, %s694
      %s696 = sphi 0, %s694
      %s697 = sphi 0, %s696
      %s711 = sphi 0, %s697
      %s715 = sphi 0, %s715
      %s717 = sphi 0, %s715
      %s718 = sphi 0, %s717
      %s732 = sphi 0, %s718
      %s736 = sphi 0, %s736
      %s738 = sphi 0, %s736
      %s739 = sphi 0, %s738
      %s753 = sphi 0, %s739
      %s757 = sphi 0, %s757
      %s759 = sphi 0, %s757
      %s760 = sphi 0, %s759
      %s774 = sphi 0, %s760
      %s778 = sphi 0, %s778
      %s780 = sphi 0, %s778
      %s781 = sphi 0, %s780
      %s795 = sphi 0, %s781
      %s799 = sphi 0, %s799
      %s801 = sphi 0, %s799
      %s802 = sphi 0, %s801
      %s816 = sphi 0, %s802
      %s820 = sphi 0, %s820
      %s822 = sphi 0, %s820
      %s823 = sphi 0, %s822
      %s837 = sphi 0, %s823
      %s841 = sphi 0, %s841
      %s843 = sphi 0, %s841
      %s844 = sphi 0, %s843
      %s858 = sphi 0, %s844
      %s864 = sphi 0, %s866
      %s867 = sphi 0, %s864
      %s868 = sphi 0, %s867
      %s884 = sphi 0, %s868
    $region4: #{forward.1} parent=1 // loop_header_branch
      %96 = sbr.rel (%p94) target = $region8
    $region5: #{forward.1} parent=1 // loop_body
      %s98 = ssub.s32 %s93, 1
      %s99 = ssub.s32 %s93, 2
      %s100 = sadd.s32 %s93, 1
      %s101 = ssub.s32 %s93, %s100
      %p102 = scmp.eq.s32.totalorder %s101, 0
      %s104 = sadd.s32 %s103, 1
      %s105 = scalar_select %p102, %s103, %s104
      %p108 = pneg %p102
      %p109 = scmp.eq.s32.totalorder %s93, 1
      %p110 = por %p108, %p109
      %p111 = scmp.ne.s32.totalorder %s103, %s106
      %p112 = scmp.eq.s32.totalorder %s93, 0
      %p113 = por %p111, %p112
      %p114 = scmp.ne.s32.totalorder %s103, %s106
      %p115 = scmp.eq.s32.totalorder %s98, 1
      %p116 = por %p114, %p115
      %p117 = scmp.ne.s32.totalorder %s106, %s107
      %p118 = scmp.eq.s32.totalorder %s98, 0
      %p119 = por %p117, %p118
      %p120 = scmp.ne.s32.totalorder %s106, %s107
      %p121 = scmp.eq.s32.totalorder %s99, 1
      %p122 = por %p120, %p121
      %p124 = scmp.ne.s32.totalorder %s107, %s123
      %p125 = scmp.eq.s32.totalorder %s99, 0
      %p126 = por %p124, %p125
      %s128 = sadd.s32 %s127, 1
      %p131 = scmp.eq.s32.totalorder %s93, 1
      %p132 = scmp.ne.s32.totalorder %s127, %s129
      %p133 = scmp.eq.s32.totalorder %s93, 0
      %p134 = por %p132, %p133
      %p135 = scmp.ne.s32.totalorder %s127, %s129
      %p136 = scmp.eq.s32.totalorder %s98, 1
      %p137 = por %p135, %p136
      %p138 = scmp.ne.s32.totalorder %s129, %s130
      %p139 = scmp.eq.s32.totalorder %s98, 0
      %p140 = por %p138, %p139
      %p141 = scmp.ne.s32.totalorder %s129, %s130
      %p142 = scmp.eq.s32.totalorder %s99, 1
      %p143 = por %p141, %p142
      %p145 = scmp.ne.s32.totalorder %s130, %s144
      %p146 = scmp.eq.s32.totalorder %s99, 0
      %p147 = por %p145, %p146
      %s149 = sadd.s32 %s148, 1
      %p152 = scmp.eq.s32.totalorder %s93, 1
      %p153 = scmp.ne.s32.totalorder %s148, %s150
      %p154 = scmp.eq.s32.totalorder %s93, 0
      %p155 = por %p153, %p154
      %p156 = scmp.ne.s32.totalorder %s148, %s150
      %p157 = scmp.eq.s32.totalorder %s98, 1
      %p158 = por %p156, %p157
      %p159 = scmp.ne.s32.totalorder %s150, %s151
      %p160 = scmp.eq.s32.totalorder %s98, 0
      %p161 = por %p159, %p160
      %p162 = scmp.ne.s32.totalorder %s150, %s151
      %p163 = scmp.eq.s32.totalorder %s99, 1
      %p164 = por %p162, %p163
      %p166 = scmp.ne.s32.totalorder %s151, %s165
      %p167 = scmp.eq.s32.totalorder %s99, 0
      %p168 = por %p166, %p167
      %s170 = sadd.s32 %s169, 1
      %p173 = scmp.eq.s32.totalorder %s93, 1
      %p174 = scmp.ne.s32.totalorder %s169, %s171
      %p175 = scmp.eq.s32.totalorder %s93, 0
      %p176 = por %p174, %p175
      %p177 = scmp.ne.s32.totalorder %s169, %s171
      %p178 = scmp.eq.s32.totalorder %s98, 1
      %p179 = por %p177, %p178
      %p180 = scmp.ne.s32.totalorder %s171, %s172
      %p181 = scmp.eq.s32.totalorder %s98, 0
      %p182 = por %p180, %p181
      %p183 = scmp.ne.s32.totalorder %s171, %s172
      %p184 = scmp.eq.s32.totalorder %s99, 1
      %p185 = por %p183, %p184
      %p187 = scmp.ne.s32.totalorder %s172, %s186
      %p188 = scmp.eq.s32.totalorder %s99, 0
      %p189 = por %p187, %p188
      %s191 = sadd.s32 %s190, 1
      %p194 = scmp.eq.s32.totalorder %s93, 1
      %p195 = scmp.ne.s32.totalorder %s190, %s192
      %p196 = scmp.eq.s32.totalorder %s93, 0
      %p197 = por %p195, %p196
      %p198 = scmp.ne.s32.totalorder %s190, %s192
      %p199 = scmp.eq.s32.totalorder %s98, 1
      %p200 = por %p198, %p199
      %p201 = scmp.ne.s32.totalorder %s192, %s193
      %p202 = scmp.eq.s32.totalorder %s98, 0
      %p203 = por %p201, %p202
      %p204 = scmp.ne.s32.totalorder %s192, %s193
      %p205 = scmp.eq.s32.totalorder %s99, 1
      %p206 = por %p204, %p205
      %p208 = scmp.ne.s32.totalorder %s193, %s207
      %p209 = scmp.eq.s32.totalorder %s99, 0
      %p210 = por %p208, %p209
      %s212 = sadd.s32 %s211, 1
      %p215 = scmp.eq.s32.totalorder %s93, 1
      %p216 = scmp.ne.s32.totalorder %s211, %s213
      %p217 = scmp.eq.s32.totalorder %s93, 0
      %p218 = por %p216, %p217
      %p219 = scmp.ne.s32.totalorder %s211, %s213
      %p220 = scmp.eq.s32.totalorder %s98, 1
      %p221 = por %p219, %p220
      %p222 = scmp.ne.s32.totalorder %s213, %s214
      %p223 = scmp.eq.s32.totalorder %s98, 0
      %p224 = por %p222, %p223
      %p225 = scmp.ne.s32.totalorder %s213, %s214
      %p226 = scmp.eq.s32.totalorder %s99, 1
      %p227 = por %p225, %p226
      %p229 = scmp.ne.s32.totalorder %s214, %s228
      %p230 = scmp.eq.s32.totalorder %s99, 0
      %p231 = por %p229, %p230
      %s233 = sadd.s32 %s232, 1
      %p236 = scmp.eq.s32.totalorder %s93, 1
      %p237 = scmp.ne.s32.totalorder %s232, %s234
      %p238 = scmp.eq.s32.totalorder %s93, 0
      %p239 = por %p237, %p238
      %p240 = scmp.ne.s32.totalorder %s232, %s234
      %p241 = scmp.eq.s32.totalorder %s98, 1
      %p242 = por %p240, %p241
      %p243 = scmp.ne.s32.totalorder %s234, %s235
      %p244 = scmp.eq.s32.totalorder %s98, 0
      %p245 = por %p243, %p244
      %p246 = scmp.ne.s32.totalorder %s234, %s235
      %p247 = scmp.eq.s32.totalorder %s99, 1
      %p248 = por %p246, %p247
      %p250 = scmp.ne.s32.totalorder %s235, %s249
      %p251 = scmp.eq.s32.totalorder %s99, 0
      %p252 = por %p250, %p251
      %s254 = sadd.s32 %s253, 1
      %p257 = scmp.eq.s32.totalorder %s93, 1
      %p258 = scmp.ne.s32.totalorder %s253, %s255
      %p259 = scmp.eq.s32.totalorder %s93, 0
      %p260 = por %p258, %p259
      %p261 = scmp.ne.s32.totalorder %s253, %s255
      %p262 = scmp.eq.s32.totalorder %s98, 1
      %p263 = por %p261, %p262
      %p264 = scmp.ne.s32.totalorder %s255, %s256
      %p265 = scmp.eq.s32.totalorder %s98, 0
      %p266 = por %p264, %p265
      %p267 = scmp.ne.s32.totalorder %s255, %s256
      %p268 = scmp.eq.s32.totalorder %s99, 1
      %p269 = por %p267, %p268
      %p271 = scmp.ne.s32.totalorder %s256, %s270
      %p272 = scmp.eq.s32.totalorder %s99, 0
      %p273 = por %p271, %p272
      %s275 = sadd.s32 %s274, 1
      %p278 = scmp.eq.s32.totalorder %s93, 1
      %p279 = scmp.ne.s32.totalorder %s274, %s276
      %p280 = scmp.eq.s32.totalorder %s93, 0
      %p281 = por %p279, %p280
      %p282 = scmp.ne.s32.totalorder %s274, %s276
      %p283 = scmp.eq.s32.totalorder %s98, 1
      %p284 = por %p282, %p283
      %p285 = scmp.ne.s32.totalorder %s276, %s277
      %p286 = scmp.eq.s32.totalorder %s98, 0
      %p287 = por %p285, %p286
      %p288 = scmp.ne.s32.totalorder %s276, %s277
      %p289 = scmp.eq.s32.totalorder %s99, 1
      %p290 = por %p288, %p289
      %p292 = scmp.ne.s32.totalorder %s277, %s291
      %p293 = scmp.eq.s32.totalorder %s99, 0
      %p294 = por %p292, %p293
      %s296 = sadd.s32 %s295, 1
      %p299 = scmp.eq.s32.totalorder %s93, 1
      %p300 = scmp.ne.s32.totalorder %s295, %s297
      %p301 = scmp.eq.s32.totalorder %s93, 0
      %p302 = por %p300, %p301
      %p303 = scmp.ne.s32.totalorder %s295, %s297
      %p304 = scmp.eq.s32.totalorder %s98, 1
      %p305 = por %p303, %p304
      %p306 = scmp.ne.s32.totalorder %s297, %s298
      %p307 = scmp.eq.s32.totalorder %s98, 0
      %p308 = por %p306, %p307
      %p309 = scmp.ne.s32.totalorder %s297, %s298
      %p310 = scmp.eq.s32.totalorder %s99, 1
      %p311 = por %p309, %p310
      %p313 = scmp.ne.s32.totalorder %s298, %s312
      %p314 = scmp.eq.s32.totalorder %s99, 0
      %p315 = por %p313, %p314
      %s317 = sadd.s32 %s316, 1
      %p320 = scmp.eq.s32.totalorder %s93, 1
      %p321 = scmp.ne.s32.totalorder %s316, %s318
      %p322 = scmp.eq.s32.totalorder %s93, 0
      %p323 = por %p321, %p322
      %p324 = scmp.ne.s32.totalorder %s316, %s318
      %p325 = scmp.eq.s32.totalorder %s98, 1
      %p326 = por %p324, %p325
      %p327 = scmp.ne.s32.totalorder %s318, %s319
      %p328 = scmp.eq.s32.totalorder %s98, 0
      %p329 = por %p327, %p328
      %p330 = scmp.ne.s32.totalorder %s318, %s319
      %p331 = scmp.eq.s32.totalorder %s99, 1
      %p332 = por %p330, %p331
      %p334 = scmp.ne.s32.totalorder %s319, %s333
      %p335 = scmp.eq.s32.totalorder %s99, 0
      %p336 = por %p334, %p335
      %s338 = sadd.s32 %s337, 1
      %p341 = scmp.eq.s32.totalorder %s93, 1
      %p342 = scmp.ne.s32.totalorder %s337, %s339
      %p343 = scmp.eq.s32.totalorder %s93, 0
      %p344 = por %p342, %p343
      %p345 = scmp.ne.s32.totalorder %s337, %s339
      %p346 = scmp.eq.s32.totalorder %s98, 1
      %p347 = por %p345, %p346
      %p348 = scmp.ne.s32.totalorder %s339, %s340
      %p349 = scmp.eq.s32.totalorder %s98, 0
      %p350 = por %p348, %p349
      %p351 = scmp.ne.s32.totalorder %s339, %s340
      %p352 = scmp.eq.s32.totalorder %s99, 1
      %p353 = por %p351, %p352
      %p355 = scmp.ne.s32.totalorder %s340, %s354
      %p356 = scmp.eq.s32.totalorder %s99, 0
      %p357 = por %p355, %p356
      %s359 = sadd.s32 %s358, 1
      %p362 = scmp.eq.s32.totalorder %s93, 1
      %p363 = scmp.ne.s32.totalorder %s358, %s360
      %p364 = scmp.eq.s32.totalorder %s93, 0
      %p365 = por %p363, %p364
      %p366 = scmp.ne.s32.totalorder %s358, %s360
      %p367 = scmp.eq.s32.totalorder %s98, 1
      %p368 = por %p366, %p367
      %p369 = scmp.ne.s32.totalorder %s360, %s361
      %p370 = scmp.eq.s32.totalorder %s98, 0
      %p371 = por %p369, %p370
      %p372 = scmp.ne.s32.totalorder %s360, %s361
      %p373 = scmp.eq.s32.totalorder %s99, 1
      %p374 = por %p372, %p373
      %p376 = scmp.ne.s32.totalorder %s361, %s375
      %p377 = scmp.eq.s32.totalorder %s99, 0
      %p378 = por %p376, %p377
      %s380 = sadd.s32 %s379, 1
      %p383 = scmp.eq.s32.totalorder %s93, 1
      %p384 = scmp.ne.s32.totalorder %s379, %s381
      %p385 = scmp.eq.s32.totalorder %s93, 0
      %p386 = por %p384, %p385
      %p387 = scmp.ne.s32.totalorder %s379, %s381
      %p388 = scmp.eq.s32.totalorder %s98, 1
      %p389 = por %p387, %p388
      %p390 = scmp.ne.s32.totalorder %s381, %s382
      %p391 = scmp.eq.s32.totalorder %s98, 0
      %p392 = por %p390, %p391
      %p393 = scmp.ne.s32.totalorder %s381, %s382
      %p394 = scmp.eq.s32.totalorder %s99, 1
      %p395 = por %p393, %p394
      %p397 = scmp.ne.s32.totalorder %s382, %s396
      %p398 = scmp.eq.s32.totalorder %s99, 0
      %p399 = por %p397, %p398
      %s401 = sadd.s32 %s400, 1
      %p404 = scmp.eq.s32.totalorder %s93, 1
      %p405 = scmp.ne.s32.totalorder %s400, %s402
      %p406 = scmp.eq.s32.totalorder %s93, 0
      %p407 = por %p405, %p406
      %p408 = scmp.ne.s32.totalorder %s400, %s402
      %p409 = scmp.eq.s32.totalorder %s98, 1
      %p410 = por %p408, %p409
      %p411 = scmp.ne.s32.totalorder %s402, %s403
      %p412 = scmp.eq.s32.totalorder %s98, 0
      %p413 = por %p411, %p412
      %p414 = scmp.ne.s32.totalorder %s402, %s403
      %p415 = scmp.eq.s32.totalorder %s99, 1
      %p416 = por %p414, %p415
      %p418 = scmp.ne.s32.totalorder %s403, %s417
      %p419 = scmp.eq.s32.totalorder %s99, 0
      %p420 = por %p418, %p419
      %s422 = sadd.s32 %s421, 1
      %p425 = scmp.eq.s32.totalorder %s93, 1
      %p426 = scmp.ne.s32.totalorder %s421, %s423
      %p427 = scmp.eq.s32.totalorder %s93, 0
      %p428 = por %p426, %p427
      %p429 = scmp.ne.s32.totalorder %s421, %s423
      %p430 = scmp.eq.s32.totalorder %s98, 1
      %p431 = por %p429, %p430
      %p432 = scmp.ne.s32.totalorder %s423, %s424
      %p433 = scmp.eq.s32.totalorder %s98, 0
      %p434 = por %p432, %p433
      %p435 = scmp.ne.s32.totalorder %s423, %s424
      %p436 = scmp.eq.s32.totalorder %s99, 1
      %p437 = por %p435, %p436
      %p439 = scmp.ne.s32.totalorder %s424, %s438
      %p440 = scmp.eq.s32.totalorder %s99, 0
      %p441 = por %p439, %p440
      %s443 = sadd.s32 %s442, 1
      %p446 = scmp.eq.s32.totalorder %s93, 1
      %p447 = scmp.ne.s32.totalorder %s442, %s444
      %p448 = scmp.eq.s32.totalorder %s93, 0
      %p449 = por %p447, %p448
      %p450 = scmp.ne.s32.totalorder %s442, %s444
      %p451 = scmp.eq.s32.totalorder %s98, 1
      %p452 = por %p450, %p451
      %p453 = scmp.ne.s32.totalorder %s444, %s445
      %p454 = scmp.eq.s32.totalorder %s98, 0
      %p455 = por %p453, %p454
      %p456 = scmp.ne.s32.totalorder %s444, %s445
      %p457 = scmp.eq.s32.totalorder %s99, 1
      %p458 = por %p456, %p457
      %p460 = scmp.ne.s32.totalorder %s445, %s459
      %p461 = scmp.eq.s32.totalorder %s99, 0
      %p462 = por %p460, %p461
      %s464 = sadd.s32 %s463, 1
      %p467 = scmp.eq.s32.totalorder %s93, 1
      %p468 = scmp.ne.s32.totalorder %s463, %s465
      %p469 = scmp.eq.s32.totalorder %s93, 0
      %p470 = por %p468, %p469
      %p471 = scmp.ne.s32.totalorder %s463, %s465
      %p472 = scmp.eq.s32.totalorder %s98, 1
      %p473 = por %p471, %p472
      %p474 = scmp.ne.s32.totalorder %s465, %s466
      %p475 = scmp.eq.s32.totalorder %s98, 0
      %p476 = por %p474, %p475
      %p477 = scmp.ne.s32.totalorder %s465, %s466
      %p478 = scmp.eq.s32.totalorder %s99, 1
      %p479 = por %p477, %p478
      %p481 = scmp.ne.s32.totalorder %s466, %s480
      %p482 = scmp.eq.s32.totalorder %s99, 0
      %p483 = por %p481, %p482
      %s485 = sadd.s32 %s484, 1
      %p488 = scmp.eq.s32.totalorder %s93, 1
      %p489 = scmp.ne.s32.totalorder %s484, %s486
      %p490 = scmp.eq.s32.totalorder %s93, 0
      %p491 = por %p489, %p490
      %p492 = scmp.ne.s32.totalorder %s484, %s486
      %p493 = scmp.eq.s32.totalorder %s98, 1
      %p494 = por %p492, %p493
      %p495 = scmp.ne.s32.totalorder %s486, %s487
      %p496 = scmp.eq.s32.totalorder %s98, 0
      %p497 = por %p495, %p496
      %p498 = scmp.ne.s32.totalorder %s486, %s487
      %p499 = scmp.eq.s32.totalorder %s99, 1
      %p500 = por %p498, %p499
      %p502 = scmp.ne.s32.totalorder %s487, %s501
      %p503 = scmp.eq.s32.totalorder %s99, 0
      %p504 = por %p502, %p503
      %s506 = sadd.s32 %s505, 1
      %p509 = scmp.eq.s32.totalorder %s93, 1
      %p510 = scmp.ne.s32.totalorder %s505, %s507
      %p511 = scmp.eq.s32.totalorder %s93, 0
      %p512 = por %p510, %p511
      %p513 = scmp.ne.s32.totalorder %s505, %s507
      %p514 = scmp.eq.s32.totalorder %s98, 1
      %p515 = por %p513, %p514
      %p516 = scmp.ne.s32.totalorder %s507, %s508
      %p517 = scmp.eq.s32.totalorder %s98, 0
      %p518 = por %p516, %p517
      %p519 = scmp.ne.s32.totalorder %s507, %s508
      %p520 = scmp.eq.s32.totalorder %s99, 1
      %p521 = por %p519, %p520
      %p523 = scmp.ne.s32.totalorder %s508, %s522
      %p524 = scmp.eq.s32.totalorder %s99, 0
      %p525 = por %p523, %p524
      %s527 = sadd.s32 %s526, 1
      %p530 = scmp.eq.s32.totalorder %s93, 1
      %p531 = scmp.ne.s32.totalorder %s526, %s528
      %p532 = scmp.eq.s32.totalorder %s93, 0
      %p533 = por %p531, %p532
      %p534 = scmp.ne.s32.totalorder %s526, %s528
      %p535 = scmp.eq.s32.totalorder %s98, 1
      %p536 = por %p534, %p535
      %p537 = scmp.ne.s32.totalorder %s528, %s529
      %p538 = scmp.eq.s32.totalorder %s98, 0
      %p539 = por %p537, %p538
      %p540 = scmp.ne.s32.totalorder %s528, %s529
      %p541 = scmp.eq.s32.totalorder %s99, 1
      %p542 = por %p540, %p541
      %p544 = scmp.ne.s32.totalorder %s529, %s543
      %p545 = scmp.eq.s32.totalorder %s99, 0
      %p546 = por %p544, %p545
      %s548 = sadd.s32 %s547, 1
      %p551 = scmp.eq.s32.totalorder %s93, 1
      %p552 = scmp.ne.s32.totalorder %s547, %s549
      %p553 = scmp.eq.s32.totalorder %s93, 0
      %p554 = por %p552, %p553
      %p555 = scmp.ne.s32.totalorder %s547, %s549
      %p556 = scmp.eq.s32.totalorder %s98, 1
      %p557 = por %p555, %p556
      %p558 = scmp.ne.s32.totalorder %s549, %s550
      %p559 = scmp.eq.s32.totalorder %s98, 0
      %p560 = por %p558, %p559
      %p561 = scmp.ne.s32.totalorder %s549, %s550
      %p562 = scmp.eq.s32.totalorder %s99, 1
      %p563 = por %p561, %p562
      %p565 = scmp.ne.s32.totalorder %s550, %s564
      %p566 = scmp.eq.s32.totalorder %s99, 0
      %p567 = por %p565, %p566
      %s569 = sadd.s32 %s568, 1
      %p572 = scmp.eq.s32.totalorder %s93, 1
      %p573 = scmp.ne.s32.totalorder %s568, %s570
      %p574 = scmp.eq.s32.totalorder %s93, 0
      %p575 = por %p573, %p574
      %p576 = scmp.ne.s32.totalorder %s568, %s570
      %p577 = scmp.eq.s32.totalorder %s98, 1
      %p578 = por %p576, %p577
      %p579 = scmp.ne.s32.totalorder %s570, %s571
      %p580 = scmp.eq.s32.totalorder %s98, 0
      %p581 = por %p579, %p580
      %p582 = scmp.ne.s32.totalorder %s570, %s571
      %p583 = scmp.eq.s32.totalorder %s99, 1
      %p584 = por %p582, %p583
      %p586 = scmp.ne.s32.totalorder %s571, %s585
      %p587 = scmp.eq.s32.totalorder %s99, 0
      %p588 = por %p586, %p587
      %s590 = sadd.s32 %s589, 1
      %p593 = scmp.eq.s32.totalorder %s93, 1
      %p594 = scmp.ne.s32.totalorder %s589, %s591
      %p595 = scmp.eq.s32.totalorder %s93, 0
      %p596 = por %p594, %p595
      %p597 = scmp.ne.s32.totalorder %s589, %s591
      %p598 = scmp.eq.s32.totalorder %s98, 1
      %p599 = por %p597, %p598
      %p600 = scmp.ne.s32.totalorder %s591, %s592
      %p601 = scmp.eq.s32.totalorder %s98, 0
      %p602 = por %p600, %p601
      %p603 = scmp.ne.s32.totalorder %s591, %s592
      %p604 = scmp.eq.s32.totalorder %s99, 1
      %p605 = por %p603, %p604
      %p607 = scmp.ne.s32.totalorder %s592, %s606
      %p608 = scmp.eq.s32.totalorder %s99, 0
      %p609 = por %p607, %p608
      %s611 = sadd.s32 %s610, 1
      %p614 = scmp.eq.s32.totalorder %s93, 1
      %p615 = scmp.ne.s32.totalorder %s610, %s612
      %p616 = scmp.eq.s32.totalorder %s93, 0
      %p617 = por %p615, %p616
      %p618 = scmp.ne.s32.totalorder %s610, %s612
      %p619 = scmp.eq.s32.totalorder %s98, 1
      %p620 = por %p618, %p619
      %p621 = scmp.ne.s32.totalorder %s612, %s613
      %p622 = scmp.eq.s32.totalorder %s98, 0
      %p623 = por %p621, %p622
      %p624 = scmp.ne.s32.totalorder %s612, %s613
      %p625 = scmp.eq.s32.totalorder %s99, 1
      %p626 = por %p624, %p625
      %p628 = scmp.ne.s32.totalorder %s613, %s627
      %p629 = scmp.eq.s32.totalorder %s99, 0
      %p630 = por %p628, %p629
      %s632 = sadd.s32 %s631, 1
      %p635 = scmp.eq.s32.totalorder %s93, 1
      %p636 = scmp.ne.s32.totalorder %s631, %s633
      %p637 = scmp.eq.s32.totalorder %s93, 0
      %p638 = por %p636, %p637
      %p639 = scmp.ne.s32.totalorder %s631, %s633
      %p640 = scmp.eq.s32.totalorder %s98, 1
      %p641 = por %p639, %p640
      %p642 = scmp.ne.s32.totalorder %s633, %s634
      %p643 = scmp.eq.s32.totalorder %s98, 0
      %p644 = por %p642, %p643
      %p645 = scmp.ne.s32.totalorder %s633, %s634
      %p646 = scmp.eq.s32.totalorder %s99, 1
      %p647 = por %p645, %p646
      %p649 = scmp.ne.s32.totalorder %s634, %s648
      %p650 = scmp.eq.s32.totalorder %s99, 0
      %p651 = por %p649, %p650
      %s653 = sadd.s32 %s652, 1
      %p656 = scmp.eq.s32.totalorder %s93, 1
      %p657 = scmp.ne.s32.totalorder %s652, %s654
      %p658 = scmp.eq.s32.totalorder %s93, 0
      %p659 = por %p657, %p658
      %p660 = scmp.ne.s32.totalorder %s652, %s654
      %p661 = scmp.eq.s32.totalorder %s98, 1
      %p662 = por %p660, %p661
      %p663 = scmp.ne.s32.totalorder %s654, %s655
      %p664 = scmp.eq.s32.totalorder %s98, 0
      %p665 = por %p663, %p664
      %p666 = scmp.ne.s32.totalorder %s654, %s655
      %p667 = scmp.eq.s32.totalorder %s99, 1
      %p668 = por %p666, %p667
      %p670 = scmp.ne.s32.totalorder %s655, %s669
      %p671 = scmp.eq.s32.totalorder %s99, 0
      %p672 = por %p670, %p671
      %s674 = sadd.s32 %s673, 1
      %p677 = scmp.eq.s32.totalorder %s93, 1
      %p678 = scmp.ne.s32.totalorder %s673, %s675
      %p679 = scmp.eq.s32.totalorder %s93, 0
      %p680 = por %p678, %p679
      %p681 = scmp.ne.s32.totalorder %s673, %s675
      %p682 = scmp.eq.s32.totalorder %s98, 1
      %p683 = por %p681, %p682
      %p684 = scmp.ne.s32.totalorder %s675, %s676
      %p685 = scmp.eq.s32.totalorder %s98, 0
      %p686 = por %p684, %p685
      %p687 = scmp.ne.s32.totalorder %s675, %s676
      %p688 = scmp.eq.s32.totalorder %s99, 1
      %p689 = por %p687, %p688
      %p691 = scmp.ne.s32.totalorder %s676, %s690
      %p692 = scmp.eq.s32.totalorder %s99, 0
      %p693 = por %p691, %p692
      %s695 = sadd.s32 %s694, 1
      %p698 = scmp.eq.s32.totalorder %s93, 1
      %p699 = scmp.ne.s32.totalorder %s694, %s696
      %p700 = scmp.eq.s32.totalorder %s93, 0
      %p701 = por %p699, %p700
      %p702 = scmp.ne.s32.totalorder %s694, %s696
      %p703 = scmp.eq.s32.totalorder %s98, 1
      %p704 = por %p702, %p703
      %p705 = scmp.ne.s32.totalorder %s696, %s697
      %p706 = scmp.eq.s32.totalorder %s98, 0
      %p707 = por %p705, %p706
      %p708 = scmp.ne.s32.totalorder %s696, %s697
      %p709 = scmp.eq.s32.totalorder %s99, 1
      %p710 = por %p708, %p709
      %p712 = scmp.ne.s32.totalorder %s697, %s711
      %p713 = scmp.eq.s32.totalorder %s99, 0
      %p714 = por %p712, %p713
      %s716 = sadd.s32 %s715, 1
      %p719 = scmp.eq.s32.totalorder %s93, 1
      %p720 = scmp.ne.s32.totalorder %s715, %s717
      %p721 = scmp.eq.s32.totalorder %s93, 0
      %p722 = por %p720, %p721
      %p723 = scmp.ne.s32.totalorder %s715, %s717
      %p724 = scmp.eq.s32.totalorder %s98, 1
      %p725 = por %p723, %p724
      %p726 = scmp.ne.s32.totalorder %s717, %s718
      %p727 = scmp.eq.s32.totalorder %s98, 0
      %p728 = por %p726, %p727
      %p729 = scmp.ne.s32.totalorder %s717, %s718
      %p730 = scmp.eq.s32.totalorder %s99, 1
      %p731 = por %p729, %p730
      %p733 = scmp.ne.s32.totalorder %s718, %s732
      %p734 = scmp.eq.s32.totalorder %s99, 0
      %p735 = por %p733, %p734
      %s737 = sadd.s32 %s736, 1
      %p740 = scmp.eq.s32.totalorder %s93, 1
      %p741 = scmp.ne.s32.totalorder %s736, %s738
      %p742 = scmp.eq.s32.totalorder %s93, 0
      %p743 = por %p741, %p742
      %p744 = scmp.ne.s32.totalorder %s736, %s738
      %p745 = scmp.eq.s32.totalorder %s98, 1
      %p746 = por %p744, %p745
      %p747 = scmp.ne.s32.totalorder %s738, %s739
      %p748 = scmp.eq.s32.totalorder %s98, 0
      %p749 = por %p747, %p748
      %p750 = scmp.ne.s32.totalorder %s738, %s739
      %p751 = scmp.eq.s32.totalorder %s99, 1
      %p752 = por %p750, %p751
      %p754 = scmp.ne.s32.totalorder %s739, %s753
      %p755 = scmp.eq.s32.totalorder %s99, 0
      %p756 = por %p754, %p755
      %s758 = sadd.s32 %s757, 1
      %p761 = scmp.eq.s32.totalorder %s93, 1
      %p762 = scmp.ne.s32.totalorder %s757, %s759
      %p763 = scmp.eq.s32.totalorder %s93, 0
      %p764 = por %p762, %p763
      %p765 = scmp.ne.s32.totalorder %s757, %s759
      %p766 = scmp.eq.s32.totalorder %s98, 1
      %p767 = por %p765, %p766
      %p768 = scmp.ne.s32.totalorder %s759, %s760
      %p769 = scmp.eq.s32.totalorder %s98, 0
      %p770 = por %p768, %p769
      %p771 = scmp.ne.s32.totalorder %s759, %s760
      %p772 = scmp.eq.s32.totalorder %s99, 1
      %p773 = por %p771, %p772
      %p775 = scmp.ne.s32.totalorder %s760, %s774
      %p776 = scmp.eq.s32.totalorder %s99, 0
      %p777 = por %p775, %p776
      %s779 = sadd.s32 %s778, 1
      %p782 = scmp.eq.s32.totalorder %s93, 1
      %p783 = scmp.ne.s32.totalorder %s778, %s780
      %p784 = scmp.eq.s32.totalorder %s93, 0
      %p785 = por %p783, %p784
      %p786 = scmp.ne.s32.totalorder %s778, %s780
      %p787 = scmp.eq.s32.totalorder %s98, 1
      %p788 = por %p786, %p787
      %p789 = scmp.ne.s32.totalorder %s780, %s781
      %p790 = scmp.eq.s32.totalorder %s98, 0
      %p791 = por %p789, %p790
      %p792 = scmp.ne.s32.totalorder %s780, %s781
      %p793 = scmp.eq.s32.totalorder %s99, 1
      %p794 = por %p792, %p793
      %p796 = scmp.ne.s32.totalorder %s781, %s795
      %p797 = scmp.eq.s32.totalorder %s99, 0
      %p798 = por %p796, %p797
      %s800 = sadd.s32 %s799, 1
      %p803 = scmp.eq.s32.totalorder %s93, 1
      %p804 = scmp.ne.s32.totalorder %s799, %s801
      %p805 = scmp.eq.s32.totalorder %s93, 0
      %p806 = por %p804, %p805
      %p807 = scmp.ne.s32.totalorder %s799, %s801
      %p808 = scmp.eq.s32.totalorder %s98, 1
      %p809 = por %p807, %p808
      %p810 = scmp.ne.s32.totalorder %s801, %s802
      %p811 = scmp.eq.s32.totalorder %s98, 0
      %p812 = por %p810, %p811
      %p813 = scmp.ne.s32.totalorder %s801, %s802
      %p814 = scmp.eq.s32.totalorder %s99, 1
      %p815 = por %p813, %p814
      %p817 = scmp.ne.s32.totalorder %s802, %s816
      %p818 = scmp.eq.s32.totalorder %s99, 0
      %p819 = por %p817, %p818
      %s821 = sadd.s32 %s820, 1
      %p824 = scmp.eq.s32.totalorder %s93, 1
      %p825 = scmp.ne.s32.totalorder %s820, %s822
      %p826 = scmp.eq.s32.totalorder %s93, 0
      %p827 = por %p825, %p826
      %p828 = scmp.ne.s32.totalorder %s820, %s822
      %p829 = scmp.eq.s32.totalorder %s98, 1
      %p830 = por %p828, %p829
      %p831 = scmp.ne.s32.totalorder %s822, %s823
      %p832 = scmp.eq.s32.totalorder %s98, 0
      %p833 = por %p831, %p832
      %p834 = scmp.ne.s32.totalorder %s822, %s823
      %p835 = scmp.eq.s32.totalorder %s99, 1
      %p836 = por %p834, %p835
      %p838 = scmp.ne.s32.totalorder %s823, %s837
      %p839 = scmp.eq.s32.totalorder %s99, 0
      %p840 = por %p838, %p839
      %s842 = sadd.s32 %s841, 1
      %p845 = scmp.eq.s32.totalorder %s93, 1
      %p846 = scmp.ne.s32.totalorder %s841, %s843
      %p847 = scmp.eq.s32.totalorder %s93, 0
      %p848 = por %p846, %p847
      %p849 = scmp.ne.s32.totalorder %s841, %s843
      %p850 = scmp.eq.s32.totalorder %s98, 1
      %p851 = por %p849, %p850
      %p852 = scmp.ne.s32.totalorder %s843, %s844
      %p853 = scmp.eq.s32.totalorder %s98, 0
      %p854 = por %p852, %p853
      %p855 = scmp.ne.s32.totalorder %s843, %s844
      %p856 = scmp.eq.s32.totalorder %s99, 1
      %p857 = por %p855, %p856
      %p859 = scmp.ne.s32.totalorder %s844, %s858
      %p860 = scmp.eq.s32.totalorder %s99, 0
      %p861 = por %p859, %p860
      %s862 = ssub.s32 %s93, %s100
      %p863 = scmp.eq.s32.totalorder %s862, 0
      %s865 = sadd.s32 %s864, 1
      %s866 = scalar_select %p863, %s864, %s865
      %p869 = pneg %p863
      %p870 = scmp.eq.s32.totalorder %s93, 1
      %p871 = por %p869, %p870
      %p872 = scmp.ne.s32.totalorder %s864, %s867
      %p873 = scmp.eq.s32.totalorder %s93, 0
      %p874 = por %p872, %p873
      %p875 = scmp.ne.s32.totalorder %s864, %s867
      %p876 = scmp.eq.s32.totalorder %s98, 1
      %p877 = por %p875, %p876
      %p878 = scmp.ne.s32.totalorder %s867, %s868
      %p879 = scmp.eq.s32.totalorder %s98, 0
      %p880 = por %p878, %p879
      %p881 = scmp.ne.s32.totalorder %s867, %s868
      %p882 = scmp.eq.s32.totalorder %s99, 1
      %p883 = por %p881, %p882
      %p885 = scmp.ne.s32.totalorder %s868, %s884
      %p886 = scmp.eq.s32.totalorder %s99, 0
      %p887 = por %p885, %p886
      %p888 = scmp.le.s32.totalorder 1, %s93
      %p889 = scmp.lt.s32.totalorder %s93, 3
      %p890 = pnand %p888, %p889
      %p891 = pneg %p890
      // Predicated region
      $region9: #{forward.1} parent=5 // pred_check
        _
      $region10: #{forward.1} parent=5 // pred_check_branch
        %893 = sbr.rel (%p890) target = $region12
      $region11: #{forward.1} parent=5 // pred_region
        %s894 = ssub.s32 %s93, 1
        // Predicated region
        $region13: #{forward.1} parent=11 // pred_check
          %p895 = pneg %p140
        $region14: #{forward.1} parent=11 // pred_check_branch
          %897 = sbr.rel (%p895) target = $region16
        $region15: #{forward.1} parent=11 // pred_region
          %s899 = ssub.s32 768, 768
          %900 = vsyncadd [#allocation3], %s899
          %s901 = sshll.u32 [#allocation2], 4
          %s902 = int_to_ptr.vmem [resolvable:$true] %s901
          %907 = dma.hbm_to_vmem [thread:$0]  %s3, 768, %s902, [#allocation3], 64, 64, 4
        $region16: #{forward.1} parent=11 // pred_fallthru
          _
        // Predicated region
        $region17: #{forward.1} parent=11 // pred_check
          %p908 = pneg %p161
        $region18: #{forward.1} parent=11 // pred_check_branch
          %910 = sbr.rel (%p908) target = $region20
        $region19: #{forward.1} parent=11 // pred_region
          %s912 = ssub.s32 1152, 1152
          %913 = vsyncadd [#allocation5], %s912
          %s914 = sshll.u32 [#allocation4], 4
          %s915 = int_to_ptr.vmem [resolvable:$true] %s914
          %920 = dma.hbm_to_vmem [thread:$0]  %s5, 1152, %s915, [#allocation5], 64, 64, 4
        $region20: #{forward.1} parent=11 // pred_fallthru
          _
        // Predicated region
        $region21: #{forward.1} parent=11 // pred_check
          %p921 = pneg %p182
        $region22: #{forward.1} parent=11 // pred_check_branch
          %923 = sbr.rel (%p921) target = $region24
        $region23: #{forward.1} parent=11 // pred_region
          %s925 = ssub.s32 16, 16
          %926 = vsyncadd [#allocation5], %s925
          %s928 = sshll.u32 [#allocation6], 4
          %s929 = int_to_ptr.vmem [resolvable:$true] %s928
          %931 = dma.hbm_to_vmem [thread:$0]  %s7, 16, %s929, [#allocation5]
        $region24: #{forward.1} parent=11 // pred_fallthru
          _
        // Predicated region
        $region25: #{forward.1} parent=11 // pred_check
          %p932 = pneg %p203
        $region26: #{forward.1} parent=11 // pred_check_branch
          %934 = sbr.rel (%p932) target = $region28
        $region27: #{forward.1} parent=11 // pred_region
          %s936 = ssub.s32 256, 256
          %937 = vsyncadd [#allocation8], %s936
          %s938 = sshll.u32 [#allocation7], 4
          %s939 = int_to_ptr.vmem [resolvable:$true] %s938
          %944 = dma.hbm_to_vmem [thread:$0]  %s9, 256, %s939, [#allocation8], 64, 64, 4
        $region28: #{forward.1} parent=11 // pred_fallthru
          _
        // Predicated region
        $region29: #{forward.1} parent=11 // pred_check
          %p945 = pneg %p224
        $region30: #{forward.1} parent=11 // pred_check_branch
          %947 = sbr.rel (%p945) target = $region32
        $region31: #{forward.1} parent=11 // pred_region
          %s949 = ssub.s32 1024, 1024
          %950 = vsyncadd [#allocation8], %s949
          %s951 = sshll.u32 [#allocation9], 4
          %s952 = int_to_ptr.vmem [resolvable:$true] %s951
          %957 = dma.hbm_to_vmem [thread:$0]  %s11, 1024, %s952, [#allocation8], 64, 64, 4
        $region32: #{forward.1} parent=11 // pred_fallthru
          _
        // Predicated region
        $region33: #{forward.1} parent=11 // pred_check
          %p958 = pneg %p245
        $region34: #{forward.1} parent=11 // pred_check_branch
          %960 = sbr.rel (%p958) target = $region36
        $region35: #{forward.1} parent=11 // pred_region
          %s962 = ssub.s32 384, 384
          %963 = vsyncadd [#allocation11], %s962
          %s964 = sshll.u32 [#allocation10], 4
          %s965 = int_to_ptr.vmem [resolvable:$true] %s964
          %970 = dma.hbm_to_vmem [thread:$0]  %s13, 384, %s965, [#allocation11], 64, 64, 4
        $region36: #{forward.1} parent=11 // pred_fallthru
          _
        // Predicated region
        $region37: #{forward.1} parent=11 // pred_check
          %p971 = pneg %p266
        $region38: #{forward.1} parent=11 // pred_check_branch
          %973 = sbr.rel (%p971) target = $region40
        $region39: #{forward.1} parent=11 // pred_region
          %s975 = ssub.s32 3072, 3072
          %976 = vsyncadd [#allocation11], %s975
          %s977 = sshll.u32 [#allocation12], 4
          %s978 = int_to_ptr.vmem [resolvable:$true] %s977
          %983 = dma.hbm_to_vmem [thread:$0]  %s15, 3072, %s978, [#allocation11], 64, 64, 4
        $region40: #{forward.1} parent=11 // pred_fallthru
          _
        // Predicated region
        $region41: #{forward.1} parent=11 // pred_check
          %p984 = pneg %p287
        $region42: #{forward.1} parent=11 // pred_check_branch
          %986 = sbr.rel (%p984) target = $region44
        $region43: #{forward.1} parent=11 // pred_region
          %s988 = ssub.s32 16, 16
          %989 = vsyncadd [#allocation14], %s988
          %s991 = sshll.u32 [#allocation13], 4
          %s992 = int_to_ptr.vmem [resolvable:$true] %s991
          %994 = dma.hbm_to_vmem [thread:$0]  %s17, 16, %s992, [#allocation14]
        $region44: #{forward.1} parent=11 // pred_fallthru
          _
        // Predicated region
        $region45: #{forward.1} parent=11 // pred_check
          %p995 = pneg %p308
        $region46: #{forward.1} parent=11 // pred_check_branch
          %997 = sbr.rel (%p995) target = $region48
        $region47: #{forward.1} parent=11 // pred_region
          %s999 = ssub.s32 128, 128
          %1000 = vsyncadd [#allocation14], %s999
          %s1001 = sshll.u32 [#allocation15], 4
          %s1002 = int_to_ptr.vmem [resolvable:$true] %s1001
          %1007 = dma.hbm_to_vmem [thread:$0]  %s19, 128, %s1002, [#allocation14], 64, 64, 4
        $region48: #{forward.1} parent=11 // pred_fallthru
          _
        // Predicated region
        $region49: #{forward.1} parent=11 // pred_check
          %p1008 = pneg %p329
        $region50: #{forward.1} parent=11 // pred_check_branch
          %1010 = sbr.rel (%p1008) target = $region52
        $region51: #{forward.1} parent=11 // pred_region
          %s1012 = ssub.s32 1024, 1024
          %1013 = vsyncadd [#allocation17], %s1012
          %s1014 = sshll.u32 [#allocation16], 4
          %s1015 = int_to_ptr.vmem [resolvable:$true] %s1014
          %1020 = dma.hbm_to_vmem [thread:$0]  %s21, 1024, %s1015, [#allocation17], 64, 64, 4
        $region52: #{forward.1} parent=11 // pred_fallthru
          _
        // Predicated region
        $region53: #{forward.1} parent=11 // pred_check
          %p1021 = pneg %p350
        $region54: #{forward.1} parent=11 // pred_check_branch
          %1023 = sbr.rel (%p1021) target = $region56
        $region55: #{forward.1} parent=11 // pred_region
          %s1025 = ssub.s32 192, 192
          %1026 = vsyncadd [#allocation17], %s1025
          %s1027 = sshll.u32 [#allocation18], 4
          %s1028 = int_to_ptr.vmem [resolvable:$true] %s1027
          %1033 = dma.hbm_to_vmem [thread:$0]  %s23, 192, %s1028, [#allocation17], 64, 64, 4
        $region56: #{forward.1} parent=11 // pred_fallthru
          _
        // Predicated region
        $region57: #{forward.1} parent=11 // pred_check
          %p1034 = pneg %p371
        $region58: #{forward.1} parent=11 // pred_check_branch
          %1036 = sbr.rel (%p1034) target = $region60
        $region59: #{forward.1} parent=11 // pred_region
          %s1038 = ssub.s32 3072, 3072
          %1039 = vsyncadd [#allocation20], %s1038
          %s1040 = sshll.u32 [#allocation19], 4
          %s1041 = int_to_ptr.vmem [resolvable:$true] %s1040
          %1046 = dma.hbm_to_vmem [thread:$0]  %s25, 3072, %s1041, [#allocation20], 64, 64, 4
        $region60: #{forward.1} parent=11 // pred_fallthru
          _
        // Predicated region
        $region61: #{forward.1} parent=11 // pred_check
          %p1047 = pneg %p392
        $region62: #{forward.1} parent=11 // pred_check_branch
          %1049 = sbr.rel (%p1047) target = $region64
        $region63: #{forward.1} parent=11 // pred_region
          %s1051 = ssub.s32 16, 16
          %1052 = vsyncadd [#allocation20], %s1051
          %s1054 = sshll.u32 [#allocation21], 4
          %s1055 = int_to_ptr.vmem [resolvable:$true] %s1054
          %1057 = dma.hbm_to_vmem [thread:$0]  %s27, 16, %s1055, [#allocation20]
        $region64: #{forward.1} parent=11 // pred_fallthru
          _
        // Predicated region
        $region65: #{forward.1} parent=11 // pred_check
          %p1058 = pneg %p413
        $region66: #{forward.1} parent=11 // pred_check_branch
          %1060 = sbr.rel (%p1058) target = $region68
        $region67: #{forward.1} parent=11 // pred_region
          %s1062 = ssub.s32 64, 64
          %1063 = vsyncadd [#allocation23], %s1062
          %s1065 = sshll.u32 [#allocation22], 4
          %s1066 = int_to_ptr.vmem [resolvable:$true] %s1065
          %1068 = dma.hbm_to_vmem [thread:$0]  %s29, 64, %s1066, [#allocation23]
        $region68: #{forward.1} parent=11 // pred_fallthru
          _
        // Predicated region
        $region69: #{forward.1} parent=11 // pred_check
          %p1069 = pneg %p434
        $region70: #{forward.1} parent=11 // pred_check_branch
          %1071 = sbr.rel (%p1069) target = $region72
        $region71: #{forward.1} parent=11 // pred_region
          %s1073 = ssub.s32 1024, 1024
          %1074 = vsyncadd [#allocation23], %s1073
          %s1075 = sshll.u32 [#allocation24], 4
          %s1076 = int_to_ptr.vmem [resolvable:$true] %s1075
          %1081 = dma.hbm_to_vmem [thread:$0]  %s31, 1024, %s1076, [#allocation23], 64, 64, 4
        $region72: #{forward.1} parent=11 // pred_fallthru
          _
        // Predicated region
        $region73: #{forward.1} parent=11 // pred_check
          %p1082 = pneg %p455
        $region74: #{forward.1} parent=11 // pred_check_branch
          %1084 = sbr.rel (%p1082) target = $region76
        $region75: #{forward.1} parent=11 // pred_region
          _
        $region76: #{forward.1} parent=11 // pred_fallthru
          _
        // Predicated region
        $region77: #{forward.1} parent=11 // pred_check
          %p1085 = pneg %p476
        $region78: #{forward.1} parent=11 // pred_check_branch
          %1087 = sbr.rel (%p1085) target = $region80
        $region79: #{forward.1} parent=11 // pred_region
          %s1089 = ssub.s32 3072, 3072
          %1090 = vsyncadd [#allocation26], %s1089
          %s1091 = sshll.u32 [#allocation25], 4
          %s1092 = int_to_ptr.vmem [resolvable:$true] %s1091
          %1097 = dma.hbm_to_vmem [thread:$0]  %s35, 3072, %s1092, [#allocation26], 64, 64, 4
        $region80: #{forward.1} parent=11 // pred_fallthru
          _
        // Predicated region
        $region81: #{forward.1} parent=11 // pred_check
          %p1098 = pneg %p497
        $region82: #{forward.1} parent=11 // pred_check_branch
          %1100 = sbr.rel (%p1098) target = $region84
        $region83: #{forward.1} parent=11 // pred_region
          %s1102 = ssub.s32 16, 16
          %1103 = vsyncadd [#allocation26], %s1102
          %s1105 = sshll.u32 [#allocation27], 4
          %s1106 = int_to_ptr.vmem [resolvable:$true] %s1105
          %1108 = dma.hbm_to_vmem [thread:$0]  %s37, 16, %s1106, [#allocation26]
        $region84: #{forward.1} parent=11 // pred_fallthru
          _
        // Predicated region
        $region85: #{forward.1} parent=11 // pred_check
          %p1109 = pneg %p518
        $region86: #{forward.1} parent=11 // pred_check_branch
          %1111 = sbr.rel (%p1109) target = $region88
        $region87: #{forward.1} parent=11 // pred_region
          _
        $region88: #{forward.1} parent=11 // pred_fallthru
          _
        // Predicated region
        $region89: #{forward.1} parent=11 // pred_check
          %p1112 = pneg %p539
        $region90: #{forward.1} parent=11 // pred_check_branch
          %1114 = sbr.rel (%p1112) target = $region92
        $region91: #{forward.1} parent=11 // pred_region
          %s1116 = ssub.s32 16, 16
          %1117 = vsyncadd [#allocation29], %s1116
          %s1119 = sshll.u32 [#allocation28], 4
          %s1120 = int_to_ptr.vmem [resolvable:$true] %s1119
          %1122 = dma.hbm_to_vmem [thread:$0]  %s41, 16, %s1120, [#allocation29]
        $region92: #{forward.1} parent=11 // pred_fallthru
          _
        // Predicated region
        $region93: #{forward.1} parent=11 // pred_check
          %p1123 = pneg %p560
        $region94: #{forward.1} parent=11 // pred_check_branch
          %1125 = sbr.rel (%p1123) target = $region96
        $region95: #{forward.1} parent=11 // pred_region
          _
        $region96: #{forward.1} parent=11 // pred_fallthru
          _
        // Predicated region
        $region97: #{forward.1} parent=11 // pred_check
          %p1126 = pneg %p581
        $region98: #{forward.1} parent=11 // pred_check_branch
          %1128 = sbr.rel (%p1126) target = $region100
        $region99: #{forward.1} parent=11 // pred_region
          %s1130 = ssub.s32 16, 16
          %1131 = vsyncadd [#allocation29], %s1130
          %s1133 = sshll.u32 [#allocation30], 4
          %s1134 = int_to_ptr.vmem [resolvable:$true] %s1133
          %1136 = dma.hbm_to_vmem [thread:$0]  %s45, 16, %s1134, [#allocation29]
        $region100: #{forward.1} parent=11 // pred_fallthru
          _
        // Predicated region
        $region101: #{forward.1} parent=11 // pred_check
          %p1137 = pneg %p602
        $region102: #{forward.1} parent=11 // pred_check_branch
          %1139 = sbr.rel (%p1137) target = $region104
        $region103: #{forward.1} parent=11 // pred_region
          _
        $region104: #{forward.1} parent=11 // pred_fallthru
          _
        // Predicated region
        $region105: #{forward.1} parent=11 // pred_check
          %p1140 = pneg %p623
        $region106: #{forward.1} parent=11 // pred_check_branch
          %1142 = sbr.rel (%p1140) target = $region108
        $region107: #{forward.1} parent=11 // pred_region
          %s1144 = ssub.s32 16, 16
          %1145 = vsyncadd [#allocation32], %s1144
          %s1147 = sshll.u32 [#allocation31], 4
          %s1148 = int_to_ptr.vmem [resolvable:$true] %s1147
          %1150 = dma.hbm_to_vmem [thread:$0]  %s49, 16, %s1148, [#allocation32]
        $region108: #{forward.1} parent=11 // pred_fallthru
          _
        // Predicated region
        $region109: #{forward.1} parent=11 // pred_check
          %p1151 = pneg %p644
        $region110: #{forward.1} parent=11 // pred_check_branch
          %1153 = sbr.rel (%p1151) target = $region112
        $region111: #{forward.1} parent=11 // pred_region
          _
        $region112: #{forward.1} parent=11 // pred_fallthru
          _
        // Predicated region
        $region113: #{forward.1} parent=11 // pred_check
          %p1154 = pneg %p665
        $region114: #{forward.1} parent=11 // pred_check_branch
          %1156 = sbr.rel (%p1154) target = $region116
        $region115: #{forward.1} parent=11 // pred_region
          %s1158 = ssub.s32 16, 16
          %1159 = vsyncadd [#allocation32], %s1158
          %s1161 = sshll.u32 [#allocation33], 4
          %s1162 = int_to_ptr.vmem [resolvable:$true] %s1161
          %1164 = dma.hbm_to_vmem [thread:$0]  %s53, 16, %s1162, [#allocation32]
        $region116: #{forward.1} parent=11 // pred_fallthru
          _
        // Predicated region
        $region117: #{forward.1} parent=11 // pred_check
          %p1165 = pneg %p686
        $region118: #{forward.1} parent=11 // pred_check_branch
          %1167 = sbr.rel (%p1165) target = $region120
        $region119: #{forward.1} parent=11 // pred_region
          _
        $region120: #{forward.1} parent=11 // pred_fallthru
          _
        // Predicated region
        $region121: #{forward.1} parent=11 // pred_check
          %p1168 = pneg %p707
        $region122: #{forward.1} parent=11 // pred_check_branch
          %1170 = sbr.rel (%p1168) target = $region124
        $region123: #{forward.1} parent=11 // pred_region
          %s1172 = ssub.s32 16, 16
          %1173 = vsyncadd [#allocation35], %s1172
          %s1175 = sshll.u32 [#allocation34], 4
          %s1176 = int_to_ptr.vmem [resolvable:$true] %s1175
          %1178 = dma.hbm_to_vmem [thread:$0]  %s57, 16, %s1176, [#allocation35]
        $region124: #{forward.1} parent=11 // pred_fallthru
          _
        // Predicated region
        $region125: #{forward.1} parent=11 // pred_check
          %p1179 = pneg %p728
        $region126: #{forward.1} parent=11 // pred_check_branch
          %1181 = sbr.rel (%p1179) target = $region128
        $region127: #{forward.1} parent=11 // pred_region
          _
        $region128: #{forward.1} parent=11 // pred_fallthru
          _
        // Predicated region
        $region129: #{forward.1} parent=11 // pred_check
          %p1182 = pneg %p749
        $region130: #{forward.1} parent=11 // pred_check_branch
          %1184 = sbr.rel (%p1182) target = $region132
        $region131: #{forward.1} parent=11 // pred_region
          %s1186 = ssub.s32 16, 16
          %1187 = vsyncadd [#allocation35], %s1186
          %s1189 = sshll.u32 [#allocation36], 4
          %s1190 = int_to_ptr.vmem [resolvable:$true] %s1189
          %1192 = dma.hbm_to_vmem [thread:$0]  %s61, 16, %s1190, [#allocation35]
        $region132: #{forward.1} parent=11 // pred_fallthru
          _
        // Predicated region
        $region133: #{forward.1} parent=11 // pred_check
          %p1193 = pneg %p770
        $region134: #{forward.1} parent=11 // pred_check_branch
          %1195 = sbr.rel (%p1193) target = $region136
        $region135: #{forward.1} parent=11 // pred_region
          _
        $region136: #{forward.1} parent=11 // pred_fallthru
          _
        // Predicated region
        $region137: #{forward.1} parent=11 // pred_check
          %p1196 = pneg %p791
        $region138: #{forward.1} parent=11 // pred_check_branch
          %1198 = sbr.rel (%p1196) target = $region140
        $region139: #{forward.1} parent=11 // pred_region
          %s1200 = ssub.s32 16, 16
          %1201 = vsyncadd [#allocation38], %s1200
          %s1203 = sshll.u32 [#allocation37], 4
          %s1204 = int_to_ptr.vmem [resolvable:$true] %s1203
          %1206 = dma.hbm_to_vmem [thread:$0]  %s65, 16, %s1204, [#allocation38]
        $region140: #{forward.1} parent=11 // pred_fallthru
          _
        // Predicated region
        $region141: #{forward.1} parent=11 // pred_check
          %p1207 = pneg %p812
        $region142: #{forward.1} parent=11 // pred_check_branch
          %1209 = sbr.rel (%p1207) target = $region144
        $region143: #{forward.1} parent=11 // pred_region
          _
        $region144: #{forward.1} parent=11 // pred_fallthru
          _
        // Predicated region
        $region145: #{forward.1} parent=11 // pred_check
          %p1210 = pneg %p833
        $region146: #{forward.1} parent=11 // pred_check_branch
          %1212 = sbr.rel (%p1210) target = $region148
        $region147: #{forward.1} parent=11 // pred_region
          %s1214 = ssub.s32 16, 16
          %1215 = vsyncadd [#allocation38], %s1214
          %s1217 = sshll.u32 [#allocation39], 4
          %s1218 = int_to_ptr.vmem [resolvable:$true] %s1217
          %1220 = dma.hbm_to_vmem [thread:$0]  %s69, 16, %s1218, [#allocation38]
        $region148: #{forward.1} parent=11 // pred_fallthru
          _
        // Predicated region
        $region149: #{forward.1} parent=11 // pred_check
          %p1221 = pneg %p854
        $region150: #{forward.1} parent=11 // pred_check_branch
          %1223 = sbr.rel (%p1221) target = $region152
        $region151: #{forward.1} parent=11 // pred_region
          %s1225 = ssub.s32 128, 128
          %1226 = vsyncadd [#allocation41], %s1225
          %s1228 = sshll.u32 [#allocation40], 4
          %s1229 = int_to_ptr.vmem [resolvable:$true] %s1228
          %1231 = dma.hbm_to_vmem [thread:$0]  %s71, 128, %s1229, [#allocation41]
        $region152: #{forward.1} parent=11 // pred_fallthru
          _
      $region12: #{forward.1} parent=5 // pred_fallthru
        _
      %p1232 = scmp.lt.s32.totalorder %s93, 2
      // Predicated region
      $region153: #{forward.1} parent=5 // pred_check
        %p1233 = pneg %p1232
      $region154: #{forward.1} parent=5 // pred_check_branch
        %1235 = sbr.rel (%p1233) target = $region156
      $region155: #{forward.1} parent=5 // pred_region
        // Predicated region
        $region157: #{forward.1} parent=155 // pred_check
          %p1236 = pneg %p113
        $region158: #{forward.1} parent=155 // pred_check_branch
          %1238 = sbr.rel (%p1236) target = $region160
        $region159: #{forward.1} parent=155 // pred_region
          %p1239 = scmp.lt.s32.totalorder %s93, 1
          %s1240 = scalar_select %p1239, %s93, 1
          %s1241 = smul.addr %s1240, 8
          %s1242 = smul.addr %s1241, 8
          %s1243 = scalar_lea.vmem %s1, %s1242
        $region160: #{forward.1} parent=155 // pred_fallthru
          _
      $region156: #{forward.1} parent=5 // pred_fallthru
        _
      %p1244 = scmp.le.s32.totalorder 1, %s93
      %p1245 = scmp.lt.s32.totalorder %s93, 3
      %p1246 = pnand %p1244, %p1245
      %p1247 = pneg %p1246
      // Predicated region
      $region161: #{forward.1} parent=5 // pred_check
        _
      $region162: #{forward.1} parent=5 // pred_check_branch
        %1249 = sbr.rel (%p1246) target = $region164
      $region163: #{forward.1} parent=5 // pred_region
        %s1250 = ssub.s32 %s93, 1
        // Predicated region
        $region165: #{forward.1} parent=163 // pred_check
          %p1251 = pneg %p140
        $region166: #{forward.1} parent=163 // pred_check_branch
          %1253 = sbr.rel (%p1251) target = $region168
        $region167: #{forward.1} parent=163 // pred_region
          %1254 = dma.done [#allocation3], 768
        $region168: #{forward.1} parent=163 // pred_fallthru
          _
        // Predicated region
        $region169: #{forward.1} parent=163 // pred_check
          %p1255 = pneg %p161
        $region170: #{forward.1} parent=163 // pred_check_branch
          %1257 = sbr.rel (%p1255) target = $region172
        $region171: #{forward.1} parent=163 // pred_region
          %1258 = dma.done [#allocation5], 1152
        $region172: #{forward.1} parent=163 // pred_fallthru
          _
        // Predicated region
        $region173: #{forward.1} parent=163 // pred_check
          %p1259 = pneg %p182
        $region174: #{forward.1} parent=163 // pred_check_branch
          %1261 = sbr.rel (%p1259) target = $region176
        $region175: #{forward.1} parent=163 // pred_region
          %1262 = dma.done [#allocation5], 16
        $region176: #{forward.1} parent=163 // pred_fallthru
          _
        // Predicated region
        $region177: #{forward.1} parent=163 // pred_check
          %p1263 = pneg %p203
        $region178: #{forward.1} parent=163 // pred_check_branch
          %1265 = sbr.rel (%p1263) target = $region180
        $region179: #{forward.1} parent=163 // pred_region
          %1266 = dma.done [#allocation8], 256
        $region180: #{forward.1} parent=163 // pred_fallthru
          _
        // Predicated region
        $region181: #{forward.1} parent=163 // pred_check
          %p1267 = pneg %p224
        $region182: #{forward.1} parent=163 // pred_check_branch
          %1269 = sbr.rel (%p1267) target = $region184
        $region183: #{forward.1} parent=163 // pred_region
          %1270 = dma.done [#allocation8], 1024
        $region184: #{forward.1} parent=163 // pred_fallthru
          _
        // Predicated region
        $region185: #{forward.1} parent=163 // pred_check
          %p1271 = pneg %p245
        $region186: #{forward.1} parent=163 // pred_check_branch
          %1273 = sbr.rel (%p1271) target = $region188
        $region187: #{forward.1} parent=163 // pred_region
          %1274 = dma.done [#allocation11], 384
        $region188: #{forward.1} parent=163 // pred_fallthru
          _
        // Predicated region
        $region189: #{forward.1} parent=163 // pred_check
          %p1275 = pneg %p266
        $region190: #{forward.1} parent=163 // pred_check_branch
          %1277 = sbr.rel (%p1275) target = $region192
        $region191: #{forward.1} parent=163 // pred_region
          %1278 = dma.done [#allocation11], 3072
        $region192: #{forward.1} parent=163 // pred_fallthru
          _
        // Predicated region
        $region193: #{forward.1} parent=163 // pred_check
          %p1279 = pneg %p287
        $region194: #{forward.1} parent=163 // pred_check_branch
          %1281 = sbr.rel (%p1279) target = $region196
        $region195: #{forward.1} parent=163 // pred_region
          %1282 = dma.done [#allocation14], 16
        $region196: #{forward.1} parent=163 // pred_fallthru
          _
        // Predicated region
        $region197: #{forward.1} parent=163 // pred_check
          %p1283 = pneg %p308
        $region198: #{forward.1} parent=163 // pred_check_branch
          %1285 = sbr.rel (%p1283) target = $region200
        $region199: #{forward.1} parent=163 // pred_region
          %1286 = dma.done [#allocation14], 128
        $region200: #{forward.1} parent=163 // pred_fallthru
          _
        // Predicated region
        $region201: #{forward.1} parent=163 // pred_check
          %p1287 = pneg %p329
        $region202: #{forward.1} parent=163 // pred_check_branch
          %1289 = sbr.rel (%p1287) target = $region204
        $region203: #{forward.1} parent=163 // pred_region
          %1290 = dma.done [#allocation17], 1024
        $region204: #{forward.1} parent=163 // pred_fallthru
          _
        // Predicated region
        $region205: #{forward.1} parent=163 // pred_check
          %p1291 = pneg %p350
        $region206: #{forward.1} parent=163 // pred_check_branch
          %1293 = sbr.rel (%p1291) target = $region208
        $region207: #{forward.1} parent=163 // pred_region
          %1294 = dma.done [#allocation17], 192
        $region208: #{forward.1} parent=163 // pred_fallthru
          _
        // Predicated region
        $region209: #{forward.1} parent=163 // pred_check
          %p1295 = pneg %p371
        $region210: #{forward.1} parent=163 // pred_check_branch
          %1297 = sbr.rel (%p1295) target = $region212
        $region211: #{forward.1} parent=163 // pred_region
          %1298 = dma.done [#allocation20], 3072
        $region212: #{forward.1} parent=163 // pred_fallthru
          _
        // Predicated region
        $region213: #{forward.1} parent=163 // pred_check
          %p1299 = pneg %p392
        $region214: #{forward.1} parent=163 // pred_check_branch
          %1301 = sbr.rel (%p1299) target = $region216
        $region215: #{forward.1} parent=163 // pred_region
          %1302 = dma.done [#allocation20], 16
        $region216: #{forward.1} parent=163 // pred_fallthru
          _
        // Predicated region
        $region217: #{forward.1} parent=163 // pred_check
          %p1303 = pneg %p413
        $region218: #{forward.1} parent=163 // pred_check_branch
          %1305 = sbr.rel (%p1303) target = $region220
        $region219: #{forward.1} parent=163 // pred_region
          %1306 = dma.done [#allocation23], 64
        $region220: #{forward.1} parent=163 // pred_fallthru
          _
        // Predicated region
        $region221: #{forward.1} parent=163 // pred_check
          %p1307 = pneg %p434
        $region222: #{forward.1} parent=163 // pred_check_branch
          %1309 = sbr.rel (%p1307) target = $region224
        $region223: #{forward.1} parent=163 // pred_region
          %1310 = dma.done [#allocation23], 1024
        $region224: #{forward.1} parent=163 // pred_fallthru
          _
        // Predicated region
        $region225: #{forward.1} parent=163 // pred_check
          %p1311 = pneg %p476
        $region226: #{forward.1} parent=163 // pred_check_branch
          %1313 = sbr.rel (%p1311) target = $region228
        $region227: #{forward.1} parent=163 // pred_region
          %1314 = dma.done [#allocation26], 3072
        $region228: #{forward.1} parent=163 // pred_fallthru
          _
        // Predicated region
        $region229: #{forward.1} parent=163 // pred_check
          %p1315 = pneg %p497
        $region230: #{forward.1} parent=163 // pred_check_branch
          %1317 = sbr.rel (%p1315) target = $region232
        $region231: #{forward.1} parent=163 // pred_region
          %1318 = dma.done [#allocation26], 16
        $region232: #{forward.1} parent=163 // pred_fallthru
          _
        // Predicated region
        $region233: #{forward.1} parent=163 // pred_check
          %p1319 = pneg %p539
        $region234: #{forward.1} parent=163 // pred_check_branch
          %1321 = sbr.rel (%p1319) target = $region236
        $region235: #{forward.1} parent=163 // pred_region
          %1322 = dma.done [#allocation29], 16
        $region236: #{forward.1} parent=163 // pred_fallthru
          _
        // Predicated region
        $region237: #{forward.1} parent=163 // pred_check
          %p1323 = pneg %p581
        $region238: #{forward.1} parent=163 // pred_check_branch
          %1325 = sbr.rel (%p1323) target = $region240
        $region239: #{forward.1} parent=163 // pred_region
          %1326 = dma.done [#allocation29], 16
        $region240: #{forward.1} parent=163 // pred_fallthru
          _
        // Predicated region
        $region241: #{forward.1} parent=163 // pred_check
          %p1327 = pneg %p623
        $region242: #{forward.1} parent=163 // pred_check_branch
          %1329 = sbr.rel (%p1327) target = $region244
        $region243: #{forward.1} parent=163 // pred_region
          %1330 = dma.done [#allocation32], 16
        $region244: #{forward.1} parent=163 // pred_fallthru
          _
        // Predicated region
        $region245: #{forward.1} parent=163 // pred_check
          %p1331 = pneg %p665
        $region246: #{forward.1} parent=163 // pred_check_branch
          %1333 = sbr.rel (%p1331) target = $region248
        $region247: #{forward.1} parent=163 // pred_region
          %1334 = dma.done [#allocation32], 16
        $region248: #{forward.1} parent=163 // pred_fallthru
          _
        // Predicated region
        $region249: #{forward.1} parent=163 // pred_check
          %p1335 = pneg %p707
        $region250: #{forward.1} parent=163 // pred_check_branch
          %1337 = sbr.rel (%p1335) target = $region252
        $region251: #{forward.1} parent=163 // pred_region
          %1338 = dma.done [#allocation35], 16
        $region252: #{forward.1} parent=163 // pred_fallthru
          _
        // Predicated region
        $region253: #{forward.1} parent=163 // pred_check
          %p1339 = pneg %p749
        $region254: #{forward.1} parent=163 // pred_check_branch
          %1341 = sbr.rel (%p1339) target = $region256
        $region255: #{forward.1} parent=163 // pred_region
          %1342 = dma.done [#allocation35], 16
        $region256: #{forward.1} parent=163 // pred_fallthru
          _
        // Predicated region
        $region257: #{forward.1} parent=163 // pred_check
          %p1343 = pneg %p791
        $region258: #{forward.1} parent=163 // pred_check_branch
          %1345 = sbr.rel (%p1343) target = $region260
        $region259: #{forward.1} parent=163 // pred_region
          %1346 = dma.done [#allocation38], 16
        $region260: #{forward.1} parent=163 // pred_fallthru
          _
        // Predicated region
        $region261: #{forward.1} parent=163 // pred_check
          %p1347 = pneg %p833
        $region262: #{forward.1} parent=163 // pred_check_branch
          %1349 = sbr.rel (%p1347) target = $region264
        $region263: #{forward.1} parent=163 // pred_region
          %1350 = dma.done [#allocation38], 16
        $region264: #{forward.1} parent=163 // pred_fallthru
          _
        // Predicated region
        $region265: #{forward.1} parent=163 // pred_check
          %p1351 = pneg %p854
        $region266: #{forward.1} parent=163 // pred_check_branch
          %1353 = sbr.rel (%p1351) target = $region268
        $region267: #{forward.1} parent=163 // pred_region
          %1354 = dma.done [#allocation41], 128
        $region268: #{forward.1} parent=163 // pred_fallthru
          _
        %p1355 = scmp.lt.s32.totalorder %s98, 1
        %s1356 = scalar_select %p1355, %s98, 1
        %s1357 = smul.addr %s1356, 8
        %s1358 = smul.addr %s1357, 8
        %s1359 = scalar_lea.vmem %s1, %s1358
        %p1360 = pneg %p119
        %p1361 = pneg %p116
        %p1362 = pneg %p140
        %p1363 = pneg %p137
        %p1364 = pneg %p161
        %p1365 = pneg %p158
        %p1366 = pneg %p182
        %p1367 = pneg %p179
        %p1368 = pneg %p203
        %p1369 = pneg %p200
        %p1370 = pneg %p224
        %p1371 = pneg %p221
        %p1372 = pneg %p245
        %p1373 = pneg %p242
        %p1374 = pneg %p266
        %p1375 = pneg %p263
        %p1376 = pneg %p287
        %p1377 = pneg %p284
        %p1378 = pneg %p308
        %p1379 = pneg %p305
        %p1380 = pneg %p329
        %p1381 = pneg %p326
        %p1382 = pneg %p350
        %p1383 = pneg %p347
        %p1384 = pneg %p371
        %p1385 = pneg %p368
        %p1386 = pneg %p392
        %p1387 = pneg %p389
        %p1388 = pneg %p413
        %p1389 = pneg %p410
        %p1390 = pneg %p434
        %p1391 = pneg %p431
        %p1392 = pneg %p455
        %p1393 = pneg %p452
        %p1394 = pneg %p476
        %p1395 = pneg %p473
        %p1396 = pneg %p497
        %p1397 = pneg %p494
        %p1398 = pneg %p518
        %p1399 = pneg %p515
        %p1400 = pneg %p539
        %p1401 = pneg %p536
        %p1402 = pneg %p560
        %p1403 = pneg %p557
        %p1404 = pneg %p581
        %p1405 = pneg %p578
        %p1406 = pneg %p602
        %p1407 = pneg %p599
        %p1408 = pneg %p623
        %p1409 = pneg %p620
        %p1410 = pneg %p644
        %p1411 = pneg %p641
        %p1412 = pneg %p665
        %p1413 = pneg %p662
        %p1414 = pneg %p686
        %p1415 = pneg %p683
        %p1416 = pneg %p707
        %p1417 = pneg %p704
        %p1418 = pneg %p728
        %p1419 = pneg %p725
        %p1420 = pneg %p749
        %p1421 = pneg %p746
        %p1422 = pneg %p770
        %p1423 = pneg %p767
        %p1424 = pneg %p791
        %p1425 = pneg %p788
        %p1426 = pneg %p812
        %p1427 = pneg %p809
        %p1428 = pneg %p833
        %p1429 = pneg %p830
        %p1430 = pneg %p854
        %p1431 = pneg %p851
        %p1432 = pneg %p880
        %p1433 = pneg %p877
        %p1434 = scmp.lt.s32.totalorder %s98, 1
        %s1435 = scalar_select %p1434, %s98, 1
        %s1436 = smul.addr %s1435, 8
        %s1437 = scalar_lea.vmem %s73, %s1436
        %p1438 = scmp.lt.s32.totalorder %s98, 1
        %s1439 = scalar_select %p1438, %s98, 1
        %s1440 = smul.addr %s1439, 8
        %s1441 = smul.addr %s1440, 8
        %s1442 = scalar_lea.vmem %s1, %s1441
        %p1443 = scmp.lt.s32.totalorder %s98, 1
        %s1444 = scalar_select %p1443, %s98, 1
        %s1445 = smul.addr %s1444, 8
        %s1446 = scalar_lea.vmem %s73, %s1445
        %v1448 = vld [vmem:[%s1442] sm:$0xff]
        %v1449 = vld [vmem:[%s1442 + $0x8] sm:$0xff]
        %v1450 = vld [vmem:[%s1442 + $0x10] sm:$0xff]
        %v1451 = vld [vmem:[%s1442 + $0x18] sm:$0xff]
        %v1452 = vld [vmem:[%s1442 + $0x20] sm:$0xff]
        %v1453 = vld [vmem:[%s1442 + $0x28] sm:$0xff]
        %v1454 = vld [vmem:[%s1442 + $0x30] sm:$0xff]
        %v1455 = vld [vmem:[%s1442 + $0x38] sm:$0xff]
        %v1456 = vpack.c.bf16 %v1449, %v1448
        %v1457 = vpack.c.bf16 %v1451, %v1450
        %v1458 = vpack.c.bf16 %v1453, %v1452
        %v1459 = vpack.c.bf16 %v1455, %v1454
        %v1460 = vld [vmem:[#allocation2] sm:$0xf]
        %v1461 = vld [vmem:[#allocation2 + $0x4] sm:$0xf]
        %v1462 = vld [vmem:[#allocation2 + $0x8] sm:$0xf]
        %v1463 = vld [vmem:[#allocation2 + $0xc] sm:$0xf]
        %v1464 = vld [vmem:[#allocation2 + $0x10] sm:$0xf]
        %v1465 = vld [vmem:[#allocation2 + $0x14] sm:$0xf]
        %v1466 = vld [vmem:[#allocation2 + $0x18] sm:$0xf]
        %v1467 = vld [vmem:[#allocation2 + $0x1c] sm:$0xf]
        %v1468 = vld [vmem:[#allocation2 + $0x20] sm:$0xf]
        %v1469 = vld [vmem:[#allocation2 + $0x24] sm:$0xf]
        %v1470 = vld [vmem:[#allocation2 + $0x28] sm:$0xf]
        %v1471 = vld [vmem:[#allocation2 + $0x2c] sm:$0xf]
        %v1484 = vunpack.c.l.b16 %v1460
        %v1485 = vunpack.c.l.b16 %v1461
        %v1486 = vunpack.c.l.b16 %v1462
        %v1487 = vunpack.c.l.b16 %v1463
        %v1488 = vunpack.c.l.b16 %v1464
        %v1489 = vunpack.c.l.b16 %v1465
        %v1490 = vunpack.c.l.b16 %v1466
        %v1491 = vunpack.c.l.b16 %v1467
        %v1492 = vunpack.c.l.b16 %v1468
        %v1493 = vunpack.c.l.b16 %v1469
        %v1494 = vunpack.c.l.b16 %v1470
        %v1495 = vunpack.c.l.b16 %v1471
        %v1496 = vpack.c.b16 %v1485, %v1484
        %v1497 = vpack.c.b16 %v1487, %v1486
        %v1498 = vpack.c.b16 %v1489, %v1488
        %v1499 = vpack.c.b16 %v1491, %v1490
        %v1500 = vpack.c.b16 %v1493, %v1492
        %v1501 = vpack.c.b16 %v1495, %v1494
        %vm1502 = vcmask 523264
        %v1504 = vsel %vm1502, %v1496, 0
        %v1507 = vsel %vm1502, %v1497, 0
        %v1510 = vsel %vm1502, %v1498, 0
        %v1513 = vsel %vm1502, %v1499, 0
        %v1516 = vsel %vm1502, %v1500, 0
        %v1519 = vsel %vm1502, %v1501, 0
        %1521 = vmatprep.subr.bf16.mxu0 0
        %1522 = vmatpush1.bf16.msra.mxu0 %v1456
        %1523 = vmatprep.subr.bf16.mxu0 0
        %1524 = vmatpush1.bf16.msra.mxu0 %v1457
        %1525 = vmatprep.subr.bf16.mxu0 0
        %1526 = vmatpush1.bf16.msra.mxu0 %v1458
        %1527 = vmatprep.subr.bf16.mxu0 0
        %1528 = vmatpush1.bf16.msra.mxu0 %v1459
        %1529 = vmatprep.subr.bf16.mxu0 0
        %1530 = vmatpush1.bf16.msra.mxu0 0
        %1531 = vmatprep.subr.bf16.mxu0 0
        %1532 = vmatpush1.bf16.msra.mxu0 0
        %1533 = vmatprep.subr.bf16.mxu0 0
        %1534 = vmatpush1.bf16.msra.mxu0 0
        %1535 = vmatprep.subr.bf16.mxu0 0
        %1536 = vmatpush1.bf16.msra.mxu0 0
        %1537 = vmatprep.subr.bf16.mxu0 0
        %1538 = vmatpush1.bf16.msra.mxu0 0
        %1539 = vmatprep.subr.bf16.mxu0 0
        %1540 = vmatpush1.bf16.msra.mxu0 0
        %1541 = vmatprep.subr.bf16.mxu0 0
        %1542 = vmatpush1.bf16.msra.mxu0 0
        %1543 = vmatprep.subr.bf16.mxu0 0
        %1544 = vmatpush1.bf16.msra.mxu0 0
        %1545 = vmatprep.subr.bf16.mxu0 0
        %1546 = vmatpush1.bf16.msra.mxu0 0
        %1547 = vmatprep.subr.bf16.mxu0 0
        %1548 = vmatpush1.bf16.msra.mxu0 0
        %1549 = vmatprep.subr.bf16.mxu0 0
        %1550 = vmatpush1.bf16.msra.mxu0 0
        %1551 = vmatprep.subr.bf16.mxu0 0
        %1552 = vmatpush1.bf16.msra.mxu0 0
        %1553 = vmatprep.mubr.bf16.mxu0 0
        %1554 = vmatmul.mubr.bf16.gmra.mrb[0].mxu0 %v1504
        %v1555 = vpop.f32.mrb[0].mxu0
        %v1556 = vadd.f32 0.0, %v1555
        %v1557 = vpop.f32.mrb[0].mxu0
        %v1558 = vpop.f32.mrb[0].mxu0
        %v1559 = vadd.f32 0.0, %v1558
        %v1560 = vpop.f32.mrb[0].mxu0
        %1561 = vmatprep.mubr.bf16.mxu0 0
        %1562 = vmatmul.mubr.bf16.gmra.mrb[0].mxu0 %v1507
        %v1563 = vpop.f32.mrb[0].mxu0
        %v1564 = vadd.f32 0.0, %v1563
        %v1565 = vpop.f32.mrb[0].mxu0
        %v1566 = vpop.f32.mrb[0].mxu0
        %v1567 = vadd.f32 0.0, %v1566
        %v1568 = vpop.f32.mrb[0].mxu0
        %1569 = vmatprep.mubr.bf16.mxu0 0
        %1570 = vmatmul.mubr.bf16.gmra.mrb[0].mxu0 %v1510
        %v1571 = vpop.f32.mrb[0].mxu0
        %v1572 = vadd.f32 0.0, %v1571
        %v1573 = vpop.f32.mrb[0].mxu0
        %v1574 = vpop.f32.mrb[0].mxu0
        %v1575 = vadd.f32 0.0, %v1574
        %v1576 = vpop.f32.mrb[0].mxu0
        %1577 = vmatprep.mubr.bf16.mxu0 0
        %1578 = vmatmul.mubr.bf16.gmra.mrb[0].mxu0 %v1513
        %v1579 = vpop.f32.mrb[0].mxu0
        %v1580 = vadd.f32 0.0, %v1579
        %v1581 = vpop.f32.mrb[0].mxu0
        %v1582 = vpop.f32.mrb[0].mxu0
        %v1583 = vadd.f32 0.0, %v1582
        %v1584 = vpop.f32.mrb[0].mxu0
        %1585 = vmatprep.mubr.bf16.mxu0 0
        %1586 = vmatmul.mubr.bf16.gmra.mrb[0].mxu0 %v1516
        %v1587 = vpop.f32.mrb[0].mxu0
        %v1588 = vadd.f32 0.0, %v1587
        %v1589 = vpop.f32.mrb[0].mxu0
        %v1590 = vpop.f32.mrb[0].mxu0
        %v1591 = vadd.f32 0.0, %v1590
        %v1592 = vpop.f32.mrb[0].mxu0
        %1593 = vmatprep.mubr.bf16.mxu0 0
        %1594 = vmatmul.mubr.bf16.gmra.mrb[0].mxu0 %v1519
        %v1595 = vpop.f32.mrb[0].mxu0
        %v1596 = vadd.f32 0.0, %v1595
        %v1597 = vpop.f32.mrb[0].mxu0
        %v1598 = vpop.f32.mrb[0].mxu0
        %v1599 = vadd.f32 0.0, %v1598
        %v1600 = vpop.f32.mrb[0].mxu0
        %1601 = vdwg.mxu0
        %v1602 = vpack.c.bf16 %v1559, %v1556
        %v1603 = vpack.c.bf16 %v1567, %v1564
        %v1604 = vpack.c.bf16 %v1575, %v1572
        %v1605 = vpack.c.bf16 %v1583, %v1580
        %v1606 = vpack.c.bf16 %v1591, %v1588
        %v1607 = vpack.c.bf16 %v1599, %v1596
        %1610 = vrot.lane.b32.xlu0 %v1604, 48
        %v1611 = vpop.permute.xlu0 %1610
        %1612 = vrot.lane.b32.xlu0 %v1605, 48
        %v1613 = vpop.permute.xlu0 %1612
        %1616 = vrot.lane.b32.xlu0 %v1606, 96
        %v1617 = vpop.permute.xlu0 %1616
        %1618 = vrot.lane.b32.xlu0 %v1607, 96
        %v1619 = vpop.permute.xlu0 %1618
        %vm1620 = vcmask 392192
        %v1623 = vsel %vm1620, %v1602, %v1611
        %v1626 = vsel %vm1620, %v1603, %v1613
        %vm1627 = vcmask 785408
        %v1629 = vsel %vm1627, %v1623, %v1617
        %v1632 = vsel %vm1627, %v1626, %v1619
        %v1634 = vld [vmem:[#allocation4] sm:$0xf]
        %v1635 = vld [vmem:[#allocation4 + $0x4] sm:$0xf]
        %v1636 = vld [vmem:[#allocation4 + $0x8] sm:$0xf]
        %v1637 = vld [vmem:[#allocation4 + $0xc] sm:$0xf]
        %v1638 = vld [vmem:[#allocation4 + $0x10] sm:$0xf]
        %v1639 = vld [vmem:[#allocation4 + $0x14] sm:$0xf]
        %v1640 = vld [vmem:[#allocation4 + $0x18] sm:$0xf]
        %v1641 = vld [vmem:[#allocation4 + $0x1c] sm:$0xf]
        %v1642 = vld [vmem:[#allocation4 + $0x20] sm:$0xf]
        %v1643 = vld [vmem:[#allocation4 + $0x24] sm:$0xf]
        %v1644 = vld [vmem:[#allocation4 + $0x28] sm:$0xf]
        %v1645 = vld [vmem:[#allocation4 + $0x2c] sm:$0xf]
        %v1646 = vld [vmem:[#allocation4 + $0x30] sm:$0xf]
        %v1647 = vld [vmem:[#allocation4 + $0x34] sm:$0xf]
        %v1648 = vld [vmem:[#allocation4 + $0x38] sm:$0xf]
        %v1649 = vld [vmem:[#allocation4 + $0x3c] sm:$0xf]
        %v1650 = vld [vmem:[#allocation4 + $0x40] sm:$0xf]
        %v1651 = vld [vmem:[#allocation4 + $0x44] sm:$0xf]
        %v1652 = vld [vmem:[#allocation6] sm:$0x1]
        %v1654 = vlaneseq
        %v1655 = vshrl.u32 %v1654, 7
        %v1656 = vsub.s32 0, %v1655
        %v1657 = vrot.slane %v1652, %v1656
        %v1677 = vunpack.c.l.b16 %v1634
        %v1678 = vunpack.c.l.b16 %v1635
        %v1679 = vunpack.c.l.b16 %v1636
        %v1680 = vunpack.c.l.b16 %v1637
        %v1681 = vunpack.c.l.b16 %v1638
        %v1682 = vunpack.c.l.b16 %v1639
        %v1683 = vunpack.c.l.b16 %v1640
        %v1684 = vunpack.c.l.b16 %v1641
        %v1685 = vunpack.c.l.b16 %v1642
        %v1686 = vunpack.c.l.b16 %v1643
        %v1687 = vunpack.c.l.b16 %v1644
        %v1688 = vunpack.c.l.b16 %v1645
        %v1689 = vunpack.c.l.b16 %v1646
        %v1690 = vunpack.c.l.b16 %v1647
        %v1691 = vunpack.c.l.b16 %v1648
        %v1692 = vunpack.c.l.b16 %v1649
        %v1693 = vunpack.c.l.b16 %v1650
        %v1694 = vunpack.c.l.b16 %v1651
        %v1695 = vpack.c.b16 %v1678, %v1677
        %v1696 = vpack.c.b16 %v1680, %v1679
        %v1697 = vpack.c.b16 %v1682, %v1681
        %v1698 = vpack.c.b16 %v1684, %v1683
        %v1699 = vpack.c.b16 %v1686, %v1685
        %v1700 = vpack.c.b16 %v1688, %v1687
        %v1701 = vpack.c.b16 %v1690, %v1689
        %v1702 = vpack.c.b16 %v1692, %v1691
        %v1703 = vpack.c.b16 %v1694, %v1693
        %vm1713 = vcmask 130048
        %v1714 = vsel %vm1713, %v1617, 0
        %v1716 = vsel %vm1713, %v1619, 0
        %1718 = vmatprep.subr.bf16.mxu0 0
        %1719 = vmatpush1.bf16.msra.mxu0 %v1695
        %1720 = vmatprep.subr.bf16.mxu0 0
        %1721 = vmatpush1.bf16.msra.mxu0 %v1696
        %1722 = vmatprep.subr.bf16.mxu0 0
        %1723 = vmatpush1.bf16.msra.mxu0 %v1697
        %1724 = vmatprep.subr.bf16.mxu0 0
        %1725 = vmatpush1.bf16.msra.mxu0 %v1698
        %1726 = vmatprep.subr.bf16.mxu0 0
        %1727 = vmatpush1.bf16.msra.mxu0 %v1699
        %1728 = vmatprep.subr.bf16.mxu0 0
        %1729 = vmatpush1.bf16.msra.mxu0 %v1700
        %1730 = vmatprep.subr.bf16.mxu0 0
        %1731 = vmatpush1.bf16.msra.mxu0 %v1701
        %1732 = vmatprep.subr.bf16.mxu0 0
        %1733 = vmatpush1.bf16.msra.mxu0 %v1702
        %1734 = vmatprep.subr.bf16.mxu0 0
        %1735 = vmatpush1.bf16.msra.mxu0 %v1703
        %1736 = vmatprep.subr.bf16.mxu0 0
        %1737 = vmatpush1.bf16.msra.mxu0 0
        %1738 = vmatprep.subr.bf16.mxu0 0
        %1739 = vmatpush1.bf16.msra.mxu0 0
        %1740 = vmatprep.subr.bf16.mxu0 0
        %1741 = vmatpush1.bf16.msra.mxu0 0
        %1742 = vmatprep.subr.bf16.mxu0 0
        %1743 = vmatpush1.bf16.msra.mxu0 0
        %1744 = vmatprep.subr.bf16.mxu0 0
        %1745 = vmatpush1.bf16.msra.mxu0 0
        %1746 = vmatprep.subr.bf16.mxu0 0
        %1747 = vmatpush1.bf16.msra.mxu0 0
        %1748 = vmatprep.subr.bf16.mxu0 0
        %1749 = vmatpush1.bf16.msra.mxu0 0
        %1750 = vmatprep.mubr.bf16.mxu0 %v1714
        %1751 = vmatmul.mubr.bf16.gmra.mrb[0].mxu0 %v1629
        %v1752 = vpop.f32.mrb[0].mxu0
        %v1753 = vadd.f32 %v1657, %v1752
        %v1754 = vpop.f32.mrb[0].mxu0
        %v1755 = vpop.f32.mrb[0].mxu0
        %v1756 = vadd.f32 %v1657, %v1755
        %v1757 = vpop.f32.mrb[0].mxu0
        %1758 = vmatprep.mubr.bf16.mxu0 %v1716
        %1759 = vmatmul.mubr.bf16.gmra.mrb[0].mxu0 %v1632
        %v1760 = vpop.f32.mrb[0].mxu0
        %v1761 = vadd.f32 %v1657, %v1760
        %v1762 = vpop.f32.mrb[0].mxu0
        %v1763 = vpop.f32.mrb[0].mxu0
        %v1764 = vadd.f32 %v1657, %v1763
        %v1765 = vpop.f32.mrb[0].mxu0
        %1766 = vdwg.mxu0
        %v1767 = vld [vmem:[#allocation7] sm:$0xf]
        %v1768 = vld [vmem:[#allocation7 + $0x4] sm:$0xf]
        %v1769 = vld [vmem:[#allocation7 + $0x8] sm:$0xf]
        %v1770 = vld [vmem:[#allocation7 + $0xc] sm:$0xf]
        %v1771 = vld [vmem:[#allocation9] sm:$0xf]
        %v1772 = vld [vmem:[#allocation9 + $0x4] sm:$0xf]
        %v1773 = vld [vmem:[#allocation9 + $0x8] sm:$0xf]
        %v1774 = vld [vmem:[#allocation9 + $0xc] sm:$0xf]
        %v1775 = vld [vmem:[#allocation9 + $0x10] sm:$0xf]
        %v1776 = vld [vmem:[#allocation9 + $0x14] sm:$0xf]
        %v1777 = vld [vmem:[#allocation9 + $0x18] sm:$0xf]
        %v1778 = vld [vmem:[#allocation9 + $0x1c] sm:$0xf]
        %v1779 = vld [vmem:[#allocation9 + $0x20] sm:$0xf]
        %v1780 = vld [vmem:[#allocation9 + $0x24] sm:$0xf]
        %v1781 = vld [vmem:[#allocation9 + $0x28] sm:$0xf]
        %v1782 = vld [vmem:[#allocation9 + $0x2c] sm:$0xf]
        %v1783 = vld [vmem:[#allocation9 + $0x30] sm:$0xf]
        %v1784 = vld [vmem:[#allocation9 + $0x34] sm:$0xf]
        %v1785 = vld [vmem:[#allocation9 + $0x38] sm:$0xf]
        %v1786 = vld [vmem:[#allocation9 + $0x3c] sm:$0xf]
        %v1787 = vpack.c.bf16 %v1756, %v1753
        %v1788 = vpack.c.bf16 %v1764, %v1761
        %v1793 = vunpack.c.l.b16 %v1767
        %v1794 = vunpack.c.l.b16 %v1768
        %v1795 = vunpack.c.l.b16 %v1769
        %v1796 = vunpack.c.l.b16 %v1770
        %v1797 = vpack.c.b16 %v1794, %v1793
        %v1798 = vpack.c.b16 %v1796, %v1795
        %vm1799 = vcmask 261120
        %v1801 = vsel %vm1799, %v1797, 0
        %v1804 = vsel %vm1799, %v1798, 0
        %1806 = vmatprep.subr.bf16.mxu0 0
        %1807 = vmatpush1.bf16.msra.mxu0 %v1787
        %1808 = vmatprep.subr.bf16.mxu0 0
        %1809 = vmatpush1.bf16.msra.mxu0 %v1788
        %1810 = vmatprep.subr.bf16.mxu0 0
        %1811 = vmatpush1.bf16.msra.mxu0 0
        %1812 = vmatprep.subr.bf16.mxu0 0
        %1813 = vmatpush1.bf16.msra.mxu0 0
        %1814 = vmatprep.subr.bf16.mxu0 0
        %1815 = vmatpush1.bf16.msra.mxu0 0
        %1816 = vmatprep.subr.bf16.mxu0 0
        %1817 = vmatpush1.bf16.msra.mxu0 0
        %1818 = vmatprep.subr.bf16.mxu0 0
        %1819 = vmatpush1.bf16.msra.mxu0 0
        %1820 = vmatprep.subr.bf16.mxu0 0
        %1821 = vmatpush1.bf16.msra.mxu0 0
        %1822 = vmatprep.subr.bf16.mxu0 0
        %1823 = vmatpush1.bf16.msra.mxu0 0
        %1824 = vmatprep.subr.bf16.mxu0 0
        %1825 = vmatpush1.bf16.msra.mxu0 0
        %1826 = vmatprep.subr.bf16.mxu0 0
        %1827 = vmatpush1.bf16.msra.mxu0 0
        %1828 = vmatprep.subr.bf16.mxu0 0
        %1829 = vmatpush1.bf16.msra.mxu0 0
        %1830 = vmatprep.subr.bf16.mxu0 0
        %1831 = vmatpush1.bf16.msra.mxu0 0
        %1832 = vmatprep.subr.bf16.mxu0 0
        %1833 = vmatpush1.bf16.msra.mxu0 0
        %1834 = vmatprep.subr.bf16.mxu0 0
        %1835 = vmatpush1.bf16.msra.mxu0 0
        %1836 = vmatprep.subr.bf16.mxu0 0
        %1837 = vmatpush1.bf16.msra.mxu0 0
        %1838 = vmatprep.mubr.bf16.mxu0 0
        %1839 = vmatmul.mubr.bf16.gmra.mrb[0].mxu0 %v1801
        %v1840 = vpop.f32.mrb[0].mxu0
        %v1841 = vadd.f32 0.0, %v1840
        %v1842 = vpop.f32.mrb[0].mxu0
        %v1843 = vpop.f32.mrb[0].mxu0
        %v1844 = vadd.f32 0.0, %v1843
        %v1845 = vpop.f32.mrb[0].mxu0
        %1846 = vmatprep.mubr.bf16.mxu0 0
        %1847 = vmatmul.mubr.bf16.gmra.mrb[0].mxu0 %v1804
        %v1848 = vpop.f32.mrb[0].mxu0
        %v1849 = vadd.f32 0.0, %v1848
        %v1850 = vpop.f32.mrb[0].mxu0
        %v1851 = vpop.f32.mrb[0].mxu0
        %v1852 = vadd.f32 0.0, %v1851
        %v1853 = vpop.f32.mrb[0].mxu0
        %1854 = vdwg.mxu0
        %v1855 = vpack.c.bf16 %v1844, %v1841
        %v1856 = vpack.c.bf16 %v1852, %v1849
        %v1873 = vunpack.c.l.b16 %v1771
        %v1874 = vunpack.c.l.b16 %v1772
        %v1875 = vunpack.c.l.b16 %v1773
        %v1876 = vunpack.c.l.b16 %v1774
        %v1877 = vunpack.c.l.b16 %v1775
        %v1878 = vunpack.c.l.b16 %v1776
        %v1879 = vunpack.c.l.b16 %v1777
        %v1880 = vunpack.c.l.b16 %v1778
        %v1881 = vunpack.c.l.b16 %v1779
        %v1882 = vunpack.c.l.b16 %v1780
        %v1883 = vunpack.c.l.b16 %v1781
        %v1884 = vunpack.c.l.b16 %v1782
        %v1885 = vunpack.c.l.b16 %v1783
        %v1886 = vunpack.c.l.b16 %v1784
        %v1887 = vunpack.c.l.b16 %v1785
        %v1888 = vunpack.c.l.b16 %v1786
        %v1889 = vpack.c.b16 %v1874, %v1873
        %v1890 = vpack.c.b16 %v1876, %v1875
        %v1891 = vpack.c.b16 %v1878, %v1877
        %v1892 = vpack.c.b16 %v1880, %v1879
        %v1893 = vpack.c.b16 %v1882, %v1881
        %v1894 = vpack.c.b16 %v1884, %v1883
        %v1895 = vpack.c.b16 %v1886, %v1885
        %v1896 = vpack.c.b16 %v1888, %v1887
        %1905 = vmatprep.subr.bf16.mxu0 0
        %1906 = vmatpush1.bf16.msra.mxu0 %v1889
        %1907 = vmatprep.subr.bf16.mxu0 0
        %1908 = vmatpush1.bf16.msra.mxu0 %v1890
        %1909 = vmatprep.subr.bf16.mxu0 0
        %1910 = vmatpush1.bf16.msra.mxu0 %v1891
        %1911 = vmatprep.subr.bf16.mxu0 0
        %1912 = vmatpush1.bf16.msra.mxu0 %v1892
        %1913 = vmatprep.subr.bf16.mxu0 0
        %1914 = vmatpush1.bf16.msra.mxu0 %v1893
        %1915 = vmatprep.subr.bf16.mxu0 0
        %1916 = vmatpush1.bf16.msra.mxu0 %v1894
        %1917 = vmatprep.subr.bf16.mxu0 0
        %1918 = vmatpush1.bf16.msra.mxu0 %v1895
        %1919 = vmatprep.subr.bf16.mxu0 0
        %1920 = vmatpush1.bf16.msra.mxu0 %v1896
        %1921 = vmatprep.subr.bf16.mxu0 0
        %1922 = vmatpush1.bf16.msra.mxu0 0
        %1923 = vmatprep.subr.bf16.mxu0 0
        %1924 = vmatpush1.bf16.msra.mxu0 0
        %1925 = vmatprep.subr.bf16.mxu0 0
        %1926 = vmatpush1.bf16.msra.mxu0 0
        %1927 = vmatprep.subr.bf16.mxu0 0
        %1928 = vmatpush1.bf16.msra.mxu0 0
        %1929 = vmatprep.subr.bf16.mxu0 0
        %1930 = vmatpush1.bf16.msra.mxu0 0
        %1931 = vmatprep.subr.bf16.mxu0 0
        %1932 = vmatpush1.bf16.msra.mxu0 0
        %1933 = vmatprep.subr.bf16.mxu0 0
        %1934 = vmatpush1.bf16.msra.mxu0 0
        %1935 = vmatprep.subr.bf16.mxu0 0
        %1936 = vmatpush1.bf16.msra.mxu0 0
        %1937 = vmatprep.mubr.bf16.mxu0 0
        %1938 = vmatmul.mubr.bf16.gmra.mrb[0].mxu0 %v1855
        %v1939 = vpop.f32.mrb[0].mxu0
        %v1940 = vadd.f32 0.0, %v1939
        %v1941 = vpop.f32.mrb[0].mxu0
        %v1942 = vpop.f32.mrb[0].mxu0
        %v1943 = vadd.f32 0.0, %v1942
        %v1944 = vpop.f32.mrb[0].mxu0
        %1945 = vmatprep.mubr.bf16.mxu0 0
        %1946 = vmatmul.mubr.bf16.gmra.mrb[0].mxu0 %v1856
        %v1947 = vpop.f32.mrb[0].mxu0
        %v1948 = vadd.f32 0.0, %v1947
        %v1949 = vpop.f32.mrb[0].mxu0
        %v1950 = vpop.f32.mrb[0].mxu0
        %v1951 = vadd.f32 0.0, %v1950
        %v1952 = vpop.f32.mrb[0].mxu0
        %1953 = vdwg.mxu0
        %v1954 = vsub.f32 %v1753, %v1940
        %v1955 = vsub.f32 %v1756, %v1943
        %v1956 = vsub.f32 %v1761, %v1948
        %v1957 = vsub.f32 %v1764, %v1951
        %v1958 = vmul.f32 %v1954, %v1954
        %v1959 = vmul.f32 %v1955, %v1955
        %v1960 = vmul.f32 %v1956, %v1956
        %v1961 = vmul.f32 %v1957, %v1957
        %v1962 = vpack.c.bf16 %v1959, %v1958
        %v1963 = vpack.c.bf16 %v1961, %v1960
        %1964 = vmatprep.subr.bf16.mxu0 0
        %1965 = vmatpush1.bf16.msra.mxu0 %v1962
        %1966 = vmatprep.subr.bf16.mxu0 0
        %1967 = vmatpush1.bf16.msra.mxu0 %v1963
        %1968 = vmatprep.subr.bf16.mxu0 0
        %1969 = vmatpush1.bf16.msra.mxu0 0
        %1970 = vmatprep.subr.bf16.mxu0 0
        %1971 = vmatpush1.bf16.msra.mxu0 0
        %1972 = vmatprep.subr.bf16.mxu0 0
        %1973 = vmatpush1.bf16.msra.mxu0 0
        %1974 = vmatprep.subr.bf16.mxu0 0
        %1975 = vmatpush1.bf16.msra.mxu0 0
        %1976 = vmatprep.subr.bf16.mxu0 0
        %1977 = vmatpush1.bf16.msra.mxu0 0
        %1978 = vmatprep.subr.bf16.mxu0 0
        %1979 = vmatpush1.bf16.msra.mxu0 0
        %1980 = vmatprep.subr.bf16.mxu0 0
        %1981 = vmatpush1.bf16.msra.mxu0 0
        %1982 = vmatprep.subr.bf16.mxu0 0
        %1983 = vmatpush1.bf16.msra.mxu0 0
        %1984 = vmatprep.subr.bf16.mxu0 0
        %1985 = vmatpush1.bf16.msra.mxu0 0
        %1986 = vmatprep.subr.bf16.mxu0 0
        %1987 = vmatpush1.bf16.msra.mxu0 0
        %1988 = vmatprep.subr.bf16.mxu0 0
        %1989 = vmatpush1.bf16.msra.mxu0 0
        %1990 = vmatprep.subr.bf16.mxu0 0
        %1991 = vmatpush1.bf16.msra.mxu0 0
        %1992 = vmatprep.subr.bf16.mxu0 0
        %1993 = vmatpush1.bf16.msra.mxu0 0
        %1994 = vmatprep.subr.bf16.mxu0 0
        %1995 = vmatpush1.bf16.msra.mxu0 0
        %1996 = vmatprep.mubr.bf16.mxu0 0
        %1997 = vmatmul.mubr.bf16.gmra.mrb[0].mxu0 %v1801
        %v1998 = vpop.f32.mrb[0].mxu0
        %v1999 = vadd.f32 0.0, %v1998
        %v2000 = vpop.f32.mrb[0].mxu0
        %v2001 = vpop.f32.mrb[0].mxu0
        %v2002 = vadd.f32 0.0, %v2001
        %v2003 = vpop.f32.mrb[0].mxu0
        %2004 = vmatprep.mubr.bf16.mxu0 0
        %2005 = vmatmul.mubr.bf16.gmra.mrb[0].mxu0 %v1804
        %v2006 = vpop.f32.mrb[0].mxu0
        %v2007 = vadd.f32 0.0, %v2006
        %v2008 = vpop.f32.mrb[0].mxu0
        %v2009 = vpop.f32.mrb[0].mxu0
        %v2010 = vadd.f32 0.0, %v2009
        %v2011 = vpop.f32.mrb[0].mxu0
        %2012 = vdwg.mxu0
        %v2013 = vpack.c.bf16 %v2002, %v1999
        %v2014 = vpack.c.bf16 %v2010, %v2007
        %2015 = vmatprep.subr.bf16.mxu0 0
        %2016 = vmatpush1.bf16.msra.mxu0 %v1889
        %2017 = vmatprep.subr.bf16.mxu0 0
        %2018 = vmatpush1.bf16.msra.mxu0 %v1890
        %2019 = vmatprep.subr.bf16.mxu0 0
        %2020 = vmatpush1.bf16.msra.mxu0 %v1891
        %2021 = vmatprep.subr.bf16.mxu0 0
        %2022 = vmatpush1.bf16.msra.mxu0 %v1892
        %2023 = vmatprep.subr.bf16.mxu0 0
        %2024 = vmatpush1.bf16.msra.mxu0 %v1893
        %2025 = vmatprep.subr.bf16.mxu0 0
        %2026 = vmatpush1.bf16.msra.mxu0 %v1894
        %2027 = vmatprep.subr.bf16.mxu0 0
        %2028 = vmatpush1.bf16.msra.mxu0 %v1895
        %2029 = vmatprep.subr.bf16.mxu0 0
        %2030 = vmatpush1.bf16.msra.mxu0 %v1896
        %2031 = vmatprep.subr.bf16.mxu0 0
        %2032 = vmatpush1.bf16.msra.mxu0 0
        %2033 = vmatprep.subr.bf16.mxu0 0
        %2034 = vmatpush1.bf16.msra.mxu0 0
        %2035 = vmatprep.subr.bf16.mxu0 0
        %2036 = vmatpush1.bf16.msra.mxu0 0
        %2037 = vmatprep.subr.bf16.mxu0 0
        %2038 = vmatpush1.bf16.msra.mxu0 0
        %2039 = vmatprep.subr.bf16.mxu0 0
        %2040 = vmatpush1.bf16.msra.mxu0 0
        %2041 = vmatprep.subr.bf16.mxu0 0
        %2042 = vmatpush1.bf16.msra.mxu0 0
        %2043 = vmatprep.subr.bf16.mxu0 0
        %2044 = vmatpush1.bf16.msra.mxu0 0
        %2045 = vmatprep.subr.bf16.mxu0 0
        %2046 = vmatpush1.bf16.msra.mxu0 0
        %2047 = vmatprep.mubr.bf16.mxu0 0
        %2048 = vmatmul.mubr.bf16.gmra.mrb[0].mxu0 %v2013
        %v2049 = vpop.f32.mrb[0].mxu0
        %v2050 = vadd.f32 1e-05, %v2049
        %v2051 = vpop.f32.mrb[0].mxu0
        %v2052 = vpop.f32.mrb[0].mxu0
        %v2053 = vadd.f32 1e-05, %v2052
        %v2054 = vpop.f32.mrb[0].mxu0
        %2055 = vmatprep.mubr.bf16.mxu0 0
        %2056 = vmatmul.mubr.bf16.gmra.mrb[0].mxu0 %v2014
        %v2057 = vpop.f32.mrb[0].mxu0
        %v2058 = vadd.f32 1e-05, %v2057
        %v2059 = vpop.f32.mrb[0].mxu0
        %v2060 = vpop.f32.mrb[0].mxu0
        %v2061 = vadd.f32 1e-05, %v2060
        %v2062 = vpop.f32.mrb[0].mxu0
        %2063 = vdwg.mxu0
        %v2064 = vrsqrt.pop %v2050
        %v2065 = vrsqrt.pop %v2053
        %v2066 = vrsqrt.pop %v2058
        %v2067 = vrsqrt.pop %v2061
        %v2068 = vmul.f32 %v1954, %v2064
        %v2069 = vmul.f32 %v1955, %v2065
        %v2070 = vmul.f32 %v1956, %v2066
        %v2071 = vmul.f32 %v1957, %v2067
        %v2072 = vmax.f32 %v2068, 0.0
        %v2073 = vmax.f32 %v2069, 0.0
        %v2074 = vmax.f32 %v2070, 0.0
        %v2075 = vmax.f32 %v2071, 0.0
        %v2076 = vpack.c.bf16 %v2073, %v2072
        %v2077 = vpack.c.bf16 %v2075, %v2074
        %v2078 = vld [vmem:[#allocation10] sm:$0xf]
        %v2079 = vld [vmem:[#allocation10 + $0x4] sm:$0xf]
        %v2080 = vld [vmem:[#allocation10 + $0x8] sm:$0xf]
        %v2081 = vld [vmem:[#allocation10 + $0xc] sm:$0xf]
        %v2082 = vld [vmem:[#allocation10 + $0x10] sm:$0xf]
        %v2083 = vld [vmem:[#allocation10 + $0x14] sm:$0xf]
        %v2090 = vunpack.c.l.b16 %v2078
        %v2091 = vunpack.c.l.b16 %v2079
        %v2092 = vunpack.c.l.b16 %v2080
        %v2093 = vunpack.c.l.b16 %v2081
        %v2094 = vunpack.c.l.b16 %v2082
        %v2095 = vunpack.c.l.b16 %v2083
        %v2096 = vpack.c.b16 %v2091, %v2090
        %v2097 = vpack.c.b16 %v2093, %v2092
        %v2098 = vpack.c.b16 %v2095, %v2094
        %v2100 = vsel %vm1799, %v2096, 0
        %v2103 = vsel %vm1799, %v2097, 0
        %v2106 = vsel %vm1799, %v2098, 0
        %2108 = vmatprep.subr.bf16.mxu0 0
        %2109 = vmatpush1.bf16.msra.mxu0 %v2076
        %2110 = vmatprep.subr.bf16.mxu0 0
        %2111 = vmatpush1.bf16.msra.mxu0 %v2077
        %2112 = vmatprep.subr.bf16.mxu0 0
        %2113 = vmatpush1.bf16.msra.mxu0 0
        %2114 = vmatprep.subr.bf16.mxu0 0
        %2115 = vmatpush1.bf16.msra.mxu0 0
        %2116 = vmatprep.subr.bf16.mxu0 0
        %2117 = vmatpush1.bf16.msra.mxu0 0
        %2118 = vmatprep.subr.bf16.mxu0 0
        %2119 = vmatpush1.bf16.msra.mxu0 0
        %2120 = vmatprep.subr.bf16.mxu0 0
        %2121 = vmatpush1.bf16.msra.mxu0 0
        %2122 = vmatprep.subr.bf16.mxu0 0
        %2123 = vmatpush1.bf16.msra.mxu0 0
        %2124 = vmatprep.subr.bf16.mxu0 0
        %2125 = vmatpush1.bf16.msra.mxu0 0
        %2126 = vmatprep.subr.bf16.mxu0 0
        %2127 = vmatpush1.bf16.msra.mxu0 0
        %2128 = vmatprep.subr.bf16.mxu0 0
        %2129 = vmatpush1.bf16.msra.mxu0 0
        %2130 = vmatprep.subr.bf16.mxu0 0
        %2131 = vmatpush1.bf16.msra.mxu0 0
        %2132 = vmatprep.subr.bf16.mxu0 0
        %2133 = vmatpush1.bf16.msra.mxu0 0
        %2134 = vmatprep.subr.bf16.mxu0 0
        %2135 = vmatpush1.bf16.msra.mxu0 0
        %2136 = vmatprep.subr.bf16.mxu0 0
        %2137 = vmatpush1.bf16.msra.mxu0 0
        %2138 = vmatprep.subr.bf16.mxu0 0
        %2139 = vmatpush1.bf16.msra.mxu0 0
        %2140 = vmatprep.mubr.bf16.mxu0 0
        %2141 = vmatmul.mubr.bf16.gmra.mrb[0].mxu0 %v2100
        %v2142 = vpop.f32.mrb[0].mxu0
        %v2143 = vadd.f32 0.0, %v2142
        %v2144 = vpop.f32.mrb[0].mxu0
        %v2145 = vpop.f32.mrb[0].mxu0
        %v2146 = vadd.f32 0.0, %v2145
        %v2147 = vpop.f32.mrb[0].mxu0
        %2148 = vmatprep.mubr.bf16.mxu0 0
        %2149 = vmatmul.mubr.bf16.gmra.mrb[0].mxu0 %v2103
        %v2150 = vpop.f32.mrb[0].mxu0
        %v2151 = vadd.f32 0.0, %v2150
        %v2152 = vpop.f32.mrb[0].mxu0
        %v2153 = vpop.f32.mrb[0].mxu0
        %v2154 = vadd.f32 0.0, %v2153
        %v2155 = vpop.f32.mrb[0].mxu0
        %2156 = vmatprep.mubr.bf16.mxu0 0
        %2157 = vmatmul.mubr.bf16.gmra.mrb[0].mxu0 %v2106
        %v2158 = vpop.f32.mrb[0].mxu0
        %v2159 = vadd.f32 0.0, %v2158
        %v2160 = vpop.f32.mrb[0].mxu0
        %v2161 = vpop.f32.mrb[0].mxu0
        %v2162 = vadd.f32 0.0, %v2161
        %v2163 = vpop.f32.mrb[0].mxu0
        %2164 = vdwg.mxu0
        %v2165 = vpack.c.bf16 %v2146, %v2143
        %v2166 = vpack.c.bf16 %v2154, %v2151
        %v2167 = vpack.c.bf16 %v2162, %v2159
        %v2168 = vld [vmem:[#allocation12] sm:$0xf]
        %v2169 = vld [vmem:[#allocation12 + $0x4] sm:$0xf]
        %v2170 = vld [vmem:[#allocation12 + $0x8] sm:$0xf]
        %v2171 = vld [vmem:[#allocation12 + $0xc] sm:$0xf]
        %v2172 = vld [vmem:[#allocation12 + $0x10] sm:$0xf]
        %v2173 = vld [vmem:[#allocation12 + $0x14] sm:$0xf]
        %v2174 = vld [vmem:[#allocation12 + $0x18] sm:$0xf]
        %v2175 = vld [vmem:[#allocation12 + $0x1c] sm:$0xf]
        %v2176 = vld [vmem:[#allocation12 + $0x20] sm:$0xf]
        %v2177 = vld [vmem:[#allocation12 + $0x24] sm:$0xf]
        %v2178 = vld [vmem:[#allocation12 + $0x28] sm:$0xf]
        %v2179 = vld [vmem:[#allocation12 + $0x2c] sm:$0xf]
        %v2180 = vld [vmem:[#allocation12 + $0x30] sm:$0xf]
        %v2181 = vld [vmem:[#allocation12 + $0x34] sm:$0xf]
        %v2182 = vld [vmem:[#allocation12 + $0x38] sm:$0xf]
        %v2183 = vld [vmem:[#allocation12 + $0x3c] sm:$0xf]
        %v2184 = vld [vmem:[#allocation12 + $0x40] sm:$0xf]
        %v2185 = vld [vmem:[#allocation12 + $0x44] sm:$0xf]
        %v2186 = vld [vmem:[#allocation12 + $0x48] sm:$0xf]
        %v2187 = vld [vmem:[#allocation12 + $0x4c] sm:$0xf]
        %v2188 = vld [vmem:[#allocation12 + $0x50] sm:$0xf]
        %v2189 = vld [vmem:[#allocation12 + $0x54] sm:$0xf]
        %v2190 = vld [vmem:[#allocation12 + $0x58] sm:$0xf]
        %v2191 = vld [vmem:[#allocation12 + $0x5c] sm:$0xf]
        %v2192 = vld [vmem:[#allocation12 + $0x60] sm:$0xf]
        %v2193 = vld [vmem:[#allocation12 + $0x64] sm:$0xf]
        %v2194 = vld [vmem:[#allocation12 + $0x68] sm:$0xf]
        %v2195 = vld [vmem:[#allocation12 + $0x6c] sm:$0xf]
        %v2196 = vld [vmem:[#allocation12 + $0x70] sm:$0xf]
        %v2197 = vld [vmem:[#allocation12 + $0x74] sm:$0xf]
        %v2198 = vld [vmem:[#allocation12 + $0x78] sm:$0xf]
        %v2199 = vld [vmem:[#allocation12 + $0x7c] sm:$0xf]
        %v2200 = vld [vmem:[#allocation12 + $0x80] sm:$0xf]
        %v2201 = vld [vmem:[#allocation12 + $0x84] sm:$0xf]
        %v2202 = vld [vmem:[#allocation12 + $0x88] sm:$0xf]
        %v2203 = vld [vmem:[#allocation12 + $0x8c] sm:$0xf]
        %v2204 = vld [vmem:[#allocation12 + $0x90] sm:$0xf]
        %v2205 = vld [vmem:[#allocation12 + $0x94] sm:$0xf]
        %v2206 = vld [vmem:[#allocation12 + $0x98] sm:$0xf]
        %v2207 = vld [vmem:[#allocation12 + $0x9c] sm:$0xf]
        %v2208 = vld [vmem:[#allocation12 + $0xa0] sm:$0xf]
        %v2209 = vld [vmem:[#allocation12 + $0xa4] sm:$0xf]
        %v2210 = vld [vmem:[#allocation12 + $0xa8] sm:$0xf]
        %v2211 = vld [vmem:[#allocation12 + $0xac] sm:$0xf]
        %v2212 = vld [vmem:[#allocation12 + $0xb0] sm:$0xf]
        %v2213 = vld [vmem:[#allocation12 + $0xb4] sm:$0xf]
        %v2214 = vld [vmem:[#allocation12 + $0xb8] sm:$0xf]
        %v2215 = vld [vmem:[#allocation12 + $0xbc] sm:$0xf]
        %v2216 = vld [vmem:[#allocation13] sm:$0x1]
        %v2218 = vlaneseq
        %v2219 = vshrl.u32 %v2218, 7
        %v2220 = vsub.s32 0, %v2219
        %v2221 = vrot.slane %v2216, %v2220
        %v2271 = vunpack.c.l.b16 %v2168
        %v2272 = vunpack.c.l.b16 %v2169
        %v2273 = vunpack.c.l.b16 %v2170
        %v2274 = vunpack.c.l.b16 %v2171
        %v2275 = vunpack.c.l.b16 %v2172
        %v2276 = vunpack.c.l.b16 %v2173
        %v2277 = vunpack.c.l.b16 %v2174
        %v2278 = vunpack.c.l.b16 %v2175
        %v2279 = vunpack.c.l.b16 %v2176
        %v2280 = vunpack.c.l.b16 %v2177
        %v2281 = vunpack.c.l.b16 %v2178
        %v2282 = vunpack.c.l.b16 %v2179
        %v2283 = vunpack.c.l.b16 %v2180
        %v2284 = vunpack.c.l.b16 %v2181
        %v2285 = vunpack.c.l.b16 %v2182
        %v2286 = vunpack.c.l.b16 %v2183
        %v2287 = vunpack.c.l.b16 %v2184
        %v2288 = vunpack.c.l.b16 %v2185
        %v2289 = vunpack.c.l.b16 %v2186
        %v2290 = vunpack.c.l.b16 %v2187
        %v2291 = vunpack.c.l.b16 %v2188
        %v2292 = vunpack.c.l.b16 %v2189
        %v2293 = vunpack.c.l.b16 %v2190
        %v2294 = vunpack.c.l.b16 %v2191
        %v2295 = vunpack.c.l.b16 %v2192
        %v2296 = vunpack.c.l.b16 %v2193
        %v2297 = vunpack.c.l.b16 %v2194
        %v2298 = vunpack.c.l.b16 %v2195
        %v2299 = vunpack.c.l.b16 %v2196
        %v2300 = vunpack.c.l.b16 %v2197
        %v2301 = vunpack.c.l.b16 %v2198
        %v2302 = vunpack.c.l.b16 %v2199
        %v2303 = vunpack.c.l.b16 %v2200
        %v2304 = vunpack.c.l.b16 %v2201
        %v2305 = vunpack.c.l.b16 %v2202
        %v2306 = vunpack.c.l.b16 %v2203
        %v2307 = vunpack.c.l.b16 %v2204
        %v2308 = vunpack.c.l.b16 %v2205
        %v2309 = vunpack.c.l.b16 %v2206
        %v2310 = vunpack.c.l.b16 %v2207
        %v2311 = vunpack.c.l.b16 %v2208
        %v2312 = vunpack.c.l.b16 %v2209
        %v2313 = vunpack.c.l.b16 %v2210
        %v2314 = vunpack.c.l.b16 %v2211
        %v2315 = vunpack.c.l.b16 %v2212
        %v2316 = vunpack.c.l.b16 %v2213
        %v2317 = vunpack.c.l.b16 %v2214
        %v2318 = vunpack.c.l.b16 %v2215
        %v2319 = vpack.c.b16 %v2272, %v2271
        %v2320 = vpack.c.b16 %v2274, %v2273
        %v2321 = vpack.c.b16 %v2276, %v2275
        %v2322 = vpack.c.b16 %v2278, %v2277
        %v2323 = vpack.c.b16 %v2280, %v2279
        %v2324 = vpack.c.b16 %v2282, %v2281
        %v2325 = vpack.c.b16 %v2284, %v2283
        %v2326 = vpack.c.b16 %v2286, %v2285
        %v2327 = vpack.c.b16 %v2288, %v2287
        %v2328 = vpack.c.b16 %v2290, %v2289
        %v2329 = vpack.c.b16 %v2292, %v2291
        %v2330 = vpack.c.b16 %v2294, %v2293
        %v2331 = vpack.c.b16 %v2296, %v2295
        %v2332 = vpack.c.b16 %v2298, %v2297
        %v2333 = vpack.c.b16 %v2300, %v2299
        %v2334 = vpack.c.b16 %v2302, %v2301
        %v2335 = vpack.c.b16 %v2304, %v2303
        %v2336 = vpack.c.b16 %v2306, %v2305
        %v2337 = vpack.c.b16 %v2308, %v2307
        %v2338 = vpack.c.b16 %v2310, %v2309
        %v2339 = vpack.c.b16 %v2312, %v2311
        %v2340 = vpack.c.b16 %v2314, %v2313
        %v2341 = vpack.c.b16 %v2316, %v2315
        %v2342 = vpack.c.b16 %v2318, %v2317
        %2367 = vmatprep.subr.bf16.mxu0 0
        %2368 = vmatpush1.bf16.msra.mxu0 %v2319
        %2369 = vmatprep.subr.bf16.mxu0 0
        %2370 = vmatpush1.bf16.msra.mxu0 %v2320
        %2371 = vmatprep.subr.bf16.mxu0 0
        %2372 = vmatpush1.bf16.msra.mxu0 %v2321
        %2373 = vmatprep.subr.bf16.mxu0 0
        %2374 = vmatpush1.bf16.msra.mxu0 %v2322
        %2375 = vmatprep.subr.bf16.mxu0 0
        %2376 = vmatpush1.bf16.msra.mxu0 %v2323
        %2377 = vmatprep.subr.bf16.mxu0 0
        %2378 = vmatpush1.bf16.msra.mxu0 %v2324
        %2379 = vmatprep.subr.bf16.mxu0 0
        %2380 = vmatpush1.bf16.msra.mxu0 %v2325
        %2381 = vmatprep.subr.bf16.mxu0 0
        %2382 = vmatpush1.bf16.msra.mxu0 %v2326
        %2383 = vmatprep.subr.bf16.mxu0 0
        %2384 = vmatpush1.bf16.msra.mxu0 %v2327
        %2385 = vmatprep.subr.bf16.mxu0 0
        %2386 = vmatpush1.bf16.msra.mxu0 %v2328
        %2387 = vmatprep.subr.bf16.mxu0 0
        %2388 = vmatpush1.bf16.msra.mxu0 %v2329
        %2389 = vmatprep.subr.bf16.mxu0 0
        %2390 = vmatpush1.bf16.msra.mxu0 %v2330
        %2391 = vmatprep.subr.bf16.mxu0 0
        %2392 = vmatpush1.bf16.msra.mxu0 %v2331
        %2393 = vmatprep.subr.bf16.mxu0 0
        %2394 = vmatpush1.bf16.msra.mxu0 %v2332
        %2395 = vmatprep.subr.bf16.mxu0 0
        %2396 = vmatpush1.bf16.msra.mxu0 %v2333
        %2397 = vmatprep.subr.bf16.mxu0 0
        %2398 = vmatpush1.bf16.msra.mxu0 %v2334
        %2399 = vmatprep.mubr.bf16.mxu0 %v2166
        %2400 = vmatmul.mubr.bf16.gmra.mrb[0].mxu0 %v2165
        %v2401 = vpop.f32.mrb[0].mxu0
        %v2402 = vadd.f32 %v2221, %v2401
        %v2403 = vpop.f32.mrb[0].mxu0
        %v2404 = vpop.f32.mrb[0].mxu0
        %v2405 = vadd.f32 %v2221, %v2404
        %v2406 = vpop.f32.mrb[0].mxu0
        %2407 = vdwg.mxu0
        %2408 = vmatprep.subr.bf16.mxu0 0
        %2409 = vmatpush1.bf16.msra.mxu0 %v2335
        %2410 = vmatprep.subr.bf16.mxu0 0
        %2411 = vmatpush1.bf16.msra.mxu0 %v2336
        %2412 = vmatprep.subr.bf16.mxu0 0
        %2413 = vmatpush1.bf16.msra.mxu0 %v2337
        %2414 = vmatprep.subr.bf16.mxu0 0
        %2415 = vmatpush1.bf16.msra.mxu0 %v2338
        %2416 = vmatprep.subr.bf16.mxu0 0
        %2417 = vmatpush1.bf16.msra.mxu0 %v2339
        %2418 = vmatprep.subr.bf16.mxu0 0
        %2419 = vmatpush1.bf16.msra.mxu0 %v2340
        %2420 = vmatprep.subr.bf16.mxu0 0
        %2421 = vmatpush1.bf16.msra.mxu0 %v2341
        %2422 = vmatprep.subr.bf16.mxu0 0
        %2423 = vmatpush1.bf16.msra.mxu0 %v2342
        %2424 = vmatprep.subr.bf16.mxu0 0
        %2425 = vmatpush1.bf16.msra.mxu0 0
        %2426 = vmatprep.subr.bf16.mxu0 0
        %2427 = vmatpush1.bf16.msra.mxu0 0
        %2428 = vmatprep.subr.bf16.mxu0 0
        %2429 = vmatpush1.bf16.msra.mxu0 0
        %2430 = vmatprep.subr.bf16.mxu0 0
        %2431 = vmatpush1.bf16.msra.mxu0 0
        %2432 = vmatprep.subr.bf16.mxu0 0
        %2433 = vmatpush1.bf16.msra.mxu0 0
        %2434 = vmatprep.subr.bf16.mxu0 0
        %2435 = vmatpush1.bf16.msra.mxu0 0
        %2436 = vmatprep.subr.bf16.mxu0 0
        %2437 = vmatpush1.bf16.msra.mxu0 0
        %2438 = vmatprep.subr.bf16.mxu0 0
        %2439 = vmatpush1.bf16.msra.mxu0 0
        %2440 = vmatprep.mubr.bf16.mxu0 0
        %2441 = vmatmul.mubr.bf16.gmra.mrb[0].mxu0 %v2167
        %v2442 = vpop.f32.mrb[0].mxu0
        %v2443 = vadd.f32 %v2402, %v2442
        %v2444 = vpop.f32.mrb[0].mxu0
        %v2445 = vpop.f32.mrb[0].mxu0
        %v2446 = vadd.f32 %v2405, %v2445
        %v2447 = vpop.f32.mrb[0].mxu0
        %2448 = vdwg.mxu0
        %v2449 = vld [vmem:[#allocation15] sm:$0xf]
        %v2450 = vld [vmem:[#allocation15 + $0x4] sm:$0xf]
        %v2451 = vld [vmem:[#allocation16] sm:$0xf]
        %v2452 = vld [vmem:[#allocation16 + $0x4] sm:$0xf]
        %v2453 = vld [vmem:[#allocation16 + $0x8] sm:$0xf]
        %v2454 = vld [vmem:[#allocation16 + $0xc] sm:$0xf]
        %v2455 = vld [vmem:[#allocation16 + $0x10] sm:$0xf]
        %v2456 = vld [vmem:[#allocation16 + $0x14] sm:$0xf]
        %v2457 = vld [vmem:[#allocation16 + $0x18] sm:$0xf]
        %v2458 = vld [vmem:[#allocation16 + $0x1c] sm:$0xf]
        %v2459 = vld [vmem:[#allocation16 + $0x20] sm:$0xf]
        %v2460 = vld [vmem:[#allocation16 + $0x24] sm:$0xf]
        %v2461 = vld [vmem:[#allocation16 + $0x28] sm:$0xf]
        %v2462 = vld [vmem:[#allocation16 + $0x2c] sm:$0xf]
        %v2463 = vld [vmem:[#allocation16 + $0x30] sm:$0xf]
        %v2464 = vld [vmem:[#allocation16 + $0x34] sm:$0xf]
        %v2465 = vld [vmem:[#allocation16 + $0x38] sm:$0xf]
        %v2466 = vld [vmem:[#allocation16 + $0x3c] sm:$0xf]
        %v2467 = vpack.c.bf16 %v2446, %v2443
        %v2470 = vunpack.c.l.b16 %v2449
        %v2471 = vunpack.c.l.b16 %v2450
        %v2472 = vpack.c.b16 %v2471, %v2470
        %v2474 = vsel %vm1713, %v2472, 0
        %2476 = vmatprep.subr.bf16.mxu0 0
        %2477 = vmatpush1.bf16.msra.mxu0 %v2467
        %2478 = vmatprep.subr.bf16.mxu0 0
        %2479 = vmatpush1.bf16.msra.mxu0 0
        %2480 = vmatprep.subr.bf16.mxu0 0
        %2481 = vmatpush1.bf16.msra.mxu0 0
        %2482 = vmatprep.subr.bf16.mxu0 0
        %2483 = vmatpush1.bf16.msra.mxu0 0
        %2484 = vmatprep.subr.bf16.mxu0 0
        %2485 = vmatpush1.bf16.msra.mxu0 0
        %2486 = vmatprep.subr.bf16.mxu0 0
        %2487 = vmatpush1.bf16.msra.mxu0 0
        %2488 = vmatprep.subr.bf16.mxu0 0
        %2489 = vmatpush1.bf16.msra.mxu0 0
        %2490 = vmatprep.subr.bf16.mxu0 0
        %2491 = vmatpush1.bf16.msra.mxu0 0
        %2492 = vmatprep.subr.bf16.mxu0 0
        %2493 = vmatpush1.bf16.msra.mxu0 0
        %2494 = vmatprep.subr.bf16.mxu0 0
        %2495 = vmatpush1.bf16.msra.mxu0 0
        %2496 = vmatprep.subr.bf16.mxu0 0
        %2497 = vmatpush1.bf16.msra.mxu0 0
        %2498 = vmatprep.subr.bf16.mxu0 0
        %2499 = vmatpush1.bf16.msra.mxu0 0
        %2500 = vmatprep.subr.bf16.mxu0 0
        %2501 = vmatpush1.bf16.msra.mxu0 0
        %2502 = vmatprep.subr.bf16.mxu0 0
        %2503 = vmatpush1.bf16.msra.mxu0 0
        %2504 = vmatprep.subr.bf16.mxu0 0
        %2505 = vmatpush1.bf16.msra.mxu0 0
        %2506 = vmatprep.subr.bf16.mxu0 0
        %2507 = vmatpush1.bf16.msra.mxu0 0
        %2508 = vmatprep.mubr.bf16.mxu0 0
        %2509 = vmatmul.mubr.bf16.gmra.mrb[0].mxu0 %v2474
        %v2510 = vpop.f32.mrb[0].mxu0
        %v2511 = vadd.f32 0.0, %v2510
        %v2512 = vpop.f32.mrb[0].mxu0
        %v2513 = vpop.f32.mrb[0].mxu0
        %v2514 = vadd.f32 0.0, %v2513
        %v2515 = vpop.f32.mrb[0].mxu0
        %2516 = vdwg.mxu0
        %v2517 = vpack.c.bf16 %v2514, %v2511
        %v2534 = vunpack.c.l.b16 %v2451
        %v2535 = vunpack.c.l.b16 %v2452
        %v2536 = vunpack.c.l.b16 %v2453
        %v2537 = vunpack.c.l.b16 %v2454
        %v2538 = vunpack.c.l.b16 %v2455
        %v2539 = vunpack.c.l.b16 %v2456
        %v2540 = vunpack.c.l.b16 %v2457
        %v2541 = vunpack.c.l.b16 %v2458
        %v2542 = vunpack.c.l.b16 %v2459
        %v2543 = vunpack.c.l.b16 %v2460
        %v2544 = vunpack.c.l.b16 %v2461
        %v2545 = vunpack.c.l.b16 %v2462
        %v2546 = vunpack.c.l.b16 %v2463
        %v2547 = vunpack.c.l.b16 %v2464
        %v2548 = vunpack.c.l.b16 %v2465
        %v2549 = vunpack.c.l.b16 %v2466
        %v2550 = vpack.c.b16 %v2535, %v2534
        %v2551 = vpack.c.b16 %v2537, %v2536
        %v2552 = vpack.c.b16 %v2539, %v2538
        %v2553 = vpack.c.b16 %v2541, %v2540
        %v2554 = vpack.c.b16 %v2543, %v2542
        %v2555 = vpack.c.b16 %v2545, %v2544
        %v2556 = vpack.c.b16 %v2547, %v2546
        %v2557 = vpack.c.b16 %v2549, %v2548
        %2566 = vmatprep.subr.bf16.mxu0 0
        %2567 = vmatpush1.bf16.msra.mxu0 %v2550
        %2568 = vmatprep.subr.bf16.mxu0 0
        %2569 = vmatpush1.bf16.msra.mxu0 %v2551
        %2570 = vmatprep.subr.bf16.mxu0 0
        %2571 = vmatpush1.bf16.msra.mxu0 %v2552
        %2572 = vmatprep.subr.bf16.mxu0 0
        %2573 = vmatpush1.bf16.msra.mxu0 %v2553
        %2574 = vmatprep.subr.bf16.mxu0 0
        %2575 = vmatpush1.bf16.msra.mxu0 %v2554
        %2576 = vmatprep.subr.bf16.mxu0 0
        %2577 = vmatpush1.bf16.msra.mxu0 %v2555
        %2578 = vmatprep.subr.bf16.mxu0 0
        %2579 = vmatpush1.bf16.msra.mxu0 %v2556
        %2580 = vmatprep.subr.bf16.mxu0 0
        %2581 = vmatpush1.bf16.msra.mxu0 %v2557
        %2582 = vmatprep.subr.bf16.mxu0 0
        %2583 = vmatpush1.bf16.msra.mxu0 0
        %2584 = vmatprep.subr.bf16.mxu0 0
        %2585 = vmatpush1.bf16.msra.mxu0 0
        %2586 = vmatprep.subr.bf16.mxu0 0
        %2587 = vmatpush1.bf16.msra.mxu0 0
        %2588 = vmatprep.subr.bf16.mxu0 0
        %2589 = vmatpush1.bf16.msra.mxu0 0
        %2590 = vmatprep.subr.bf16.mxu0 0
        %2591 = vmatpush1.bf16.msra.mxu0 0
        %2592 = vmatprep.subr.bf16.mxu0 0
        %2593 = vmatpush1.bf16.msra.mxu0 0
        %2594 = vmatprep.subr.bf16.mxu0 0
        %2595 = vmatpush1.bf16.msra.mxu0 0
        %2596 = vmatprep.subr.bf16.mxu0 0
        %2597 = vmatpush1.bf16.msra.mxu0 0
        %2598 = vmatprep.mubr.bf16.mxu0 0
        %2599 = vmatmul.mubr.bf16.gmra.mrb[0].mxu0 %v2517
        %v2600 = vpop.f32.mrb[0].mxu0
        %v2601 = vadd.f32 0.0, %v2600
        %v2602 = vpop.f32.mrb[0].mxu0
        %v2603 = vpop.f32.mrb[0].mxu0
        %v2604 = vadd.f32 0.0, %v2603
        %v2605 = vpop.f32.mrb[0].mxu0
        %2606 = vdwg.mxu0
        %v2607 = vsub.f32 %v2443, %v2601
        %v2608 = vsub.f32 %v2446, %v2604
        %v2609 = vmul.f32 %v2607, %v2607
        %v2610 = vmul.f32 %v2608, %v2608
        %v2611 = vpack.c.bf16 %v2610, %v2609
        %2612 = vmatprep.subr.bf16.mxu0 0
        %2613 = vmatpush1.bf16.msra.mxu0 %v2611
        %2614 = vmatprep.subr.bf16.mxu0 0
        %2615 = vmatpush1.bf16.msra.mxu0 0
        %2616 = vmatprep.subr.bf16.mxu0 0
        %2617 = vmatpush1.bf16.msra.mxu0 0
        %2618 = vmatprep.subr.bf16.mxu0 0
        %2619 = vmatpush1.bf16.msra.mxu0 0
        %2620 = vmatprep.subr.bf16.mxu0 0
        %2621 = vmatpush1.bf16.msra.mxu0 0
        %2622 = vmatprep.subr.bf16.mxu0 0
        %2623 = vmatpush1.bf16.msra.mxu0 0
        %2624 = vmatprep.subr.bf16.mxu0 0
        %2625 = vmatpush1.bf16.msra.mxu0 0
        %2626 = vmatprep.subr.bf16.mxu0 0
        %2627 = vmatpush1.bf16.msra.mxu0 0
        %2628 = vmatprep.subr.bf16.mxu0 0
        %2629 = vmatpush1.bf16.msra.mxu0 0
        %2630 = vmatprep.subr.bf16.mxu0 0
        %2631 = vmatpush1.bf16.msra.mxu0 0
        %2632 = vmatprep.subr.bf16.mxu0 0
        %2633 = vmatpush1.bf16.msra.mxu0 0
        %2634 = vmatprep.subr.bf16.mxu0 0
        %2635 = vmatpush1.bf16.msra.mxu0 0
        %2636 = vmatprep.subr.bf16.mxu0 0
        %2637 = vmatpush1.bf16.msra.mxu0 0
        %2638 = vmatprep.subr.bf16.mxu0 0
        %2639 = vmatpush1.bf16.msra.mxu0 0
        %2640 = vmatprep.subr.bf16.mxu0 0
        %2641 = vmatpush1.bf16.msra.mxu0 0
        %2642 = vmatprep.subr.bf16.mxu0 0
        %2643 = vmatpush1.bf16.msra.mxu0 0
        %2644 = vmatprep.mubr.bf16.mxu0 0
        %2645 = vmatmul.mubr.bf16.gmra.mrb[0].mxu0 %v2474
        %v2646 = vpop.f32.mrb[0].mxu0
        %v2647 = vadd.f32 0.0, %v2646
        %v2648 = vpop.f32.mrb[0].mxu0
        %v2649 = vpop.f32.mrb[0].mxu0
        %v2650 = vadd.f32 0.0, %v2649
        %v2651 = vpop.f32.mrb[0].mxu0
        %2652 = vdwg.mxu0
        %v2653 = vpack.c.bf16 %v2650, %v2647
        %2654 = vmatprep.subr.bf16.mxu0 0
        %2655 = vmatpush1.bf16.msra.mxu0 %v2550
        %2656 = vmatprep.subr.bf16.mxu0 0
        %2657 = vmatpush1.bf16.msra.mxu0 %v2551
        %2658 = vmatprep.subr.bf16.mxu0 0
        %2659 = vmatpush1.bf16.msra.mxu0 %v2552
        %2660 = vmatprep.subr.bf16.mxu0 0
        %2661 = vmatpush1.bf16.msra.mxu0 %v2553
        %2662 = vmatprep.subr.bf16.mxu0 0
        %2663 = vmatpush1.bf16.msra.mxu0 %v2554
        %2664 = vmatprep.subr.bf16.mxu0 0
        %2665 = vmatpush1.bf16.msra.mxu0 %v2555
        %2666 = vmatprep.subr.bf16.mxu0 0
        %2667 = vmatpush1.bf16.msra.mxu0 %v2556
        %2668 = vmatprep.subr.bf16.mxu0 0
        %2669 = vmatpush1.bf16.msra.mxu0 %v2557
        %2670 = vmatprep.subr.bf16.mxu0 0
        %2671 = vmatpush1.bf16.msra.mxu0 0
        %2672 = vmatprep.subr.bf16.mxu0 0
        %2673 = vmatpush1.bf16.msra.mxu0 0
        %2674 = vmatprep.subr.bf16.mxu0 0
        %2675 = vmatpush1.bf16.msra.mxu0 0
        %2676 = vmatprep.subr.bf16.mxu0 0
        %2677 = vmatpush1.bf16.msra.mxu0 0
        %2678 = vmatprep.subr.bf16.mxu0 0
        %2679 = vmatpush1.bf16.msra.mxu0 0
        %2680 = vmatprep.subr.bf16.mxu0 0
        %2681 = vmatpush1.bf16.msra.mxu0 0
        %2682 = vmatprep.subr.bf16.mxu0 0
        %2683 = vmatpush1.bf16.msra.mxu0 0
        %2684 = vmatprep.subr.bf16.mxu0 0
        %2685 = vmatpush1.bf16.msra.mxu0 0
        %2686 = vmatprep.mubr.bf16.mxu0 0
        %2687 = vmatmul.mubr.bf16.gmra.mrb[0].mxu0 %v2653
        %v2688 = vpop.f32.mrb[0].mxu0
        %v2689 = vadd.f32 1e-05, %v2688
        %v2690 = vpop.f32.mrb[0].mxu0
        %v2691 = vpop.f32.mrb[0].mxu0
        %v2692 = vadd.f32 1e-05, %v2691
        %v2693 = vpop.f32.mrb[0].mxu0
        %2694 = vdwg.mxu0
        %v2695 = vrsqrt.pop %v2689
        %v2696 = vrsqrt.pop %v2692
        %v2697 = vmul.f32 %v2607, %v2695
        %v2698 = vmul.f32 %v2608, %v2696
        %v2699 = vmax.f32 %v2697, 0.0
        %v2700 = vmax.f32 %v2698, 0.0
        %v2701 = vpack.c.bf16 %v2700, %v2699
        %v2702 = vld [vmem:[#allocation18] sm:$0xf]
        %v2703 = vld [vmem:[#allocation18 + $0x4] sm:$0xf]
        %v2704 = vld [vmem:[#allocation18 + $0x8] sm:$0xf]
        %v2708 = vunpack.c.l.b16 %v2702
        %v2709 = vunpack.c.l.b16 %v2703
        %v2710 = vunpack.c.l.b16 %v2704
        %v2711 = vpack.c.b16 %v2709, %v2708
        %v2712 = vpack.c.b16 %v2710, %v2710
        %v2714 = vsel %vm1713, %v2711, 0
        %v2717 = vsel %vm1713, %v2712, 0
        %2719 = vmatprep.subr.bf16.mxu0 0
        %2720 = vmatpush1.bf16.msra.mxu0 %v2701
        %2721 = vmatprep.subr.bf16.mxu0 0
        %2722 = vmatpush1.bf16.msra.mxu0 0
        %2723 = vmatprep.subr.bf16.mxu0 0
        %2724 = vmatpush1.bf16.msra.mxu0 0
        %2725 = vmatprep.subr.bf16.mxu0 0
        %2726 = vmatpush1.bf16.msra.mxu0 0
        %2727 = vmatprep.subr.bf16.mxu0 0
        %2728 = vmatpush1.bf16.msra.mxu0 0
        %2729 = vmatprep.subr.bf16.mxu0 0
        %2730 = vmatpush1.bf16.msra.mxu0 0
        %2731 = vmatprep.subr.bf16.mxu0 0
        %2732 = vmatpush1.bf16.msra.mxu0 0
        %2733 = vmatprep.subr.bf16.mxu0 0
        %2734 = vmatpush1.bf16.msra.mxu0 0
        %2735 = vmatprep.subr.bf16.mxu0 0
        %2736 = vmatpush1.bf16.msra.mxu0 0
        %2737 = vmatprep.subr.bf16.mxu0 0
        %2738 = vmatpush1.bf16.msra.mxu0 0
        %2739 = vmatprep.subr.bf16.mxu0 0
        %2740 = vmatpush1.bf16.msra.mxu0 0
        %2741 = vmatprep.subr.bf16.mxu0 0
        %2742 = vmatpush1.bf16.msra.mxu0 0
        %2743 = vmatprep.subr.bf16.mxu0 0
        %2744 = vmatpush1.bf16.msra.mxu0 0
        %2745 = vmatprep.subr.bf16.mxu0 0
        %2746 = vmatpush1.bf16.msra.mxu0 0
        %2747 = vmatprep.subr.bf16.mxu0 0
        %2748 = vmatpush1.bf16.msra.mxu0 0
        %2749 = vmatprep.subr.bf16.mxu0 0
        %2750 = vmatpush1.bf16.msra.mxu0 0
        %2751 = vmatprep.mubr.bf16.mxu0 0
        %2752 = vmatmul.mubr.bf16.gmra.mrb[0].mxu0 %v2714
        %v2753 = vpop.f32.mrb[0].mxu0
        %v2754 = vadd.f32 0.0, %v2753
        %v2755 = vpop.f32.mrb[0].mxu0
        %v2756 = vpop.f32.mrb[0].mxu0
        %v2757 = vadd.f32 0.0, %v2756
        %v2758 = vpop.f32.mrb[0].mxu0
        %2759 = vmatprep.mubr.bf16.mxu0 0
        %2760 = vmatmul.mubr.bf16.gmra.mrb[0].mxu0 %v2717
        %v2761 = vpop.f32.mrb[0].mxu0
        %v2762 = vadd.f32 0.0, %v2761
        %v2763 = vpop.f32.mrb[0].mxu0
        %v2764 = vpop.f32.mrb[0].mxu0
        %v2765 = vpop.f32.mrb[0].mxu0
        %2766 = vdwg.mxu0
        %v2767 = vpack.c.bf16 %v2757, %v2754
        %v2768 = vpack.c.bf16 %v2762, %v2762
        %v2770 = vrot.slane %v2767, 4
        %v2772 = vld [vmem:[#allocation19] sm:$0xf]
        %v2773 = vld [vmem:[#allocation19 + $0x4] sm:$0xf]
        %v2774 = vld [vmem:[#allocation19 + $0x8] sm:$0xf]
        %v2775 = vld [vmem:[#allocation19 + $0xc] sm:$0xf]
        %v2776 = vld [vmem:[#allocation19 + $0x10] sm:$0xf]
        %v2777 = vld [vmem:[#allocation19 + $0x14] sm:$0xf]
        %v2778 = vld [vmem:[#allocation19 + $0x18] sm:$0xf]
        %v2779 = vld [vmem:[#allocation19 + $0x1c] sm:$0xf]
        %v2780 = vld [vmem:[#allocation19 + $0x20] sm:$0xf]
        %v2781 = vld [vmem:[#allocation19 + $0x24] sm:$0xf]
        %v2782 = vld [vmem:[#allocation19 + $0x28] sm:$0xf]
        %v2783 = vld [vmem:[#allocation19 + $0x2c] sm:$0xf]
        %v2784 = vld [vmem:[#allocation19 + $0x30] sm:$0xf]
        %v2785 = vld [vmem:[#allocation19 + $0x34] sm:$0xf]
        %v2786 = vld [vmem:[#allocation19 + $0x38] sm:$0xf]
        %v2787 = vld [vmem:[#allocation19 + $0x3c] sm:$0xf]
        %v2788 = vld [vmem:[#allocation19 + $0x40] sm:$0xf]
        %v2789 = vld [vmem:[#allocation19 + $0x44] sm:$0xf]
        %v2790 = vld [vmem:[#allocation19 + $0x48] sm:$0xf]
        %v2791 = vld [vmem:[#allocation19 + $0x4c] sm:$0xf]
        %v2792 = vld [vmem:[#allocation19 + $0x50] sm:$0xf]
        %v2793 = vld [vmem:[#allocation19 + $0x54] sm:$0xf]
        %v2794 = vld [vmem:[#allocation19 + $0x58] sm:$0xf]
        %v2795 = vld [vmem:[#allocation19 + $0x5c] sm:$0xf]
        %v2796 = vld [vmem:[#allocation19 + $0x60] sm:$0xf]
        %v2797 = vld [vmem:[#allocation19 + $0x64] sm:$0xf]
        %v2798 = vld [vmem:[#allocation19 + $0x68] sm:$0xf]
        %v2799 = vld [vmem:[#allocation19 + $0x6c] sm:$0xf]
        %v2800 = vld [vmem:[#allocation19 + $0x70] sm:$0xf]
        %v2801 = vld [vmem:[#allocation19 + $0x74] sm:$0xf]
        %v2802 = vld [vmem:[#allocation19 + $0x78] sm:$0xf]
        %v2803 = vld [vmem:[#allocation19 + $0x7c] sm:$0xf]
        %v2804 = vld [vmem:[#allocation19 + $0x80] sm:$0xf]
        %v2805 = vld [vmem:[#allocation19 + $0x84] sm:$0xf]
        %v2806 = vld [vmem:[#allocation19 + $0x88] sm:$0xf]
        %v2807 = vld [vmem:[#allocation19 + $0x8c] sm:$0xf]
        %v2808 = vld [vmem:[#allocation19 + $0x90] sm:$0xf]
        %v2809 = vld [vmem:[#allocation19 + $0x94] sm:$0xf]
        %v2810 = vld [vmem:[#allocation19 + $0x98] sm:$0xf]
        %v2811 = vld [vmem:[#allocation19 + $0x9c] sm:$0xf]
        %v2812 = vld [vmem:[#allocation19 + $0xa0] sm:$0xf]
        %v2813 = vld [vmem:[#allocation19 + $0xa4] sm:$0xf]
        %v2814 = vld [vmem:[#allocation19 + $0xa8] sm:$0xf]
        %v2815 = vld [vmem:[#allocation19 + $0xac] sm:$0xf]
        %v2816 = vld [vmem:[#allocation19 + $0xb0] sm:$0xf]
        %v2817 = vld [vmem:[#allocation19 + $0xb4] sm:$0xf]
        %v2818 = vld [vmem:[#allocation19 + $0xb8] sm:$0xf]
        %v2819 = vld [vmem:[#allocation19 + $0xbc] sm:$0xf]
        %v2820 = vld [vmem:[#allocation21] sm:$0x1]
        %v2822 = vlaneseq
        %v2823 = vshrl.u32 %v2822, 7
        %v2824 = vsub.s32 0, %v2823
        %v2825 = vrot.slane %v2820, %v2824
        %v2875 = vunpack.c.l.b16 %v2772
        %v2876 = vunpack.c.l.b16 %v2773
        %v2877 = vunpack.c.l.b16 %v2774
        %v2878 = vunpack.c.l.b16 %v2775
        %v2879 = vunpack.c.l.b16 %v2776
        %v2880 = vunpack.c.l.b16 %v2777
        %v2881 = vunpack.c.l.b16 %v2778
        %v2882 = vunpack.c.l.b16 %v2779
        %v2883 = vunpack.c.l.b16 %v2780
        %v2884 = vunpack.c.l.b16 %v2781
        %v2885 = vunpack.c.l.b16 %v2782
        %v2886 = vunpack.c.l.b16 %v2783
        %v2887 = vunpack.c.l.b16 %v2784
        %v2888 = vunpack.c.l.b16 %v2785
        %v2889 = vunpack.c.l.b16 %v2786
        %v2890 = vunpack.c.l.b16 %v2787
        %v2891 = vunpack.c.l.b16 %v2788
        %v2892 = vunpack.c.l.b16 %v2789
        %v2893 = vunpack.c.l.b16 %v2790
        %v2894 = vunpack.c.l.b16 %v2791
        %v2895 = vunpack.c.l.b16 %v2792
        %v2896 = vunpack.c.l.b16 %v2793
        %v2897 = vunpack.c.l.b16 %v2794
        %v2898 = vunpack.c.l.b16 %v2795
        %v2899 = vunpack.c.l.b16 %v2796
        %v2900 = vunpack.c.l.b16 %v2797
        %v2901 = vunpack.c.l.b16 %v2798
        %v2902 = vunpack.c.l.b16 %v2799
        %v2903 = vunpack.c.l.b16 %v2800
        %v2904 = vunpack.c.l.b16 %v2801
        %v2905 = vunpack.c.l.b16 %v2802
        %v2906 = vunpack.c.l.b16 %v2803
        %v2907 = vunpack.c.l.b16 %v2804
        %v2908 = vunpack.c.l.b16 %v2805
        %v2909 = vunpack.c.l.b16 %v2806
        %v2910 = vunpack.c.l.b16 %v2807
        %v2911 = vunpack.c.l.b16 %v2808
        %v2912 = vunpack.c.l.b16 %v2809
        %v2913 = vunpack.c.l.b16 %v2810
        %v2914 = vunpack.c.l.b16 %v2811
        %v2915 = vunpack.c.l.b16 %v2812
        %v2916 = vunpack.c.l.b16 %v2813
        %v2917 = vunpack.c.l.b16 %v2814
        %v2918 = vunpack.c.l.b16 %v2815
        %v2919 = vunpack.c.l.b16 %v2816
        %v2920 = vunpack.c.l.b16 %v2817
        %v2921 = vunpack.c.l.b16 %v2818
        %v2922 = vunpack.c.l.b16 %v2819
        %v2923 = vpack.c.b16 %v2876, %v2875
        %v2924 = vpack.c.b16 %v2878, %v2877
        %v2925 = vpack.c.b16 %v2880, %v2879
        %v2926 = vpack.c.b16 %v2882, %v2881
        %v2927 = vpack.c.b16 %v2884, %v2883
        %v2928 = vpack.c.b16 %v2886, %v2885
        %v2929 = vpack.c.b16 %v2888, %v2887
        %v2930 = vpack.c.b16 %v2890, %v2889
        %v2931 = vpack.c.b16 %v2892, %v2891
        %v2932 = vpack.c.b16 %v2894, %v2893
        %v2933 = vpack.c.b16 %v2896, %v2895
        %v2934 = vpack.c.b16 %v2898, %v2897
        %v2935 = vpack.c.b16 %v2900, %v2899
        %v2936 = vpack.c.b16 %v2902, %v2901
        %v2937 = vpack.c.b16 %v2904, %v2903
        %v2938 = vpack.c.b16 %v2906, %v2905
        %v2939 = vpack.c.b16 %v2908, %v2907
        %v2940 = vpack.c.b16 %v2910, %v2909
        %v2941 = vpack.c.b16 %v2912, %v2911
        %v2942 = vpack.c.b16 %v2914, %v2913
        %v2943 = vpack.c.b16 %v2916, %v2915
        %v2944 = vpack.c.b16 %v2918, %v2917
        %v2945 = vpack.c.b16 %v2920, %v2919
        %v2946 = vpack.c.b16 %v2922, %v2921
        %2971 = vmatprep.subr.bf16.mxu0 0
        %2972 = vmatpush1.bf16.msra.mxu0 %v2923
        %2973 = vmatprep.subr.bf16.mxu0 0
        %2974 = vmatpush1.bf16.msra.mxu0 %v2924
        %2975 = vmatprep.subr.bf16.mxu0 0
        %2976 = vmatpush1.bf16.msra.mxu0 %v2925
        %2977 = vmatprep.subr.bf16.mxu0 0
        %2978 = vmatpush1.bf16.msra.mxu0 %v2926
        %2979 = vmatprep.subr.bf16.mxu0 0
        %2980 = vmatpush1.bf16.msra.mxu0 %v2927
        %2981 = vmatprep.subr.bf16.mxu0 0
        %2982 = vmatpush1.bf16.msra.mxu0 %v2928
        %2983 = vmatprep.subr.bf16.mxu0 0
        %2984 = vmatpush1.bf16.msra.mxu0 %v2929
        %2985 = vmatprep.subr.bf16.mxu0 0
        %2986 = vmatpush1.bf16.msra.mxu0 %v2930
        %2987 = vmatprep.subr.bf16.mxu0 0
        %2988 = vmatpush1.bf16.msra.mxu0 %v2931
        %2989 = vmatprep.subr.bf16.mxu0 0
        %2990 = vmatpush1.bf16.msra.mxu0 %v2932
        %2991 = vmatprep.subr.bf16.mxu0 0
        %2992 = vmatpush1.bf16.msra.mxu0 %v2933
        %2993 = vmatprep.subr.bf16.mxu0 0
        %2994 = vmatpush1.bf16.msra.mxu0 %v2934
        %2995 = vmatprep.subr.bf16.mxu0 0
        %2996 = vmatpush1.bf16.msra.mxu0 %v2935
        %2997 = vmatprep.subr.bf16.mxu0 0
        %2998 = vmatpush1.bf16.msra.mxu0 %v2936
        %2999 = vmatprep.subr.bf16.mxu0 0
        %3000 = vmatpush1.bf16.msra.mxu0 %v2937
        %3001 = vmatprep.subr.bf16.mxu0 0
        %3002 = vmatpush1.bf16.msra.mxu0 %v2938
        %3003 = vmatprep.mubr.bf16.mxu0 %v2770
        %3004 = vmatmul.mubr.bf16.gmra.mrb[0].mxu0 %v2767
        %v3005 = vpop.f32.mrb[0].mxu0
        %v3006 = vadd.f32 %v2825, %v3005
        %v3007 = vpop.f32.mrb[0].mxu0
        %v3008 = vpop.f32.mrb[0].mxu0
        %v3009 = vpop.f32.mrb[0].mxu0
        %3010 = vdwg.mxu0
        %3011 = vmatprep.subr.bf16.mxu0 0
        %3012 = vmatpush1.bf16.msra.mxu0 %v2939
        %3013 = vmatprep.subr.bf16.mxu0 0
        %3014 = vmatpush1.bf16.msra.mxu0 %v2940
        %3015 = vmatprep.subr.bf16.mxu0 0
        %3016 = vmatpush1.bf16.msra.mxu0 %v2941
        %3017 = vmatprep.subr.bf16.mxu0 0
        %3018 = vmatpush1.bf16.msra.mxu0 %v2942
        %3019 = vmatprep.subr.bf16.mxu0 0
        %3020 = vmatpush1.bf16.msra.mxu0 %v2943
        %3021 = vmatprep.subr.bf16.mxu0 0
        %3022 = vmatpush1.bf16.msra.mxu0 %v2944
        %3023 = vmatprep.subr.bf16.mxu0 0
        %3024 = vmatpush1.bf16.msra.mxu0 %v2945
        %3025 = vmatprep.subr.bf16.mxu0 0
        %3026 = vmatpush1.bf16.msra.mxu0 %v2946
        %3027 = vmatprep.subr.bf16.mxu0 0
        %3028 = vmatpush1.bf16.msra.mxu0 0
        %3029 = vmatprep.subr.bf16.mxu0 0
        %3030 = vmatpush1.bf16.msra.mxu0 0
        %3031 = vmatprep.subr.bf16.mxu0 0
        %3032 = vmatpush1.bf16.msra.mxu0 0
        %3033 = vmatprep.subr.bf16.mxu0 0
        %3034 = vmatpush1.bf16.msra.mxu0 0
        %3035 = vmatprep.subr.bf16.mxu0 0
        %3036 = vmatpush1.bf16.msra.mxu0 0
        %3037 = vmatprep.subr.bf16.mxu0 0
        %3038 = vmatpush1.bf16.msra.mxu0 0
        %3039 = vmatprep.subr.bf16.mxu0 0
        %3040 = vmatpush1.bf16.msra.mxu0 0
        %3041 = vmatprep.subr.bf16.mxu0 0
        %3042 = vmatpush1.bf16.msra.mxu0 0
        %3043 = vmatprep.mubr.bf16.mxu0 0
        %3044 = vmatmul.mubr.bf16.gmra.mrb[0].mxu0 %v2768
        %v3045 = vpop.f32.mrb[0].mxu0
        %v3046 = vadd.f32 %v3006, %v3045
        %v3047 = vpop.f32.mrb[0].mxu0
        %v3048 = vpop.f32.mrb[0].mxu0
        %v3049 = vpop.f32.mrb[0].mxu0
        %3050 = vdwg.mxu0
        %v3051 = vld [vmem:[#allocation22] sm:$0xf]
        %v3052 = vld [vmem:[#allocation24] sm:$0xf]
        %v3053 = vld [vmem:[#allocation24 + $0x4] sm:$0xf]
        %v3054 = vld [vmem:[#allocation24 + $0x8] sm:$0xf]
        %v3055 = vld [vmem:[#allocation24 + $0xc] sm:$0xf]
        %v3056 = vld [vmem:[#allocation24 + $0x10] sm:$0xf]
        %v3057 = vld [vmem:[#allocation24 + $0x14] sm:$0xf]
        %v3058 = vld [vmem:[#allocation24 + $0x18] sm:$0xf]
        %v3059 = vld [vmem:[#allocation24 + $0x1c] sm:$0xf]
        %v3060 = vld [vmem:[#allocation24 + $0x20] sm:$0xf]
        %v3061 = vld [vmem:[#allocation24 + $0x24] sm:$0xf]
        %v3062 = vld [vmem:[#allocation24 + $0x28] sm:$0xf]
        %v3063 = vld [vmem:[#allocation24 + $0x2c] sm:$0xf]
        %v3064 = vld [vmem:[#allocation24 + $0x30] sm:$0xf]
        %v3065 = vld [vmem:[#allocation24 + $0x34] sm:$0xf]
        %v3066 = vld [vmem:[#allocation24 + $0x38] sm:$0xf]
        %v3067 = vld [vmem:[#allocation24 + $0x3c] sm:$0xf]
        %v3068 = vpack.c.bf16 %v3046, %v3046
        %vm3069 = vcmask 64512
        %v3071 = vsel %vm3069, %v3051, 0
        %vm3073 = vcmask 1043456
        %v3075 = vsel %vm3073, %v3068, 0
        %3077 = vmatprep.subr.bf16.mxu0 0
        %3078 = vmatpush1.bf16.msra.mxu0 %v3075
        %3079 = vmatprep.subr.bf16.mxu0 0
        %3080 = vmatpush1.bf16.msra.mxu0 0
        %3081 = vmatprep.subr.bf16.mxu0 0
        %3082 = vmatpush1.bf16.msra.mxu0 0
        %3083 = vmatprep.subr.bf16.mxu0 0
        %3084 = vmatpush1.bf16.msra.mxu0 0
        %3085 = vmatprep.subr.bf16.mxu0 0
        %3086 = vmatpush1.bf16.msra.mxu0 0
        %3087 = vmatprep.subr.bf16.mxu0 0
        %3088 = vmatpush1.bf16.msra.mxu0 0
        %3089 = vmatprep.subr.bf16.mxu0 0
        %3090 = vmatpush1.bf16.msra.mxu0 0
        %3091 = vmatprep.subr.bf16.mxu0 0
        %3092 = vmatpush1.bf16.msra.mxu0 0
        %3093 = vmatprep.subr.bf16.mxu0 0
        %3094 = vmatpush1.bf16.msra.mxu0 0
        %3095 = vmatprep.subr.bf16.mxu0 0
        %3096 = vmatpush1.bf16.msra.mxu0 0
        %3097 = vmatprep.subr.bf16.mxu0 0
        %3098 = vmatpush1.bf16.msra.mxu0 0
        %3099 = vmatprep.subr.bf16.mxu0 0
        %3100 = vmatpush1.bf16.msra.mxu0 0
        %3101 = vmatprep.subr.bf16.mxu0 0
        %3102 = vmatpush1.bf16.msra.mxu0 0
        %3103 = vmatprep.subr.bf16.mxu0 0
        %3104 = vmatpush1.bf16.msra.mxu0 0
        %3105 = vmatprep.subr.bf16.mxu0 0
        %3106 = vmatpush1.bf16.msra.mxu0 0
        %3107 = vmatprep.subr.bf16.mxu0 0
        %3108 = vmatpush1.bf16.msra.mxu0 0
        %3109 = vmatprep.mubr.bf16.mxu0 0
        %3110 = vmatmul.mubr.bf16.gmra.mrb[0].mxu0 %v3071
        %v3111 = vpop.f32.mrb[0].mxu0
        %v3112 = vadd.f32 0.0, %v3111
        %v3113 = vpop.f32.mrb[0].mxu0
        %v3114 = vpop.f32.mrb[0].mxu0
        %v3115 = vpop.f32.mrb[0].mxu0
        %3116 = vdwg.mxu0
        %v3117 = vpack.c.bf16 %v3112, %v3112
        %v3134 = vunpack.c.l.b16 %v3052
        %v3135 = vunpack.c.l.b16 %v3053
        %v3136 = vunpack.c.l.b16 %v3054
        %v3137 = vunpack.c.l.b16 %v3055
        %v3138 = vunpack.c.l.b16 %v3056
        %v3139 = vunpack.c.l.b16 %v3057
        %v3140 = vunpack.c.l.b16 %v3058
        %v3141 = vunpack.c.l.b16 %v3059
        %v3142 = vunpack.c.l.b16 %v3060
        %v3143 = vunpack.c.l.b16 %v3061
        %v3144 = vunpack.c.l.b16 %v3062
        %v3145 = vunpack.c.l.b16 %v3063
        %v3146 = vunpack.c.l.b16 %v3064
        %v3147 = vunpack.c.l.b16 %v3065
        %v3148 = vunpack.c.l.b16 %v3066
        %v3149 = vunpack.c.l.b16 %v3067
        %v3150 = vpack.c.b16 %v3135, %v3134
        %v3151 = vpack.c.b16 %v3137, %v3136
        %v3152 = vpack.c.b16 %v3139, %v3138
        %v3153 = vpack.c.b16 %v3141, %v3140
        %v3154 = vpack.c.b16 %v3143, %v3142
        %v3155 = vpack.c.b16 %v3145, %v3144
        %v3156 = vpack.c.b16 %v3147, %v3146
        %v3157 = vpack.c.b16 %v3149, %v3148
        %3166 = vmatprep.subr.bf16.mxu0 0
        %3167 = vmatpush1.bf16.msra.mxu0 %v3150
        %3168 = vmatprep.subr.bf16.mxu0 0
        %3169 = vmatpush1.bf16.msra.mxu0 %v3151
        %3170 = vmatprep.subr.bf16.mxu0 0
        %3171 = vmatpush1.bf16.msra.mxu0 %v3152
        %3172 = vmatprep.subr.bf16.mxu0 0
        %3173 = vmatpush1.bf16.msra.mxu0 %v3153
        %3174 = vmatprep.subr.bf16.mxu0 0
        %3175 = vmatpush1.bf16.msra.mxu0 %v3154
        %3176 = vmatprep.subr.bf16.mxu0 0
        %3177 = vmatpush1.bf16.msra.mxu0 %v3155
        %3178 = vmatprep.subr.bf16.mxu0 0
        %3179 = vmatpush1.bf16.msra.mxu0 %v3156
        %3180 = vmatprep.subr.bf16.mxu0 0
        %3181 = vmatpush1.bf16.msra.mxu0 %v3157
        %3182 = vmatprep.subr.bf16.mxu0 0
        %3183 = vmatpush1.bf16.msra.mxu0 0
        %3184 = vmatprep.subr.bf16.mxu0 0
        %3185 = vmatpush1.bf16.msra.mxu0 0
        %3186 = vmatprep.subr.bf16.mxu0 0
        %3187 = vmatpush1.bf16.msra.mxu0 0
        %3188 = vmatprep.subr.bf16.mxu0 0
        %3189 = vmatpush1.bf16.msra.mxu0 0
        %3190 = vmatprep.subr.bf16.mxu0 0
        %3191 = vmatpush1.bf16.msra.mxu0 0
        %3192 = vmatprep.subr.bf16.mxu0 0
        %3193 = vmatpush1.bf16.msra.mxu0 0
        %3194 = vmatprep.subr.bf16.mxu0 0
        %3195 = vmatpush1.bf16.msra.mxu0 0
        %3196 = vmatprep.subr.bf16.mxu0 0
        %3197 = vmatpush1.bf16.msra.mxu0 0
        %3198 = vmatprep.mubr.bf16.mxu0 0
        %3199 = vmatmul.mubr.bf16.gmra.mrb[0].mxu0 %v3117
        %v3200 = vpop.f32.mrb[0].mxu0
        %v3201 = vadd.f32 0.0, %v3200
        %v3202 = vpop.f32.mrb[0].mxu0
        %v3203 = vpop.f32.mrb[0].mxu0
        %v3204 = vpop.f32.mrb[0].mxu0
        %3205 = vdwg.mxu0
        %v3206 = vsub.f32 %v3046, %v3201
        %v3207 = vmul.f32 %v3206, %v3206
        %v3208 = vpack.c.bf16 %v3207, %v3207
        %v3210 = vsel %vm3073, %v3208, 0
        %3212 = vmatprep.subr.bf16.mxu0 0
        %3213 = vmatpush1.bf16.msra.mxu0 %v3210
        %3214 = vmatprep.subr.bf16.mxu0 0
        %3215 = vmatpush1.bf16.msra.mxu0 0
        %3216 = vmatprep.subr.bf16.mxu0 0
        %3217 = vmatpush1.bf16.msra.mxu0 0
        %3218 = vmatprep.subr.bf16.mxu0 0
        %3219 = vmatpush1.bf16.msra.mxu0 0
        %3220 = vmatprep.subr.bf16.mxu0 0
        %3221 = vmatpush1.bf16.msra.mxu0 0
        %3222 = vmatprep.subr.bf16.mxu0 0
        %3223 = vmatpush1.bf16.msra.mxu0 0
        %3224 = vmatprep.subr.bf16.mxu0 0
        %3225 = vmatpush1.bf16.msra.mxu0 0
        %3226 = vmatprep.subr.bf16.mxu0 0
        %3227 = vmatpush1.bf16.msra.mxu0 0
        %3228 = vmatprep.subr.bf16.mxu0 0
        %3229 = vmatpush1.bf16.msra.mxu0 0
        %3230 = vmatprep.subr.bf16.mxu0 0
        %3231 = vmatpush1.bf16.msra.mxu0 0
        %3232 = vmatprep.subr.bf16.mxu0 0
        %3233 = vmatpush1.bf16.msra.mxu0 0
        %3234 = vmatprep.subr.bf16.mxu0 0
        %3235 = vmatpush1.bf16.msra.mxu0 0
        %3236 = vmatprep.subr.bf16.mxu0 0
        %3237 = vmatpush1.bf16.msra.mxu0 0
        %3238 = vmatprep.subr.bf16.mxu0 0
        %3239 = vmatpush1.bf16.msra.mxu0 0
        %3240 = vmatprep.subr.bf16.mxu0 0
        %3241 = vmatpush1.bf16.msra.mxu0 0
        %3242 = vmatprep.subr.bf16.mxu0 0
        %3243 = vmatpush1.bf16.msra.mxu0 0
        %3244 = vmatprep.mubr.bf16.mxu0 0
        %3245 = vmatmul.mubr.bf16.gmra.mrb[0].mxu0 %v3071
        %v3246 = vpop.f32.mrb[0].mxu0
        %v3247 = vadd.f32 0.0, %v3246
        %v3248 = vpop.f32.mrb[0].mxu0
        %v3249 = vpop.f32.mrb[0].mxu0
        %v3250 = vpop.f32.mrb[0].mxu0
        %3251 = vdwg.mxu0
        %v3252 = vpack.c.bf16 %v3247, %v3247
        %3253 = vmatprep.subr.bf16.mxu0 0
        %3254 = vmatpush1.bf16.msra.mxu0 %v3150
        %3255 = vmatprep.subr.bf16.mxu0 0
        %3256 = vmatpush1.bf16.msra.mxu0 %v3151
        %3257 = vmatprep.subr.bf16.mxu0 0
        %3258 = vmatpush1.bf16.msra.mxu0 %v3152
        %3259 = vmatprep.subr.bf16.mxu0 0
        %3260 = vmatpush1.bf16.msra.mxu0 %v3153
        %3261 = vmatprep.subr.bf16.mxu0 0
        %3262 = vmatpush1.bf16.msra.mxu0 %v3154
        %3263 = vmatprep.subr.bf16.mxu0 0
        %3264 = vmatpush1.bf16.msra.mxu0 %v3155
        %3265 = vmatprep.subr.bf16.mxu0 0
        %3266 = vmatpush1.bf16.msra.mxu0 %v3156
        %3267 = vmatprep.subr.bf16.mxu0 0
        %3268 = vmatpush1.bf16.msra.mxu0 %v3157
        %3269 = vmatprep.subr.bf16.mxu0 0
        %3270 = vmatpush1.bf16.msra.mxu0 0
        %3271 = vmatprep.subr.bf16.mxu0 0
        %3272 = vmatpush1.bf16.msra.mxu0 0
        %3273 = vmatprep.subr.bf16.mxu0 0
        %3274 = vmatpush1.bf16.msra.mxu0 0
        %3275 = vmatprep.subr.bf16.mxu0 0
        %3276 = vmatpush1.bf16.msra.mxu0 0
        %3277 = vmatprep.subr.bf16.mxu0 0
        %3278 = vmatpush1.bf16.msra.mxu0 0
        %3279 = vmatprep.subr.bf16.mxu0 0
        %3280 = vmatpush1.bf16.msra.mxu0 0
        %3281 = vmatprep.subr.bf16.mxu0 0
        %3282 = vmatpush1.bf16.msra.mxu0 0
        %3283 = vmatprep.subr.bf16.mxu0 0
        %3284 = vmatpush1.bf16.msra.mxu0 0
        %3285 = vmatprep.mubr.bf16.mxu0 0
        %3286 = vmatmul.mubr.bf16.gmra.mrb[0].mxu0 %v3252
        %v3287 = vpop.f32.mrb[0].mxu0
        %v3288 = vadd.f32 1e-05, %v3287
        %v3289 = vpop.f32.mrb[0].mxu0
        %v3290 = vpop.f32.mrb[0].mxu0
        %v3291 = vpop.f32.mrb[0].mxu0
        %3292 = vdwg.mxu0
        %v3293 = vrsqrt.pop %v3288
        %v3294 = vmul.f32 %v3206, %v3293
        %v3295 = vmax.f32 %v3294, 0.0
        %v3296 = vpack.c.bf16 %v3295, %v3295
        %v3297 = vld [vmem:[%s33] sm:$0xf]
        %v3298 = vld [vmem:[%s33 + $0x4] sm:$0xf]
        %v3301 = vunpack.c.l.b16 %v3297
        %v3302 = vunpack.c.l.b16 %v3298
        %v3303 = vpack.c.b16 %v3302, %v3301
        %v3305 = vsel %vm3069, %v3303, 0
        %v3308 = vsel %vm3073, %v3296, 0
        %3310 = vmatprep.subr.bf16.mxu0 0
        %3311 = vmatpush1.bf16.msra.mxu0 %v3308
        %3312 = vmatprep.subr.bf16.mxu0 0
        %3313 = vmatpush1.bf16.msra.mxu0 0
        %3314 = vmatprep.subr.bf16.mxu0 0
        %3315 = vmatpush1.bf16.msra.mxu0 0
        %3316 = vmatprep.subr.bf16.mxu0 0
        %3317 = vmatpush1.bf16.msra.mxu0 0
        %3318 = vmatprep.subr.bf16.mxu0 0
        %3319 = vmatpush1.bf16.msra.mxu0 0
        %3320 = vmatprep.subr.bf16.mxu0 0
        %3321 = vmatpush1.bf16.msra.mxu0 0
        %3322 = vmatprep.subr.bf16.mxu0 0
        %3323 = vmatpush1.bf16.msra.mxu0 0
        %3324 = vmatprep.subr.bf16.mxu0 0
        %3325 = vmatpush1.bf16.msra.mxu0 0
        %3326 = vmatprep.subr.bf16.mxu0 0
        %3327 = vmatpush1.bf16.msra.mxu0 0
        %3328 = vmatprep.subr.bf16.mxu0 0
        %3329 = vmatpush1.bf16.msra.mxu0 0
        %3330 = vmatprep.subr.bf16.mxu0 0
        %3331 = vmatpush1.bf16.msra.mxu0 0
        %3332 = vmatprep.subr.bf16.mxu0 0
        %3333 = vmatpush1.bf16.msra.mxu0 0
        %3334 = vmatprep.subr.bf16.mxu0 0
        %3335 = vmatpush1.bf16.msra.mxu0 0
        %3336 = vmatprep.subr.bf16.mxu0 0
        %3337 = vmatpush1.bf16.msra.mxu0 0
        %3338 = vmatprep.subr.bf16.mxu0 0
        %3339 = vmatpush1.bf16.msra.mxu0 0
        %3340 = vmatprep.subr.bf16.mxu0 0
        %3341 = vmatpush1.bf16.msra.mxu0 0
        %3342 = vmatprep.mubr.bf16.mxu0 0
        %3343 = vmatmul.mubr.bf16.gmra.mrb[0].mxu0 %v3305
        %v3344 = vpop.f32.mrb[0].mxu0
        %v3345 = vadd.f32 0.0, %v3344
        %v3346 = vpop.f32.mrb[0].mxu0
        %v3347 = vpop.f32.mrb[0].mxu0
        %v3348 = vadd.f32 0.0, %v3347
        %v3349 = vpop.f32.mrb[0].mxu0
        %3350 = vdwg.mxu0
        %v3351 = vpack.c.bf16 %v3348, %v3345
        %v3353 = vrot.slane %v3351, 4
        %v3355 = vld [vmem:[#allocation25] sm:$0xf]
        %v3356 = vld [vmem:[#allocation25 + $0x4] sm:$0xf]
        %v3357 = vld [vmem:[#allocation25 + $0x8] sm:$0xf]
        %v3358 = vld [vmem:[#allocation25 + $0xc] sm:$0xf]
        %v3359 = vld [vmem:[#allocation25 + $0x10] sm:$0xf]
        %v3360 = vld [vmem:[#allocation25 + $0x14] sm:$0xf]
        %v3361 = vld [vmem:[#allocation25 + $0x18] sm:$0xf]
        %v3362 = vld [vmem:[#allocation25 + $0x1c] sm:$0xf]
        %v3363 = vld [vmem:[#allocation25 + $0x20] sm:$0xf]
        %v3364 = vld [vmem:[#allocation25 + $0x24] sm:$0xf]
        %v3365 = vld [vmem:[#allocation25 + $0x28] sm:$0xf]
        %v3366 = vld [vmem:[#allocation25 + $0x2c] sm:$0xf]
        %v3367 = vld [vmem:[#allocation25 + $0x30] sm:$0xf]
        %v3368 = vld [vmem:[#allocation25 + $0x34] sm:$0xf]
        %v3369 = vld [vmem:[#allocation25 + $0x38] sm:$0xf]
        %v3370 = vld [vmem:[#allocation25 + $0x3c] sm:$0xf]
        %v3371 = vld [vmem:[#allocation25 + $0x40] sm:$0xf]
        %v3372 = vld [vmem:[#allocation25 + $0x44] sm:$0xf]
        %v3373 = vld [vmem:[#allocation25 + $0x48] sm:$0xf]
        %v3374 = vld [vmem:[#allocation25 + $0x4c] sm:$0xf]
        %v3375 = vld [vmem:[#allocation25 + $0x50] sm:$0xf]
        %v3376 = vld [vmem:[#allocation25 + $0x54] sm:$0xf]
        %v3377 = vld [vmem:[#allocation25 + $0x58] sm:$0xf]
        %v3378 = vld [vmem:[#allocation25 + $0x5c] sm:$0xf]
        %v3379 = vld [vmem:[#allocation25 + $0x60] sm:$0xf]
        %v3380 = vld [vmem:[#allocation25 + $0x64] sm:$0xf]
        %v3381 = vld [vmem:[#allocation25 + $0x68] sm:$0xf]
        %v3382 = vld [vmem:[#allocation25 + $0x6c] sm:$0xf]
        %v3383 = vld [vmem:[#allocation25 + $0x70] sm:$0xf]
        %v3384 = vld [vmem:[#allocation25 + $0x74] sm:$0xf]
        %v3385 = vld [vmem:[#allocation25 + $0x78] sm:$0xf]
        %v3386 = vld [vmem:[#allocation25 + $0x7c] sm:$0xf]
        %v3387 = vld [vmem:[#allocation25 + $0x80] sm:$0xf]
        %v3388 = vld [vmem:[#allocation25 + $0x84] sm:$0xf]
        %v3389 = vld [vmem:[#allocation25 + $0x88] sm:$0xf]
        %v3390 = vld [vmem:[#allocation25 + $0x8c] sm:$0xf]
        %v3391 = vld [vmem:[#allocation25 + $0x90] sm:$0xf]
        %v3392 = vld [vmem:[#allocation25 + $0x94] sm:$0xf]
        %v3393 = vld [vmem:[#allocation25 + $0x98] sm:$0xf]
        %v3394 = vld [vmem:[#allocation25 + $0x9c] sm:$0xf]
        %v3395 = vld [vmem:[#allocation25 + $0xa0] sm:$0xf]
        %v3396 = vld [vmem:[#allocation25 + $0xa4] sm:$0xf]
        %v3397 = vld [vmem:[#allocation25 + $0xa8] sm:$0xf]
        %v3398 = vld [vmem:[#allocation25 + $0xac] sm:$0xf]
        %v3399 = vld [vmem:[#allocation25 + $0xb0] sm:$0xf]
        %v3400 = vld [vmem:[#allocation25 + $0xb4] sm:$0xf]
        %v3401 = vld [vmem:[#allocation25 + $0xb8] sm:$0xf]
        %v3402 = vld [vmem:[#allocation25 + $0xbc] sm:$0xf]
        %v3403 = vld [vmem:[#allocation27] sm:$0x1]
        %v3405 = vlaneseq
        %v3406 = vshrl.u32 %v3405, 7
        %v3407 = vsub.s32 0, %v3406
        %v3408 = vrot.slane %v3403, %v3407
        %v3458 = vunpack.c.l.b16 %v3355
        %v3459 = vunpack.c.l.b16 %v3356
        %v3460 = vunpack.c.l.b16 %v3357
        %v3461 = vunpack.c.l.b16 %v3358
        %v3462 = vunpack.c.l.b16 %v3359
        %v3463 = vunpack.c.l.b16 %v3360
        %v3464 = vunpack.c.l.b16 %v3361
        %v3465 = vunpack.c.l.b16 %v3362
        %v3466 = vunpack.c.l.b16 %v3363
        %v3467 = vunpack.c.l.b16 %v3364
        %v3468 = vunpack.c.l.b16 %v3365
        %v3469 = vunpack.c.l.b16 %v3366
        %v3470 = vunpack.c.l.b16 %v3367
        %v3471 = vunpack.c.l.b16 %v3368
        %v3472 = vunpack.c.l.b16 %v3369
        %v3473 = vunpack.c.l.b16 %v3370
        %v3474 = vunpack.c.l.b16 %v3371
        %v3475 = vunpack.c.l.b16 %v3372
        %v3476 = vunpack.c.l.b16 %v3373
        %v3477 = vunpack.c.l.b16 %v3374
        %v3478 = vunpack.c.l.b16 %v3375
        %v3479 = vunpack.c.l.b16 %v3376
        %v3480 = vunpack.c.l.b16 %v3377
        %v3481 = vunpack.c.l.b16 %v3378
        %v3482 = vunpack.c.l.b16 %v3379
        %v3483 = vunpack.c.l.b16 %v3380
        %v3484 = vunpack.c.l.b16 %v3381
        %v3485 = vunpack.c.l.b16 %v3382
        %v3486 = vunpack.c.l.b16 %v3383
        %v3487 = vunpack.c.l.b16 %v3384
        %v3488 = vunpack.c.l.b16 %v3385
        %v3489 = vunpack.c.l.b16 %v3386
        %v3490 = vunpack.c.l.b16 %v3387
        %v3491 = vunpack.c.l.b16 %v3388
        %v3492 = vunpack.c.l.b16 %v3389
        %v3493 = vunpack.c.l.b16 %v3390
        %v3494 = vunpack.c.l.b16 %v3391
        %v3495 = vunpack.c.l.b16 %v3392
        %v3496 = vunpack.c.l.b16 %v3393
        %v3497 = vunpack.c.l.b16 %v3394
        %v3498 = vunpack.c.l.b16 %v3395
        %v3499 = vunpack.c.l.b16 %v3396
        %v3500 = vunpack.c.l.b16 %v3397
        %v3501 = vunpack.c.l.b16 %v3398
        %v3502 = vunpack.c.l.b16 %v3399
        %v3503 = vunpack.c.l.b16 %v3400
        %v3504 = vunpack.c.l.b16 %v3401
        %v3505 = vunpack.c.l.b16 %v3402
        %v3506 = vpack.c.b16 %v3459, %v3458
        %v3507 = vpack.c.b16 %v3461, %v3460
        %v3508 = vpack.c.b16 %v3463, %v3462
        %v3509 = vpack.c.b16 %v3465, %v3464
        %v3510 = vpack.c.b16 %v3467, %v3466
        %v3511 = vpack.c.b16 %v3469, %v3468
        %v3512 = vpack.c.b16 %v3471, %v3470
        %v3513 = vpack.c.b16 %v3473, %v3472
        %v3514 = vpack.c.b16 %v3475, %v3474
        %v3515 = vpack.c.b16 %v3477, %v3476
        %v3516 = vpack.c.b16 %v3479, %v3478
        %v3517 = vpack.c.b16 %v3481, %v3480
        %v3518 = vpack.c.b16 %v3483, %v3482
        %v3519 = vpack.c.b16 %v3485, %v3484
        %v3520 = vpack.c.b16 %v3487, %v3486
        %v3521 = vpack.c.b16 %v3489, %v3488
        %v3522 = vpack.c.b16 %v3491, %v3490
        %v3523 = vpack.c.b16 %v3493, %v3492
        %v3524 = vpack.c.b16 %v3495, %v3494
        %v3525 = vpack.c.b16 %v3497, %v3496
        %v3526 = vpack.c.b16 %v3499, %v3498
        %v3527 = vpack.c.b16 %v3501, %v3500
        %v3528 = vpack.c.b16 %v3503, %v3502
        %v3529 = vpack.c.b16 %v3505, %v3504
        %3554 = vmatprep.subr.bf16.mxu0 0
        %3555 = vmatpush1.bf16.msra.mxu0 %v3506
        %3556 = vmatprep.subr.bf16.mxu0 0
        %3557 = vmatpush1.bf16.msra.mxu0 %v3507
        %3558 = vmatprep.subr.bf16.mxu0 0
        %3559 = vmatpush1.bf16.msra.mxu0 %v3508
        %3560 = vmatprep.subr.bf16.mxu0 0
        %3561 = vmatpush1.bf16.msra.mxu0 %v3509
        %3562 = vmatprep.subr.bf16.mxu0 0
        %3563 = vmatpush1.bf16.msra.mxu0 %v3510
        %3564 = vmatprep.subr.bf16.mxu0 0
        %3565 = vmatpush1.bf16.msra.mxu0 %v3511
        %3566 = vmatprep.subr.bf16.mxu0 0
        %3567 = vmatpush1.bf16.msra.mxu0 %v3512
        %3568 = vmatprep.subr.bf16.mxu0 0
        %3569 = vmatpush1.bf16.msra.mxu0 %v3513
        %3570 = vmatprep.subr.bf16.mxu0 0
        %3571 = vmatpush1.bf16.msra.mxu0 %v3514
        %3572 = vmatprep.subr.bf16.mxu0 0
        %3573 = vmatpush1.bf16.msra.mxu0 %v3515
        %3574 = vmatprep.subr.bf16.mxu0 0
        %3575 = vmatpush1.bf16.msra.mxu0 %v3516
        %3576 = vmatprep.subr.bf16.mxu0 0
        %3577 = vmatpush1.bf16.msra.mxu0 %v3517
        %3578 = vmatprep.subr.bf16.mxu0 0
        %3579 = vmatpush1.bf16.msra.mxu0 %v3518
        %3580 = vmatprep.subr.bf16.mxu0 0
        %3581 = vmatpush1.bf16.msra.mxu0 %v3519
        %3582 = vmatprep.subr.bf16.mxu0 0
        %3583 = vmatpush1.bf16.msra.mxu0 %v3520
        %3584 = vmatprep.subr.bf16.mxu0 0
        %3585 = vmatpush1.bf16.msra.mxu0 %v3521
        %3586 = vmatprep.mubr.bf16.mxu0 %v3296
        %3587 = vmatmul.mubr.bf16.gmra.mrb[0].mxu0 %v3351
        %v3588 = vpop.f32.mrb[0].mxu0
        %v3589 = vadd.f32 %v3408, %v3588
        %v3590 = vpop.f32.mrb[0].mxu0
        %v3591 = vpop.f32.mrb[0].mxu0
        %v3592 = vpop.f32.mrb[0].mxu0
        %3593 = vdwg.mxu0
        %3594 = vmatprep.subr.bf16.mxu0 0
        %3595 = vmatpush1.bf16.msra.mxu0 %v3522
        %3596 = vmatprep.subr.bf16.mxu0 0
        %3597 = vmatpush1.bf16.msra.mxu0 %v3523
        %3598 = vmatprep.subr.bf16.mxu0 0
        %3599 = vmatpush1.bf16.msra.mxu0 %v3524
        %3600 = vmatprep.subr.bf16.mxu0 0
        %3601 = vmatpush1.bf16.msra.mxu0 %v3525
        %3602 = vmatprep.subr.bf16.mxu0 0
        %3603 = vmatpush1.bf16.msra.mxu0 %v3526
        %3604 = vmatprep.subr.bf16.mxu0 0
        %3605 = vmatpush1.bf16.msra.mxu0 %v3527
        %3606 = vmatprep.subr.bf16.mxu0 0
        %3607 = vmatpush1.bf16.msra.mxu0 %v3528
        %3608 = vmatprep.subr.bf16.mxu0 0
        %3609 = vmatpush1.bf16.msra.mxu0 %v3529
        %3610 = vmatprep.subr.bf16.mxu0 0
        %3611 = vmatpush1.bf16.msra.mxu0 0
        %3612 = vmatprep.subr.bf16.mxu0 0
        %3613 = vmatpush1.bf16.msra.mxu0 0
        %3614 = vmatprep.subr.bf16.mxu0 0
        %3615 = vmatpush1.bf16.msra.mxu0 0
        %3616 = vmatprep.subr.bf16.mxu0 0
        %3617 = vmatpush1.bf16.msra.mxu0 0
        %3618 = vmatprep.subr.bf16.mxu0 0
        %3619 = vmatpush1.bf16.msra.mxu0 0
        %3620 = vmatprep.subr.bf16.mxu0 0
        %3621 = vmatpush1.bf16.msra.mxu0 0
        %3622 = vmatprep.subr.bf16.mxu0 0
        %3623 = vmatpush1.bf16.msra.mxu0 0
        %3624 = vmatprep.subr.bf16.mxu0 0
        %3625 = vmatpush1.bf16.msra.mxu0 0
        %3626 = vmatprep.mubr.bf16.mxu0 0
        %3627 = vmatmul.mubr.bf16.gmra.mrb[0].mxu0 %v3353
        %v3628 = vpop.f32.mrb[0].mxu0
        %v3629 = vadd.f32 %v3589, %v3628
        %v3630 = vpop.f32.mrb[0].mxu0
        %v3631 = vpop.f32.mrb[0].mxu0
        %v3632 = vpop.f32.mrb[0].mxu0
        %3633 = vdwg.mxu0
        %v3634 = vpack.c.bf16 %v3629, %v3629
        %v3636 = vsel %vm3073, %v3634, 0
        %3638 = vmatprep.subr.bf16.mxu0 0
        %3639 = vmatpush1.bf16.msra.mxu0 %v3636
        %3640 = vmatprep.subr.bf16.mxu0 0
        %3641 = vmatpush1.bf16.msra.mxu0 0
        %3642 = vmatprep.subr.bf16.mxu0 0
        %3643 = vmatpush1.bf16.msra.mxu0 0
        %3644 = vmatprep.subr.bf16.mxu0 0
        %3645 = vmatpush1.bf16.msra.mxu0 0
        %3646 = vmatprep.subr.bf16.mxu0 0
        %3647 = vmatpush1.bf16.msra.mxu0 0
        %3648 = vmatprep.subr.bf16.mxu0 0
        %3649 = vmatpush1.bf16.msra.mxu0 0
        %3650 = vmatprep.subr.bf16.mxu0 0
        %3651 = vmatpush1.bf16.msra.mxu0 0
        %3652 = vmatprep.subr.bf16.mxu0 0
        %3653 = vmatpush1.bf16.msra.mxu0 0
        %3654 = vmatprep.subr.bf16.mxu0 0
        %3655 = vmatpush1.bf16.msra.mxu0 0
        %3656 = vmatprep.subr.bf16.mxu0 0
        %3657 = vmatpush1.bf16.msra.mxu0 0
        %3658 = vmatprep.subr.bf16.mxu0 0
        %3659 = vmatpush1.bf16.msra.mxu0 0
        %3660 = vmatprep.subr.bf16.mxu0 0
        %3661 = vmatpush1.bf16.msra.mxu0 0
        %3662 = vmatprep.subr.bf16.mxu0 0
        %3663 = vmatpush1.bf16.msra.mxu0 0
        %3664 = vmatprep.subr.bf16.mxu0 0
        %3665 = vmatpush1.bf16.msra.mxu0 0
        %3666 = vmatprep.subr.bf16.mxu0 0
        %3667 = vmatpush1.bf16.msra.mxu0 0
        %3668 = vmatprep.subr.bf16.mxu0 0
        %3669 = vmatpush1.bf16.msra.mxu0 0
        %3670 = vmatprep.mubr.bf16.mxu0 0
        %3671 = vmatmul.mubr.bf16.gmra.mrb[0].mxu0 %v3071
        %v3672 = vpop.f32.mrb[0].mxu0
        %v3673 = vadd.f32 0.0, %v3672
        %v3674 = vpop.f32.mrb[0].mxu0
        %v3675 = vpop.f32.mrb[0].mxu0
        %v3676 = vpop.f32.mrb[0].mxu0
        %3677 = vdwg.mxu0
        %v3678 = vpack.c.bf16 %v3673, %v3673
        %3679 = vmatprep.subr.bf16.mxu0 0
        %3680 = vmatpush1.bf16.msra.mxu0 %v3150
        %3681 = vmatprep.subr.bf16.mxu0 0
        %3682 = vmatpush1.bf16.msra.mxu0 %v3151
        %3683 = vmatprep.subr.bf16.mxu0 0
        %3684 = vmatpush1.bf16.msra.mxu0 %v3152
        %3685 = vmatprep.subr.bf16.mxu0 0
        %3686 = vmatpush1.bf16.msra.mxu0 %v3153
        %3687 = vmatprep.subr.bf16.mxu0 0
        %3688 = vmatpush1.bf16.msra.mxu0 %v3154
        %3689 = vmatprep.subr.bf16.mxu0 0
        %3690 = vmatpush1.bf16.msra.mxu0 %v3155
        %3691 = vmatprep.subr.bf16.mxu0 0
        %3692 = vmatpush1.bf16.msra.mxu0 %v3156
        %3693 = vmatprep.subr.bf16.mxu0 0
        %3694 = vmatpush1.bf16.msra.mxu0 %v3157
        %3695 = vmatprep.subr.bf16.mxu0 0
        %3696 = vmatpush1.bf16.msra.mxu0 0
        %3697 = vmatprep.subr.bf16.mxu0 0
        %3698 = vmatpush1.bf16.msra.mxu0 0
        %3699 = vmatprep.subr.bf16.mxu0 0
        %3700 = vmatpush1.bf16.msra.mxu0 0
        %3701 = vmatprep.subr.bf16.mxu0 0
        %3702 = vmatpush1.bf16.msra.mxu0 0
        %3703 = vmatprep.subr.bf16.mxu0 0
        %3704 = vmatpush1.bf16.msra.mxu0 0
        %3705 = vmatprep.subr.bf16.mxu0 0
        %3706 = vmatpush1.bf16.msra.mxu0 0
        %3707 = vmatprep.subr.bf16.mxu0 0
        %3708 = vmatpush1.bf16.msra.mxu0 0
        %3709 = vmatprep.subr.bf16.mxu0 0
        %3710 = vmatpush1.bf16.msra.mxu0 0
        %3711 = vmatprep.mubr.bf16.mxu0 0
        %3712 = vmatmul.mubr.bf16.gmra.mrb[0].mxu0 %v3678
        %v3713 = vpop.f32.mrb[0].mxu0
        %v3714 = vadd.f32 0.0, %v3713
        %v3715 = vpop.f32.mrb[0].mxu0
        %v3716 = vpop.f32.mrb[0].mxu0
        %v3717 = vpop.f32.mrb[0].mxu0
        %3718 = vdwg.mxu0
        %v3719 = vsub.f32 %v3629, %v3714
        %v3720 = vmul.f32 %v3719, %v3719
        %v3721 = vpack.c.bf16 %v3720, %v3720
        %v3723 = vsel %vm3073, %v3721, 0
        %3725 = vmatprep.subr.bf16.mxu0 0
        %3726 = vmatpush1.bf16.msra.mxu0 %v3723
        %3727 = vmatprep.subr.bf16.mxu0 0
        %3728 = vmatpush1.bf16.msra.mxu0 0
        %3729 = vmatprep.subr.bf16.mxu0 0
        %3730 = vmatpush1.bf16.msra.mxu0 0
        %3731 = vmatprep.subr.bf16.mxu0 0
        %3732 = vmatpush1.bf16.msra.mxu0 0
        %3733 = vmatprep.subr.bf16.mxu0 0
        %3734 = vmatpush1.bf16.msra.mxu0 0
        %3735 = vmatprep.subr.bf16.mxu0 0
        %3736 = vmatpush1.bf16.msra.mxu0 0
        %3737 = vmatprep.subr.bf16.mxu0 0
        %3738 = vmatpush1.bf16.msra.mxu0 0
        %3739 = vmatprep.subr.bf16.mxu0 0
        %3740 = vmatpush1.bf16.msra.mxu0 0
        %3741 = vmatprep.subr.bf16.mxu0 0
        %3742 = vmatpush1.bf16.msra.mxu0 0
        %3743 = vmatprep.subr.bf16.mxu0 0
        %3744 = vmatpush1.bf16.msra.mxu0 0
        %3745 = vmatprep.subr.bf16.mxu0 0
        %3746 = vmatpush1.bf16.msra.mxu0 0
        %3747 = vmatprep.subr.bf16.mxu0 0
        %3748 = vmatpush1.bf16.msra.mxu0 0
        %3749 = vmatprep.subr.bf16.mxu0 0
        %3750 = vmatpush1.bf16.msra.mxu0 0
        %3751 = vmatprep.subr.bf16.mxu0 0
        %3752 = vmatpush1.bf16.msra.mxu0 0
        %3753 = vmatprep.subr.bf16.mxu0 0
        %3754 = vmatpush1.bf16.msra.mxu0 0
        %3755 = vmatprep.subr.bf16.mxu0 0
        %3756 = vmatpush1.bf16.msra.mxu0 0
        %3757 = vmatprep.mubr.bf16.mxu0 0
        %3758 = vmatmul.mubr.bf16.gmra.mrb[0].mxu0 %v3071
        %v3759 = vpop.f32.mrb[0].mxu0
        %v3760 = vadd.f32 0.0, %v3759
        %v3761 = vpop.f32.mrb[0].mxu0
        %v3762 = vpop.f32.mrb[0].mxu0
        %v3763 = vpop.f32.mrb[0].mxu0
        %3764 = vdwg.mxu0
        %v3765 = vpack.c.bf16 %v3760, %v3760
        %3766 = vmatprep.subr.bf16.mxu0 0
        %3767 = vmatpush1.bf16.msra.mxu0 %v3150
        %3768 = vmatprep.subr.bf16.mxu0 0
        %3769 = vmatpush1.bf16.msra.mxu0 %v3151
        %3770 = vmatprep.subr.bf16.mxu0 0
        %3771 = vmatpush1.bf16.msra.mxu0 %v3152
        %3772 = vmatprep.subr.bf16.mxu0 0
        %3773 = vmatpush1.bf16.msra.mxu0 %v3153
        %3774 = vmatprep.subr.bf16.mxu0 0
        %3775 = vmatpush1.bf16.msra.mxu0 %v3154
        %3776 = vmatprep.subr.bf16.mxu0 0
        %3777 = vmatpush1.bf16.msra.mxu0 %v3155
        %3778 = vmatprep.subr.bf16.mxu0 0
        %3779 = vmatpush1.bf16.msra.mxu0 %v3156
        %3780 = vmatprep.subr.bf16.mxu0 0
        %3781 = vmatpush1.bf16.msra.mxu0 %v3157
        %3782 = vmatprep.subr.bf16.mxu0 0
        %3783 = vmatpush1.bf16.msra.mxu0 0
        %3784 = vmatprep.subr.bf16.mxu0 0
        %3785 = vmatpush1.bf16.msra.mxu0 0
        %3786 = vmatprep.subr.bf16.mxu0 0
        %3787 = vmatpush1.bf16.msra.mxu0 0
        %3788 = vmatprep.subr.bf16.mxu0 0
        %3789 = vmatpush1.bf16.msra.mxu0 0
        %3790 = vmatprep.subr.bf16.mxu0 0
        %3791 = vmatpush1.bf16.msra.mxu0 0
        %3792 = vmatprep.subr.bf16.mxu0 0
        %3793 = vmatpush1.bf16.msra.mxu0 0
        %3794 = vmatprep.subr.bf16.mxu0 0
        %3795 = vmatpush1.bf16.msra.mxu0 0
        %3796 = vmatprep.subr.bf16.mxu0 0
        %3797 = vmatpush1.bf16.msra.mxu0 0
        %3798 = vmatprep.mubr.bf16.mxu0 0
        %3799 = vmatmul.mubr.bf16.gmra.mrb[0].mxu0 %v3765
        %v3800 = vpop.f32.mrb[0].mxu0
        %v3801 = vadd.f32 1e-05, %v3800
        %v3802 = vpop.f32.mrb[0].mxu0
        %v3803 = vpop.f32.mrb[0].mxu0
        %v3804 = vpop.f32.mrb[0].mxu0
        %3805 = vdwg.mxu0
        %v3806 = vrsqrt.pop %v3801
        %v3807 = vmul.f32 %v3719, %v3806
        %v3808 = vmax.f32 %v3807, 0.0
        %v3809 = vpack.c.bf16 %v3808, %v3808
        %v3811 = vsel %vm3073, %v3809, 0
        %3813 = vmatprep.subr.bf16.mxu0 0
        %3814 = vmatpush1.bf16.msra.mxu0 %v3811
        %3815 = vmatprep.subr.bf16.mxu0 0
        %3816 = vmatpush1.bf16.msra.mxu0 0
        %3817 = vmatprep.subr.bf16.mxu0 0
        %3818 = vmatpush1.bf16.msra.mxu0 0
        %3819 = vmatprep.subr.bf16.mxu0 0
        %3820 = vmatpush1.bf16.msra.mxu0 0
        %3821 = vmatprep.subr.bf16.mxu0 0
        %3822 = vmatpush1.bf16.msra.mxu0 0
        %3823 = vmatprep.subr.bf16.mxu0 0
        %3824 = vmatpush1.bf16.msra.mxu0 0
        %3825 = vmatprep.subr.bf16.mxu0 0
        %3826 = vmatpush1.bf16.msra.mxu0 0
        %3827 = vmatprep.subr.bf16.mxu0 0
        %3828 = vmatpush1.bf16.msra.mxu0 0
        %3829 = vmatprep.subr.bf16.mxu0 0
        %3830 = vmatpush1.bf16.msra.mxu0 0
        %3831 = vmatprep.subr.bf16.mxu0 0
        %3832 = vmatpush1.bf16.msra.mxu0 0
        %3833 = vmatprep.subr.bf16.mxu0 0
        %3834 = vmatpush1.bf16.msra.mxu0 0
        %3835 = vmatprep.subr.bf16.mxu0 0
        %3836 = vmatpush1.bf16.msra.mxu0 0
        %3837 = vmatprep.subr.bf16.mxu0 0
        %3838 = vmatpush1.bf16.msra.mxu0 0
        %3839 = vmatprep.subr.bf16.mxu0 0
        %3840 = vmatpush1.bf16.msra.mxu0 0
        %3841 = vmatprep.subr.bf16.mxu0 0
        %3842 = vmatpush1.bf16.msra.mxu0 0
        %3843 = vmatprep.subr.bf16.mxu0 0
        %3844 = vmatpush1.bf16.msra.mxu0 0
        %3845 = vmatprep.mubr.bf16.mxu0 0
        %3846 = vmatmul.mubr.bf16.gmra.mrb[0].mxu0 %v3305
        %v3847 = vpop.f32.mrb[0].mxu0
        %v3848 = vadd.f32 0.0, %v3847
        %v3849 = vpop.f32.mrb[0].mxu0
        %v3850 = vpop.f32.mrb[0].mxu0
        %v3851 = vadd.f32 0.0, %v3850
        %v3852 = vpop.f32.mrb[0].mxu0
        %3853 = vdwg.mxu0
        %v3854 = vpack.c.bf16 %v3851, %v3848
        %v3856 = vrot.slane %v3854, 4
        %v3858 = vld [vmem:[%s39] sm:$0xf]
        %v3859 = vld [vmem:[%s39 + $0x4] sm:$0xf]
        %v3860 = vld [vmem:[%s39 + $0x8] sm:$0xf]
        %v3861 = vld [vmem:[%s39 + $0xc] sm:$0xf]
        %v3862 = vld [vmem:[%s39 + $0x10] sm:$0xf]
        %v3863 = vld [vmem:[%s39 + $0x14] sm:$0xf]
        %v3864 = vld [vmem:[%s39 + $0x18] sm:$0xf]
        %v3865 = vld [vmem:[%s39 + $0x1c] sm:$0xf]
        %v3866 = vld [vmem:[%s39 + $0x20] sm:$0xf]
        %v3867 = vld [vmem:[%s39 + $0x24] sm:$0xf]
        %v3868 = vld [vmem:[%s39 + $0x28] sm:$0xf]
        %v3869 = vld [vmem:[%s39 + $0x2c] sm:$0xf]
        %v3870 = vld [vmem:[%s39 + $0x30] sm:$0xf]
        %v3871 = vld [vmem:[%s39 + $0x34] sm:$0xf]
        %v3872 = vld [vmem:[%s39 + $0x38] sm:$0xf]
        %v3873 = vld [vmem:[%s39 + $0x3c] sm:$0xf]
        %v3874 = vld [vmem:[%s39 + $0x40] sm:$0xf]
        %v3875 = vld [vmem:[%s39 + $0x44] sm:$0xf]
        %v3876 = vld [vmem:[%s39 + $0x48] sm:$0xf]
        %v3877 = vld [vmem:[%s39 + $0x4c] sm:$0xf]
        %v3878 = vld [vmem:[%s39 + $0x50] sm:$0xf]
        %v3879 = vld [vmem:[%s39 + $0x54] sm:$0xf]
        %v3880 = vld [vmem:[%s39 + $0x58] sm:$0xf]
        %v3881 = vld [vmem:[%s39 + $0x5c] sm:$0xf]
        %v3882 = vld [vmem:[%s39 + $0x60] sm:$0xf]
        %v3883 = vld [vmem:[%s39 + $0x64] sm:$0xf]
        %v3884 = vld [vmem:[%s39 + $0x68] sm:$0xf]
        %v3885 = vld [vmem:[%s39 + $0x6c] sm:$0xf]
        %v3886 = vld [vmem:[%s39 + $0x70] sm:$0xf]
        %v3887 = vld [vmem:[%s39 + $0x74] sm:$0xf]
        %v3888 = vld [vmem:[%s39 + $0x78] sm:$0xf]
        %v3889 = vld [vmem:[%s39 + $0x7c] sm:$0xf]
        %v3890 = vld [vmem:[%s39 + $0x80] sm:$0xf]
        %v3891 = vld [vmem:[%s39 + $0x84] sm:$0xf]
        %v3892 = vld [vmem:[%s39 + $0x88] sm:$0xf]
        %v3893 = vld [vmem:[%s39 + $0x8c] sm:$0xf]
        %v3894 = vld [vmem:[%s39 + $0x90] sm:$0xf]
        %v3895 = vld [vmem:[%s39 + $0x94] sm:$0xf]
        %v3896 = vld [vmem:[%s39 + $0x98] sm:$0xf]
        %v3897 = vld [vmem:[%s39 + $0x9c] sm:$0xf]
        %v3898 = vld [vmem:[%s39 + $0xa0] sm:$0xf]
        %v3899 = vld [vmem:[%s39 + $0xa4] sm:$0xf]
        %v3900 = vld [vmem:[%s39 + $0xa8] sm:$0xf]
        %v3901 = vld [vmem:[%s39 + $0xac] sm:$0xf]
        %v3902 = vld [vmem:[%s39 + $0xb0] sm:$0xf]
        %v3903 = vld [vmem:[%s39 + $0xb4] sm:$0xf]
        %v3904 = vld [vmem:[%s39 + $0xb8] sm:$0xf]
        %v3905 = vld [vmem:[%s39 + $0xbc] sm:$0xf]
        %v3906 = vld [vmem:[#allocation28] sm:$0x1]
        %v3908 = vlaneseq
        %v3909 = vshrl.u32 %v3908, 7
        %v3910 = vsub.s32 0, %v3909
        %v3911 = vrot.slane %v3906, %v3910
        %v3961 = vunpack.c.l.b16 %v3858
        %v3962 = vunpack.c.l.b16 %v3859
        %v3963 = vunpack.c.l.b16 %v3860
        %v3964 = vunpack.c.l.b16 %v3861
        %v3965 = vunpack.c.l.b16 %v3862
        %v3966 = vunpack.c.l.b16 %v3863
        %v3967 = vunpack.c.l.b16 %v3864
        %v3968 = vunpack.c.l.b16 %v3865
        %v3969 = vunpack.c.l.b16 %v3866
        %v3970 = vunpack.c.l.b16 %v3867
        %v3971 = vunpack.c.l.b16 %v3868
        %v3972 = vunpack.c.l.b16 %v3869
        %v3973 = vunpack.c.l.b16 %v3870
        %v3974 = vunpack.c.l.b16 %v3871
        %v3975 = vunpack.c.l.b16 %v3872
        %v3976 = vunpack.c.l.b16 %v3873
        %v3977 = vunpack.c.l.b16 %v3874
        %v3978 = vunpack.c.l.b16 %v3875
        %v3979 = vunpack.c.l.b16 %v3876
        %v3980 = vunpack.c.l.b16 %v3877
        %v3981 = vunpack.c.l.b16 %v3878
        %v3982 = vunpack.c.l.b16 %v3879
        %v3983 = vunpack.c.l.b16 %v3880
        %v3984 = vunpack.c.l.b16 %v3881
        %v3985 = vunpack.c.l.b16 %v3882
        %v3986 = vunpack.c.l.b16 %v3883
        %v3987 = vunpack.c.l.b16 %v3884
        %v3988 = vunpack.c.l.b16 %v3885
        %v3989 = vunpack.c.l.b16 %v3886
        %v3990 = vunpack.c.l.b16 %v3887
        %v3991 = vunpack.c.l.b16 %v3888
        %v3992 = vunpack.c.l.b16 %v3889
        %v3993 = vunpack.c.l.b16 %v3890
        %v3994 = vunpack.c.l.b16 %v3891
        %v3995 = vunpack.c.l.b16 %v3892
        %v3996 = vunpack.c.l.b16 %v3893
        %v3997 = vunpack.c.l.b16 %v3894
        %v3998 = vunpack.c.l.b16 %v3895
        %v3999 = vunpack.c.l.b16 %v3896
        %v4000 = vunpack.c.l.b16 %v3897
        %v4001 = vunpack.c.l.b16 %v3898
        %v4002 = vunpack.c.l.b16 %v3899
        %v4003 = vunpack.c.l.b16 %v3900
        %v4004 = vunpack.c.l.b16 %v3901
        %v4005 = vunpack.c.l.b16 %v3902
        %v4006 = vunpack.c.l.b16 %v3903
        %v4007 = vunpack.c.l.b16 %v3904
        %v4008 = vunpack.c.l.b16 %v3905
        %v4009 = vpack.c.b16 %v3962, %v3961
        %v4010 = vpack.c.b16 %v3964, %v3963
        %v4011 = vpack.c.b16 %v3966, %v3965
        %v4012 = vpack.c.b16 %v3968, %v3967
        %v4013 = vpack.c.b16 %v3970, %v3969
        %v4014 = vpack.c.b16 %v3972, %v3971
        %v4015 = vpack.c.b16 %v3974, %v3973
        %v4016 = vpack.c.b16 %v3976, %v3975
        %v4017 = vpack.c.b16 %v3978, %v3977
        %v4018 = vpack.c.b16 %v3980, %v3979
        %v4019 = vpack.c.b16 %v3982, %v3981
        %v4020 = vpack.c.b16 %v3984, %v3983
        %v4021 = vpack.c.b16 %v3986, %v3985
        %v4022 = vpack.c.b16 %v3988, %v3987
        %v4023 = vpack.c.b16 %v3990, %v3989
        %v4024 = vpack.c.b16 %v3992, %v3991
        %v4025 = vpack.c.b16 %v3994, %v3993
        %v4026 = vpack.c.b16 %v3996, %v3995
        %v4027 = vpack.c.b16 %v3998, %v3997
        %v4028 = vpack.c.b16 %v4000, %v3999
        %v4029 = vpack.c.b16 %v4002, %v4001
        %v4030 = vpack.c.b16 %v4004, %v4003
        %v4031 = vpack.c.b16 %v4006, %v4005
        %v4032 = vpack.c.b16 %v4008, %v4007
        %4057 = vmatprep.subr.bf16.mxu0 0
        %4058 = vmatpush1.bf16.msra.mxu0 %v4009
        %4059 = vmatprep.subr.bf16.mxu0 0
        %4060 = vmatpush1.bf16.msra.mxu0 %v4010
        %4061 = vmatprep.subr.bf16.mxu0 0
        %4062 = vmatpush1.bf16.msra.mxu0 %v4011
        %4063 = vmatprep.subr.bf16.mxu0 0
        %4064 = vmatpush1.bf16.msra.mxu0 %v4012
        %4065 = vmatprep.subr.bf16.mxu0 0
        %4066 = vmatpush1.bf16.msra.mxu0 %v4013
        %4067 = vmatprep.subr.bf16.mxu0 0
        %4068 = vmatpush1.bf16.msra.mxu0 %v4014
        %4069 = vmatprep.subr.bf16.mxu0 0
        %4070 = vmatpush1.bf16.msra.mxu0 %v4015
        %4071 = vmatprep.subr.bf16.mxu0 0
        %4072 = vmatpush1.bf16.msra.mxu0 %v4016
        %4073 = vmatprep.subr.bf16.mxu0 0
        %4074 = vmatpush1.bf16.msra.mxu0 %v4017
        %4075 = vmatprep.subr.bf16.mxu0 0
        %4076 = vmatpush1.bf16.msra.mxu0 %v4018
        %4077 = vmatprep.subr.bf16.mxu0 0
        %4078 = vmatpush1.bf16.msra.mxu0 %v4019
        %4079 = vmatprep.subr.bf16.mxu0 0
        %4080 = vmatpush1.bf16.msra.mxu0 %v4020
        %4081 = vmatprep.subr.bf16.mxu0 0
        %4082 = vmatpush1.bf16.msra.mxu0 %v4021
        %4083 = vmatprep.subr.bf16.mxu0 0
        %4084 = vmatpush1.bf16.msra.mxu0 %v4022
        %4085 = vmatprep.subr.bf16.mxu0 0
        %4086 = vmatpush1.bf16.msra.mxu0 %v4023
        %4087 = vmatprep.subr.bf16.mxu0 0
        %4088 = vmatpush1.bf16.msra.mxu0 %v4024
        %4089 = vmatprep.mubr.bf16.mxu0 %v3809
        %4090 = vmatmul.mubr.bf16.gmra.mrb[0].mxu0 %v3854
        %v4091 = vpop.f32.mrb[0].mxu0
        %v4092 = vadd.f32 %v3911, %v4091
        %v4093 = vpop.f32.mrb[0].mxu0
        %v4094 = vpop.f32.mrb[0].mxu0
        %v4095 = vpop.f32.mrb[0].mxu0
        %4096 = vdwg.mxu0
        %4097 = vmatprep.subr.bf16.mxu0 0
        %4098 = vmatpush1.bf16.msra.mxu0 %v4025
        %4099 = vmatprep.subr.bf16.mxu0 0
        %4100 = vmatpush1.bf16.msra.mxu0 %v4026
        %4101 = vmatprep.subr.bf16.mxu0 0
        %4102 = vmatpush1.bf16.msra.mxu0 %v4027
        %4103 = vmatprep.subr.bf16.mxu0 0
        %4104 = vmatpush1.bf16.msra.mxu0 %v4028
        %4105 = vmatprep.subr.bf16.mxu0 0
        %4106 = vmatpush1.bf16.msra.mxu0 %v4029
        %4107 = vmatprep.subr.bf16.mxu0 0
        %4108 = vmatpush1.bf16.msra.mxu0 %v4030
        %4109 = vmatprep.subr.bf16.mxu0 0
        %4110 = vmatpush1.bf16.msra.mxu0 %v4031
        %4111 = vmatprep.subr.bf16.mxu0 0
        %4112 = vmatpush1.bf16.msra.mxu0 %v4032
        %4113 = vmatprep.subr.bf16.mxu0 0
        %4114 = vmatpush1.bf16.msra.mxu0 0
        %4115 = vmatprep.subr.bf16.mxu0 0
        %4116 = vmatpush1.bf16.msra.mxu0 0
        %4117 = vmatprep.subr.bf16.mxu0 0
        %4118 = vmatpush1.bf16.msra.mxu0 0
        %4119 = vmatprep.subr.bf16.mxu0 0
        %4120 = vmatpush1.bf16.msra.mxu0 0
        %4121 = vmatprep.subr.bf16.mxu0 0
        %4122 = vmatpush1.bf16.msra.mxu0 0
        %4123 = vmatprep.subr.bf16.mxu0 0
        %4124 = vmatpush1.bf16.msra.mxu0 0
        %4125 = vmatprep.subr.bf16.mxu0 0
        %4126 = vmatpush1.bf16.msra.mxu0 0
        %4127 = vmatprep.subr.bf16.mxu0 0
        %4128 = vmatpush1.bf16.msra.mxu0 0
        %4129 = vmatprep.mubr.bf16.mxu0 0
        %4130 = vmatmul.mubr.bf16.gmra.mrb[0].mxu0 %v3856
        %v4131 = vpop.f32.mrb[0].mxu0
        %v4132 = vadd.f32 %v4092, %v4131
        %v4133 = vpop.f32.mrb[0].mxu0
        %v4134 = vpop.f32.mrb[0].mxu0
        %v4135 = vpop.f32.mrb[0].mxu0
        %4136 = vdwg.mxu0
        %v4137 = vpack.c.bf16 %v4132, %v4132
        %v4139 = vsel %vm3073, %v4137, 0
        %4141 = vmatprep.subr.bf16.mxu0 0
        %4142 = vmatpush1.bf16.msra.mxu0 %v4139
        %4143 = vmatprep.subr.bf16.mxu0 0
        %4144 = vmatpush1.bf16.msra.mxu0 0
        %4145 = vmatprep.subr.bf16.mxu0 0
        %4146 = vmatpush1.bf16.msra.mxu0 0
        %4147 = vmatprep.subr.bf16.mxu0 0
        %4148 = vmatpush1.bf16.msra.mxu0 0
        %4149 = vmatprep.subr.bf16.mxu0 0
        %4150 = vmatpush1.bf16.msra.mxu0 0
        %4151 = vmatprep.subr.bf16.mxu0 0
        %4152 = vmatpush1.bf16.msra.mxu0 0
        %4153 = vmatprep.subr.bf16.mxu0 0
        %4154 = vmatpush1.bf16.msra.mxu0 0
        %4155 = vmatprep.subr.bf16.mxu0 0
        %4156 = vmatpush1.bf16.msra.mxu0 0
        %4157 = vmatprep.subr.bf16.mxu0 0
        %4158 = vmatpush1.bf16.msra.mxu0 0
        %4159 = vmatprep.subr.bf16.mxu0 0
        %4160 = vmatpush1.bf16.msra.mxu0 0
        %4161 = vmatprep.subr.bf16.mxu0 0
        %4162 = vmatpush1.bf16.msra.mxu0 0
        %4163 = vmatprep.subr.bf16.mxu0 0
        %4164 = vmatpush1.bf16.msra.mxu0 0
        %4165 = vmatprep.subr.bf16.mxu0 0
        %4166 = vmatpush1.bf16.msra.mxu0 0
        %4167 = vmatprep.subr.bf16.mxu0 0
        %4168 = vmatpush1.bf16.msra.mxu0 0
        %4169 = vmatprep.subr.bf16.mxu0 0
        %4170 = vmatpush1.bf16.msra.mxu0 0
        %4171 = vmatprep.subr.bf16.mxu0 0
        %4172 = vmatpush1.bf16.msra.mxu0 0
        %4173 = vmatprep.mubr.bf16.mxu0 0
        %4174 = vmatmul.mubr.bf16.gmra.mrb[0].mxu0 %v3071
        %v4175 = vpop.f32.mrb[0].mxu0
        %v4176 = vadd.f32 0.0, %v4175
        %v4177 = vpop.f32.mrb[0].mxu0
        %v4178 = vpop.f32.mrb[0].mxu0
        %v4179 = vpop.f32.mrb[0].mxu0
        %4180 = vdwg.mxu0
        %v4181 = vpack.c.bf16 %v4176, %v4176
        %4182 = vmatprep.subr.bf16.mxu0 0
        %4183 = vmatpush1.bf16.msra.mxu0 %v3150
        %4184 = vmatprep.subr.bf16.mxu0 0
        %4185 = vmatpush1.bf16.msra.mxu0 %v3151
        %4186 = vmatprep.subr.bf16.mxu0 0
        %4187 = vmatpush1.bf16.msra.mxu0 %v3152
        %4188 = vmatprep.subr.bf16.mxu0 0
        %4189 = vmatpush1.bf16.msra.mxu0 %v3153
        %4190 = vmatprep.subr.bf16.mxu0 0
        %4191 = vmatpush1.bf16.msra.mxu0 %v3154
        %4192 = vmatprep.subr.bf16.mxu0 0
        %4193 = vmatpush1.bf16.msra.mxu0 %v3155
        %4194 = vmatprep.subr.bf16.mxu0 0
        %4195 = vmatpush1.bf16.msra.mxu0 %v3156
        %4196 = vmatprep.subr.bf16.mxu0 0
        %4197 = vmatpush1.bf16.msra.mxu0 %v3157
        %4198 = vmatprep.subr.bf16.mxu0 0
        %4199 = vmatpush1.bf16.msra.mxu0 0
        %4200 = vmatprep.subr.bf16.mxu0 0
        %4201 = vmatpush1.bf16.msra.mxu0 0
        %4202 = vmatprep.subr.bf16.mxu0 0
        %4203 = vmatpush1.bf16.msra.mxu0 0
        %4204 = vmatprep.subr.bf16.mxu0 0
        %4205 = vmatpush1.bf16.msra.mxu0 0
        %4206 = vmatprep.subr.bf16.mxu0 0
        %4207 = vmatpush1.bf16.msra.mxu0 0
        %4208 = vmatprep.subr.bf16.mxu0 0
        %4209 = vmatpush1.bf16.msra.mxu0 0
        %4210 = vmatprep.subr.bf16.mxu0 0
        %4211 = vmatpush1.bf16.msra.mxu0 0
        %4212 = vmatprep.subr.bf16.mxu0 0
        %4213 = vmatpush1.bf16.msra.mxu0 0
        %4214 = vmatprep.mubr.bf16.mxu0 0
        %4215 = vmatmul.mubr.bf16.gmra.mrb[0].mxu0 %v4181
        %v4216 = vpop.f32.mrb[0].mxu0
        %v4217 = vadd.f32 0.0, %v4216
        %v4218 = vpop.f32.mrb[0].mxu0
        %v4219 = vpop.f32.mrb[0].mxu0
        %v4220 = vpop.f32.mrb[0].mxu0
        %4221 = vdwg.mxu0
        %v4222 = vsub.f32 %v4132, %v4217
        %v4223 = vmul.f32 %v4222, %v4222
        %v4224 = vpack.c.bf16 %v4223, %v4223
        %v4226 = vsel %vm3073, %v4224, 0
        %4228 = vmatprep.subr.bf16.mxu0 0
        %4229 = vmatpush1.bf16.msra.mxu0 %v4226
        %4230 = vmatprep.subr.bf16.mxu0 0
        %4231 = vmatpush1.bf16.msra.mxu0 0
        %4232 = vmatprep.subr.bf16.mxu0 0
        %4233 = vmatpush1.bf16.msra.mxu0 0
        %4234 = vmatprep.subr.bf16.mxu0 0
        %4235 = vmatpush1.bf16.msra.mxu0 0
        %4236 = vmatprep.subr.bf16.mxu0 0
        %4237 = vmatpush1.bf16.msra.mxu0 0
        %4238 = vmatprep.subr.bf16.mxu0 0
        %4239 = vmatpush1.bf16.msra.mxu0 0
        %4240 = vmatprep.subr.bf16.mxu0 0
        %4241 = vmatpush1.bf16.msra.mxu0 0
        %4242 = vmatprep.subr.bf16.mxu0 0
        %4243 = vmatpush1.bf16.msra.mxu0 0
        %4244 = vmatprep.subr.bf16.mxu0 0
        %4245 = vmatpush1.bf16.msra.mxu0 0
        %4246 = vmatprep.subr.bf16.mxu0 0
        %4247 = vmatpush1.bf16.msra.mxu0 0
        %4248 = vmatprep.subr.bf16.mxu0 0
        %4249 = vmatpush1.bf16.msra.mxu0 0
        %4250 = vmatprep.subr.bf16.mxu0 0
        %4251 = vmatpush1.bf16.msra.mxu0 0
        %4252 = vmatprep.subr.bf16.mxu0 0
        %4253 = vmatpush1.bf16.msra.mxu0 0
        %4254 = vmatprep.subr.bf16.mxu0 0
        %4255 = vmatpush1.bf16.msra.mxu0 0
        %4256 = vmatprep.subr.bf16.mxu0 0
        %4257 = vmatpush1.bf16.msra.mxu0 0
        %4258 = vmatprep.subr.bf16.mxu0 0
        %4259 = vmatpush1.bf16.msra.mxu0 0
        %4260 = vmatprep.mubr.bf16.mxu0 0
        %4261 = vmatmul.mubr.bf16.gmra.mrb[0].mxu0 %v3071
        %v4262 = vpop.f32.mrb[0].mxu0
        %v4263 = vadd.f32 0.0, %v4262
        %v4264 = vpop.f32.mrb[0].mxu0
        %v4265 = vpop.f32.mrb[0].mxu0
        %v4266 = vpop.f32.mrb[0].mxu0
        %4267 = vdwg.mxu0
        %v4268 = vpack.c.bf16 %v4263, %v4263
        %4269 = vmatprep.subr.bf16.mxu0 0
        %4270 = vmatpush1.bf16.msra.mxu0 %v3150
        %4271 = vmatprep.subr.bf16.mxu0 0
        %4272 = vmatpush1.bf16.msra.mxu0 %v3151
        %4273 = vmatprep.subr.bf16.mxu0 0
        %4274 = vmatpush1.bf16.msra.mxu0 %v3152
        %4275 = vmatprep.subr.bf16.mxu0 0
        %4276 = vmatpush1.bf16.msra.mxu0 %v3153
        %4277 = vmatprep.subr.bf16.mxu0 0
        %4278 = vmatpush1.bf16.msra.mxu0 %v3154
        %4279 = vmatprep.subr.bf16.mxu0 0
        %4280 = vmatpush1.bf16.msra.mxu0 %v3155
        %4281 = vmatprep.subr.bf16.mxu0 0
        %4282 = vmatpush1.bf16.msra.mxu0 %v3156
        %4283 = vmatprep.subr.bf16.mxu0 0
        %4284 = vmatpush1.bf16.msra.mxu0 %v3157
        %4285 = vmatprep.subr.bf16.mxu0 0
        %4286 = vmatpush1.bf16.msra.mxu0 0
        %4287 = vmatprep.subr.bf16.mxu0 0
        %4288 = vmatpush1.bf16.msra.mxu0 0
        %4289 = vmatprep.subr.bf16.mxu0 0
        %4290 = vmatpush1.bf16.msra.mxu0 0
        %4291 = vmatprep.subr.bf16.mxu0 0
        %4292 = vmatpush1.bf16.msra.mxu0 0
        %4293 = vmatprep.subr.bf16.mxu0 0
        %4294 = vmatpush1.bf16.msra.mxu0 0
        %4295 = vmatprep.subr.bf16.mxu0 0
        %4296 = vmatpush1.bf16.msra.mxu0 0
        %4297 = vmatprep.subr.bf16.mxu0 0
        %4298 = vmatpush1.bf16.msra.mxu0 0
        %4299 = vmatprep.subr.bf16.mxu0 0
        %4300 = vmatpush1.bf16.msra.mxu0 0
        %4301 = vmatprep.mubr.bf16.mxu0 0
        %4302 = vmatmul.mubr.bf16.gmra.mrb[0].mxu0 %v4268
        %v4303 = vpop.f32.mrb[0].mxu0
        %v4304 = vadd.f32 1e-05, %v4303
        %v4305 = vpop.f32.mrb[0].mxu0
        %v4306 = vpop.f32.mrb[0].mxu0
        %v4307 = vpop.f32.mrb[0].mxu0
        %4308 = vdwg.mxu0
        %v4309 = vrsqrt.pop %v4304
        %v4310 = vmul.f32 %v4222, %v4309
        %v4311 = vadd.f32 %v3295, %v4310
        %v4312 = vpack.c.bf16 %v4311, %v4311
        %v4314 = vsel %vm3073, %v4312, 0
        %4316 = vmatprep.subr.bf16.mxu0 0
        %4317 = vmatpush1.bf16.msra.mxu0 %v4314
        %4318 = vmatprep.subr.bf16.mxu0 0
        %4319 = vmatpush1.bf16.msra.mxu0 0
        %4320 = vmatprep.subr.bf16.mxu0 0
        %4321 = vmatpush1.bf16.msra.mxu0 0
        %4322 = vmatprep.subr.bf16.mxu0 0
        %4323 = vmatpush1.bf16.msra.mxu0 0
        %4324 = vmatprep.subr.bf16.mxu0 0
        %4325 = vmatpush1.bf16.msra.mxu0 0
        %4326 = vmatprep.subr.bf16.mxu0 0
        %4327 = vmatpush1.bf16.msra.mxu0 0
        %4328 = vmatprep.subr.bf16.mxu0 0
        %4329 = vmatpush1.bf16.msra.mxu0 0
        %4330 = vmatprep.subr.bf16.mxu0 0
        %4331 = vmatpush1.bf16.msra.mxu0 0
        %4332 = vmatprep.subr.bf16.mxu0 0
        %4333 = vmatpush1.bf16.msra.mxu0 0
        %4334 = vmatprep.subr.bf16.mxu0 0
        %4335 = vmatpush1.bf16.msra.mxu0 0
        %4336 = vmatprep.subr.bf16.mxu0 0
        %4337 = vmatpush1.bf16.msra.mxu0 0
        %4338 = vmatprep.subr.bf16.mxu0 0
        %4339 = vmatpush1.bf16.msra.mxu0 0
        %4340 = vmatprep.subr.bf16.mxu0 0
        %4341 = vmatpush1.bf16.msra.mxu0 0
        %4342 = vmatprep.subr.bf16.mxu0 0
        %4343 = vmatpush1.bf16.msra.mxu0 0
        %4344 = vmatprep.subr.bf16.mxu0 0
        %4345 = vmatpush1.bf16.msra.mxu0 0
        %4346 = vmatprep.subr.bf16.mxu0 0
        %4347 = vmatpush1.bf16.msra.mxu0 0
        %4348 = vmatprep.mubr.bf16.mxu0 0
        %4349 = vmatmul.mubr.bf16.gmra.mrb[0].mxu0 %v3305
        %v4350 = vpop.f32.mrb[0].mxu0
        %v4351 = vadd.f32 0.0, %v4350
        %v4352 = vpop.f32.mrb[0].mxu0
        %v4353 = vpop.f32.mrb[0].mxu0
        %v4354 = vadd.f32 0.0, %v4353
        %v4355 = vpop.f32.mrb[0].mxu0
        %4356 = vdwg.mxu0
        %v4357 = vpack.c.bf16 %v4354, %v4351
        %v4359 = vrot.slane %v4357, 4
        %v4361 = vld [vmem:[%s43] sm:$0xf]
        %v4362 = vld [vmem:[%s43 + $0x4] sm:$0xf]
        %v4363 = vld [vmem:[%s43 + $0x8] sm:$0xf]
        %v4364 = vld [vmem:[%s43 + $0xc] sm:$0xf]
        %v4365 = vld [vmem:[%s43 + $0x10] sm:$0xf]
        %v4366 = vld [vmem:[%s43 + $0x14] sm:$0xf]
        %v4367 = vld [vmem:[%s43 + $0x18] sm:$0xf]
        %v4368 = vld [vmem:[%s43 + $0x1c] sm:$0xf]
        %v4369 = vld [vmem:[%s43 + $0x20] sm:$0xf]
        %v4370 = vld [vmem:[%s43 + $0x24] sm:$0xf]
        %v4371 = vld [vmem:[%s43 + $0x28] sm:$0xf]
        %v4372 = vld [vmem:[%s43 + $0x2c] sm:$0xf]
        %v4373 = vld [vmem:[%s43 + $0x30] sm:$0xf]
        %v4374 = vld [vmem:[%s43 + $0x34] sm:$0xf]
        %v4375 = vld [vmem:[%s43 + $0x38] sm:$0xf]
        %v4376 = vld [vmem:[%s43 + $0x3c] sm:$0xf]
        %v4377 = vld [vmem:[%s43 + $0x40] sm:$0xf]
        %v4378 = vld [vmem:[%s43 + $0x44] sm:$0xf]
        %v4379 = vld [vmem:[%s43 + $0x48] sm:$0xf]
        %v4380 = vld [vmem:[%s43 + $0x4c] sm:$0xf]
        %v4381 = vld [vmem:[%s43 + $0x50] sm:$0xf]
        %v4382 = vld [vmem:[%s43 + $0x54] sm:$0xf]
        %v4383 = vld [vmem:[%s43 + $0x58] sm:$0xf]
        %v4384 = vld [vmem:[%s43 + $0x5c] sm:$0xf]
        %v4385 = vld [vmem:[%s43 + $0x60] sm:$0xf]
        %v4386 = vld [vmem:[%s43 + $0x64] sm:$0xf]
        %v4387 = vld [vmem:[%s43 + $0x68] sm:$0xf]
        %v4388 = vld [vmem:[%s43 + $0x6c] sm:$0xf]
        %v4389 = vld [vmem:[%s43 + $0x70] sm:$0xf]
        %v4390 = vld [vmem:[%s43 + $0x74] sm:$0xf]
        %v4391 = vld [vmem:[%s43 + $0x78] sm:$0xf]
        %v4392 = vld [vmem:[%s43 + $0x7c] sm:$0xf]
        %v4393 = vld [vmem:[%s43 + $0x80] sm:$0xf]
        %v4394 = vld [vmem:[%s43 + $0x84] sm:$0xf]
        %v4395 = vld [vmem:[%s43 + $0x88] sm:$0xf]
        %v4396 = vld [vmem:[%s43 + $0x8c] sm:$0xf]
        %v4397 = vld [vmem:[%s43 + $0x90] sm:$0xf]
        %v4398 = vld [vmem:[%s43 + $0x94] sm:$0xf]
        %v4399 = vld [vmem:[%s43 + $0x98] sm:$0xf]
        %v4400 = vld [vmem:[%s43 + $0x9c] sm:$0xf]
        %v4401 = vld [vmem:[%s43 + $0xa0] sm:$0xf]
        %v4402 = vld [vmem:[%s43 + $0xa4] sm:$0xf]
        %v4403 = vld [vmem:[%s43 + $0xa8] sm:$0xf]
        %v4404 = vld [vmem:[%s43 + $0xac] sm:$0xf]
        %v4405 = vld [vmem:[%s43 + $0xb0] sm:$0xf]
        %v4406 = vld [vmem:[%s43 + $0xb4] sm:$0xf]
        %v4407 = vld [vmem:[%s43 + $0xb8] sm:$0xf]
        %v4408 = vld [vmem:[%s43 + $0xbc] sm:$0xf]
        %v4409 = vld [vmem:[#allocation30] sm:$0x1]
        %v4411 = vlaneseq
        %v4412 = vshrl.u32 %v4411, 7
        %v4413 = vsub.s32 0, %v4412
        %v4414 = vrot.slane %v4409, %v4413
        %v4464 = vunpack.c.l.b16 %v4361
        %v4465 = vunpack.c.l.b16 %v4362
        %v4466 = vunpack.c.l.b16 %v4363
        %v4467 = vunpack.c.l.b16 %v4364
        %v4468 = vunpack.c.l.b16 %v4365
        %v4469 = vunpack.c.l.b16 %v4366
        %v4470 = vunpack.c.l.b16 %v4367
        %v4471 = vunpack.c.l.b16 %v4368
        %v4472 = vunpack.c.l.b16 %v4369
        %v4473 = vunpack.c.l.b16 %v4370
        %v4474 = vunpack.c.l.b16 %v4371
        %v4475 = vunpack.c.l.b16 %v4372
        %v4476 = vunpack.c.l.b16 %v4373
        %v4477 = vunpack.c.l.b16 %v4374
        %v4478 = vunpack.c.l.b16 %v4375
        %v4479 = vunpack.c.l.b16 %v4376
        %v4480 = vunpack.c.l.b16 %v4377
        %v4481 = vunpack.c.l.b16 %v4378
        %v4482 = vunpack.c.l.b16 %v4379
        %v4483 = vunpack.c.l.b16 %v4380
        %v4484 = vunpack.c.l.b16 %v4381
        %v4485 = vunpack.c.l.b16 %v4382
        %v4486 = vunpack.c.l.b16 %v4383
        %v4487 = vunpack.c.l.b16 %v4384
        %v4488 = vunpack.c.l.b16 %v4385
        %v4489 = vunpack.c.l.b16 %v4386
        %v4490 = vunpack.c.l.b16 %v4387
        %v4491 = vunpack.c.l.b16 %v4388
        %v4492 = vunpack.c.l.b16 %v4389
        %v4493 = vunpack.c.l.b16 %v4390
        %v4494 = vunpack.c.l.b16 %v4391
        %v4495 = vunpack.c.l.b16 %v4392
        %v4496 = vunpack.c.l.b16 %v4393
        %v4497 = vunpack.c.l.b16 %v4394
        %v4498 = vunpack.c.l.b16 %v4395
        %v4499 = vunpack.c.l.b16 %v4396
        %v4500 = vunpack.c.l.b16 %v4397
        %v4501 = vunpack.c.l.b16 %v4398
        %v4502 = vunpack.c.l.b16 %v4399
        %v4503 = vunpack.c.l.b16 %v4400
        %v4504 = vunpack.c.l.b16 %v4401
        %v4505 = vunpack.c.l.b16 %v4402
        %v4506 = vunpack.c.l.b16 %v4403
        %v4507 = vunpack.c.l.b16 %v4404
        %v4508 = vunpack.c.l.b16 %v4405
        %v4509 = vunpack.c.l.b16 %v4406
        %v4510 = vunpack.c.l.b16 %v4407
        %v4511 = vunpack.c.l.b16 %v4408
        %v4512 = vpack.c.b16 %v4465, %v4464
        %v4513 = vpack.c.b16 %v4467, %v4466
        %v4514 = vpack.c.b16 %v4469, %v4468
        %v4515 = vpack.c.b16 %v4471, %v4470
        %v4516 = vpack.c.b16 %v4473, %v4472
        %v4517 = vpack.c.b16 %v4475, %v4474
        %v4518 = vpack.c.b16 %v4477, %v4476
        %v4519 = vpack.c.b16 %v4479, %v4478
        %v4520 = vpack.c.b16 %v4481, %v4480
        %v4521 = vpack.c.b16 %v4483, %v4482
        %v4522 = vpack.c.b16 %v4485, %v4484
        %v4523 = vpack.c.b16 %v4487, %v4486
        %v4524 = vpack.c.b16 %v4489, %v4488
        %v4525 = vpack.c.b16 %v4491, %v4490
        %v4526 = vpack.c.b16 %v4493, %v4492
        %v4527 = vpack.c.b16 %v4495, %v4494
        %v4528 = vpack.c.b16 %v4497, %v4496
        %v4529 = vpack.c.b16 %v4499, %v4498
        %v4530 = vpack.c.b16 %v4501, %v4500
        %v4531 = vpack.c.b16 %v4503, %v4502
        %v4532 = vpack.c.b16 %v4505, %v4504
        %v4533 = vpack.c.b16 %v4507, %v4506
        %v4534 = vpack.c.b16 %v4509, %v4508
        %v4535 = vpack.c.b16 %v4511, %v4510
        %4560 = vmatprep.subr.bf16.mxu0 0
        %4561 = vmatpush1.bf16.msra.mxu0 %v4512
        %4562 = vmatprep.subr.bf16.mxu0 0
        %4563 = vmatpush1.bf16.msra.mxu0 %v4513
        %4564 = vmatprep.subr.bf16.mxu0 0
        %4565 = vmatpush1.bf16.msra.mxu0 %v4514
        %4566 = vmatprep.subr.bf16.mxu0 0
        %4567 = vmatpush1.bf16.msra.mxu0 %v4515
        %4568 = vmatprep.subr.bf16.mxu0 0
        %4569 = vmatpush1.bf16.msra.mxu0 %v4516
        %4570 = vmatprep.subr.bf16.mxu0 0
        %4571 = vmatpush1.bf16.msra.mxu0 %v4517
        %4572 = vmatprep.subr.bf16.mxu0 0
        %4573 = vmatpush1.bf16.msra.mxu0 %v4518
        %4574 = vmatprep.subr.bf16.mxu0 0
        %4575 = vmatpush1.bf16.msra.mxu0 %v4519
        %4576 = vmatprep.subr.bf16.mxu0 0
        %4577 = vmatpush1.bf16.msra.mxu0 %v4520
        %4578 = vmatprep.subr.bf16.mxu0 0
        %4579 = vmatpush1.bf16.msra.mxu0 %v4521
        %4580 = vmatprep.subr.bf16.mxu0 0
        %4581 = vmatpush1.bf16.msra.mxu0 %v4522
        %4582 = vmatprep.subr.bf16.mxu0 0
        %4583 = vmatpush1.bf16.msra.mxu0 %v4523
        %4584 = vmatprep.subr.bf16.mxu0 0
        %4585 = vmatpush1.bf16.msra.mxu0 %v4524
        %4586 = vmatprep.subr.bf16.mxu0 0
        %4587 = vmatpush1.bf16.msra.mxu0 %v4525
        %4588 = vmatprep.subr.bf16.mxu0 0
        %4589 = vmatpush1.bf16.msra.mxu0 %v4526
        %4590 = vmatprep.subr.bf16.mxu0 0
        %4591 = vmatpush1.bf16.msra.mxu0 %v4527
        %4592 = vmatprep.mubr.bf16.mxu0 %v4312
        %4593 = vmatmul.mubr.bf16.gmra.mrb[0].mxu0 %v4357
        %v4594 = vpop.f32.mrb[0].mxu0
        %v4595 = vadd.f32 %v4414, %v4594
        %v4596 = vpop.f32.mrb[0].mxu0
        %v4597 = vpop.f32.mrb[0].mxu0
        %v4598 = vpop.f32.mrb[0].mxu0
        %4599 = vdwg.mxu0
        %4600 = vmatprep.subr.bf16.mxu0 0
        %4601 = vmatpush1.bf16.msra.mxu0 %v4528
        %4602 = vmatprep.subr.bf16.mxu0 0
        %4603 = vmatpush1.bf16.msra.mxu0 %v4529
        %4604 = vmatprep.subr.bf16.mxu0 0
        %4605 = vmatpush1.bf16.msra.mxu0 %v4530
        %4606 = vmatprep.subr.bf16.mxu0 0
        %4607 = vmatpush1.bf16.msra.mxu0 %v4531
        %4608 = vmatprep.subr.bf16.mxu0 0
        %4609 = vmatpush1.bf16.msra.mxu0 %v4532
        %4610 = vmatprep.subr.bf16.mxu0 0
        %4611 = vmatpush1.bf16.msra.mxu0 %v4533
        %4612 = vmatprep.subr.bf16.mxu0 0
        %4613 = vmatpush1.bf16.msra.mxu0 %v4534
        %4614 = vmatprep.subr.bf16.mxu0 0
        %4615 = vmatpush1.bf16.msra.mxu0 %v4535
        %4616 = vmatprep.subr.bf16.mxu0 0
        %4617 = vmatpush1.bf16.msra.mxu0 0
        %4618 = vmatprep.subr.bf16.mxu0 0
        %4619 = vmatpush1.bf16.msra.mxu0 0
        %4620 = vmatprep.subr.bf16.mxu0 0
        %4621 = vmatpush1.bf16.msra.mxu0 0
        %4622 = vmatprep.subr.bf16.mxu0 0
        %4623 = vmatpush1.bf16.msra.mxu0 0
        %4624 = vmatprep.subr.bf16.mxu0 0
        %4625 = vmatpush1.bf16.msra.mxu0 0
        %4626 = vmatprep.subr.bf16.mxu0 0
        %4627 = vmatpush1.bf16.msra.mxu0 0
        %4628 = vmatprep.subr.bf16.mxu0 0
        %4629 = vmatpush1.bf16.msra.mxu0 0
        %4630 = vmatprep.subr.bf16.mxu0 0
        %4631 = vmatpush1.bf16.msra.mxu0 0
        %4632 = vmatprep.mubr.bf16.mxu0 0
        %4633 = vmatmul.mubr.bf16.gmra.mrb[0].mxu0 %v4359
        %v4634 = vpop.f32.mrb[0].mxu0
        %v4635 = vadd.f32 %v4595, %v4634
        %v4636 = vpop.f32.mrb[0].mxu0
        %v4637 = vpop.f32.mrb[0].mxu0
        %v4638 = vpop.f32.mrb[0].mxu0
        %4639 = vdwg.mxu0
        %v4640 = vpack.c.bf16 %v4635, %v4635
        %v4642 = vsel %vm3073, %v4640, 0
        %4644 = vmatprep.subr.bf16.mxu0 0
        %4645 = vmatpush1.bf16.msra.mxu0 %v4642
        %4646 = vmatprep.subr.bf16.mxu0 0
        %4647 = vmatpush1.bf16.msra.mxu0 0
        %4648 = vmatprep.subr.bf16.mxu0 0
        %4649 = vmatpush1.bf16.msra.mxu0 0
        %4650 = vmatprep.subr.bf16.mxu0 0
        %4651 = vmatpush1.bf16.msra.mxu0 0
        %4652 = vmatprep.subr.bf16.mxu0 0
        %4653 = vmatpush1.bf16.msra.mxu0 0
        %4654 = vmatprep.subr.bf16.mxu0 0
        %4655 = vmatpush1.bf16.msra.mxu0 0
        %4656 = vmatprep.subr.bf16.mxu0 0
        %4657 = vmatpush1.bf16.msra.mxu0 0
        %4658 = vmatprep.subr.bf16.mxu0 0
        %4659 = vmatpush1.bf16.msra.mxu0 0
        %4660 = vmatprep.subr.bf16.mxu0 0
        %4661 = vmatpush1.bf16.msra.mxu0 0
        %4662 = vmatprep.subr.bf16.mxu0 0
        %4663 = vmatpush1.bf16.msra.mxu0 0
        %4664 = vmatprep.subr.bf16.mxu0 0
        %4665 = vmatpush1.bf16.msra.mxu0 0
        %4666 = vmatprep.subr.bf16.mxu0 0
        %4667 = vmatpush1.bf16.msra.mxu0 0
        %4668 = vmatprep.subr.bf16.mxu0 0
        %4669 = vmatpush1.bf16.msra.mxu0 0
        %4670 = vmatprep.subr.bf16.mxu0 0
        %4671 = vmatpush1.bf16.msra.mxu0 0
        %4672 = vmatprep.subr.bf16.mxu0 0
        %4673 = vmatpush1.bf16.msra.mxu0 0
        %4674 = vmatprep.subr.bf16.mxu0 0
        %4675 = vmatpush1.bf16.msra.mxu0 0
        %4676 = vmatprep.mubr.bf16.mxu0 0
        %4677 = vmatmul.mubr.bf16.gmra.mrb[0].mxu0 %v3071
        %v4678 = vpop.f32.mrb[0].mxu0
        %v4679 = vadd.f32 0.0, %v4678
        %v4680 = vpop.f32.mrb[0].mxu0
        %v4681 = vpop.f32.mrb[0].mxu0
        %v4682 = vpop.f32.mrb[0].mxu0
        %4683 = vdwg.mxu0
        %v4684 = vpack.c.bf16 %v4679, %v4679
        %4685 = vmatprep.subr.bf16.mxu0 0
        %4686 = vmatpush1.bf16.msra.mxu0 %v3150
        %4687 = vmatprep.subr.bf16.mxu0 0
        %4688 = vmatpush1.bf16.msra.mxu0 %v3151
        %4689 = vmatprep.subr.bf16.mxu0 0
        %4690 = vmatpush1.bf16.msra.mxu0 %v3152
        %4691 = vmatprep.subr.bf16.mxu0 0
        %4692 = vmatpush1.bf16.msra.mxu0 %v3153
        %4693 = vmatprep.subr.bf16.mxu0 0
        %4694 = vmatpush1.bf16.msra.mxu0 %v3154
        %4695 = vmatprep.subr.bf16.mxu0 0
        %4696 = vmatpush1.bf16.msra.mxu0 %v3155
        %4697 = vmatprep.subr.bf16.mxu0 0
        %4698 = vmatpush1.bf16.msra.mxu0 %v3156
        %4699 = vmatprep.subr.bf16.mxu0 0
        %4700 = vmatpush1.bf16.msra.mxu0 %v3157
        %4701 = vmatprep.subr.bf16.mxu0 0
        %4702 = vmatpush1.bf16.msra.mxu0 0
        %4703 = vmatprep.subr.bf16.mxu0 0
        %4704 = vmatpush1.bf16.msra.mxu0 0
        %4705 = vmatprep.subr.bf16.mxu0 0
        %4706 = vmatpush1.bf16.msra.mxu0 0
        %4707 = vmatprep.subr.bf16.mxu0 0
        %4708 = vmatpush1.bf16.msra.mxu0 0
        %4709 = vmatprep.subr.bf16.mxu0 0
        %4710 = vmatpush1.bf16.msra.mxu0 0
        %4711 = vmatprep.subr.bf16.mxu0 0
        %4712 = vmatpush1.bf16.msra.mxu0 0
        %4713 = vmatprep.subr.bf16.mxu0 0
        %4714 = vmatpush1.bf16.msra.mxu0 0
        %4715 = vmatprep.subr.bf16.mxu0 0
        %4716 = vmatpush1.bf16.msra.mxu0 0
        %4717 = vmatprep.mubr.bf16.mxu0 0
        %4718 = vmatmul.mubr.bf16.gmra.mrb[0].mxu0 %v4684
        %v4719 = vpop.f32.mrb[0].mxu0
        %v4720 = vadd.f32 0.0, %v4719
        %v4721 = vpop.f32.mrb[0].mxu0
        %v4722 = vpop.f32.mrb[0].mxu0
        %v4723 = vpop.f32.mrb[0].mxu0
        %4724 = vdwg.mxu0
        %v4725 = vsub.f32 %v4635, %v4720
        %v4726 = vmul.f32 %v4725, %v4725
        %v4727 = vpack.c.bf16 %v4726, %v4726
        %v4729 = vsel %vm3073, %v4727, 0
        %4731 = vmatprep.subr.bf16.mxu0 0
        %4732 = vmatpush1.bf16.msra.mxu0 %v4729
        %4733 = vmatprep.subr.bf16.mxu0 0
        %4734 = vmatpush1.bf16.msra.mxu0 0
        %4735 = vmatprep.subr.bf16.mxu0 0
        %4736 = vmatpush1.bf16.msra.mxu0 0
        %4737 = vmatprep.subr.bf16.mxu0 0
        %4738 = vmatpush1.bf16.msra.mxu0 0
        %4739 = vmatprep.subr.bf16.mxu0 0
        %4740 = vmatpush1.bf16.msra.mxu0 0
        %4741 = vmatprep.subr.bf16.mxu0 0
        %4742 = vmatpush1.bf16.msra.mxu0 0
        %4743 = vmatprep.subr.bf16.mxu0 0
        %4744 = vmatpush1.bf16.msra.mxu0 0
        %4745 = vmatprep.subr.bf16.mxu0 0
        %4746 = vmatpush1.bf16.msra.mxu0 0
        %4747 = vmatprep.subr.bf16.mxu0 0
        %4748 = vmatpush1.bf16.msra.mxu0 0
        %4749 = vmatprep.subr.bf16.mxu0 0
        %4750 = vmatpush1.bf16.msra.mxu0 0
        %4751 = vmatprep.subr.bf16.mxu0 0
        %4752 = vmatpush1.bf16.msra.mxu0 0
        %4753 = vmatprep.subr.bf16.mxu0 0
        %4754 = vmatpush1.bf16.msra.mxu0 0
        %4755 = vmatprep.subr.bf16.mxu0 0
        %4756 = vmatpush1.bf16.msra.mxu0 0
        %4757 = vmatprep.subr.bf16.mxu0 0
        %4758 = vmatpush1.bf16.msra.mxu0 0
        %4759 = vmatprep.subr.bf16.mxu0 0
        %4760 = vmatpush1.bf16.msra.mxu0 0
        %4761 = vmatprep.subr.bf16.mxu0 0
        %4762 = vmatpush1.bf16.msra.mxu0 0
        %4763 = vmatprep.mubr.bf16.mxu0 0
        %4764 = vmatmul.mubr.bf16.gmra.mrb[0].mxu0 %v3071
        %v4765 = vpop.f32.mrb[0].mxu0
        %v4766 = vadd.f32 0.0, %v4765
        %v4767 = vpop.f32.mrb[0].mxu0
        %v4768 = vpop.f32.mrb[0].mxu0
        %v4769 = vpop.f32.mrb[0].mxu0
        %4770 = vdwg.mxu0
        %v4771 = vpack.c.bf16 %v4766, %v4766
        %4772 = vmatprep.subr.bf16.mxu0 0
        %4773 = vmatpush1.bf16.msra.mxu0 %v3150
        %4774 = vmatprep.subr.bf16.mxu0 0
        %4775 = vmatpush1.bf16.msra.mxu0 %v3151
        %4776 = vmatprep.subr.bf16.mxu0 0
        %4777 = vmatpush1.bf16.msra.mxu0 %v3152
        %4778 = vmatprep.subr.bf16.mxu0 0
        %4779 = vmatpush1.bf16.msra.mxu0 %v3153
        %4780 = vmatprep.subr.bf16.mxu0 0
        %4781 = vmatpush1.bf16.msra.mxu0 %v3154
        %4782 = vmatprep.subr.bf16.mxu0 0
        %4783 = vmatpush1.bf16.msra.mxu0 %v3155
        %4784 = vmatprep.subr.bf16.mxu0 0
        %4785 = vmatpush1.bf16.msra.mxu0 %v3156
        %4786 = vmatprep.subr.bf16.mxu0 0
        %4787 = vmatpush1.bf16.msra.mxu0 %v3157
        %4788 = vmatprep.subr.bf16.mxu0 0
        %4789 = vmatpush1.bf16.msra.mxu0 0
        %4790 = vmatprep.subr.bf16.mxu0 0
        %4791 = vmatpush1.bf16.msra.mxu0 0
        %4792 = vmatprep.subr.bf16.mxu0 0
        %4793 = vmatpush1.bf16.msra.mxu0 0
        %4794 = vmatprep.subr.bf16.mxu0 0
        %4795 = vmatpush1.bf16.msra.mxu0 0
        %4796 = vmatprep.subr.bf16.mxu0 0
        %4797 = vmatpush1.bf16.msra.mxu0 0
        %4798 = vmatprep.subr.bf16.mxu0 0
        %4799 = vmatpush1.bf16.msra.mxu0 0
        %4800 = vmatprep.subr.bf16.mxu0 0
        %4801 = vmatpush1.bf16.msra.mxu0 0
        %4802 = vmatprep.subr.bf16.mxu0 0
        %4803 = vmatpush1.bf16.msra.mxu0 0
        %4804 = vmatprep.mubr.bf16.mxu0 0
        %4805 = vmatmul.mubr.bf16.gmra.mrb[0].mxu0 %v4771
        %v4806 = vpop.f32.mrb[0].mxu0
        %v4807 = vadd.f32 1e-05, %v4806
        %v4808 = vpop.f32.mrb[0].mxu0
        %v4809 = vpop.f32.mrb[0].mxu0
        %v4810 = vpop.f32.mrb[0].mxu0
        %4811 = vdwg.mxu0
        %v4812 = vrsqrt.pop %v4807
        %v4813 = vmul.f32 %v4725, %v4812
        %v4814 = vmax.f32 %v4813, 0.0
        %v4815 = vpack.c.bf16 %v4814, %v4814
        %v4817 = vsel %vm3073, %v4815, 0
        %4819 = vmatprep.subr.bf16.mxu0 0
        %4820 = vmatpush1.bf16.msra.mxu0 %v4817
        %4821 = vmatprep.subr.bf16.mxu0 0
        %4822 = vmatpush1.bf16.msra.mxu0 0
        %4823 = vmatprep.subr.bf16.mxu0 0
        %4824 = vmatpush1.bf16.msra.mxu0 0
        %4825 = vmatprep.subr.bf16.mxu0 0
        %4826 = vmatpush1.bf16.msra.mxu0 0
        %4827 = vmatprep.subr.bf16.mxu0 0
        %4828 = vmatpush1.bf16.msra.mxu0 0
        %4829 = vmatprep.subr.bf16.mxu0 0
        %4830 = vmatpush1.bf16.msra.mxu0 0
        %4831 = vmatprep.subr.bf16.mxu0 0
        %4832 = vmatpush1.bf16.msra.mxu0 0
        %4833 = vmatprep.subr.bf16.mxu0 0
        %4834 = vmatpush1.bf16.msra.mxu0 0
        %4835 = vmatprep.subr.bf16.mxu0 0
        %4836 = vmatpush1.bf16.msra.mxu0 0
        %4837 = vmatprep.subr.bf16.mxu0 0
        %4838 = vmatpush1.bf16.msra.mxu0 0
        %4839 = vmatprep.subr.bf16.mxu0 0
        %4840 = vmatpush1.bf16.msra.mxu0 0
        %4841 = vmatprep.subr.bf16.mxu0 0
        %4842 = vmatpush1.bf16.msra.mxu0 0
        %4843 = vmatprep.subr.bf16.mxu0 0
        %4844 = vmatpush1.bf16.msra.mxu0 0
        %4845 = vmatprep.subr.bf16.mxu0 0
        %4846 = vmatpush1.bf16.msra.mxu0 0
        %4847 = vmatprep.subr.bf16.mxu0 0
        %4848 = vmatpush1.bf16.msra.mxu0 0
        %4849 = vmatprep.subr.bf16.mxu0 0
        %4850 = vmatpush1.bf16.msra.mxu0 0
        %4851 = vmatprep.mubr.bf16.mxu0 0
        %4852 = vmatmul.mubr.bf16.gmra.mrb[0].mxu0 %v3305
        %v4853 = vpop.f32.mrb[0].mxu0
        %v4854 = vadd.f32 0.0, %v4853
        %v4855 = vpop.f32.mrb[0].mxu0
        %v4856 = vpop.f32.mrb[0].mxu0
        %v4857 = vadd.f32 0.0, %v4856
        %v4858 = vpop.f32.mrb[0].mxu0
        %4859 = vdwg.mxu0
        %v4860 = vpack.c.bf16 %v4857, %v4854
        %v4862 = vrot.slane %v4860, 4
        %v4864 = vld [vmem:[%s47] sm:$0xf]
        %v4865 = vld [vmem:[%s47 + $0x4] sm:$0xf]
        %v4866 = vld [vmem:[%s47 + $0x8] sm:$0xf]
        %v4867 = vld [vmem:[%s47 + $0xc] sm:$0xf]
        %v4868 = vld [vmem:[%s47 + $0x10] sm:$0xf]
        %v4869 = vld [vmem:[%s47 + $0x14] sm:$0xf]
        %v4870 = vld [vmem:[%s47 + $0x18] sm:$0xf]
        %v4871 = vld [vmem:[%s47 + $0x1c] sm:$0xf]
        %v4872 = vld [vmem:[%s47 + $0x20] sm:$0xf]
        %v4873 = vld [vmem:[%s47 + $0x24] sm:$0xf]
        %v4874 = vld [vmem:[%s47 + $0x28] sm:$0xf]
        %v4875 = vld [vmem:[%s47 + $0x2c] sm:$0xf]
        %v4876 = vld [vmem:[%s47 + $0x30] sm:$0xf]
        %v4877 = vld [vmem:[%s47 + $0x34] sm:$0xf]
        %v4878 = vld [vmem:[%s47 + $0x38] sm:$0xf]
        %v4879 = vld [vmem:[%s47 + $0x3c] sm:$0xf]
        %v4880 = vld [vmem:[%s47 + $0x40] sm:$0xf]
        %v4881 = vld [vmem:[%s47 + $0x44] sm:$0xf]
        %v4882 = vld [vmem:[%s47 + $0x48] sm:$0xf]
        %v4883 = vld [vmem:[%s47 + $0x4c] sm:$0xf]
        %v4884 = vld [vmem:[%s47 + $0x50] sm:$0xf]
        %v4885 = vld [vmem:[%s47 + $0x54] sm:$0xf]
        %v4886 = vld [vmem:[%s47 + $0x58] sm:$0xf]
        %v4887 = vld [vmem:[%s47 + $0x5c] sm:$0xf]
        %v4888 = vld [vmem:[%s47 + $0x60] sm:$0xf]
        %v4889 = vld [vmem:[%s47 + $0x64] sm:$0xf]
        %v4890 = vld [vmem:[%s47 + $0x68] sm:$0xf]
        %v4891 = vld [vmem:[%s47 + $0x6c] sm:$0xf]
        %v4892 = vld [vmem:[%s47 + $0x70] sm:$0xf]
        %v4893 = vld [vmem:[%s47 + $0x74] sm:$0xf]
        %v4894 = vld [vmem:[%s47 + $0x78] sm:$0xf]
        %v4895 = vld [vmem:[%s47 + $0x7c] sm:$0xf]
        %v4896 = vld [vmem:[%s47 + $0x80] sm:$0xf]
        %v4897 = vld [vmem:[%s47 + $0x84] sm:$0xf]
        %v4898 = vld [vmem:[%s47 + $0x88] sm:$0xf]
        %v4899 = vld [vmem:[%s47 + $0x8c] sm:$0xf]
        %v4900 = vld [vmem:[%s47 + $0x90] sm:$0xf]
        %v4901 = vld [vmem:[%s47 + $0x94] sm:$0xf]
        %v4902 = vld [vmem:[%s47 + $0x98] sm:$0xf]
        %v4903 = vld [vmem:[%s47 + $0x9c] sm:$0xf]
        %v4904 = vld [vmem:[%s47 + $0xa0] sm:$0xf]
        %v4905 = vld [vmem:[%s47 + $0xa4] sm:$0xf]
        %v4906 = vld [vmem:[%s47 + $0xa8] sm:$0xf]
        %v4907 = vld [vmem:[%s47 + $0xac] sm:$0xf]
        %v4908 = vld [vmem:[%s47 + $0xb0] sm:$0xf]
        %v4909 = vld [vmem:[%s47 + $0xb4] sm:$0xf]
        %v4910 = vld [vmem:[%s47 + $0xb8] sm:$0xf]
        %v4911 = vld [vmem:[%s47 + $0xbc] sm:$0xf]
        %v4912 = vld [vmem:[#allocation31] sm:$0x1]
        %v4914 = vlaneseq
        %v4915 = vshrl.u32 %v4914, 7
        %v4916 = vsub.s32 0, %v4915
        %v4917 = vrot.slane %v4912, %v4916
        %v4967 = vunpack.c.l.b16 %v4864
        %v4968 = vunpack.c.l.b16 %v4865
        %v4969 = vunpack.c.l.b16 %v4866
        %v4970 = vunpack.c.l.b16 %v4867
        %v4971 = vunpack.c.l.b16 %v4868
        %v4972 = vunpack.c.l.b16 %v4869
        %v4973 = vunpack.c.l.b16 %v4870
        %v4974 = vunpack.c.l.b16 %v4871
        %v4975 = vunpack.c.l.b16 %v4872
        %v4976 = vunpack.c.l.b16 %v4873
        %v4977 = vunpack.c.l.b16 %v4874
        %v4978 = vunpack.c.l.b16 %v4875
        %v4979 = vunpack.c.l.b16 %v4876
        %v4980 = vunpack.c.l.b16 %v4877
        %v4981 = vunpack.c.l.b16 %v4878
        %v4982 = vunpack.c.l.b16 %v4879
        %v4983 = vunpack.c.l.b16 %v4880
        %v4984 = vunpack.c.l.b16 %v4881
        %v4985 = vunpack.c.l.b16 %v4882
        %v4986 = vunpack.c.l.b16 %v4883
        %v4987 = vunpack.c.l.b16 %v4884
        %v4988 = vunpack.c.l.b16 %v4885
        %v4989 = vunpack.c.l.b16 %v4886
        %v4990 = vunpack.c.l.b16 %v4887
        %v4991 = vunpack.c.l.b16 %v4888
        %v4992 = vunpack.c.l.b16 %v4889
        %v4993 = vunpack.c.l.b16 %v4890
        %v4994 = vunpack.c.l.b16 %v4891
        %v4995 = vunpack.c.l.b16 %v4892
        %v4996 = vunpack.c.l.b16 %v4893
        %v4997 = vunpack.c.l.b16 %v4894
        %v4998 = vunpack.c.l.b16 %v4895
        %v4999 = vunpack.c.l.b16 %v4896
        %v5000 = vunpack.c.l.b16 %v4897
        %v5001 = vunpack.c.l.b16 %v4898
        %v5002 = vunpack.c.l.b16 %v4899
        %v5003 = vunpack.c.l.b16 %v4900
        %v5004 = vunpack.c.l.b16 %v4901
        %v5005 = vunpack.c.l.b16 %v4902
        %v5006 = vunpack.c.l.b16 %v4903
        %v5007 = vunpack.c.l.b16 %v4904
        %v5008 = vunpack.c.l.b16 %v4905
        %v5009 = vunpack.c.l.b16 %v4906
        %v5010 = vunpack.c.l.b16 %v4907
        %v5011 = vunpack.c.l.b16 %v4908
        %v5012 = vunpack.c.l.b16 %v4909
        %v5013 = vunpack.c.l.b16 %v4910
        %v5014 = vunpack.c.l.b16 %v4911
        %v5015 = vpack.c.b16 %v4968, %v4967
        %v5016 = vpack.c.b16 %v4970, %v4969
        %v5017 = vpack.c.b16 %v4972, %v4971
        %v5018 = vpack.c.b16 %v4974, %v4973
        %v5019 = vpack.c.b16 %v4976, %v4975
        %v5020 = vpack.c.b16 %v4978, %v4977
        %v5021 = vpack.c.b16 %v4980, %v4979
        %v5022 = vpack.c.b16 %v4982, %v4981
        %v5023 = vpack.c.b16 %v4984, %v4983
        %v5024 = vpack.c.b16 %v4986, %v4985
        %v5025 = vpack.c.b16 %v4988, %v4987
        %v5026 = vpack.c.b16 %v4990, %v4989
        %v5027 = vpack.c.b16 %v4992, %v4991
        %v5028 = vpack.c.b16 %v4994, %v4993
        %v5029 = vpack.c.b16 %v4996, %v4995
        %v5030 = vpack.c.b16 %v4998, %v4997
        %v5031 = vpack.c.b16 %v5000, %v4999
        %v5032 = vpack.c.b16 %v5002, %v5001
        %v5033 = vpack.c.b16 %v5004, %v5003
        %v5034 = vpack.c.b16 %v5006, %v5005
        %v5035 = vpack.c.b16 %v5008, %v5007
        %v5036 = vpack.c.b16 %v5010, %v5009
        %v5037 = vpack.c.b16 %v5012, %v5011
        %v5038 = vpack.c.b16 %v5014, %v5013
        %5063 = vmatprep.subr.bf16.mxu0 0
        %5064 = vmatpush1.bf16.msra.mxu0 %v5015
        %5065 = vmatprep.subr.bf16.mxu0 0
        %5066 = vmatpush1.bf16.msra.mxu0 %v5016
        %5067 = vmatprep.subr.bf16.mxu0 0
        %5068 = vmatpush1.bf16.msra.mxu0 %v5017
        %5069 = vmatprep.subr.bf16.mxu0 0
        %5070 = vmatpush1.bf16.msra.mxu0 %v5018
        %5071 = vmatprep.subr.bf16.mxu0 0
        %5072 = vmatpush1.bf16.msra.mxu0 %v5019
        %5073 = vmatprep.subr.bf16.mxu0 0
        %5074 = vmatpush1.bf16.msra.mxu0 %v5020
        %5075 = vmatprep.subr.bf16.mxu0 0
        %5076 = vmatpush1.bf16.msra.mxu0 %v5021
        %5077 = vmatprep.subr.bf16.mxu0 0
        %5078 = vmatpush1.bf16.msra.mxu0 %v5022
        %5079 = vmatprep.subr.bf16.mxu0 0
        %5080 = vmatpush1.bf16.msra.mxu0 %v5023
        %5081 = vmatprep.subr.bf16.mxu0 0
        %5082 = vmatpush1.bf16.msra.mxu0 %v5024
        %5083 = vmatprep.subr.bf16.mxu0 0
        %5084 = vmatpush1.bf16.msra.mxu0 %v5025
        %5085 = vmatprep.subr.bf16.mxu0 0
        %5086 = vmatpush1.bf16.msra.mxu0 %v5026
        %5087 = vmatprep.subr.bf16.mxu0 0
        %5088 = vmatpush1.bf16.msra.mxu0 %v5027
        %5089 = vmatprep.subr.bf16.mxu0 0
        %5090 = vmatpush1.bf16.msra.mxu0 %v5028
        %5091 = vmatprep.subr.bf16.mxu0 0
        %5092 = vmatpush1.bf16.msra.mxu0 %v5029
        %5093 = vmatprep.subr.bf16.mxu0 0
        %5094 = vmatpush1.bf16.msra.mxu0 %v5030
        %5095 = vmatprep.mubr.bf16.mxu0 %v4815
        %5096 = vmatmul.mubr.bf16.gmra.mrb[0].mxu0 %v4860
        %v5097 = vpop.f32.mrb[0].mxu0
        %v5098 = vadd.f32 %v4917, %v5097
        %v5099 = vpop.f32.mrb[0].mxu0
        %v5100 = vpop.f32.mrb[0].mxu0
        %v5101 = vpop.f32.mrb[0].mxu0
        %5102 = vdwg.mxu0
        %5103 = vmatprep.subr.bf16.mxu0 0
        %5104 = vmatpush1.bf16.msra.mxu0 %v5031
        %5105 = vmatprep.subr.bf16.mxu0 0
        %5106 = vmatpush1.bf16.msra.mxu0 %v5032
        %5107 = vmatprep.subr.bf16.mxu0 0
        %5108 = vmatpush1.bf16.msra.mxu0 %v5033
        %5109 = vmatprep.subr.bf16.mxu0 0
        %5110 = vmatpush1.bf16.msra.mxu0 %v5034
        %5111 = vmatprep.subr.bf16.mxu0 0
        %5112 = vmatpush1.bf16.msra.mxu0 %v5035
        %5113 = vmatprep.subr.bf16.mxu0 0
        %5114 = vmatpush1.bf16.msra.mxu0 %v5036
        %5115 = vmatprep.subr.bf16.mxu0 0
        %5116 = vmatpush1.bf16.msra.mxu0 %v5037
        %5117 = vmatprep.subr.bf16.mxu0 0
        %5118 = vmatpush1.bf16.msra.mxu0 %v5038
        %5119 = vmatprep.subr.bf16.mxu0 0
        %5120 = vmatpush1.bf16.msra.mxu0 0
        %5121 = vmatprep.subr.bf16.mxu0 0
        %5122 = vmatpush1.bf16.msra.mxu0 0
        %5123 = vmatprep.subr.bf16.mxu0 0
        %5124 = vmatpush1.bf16.msra.mxu0 0
        %5125 = vmatprep.subr.bf16.mxu0 0
        %5126 = vmatpush1.bf16.msra.mxu0 0
        %5127 = vmatprep.subr.bf16.mxu0 0
        %5128 = vmatpush1.bf16.msra.mxu0 0
        %5129 = vmatprep.subr.bf16.mxu0 0
        %5130 = vmatpush1.bf16.msra.mxu0 0
        %5131 = vmatprep.subr.bf16.mxu0 0
        %5132 = vmatpush1.bf16.msra.mxu0 0
        %5133 = vmatprep.subr.bf16.mxu0 0
        %5134 = vmatpush1.bf16.msra.mxu0 0
        %5135 = vmatprep.mubr.bf16.mxu0 0
        %5136 = vmatmul.mubr.bf16.gmra.mrb[0].mxu0 %v4862
        %v5137 = vpop.f32.mrb[0].mxu0
        %v5138 = vadd.f32 %v5098, %v5137
        %v5139 = vpop.f32.mrb[0].mxu0
        %v5140 = vpop.f32.mrb[0].mxu0
        %v5141 = vpop.f32.mrb[0].mxu0
        %5142 = vdwg.mxu0
        %v5143 = vpack.c.bf16 %v5138, %v5138
        %v5145 = vsel %vm3073, %v5143, 0
        %5147 = vmatprep.subr.bf16.mxu0 0
        %5148 = vmatpush1.bf16.msra.mxu0 %v5145
        %5149 = vmatprep.subr.bf16.mxu0 0
        %5150 = vmatpush1.bf16.msra.mxu0 0
        %5151 = vmatprep.subr.bf16.mxu0 0
        %5152 = vmatpush1.bf16.msra.mxu0 0
        %5153 = vmatprep.subr.bf16.mxu0 0
        %5154 = vmatpush1.bf16.msra.mxu0 0
        %5155 = vmatprep.subr.bf16.mxu0 0
        %5156 = vmatpush1.bf16.msra.mxu0 0
        %5157 = vmatprep.subr.bf16.mxu0 0
        %5158 = vmatpush1.bf16.msra.mxu0 0
        %5159 = vmatprep.subr.bf16.mxu0 0
        %5160 = vmatpush1.bf16.msra.mxu0 0
        %5161 = vmatprep.subr.bf16.mxu0 0
        %5162 = vmatpush1.bf16.msra.mxu0 0
        %5163 = vmatprep.subr.bf16.mxu0 0
        %5164 = vmatpush1.bf16.msra.mxu0 0
        %5165 = vmatprep.subr.bf16.mxu0 0
        %5166 = vmatpush1.bf16.msra.mxu0 0
        %5167 = vmatprep.subr.bf16.mxu0 0
        %5168 = vmatpush1.bf16.msra.mxu0 0
        %5169 = vmatprep.subr.bf16.mxu0 0
        %5170 = vmatpush1.bf16.msra.mxu0 0
        %5171 = vmatprep.subr.bf16.mxu0 0
        %5172 = vmatpush1.bf16.msra.mxu0 0
        %5173 = vmatprep.subr.bf16.mxu0 0
        %5174 = vmatpush1.bf16.msra.mxu0 0
        %5175 = vmatprep.subr.bf16.mxu0 0
        %5176 = vmatpush1.bf16.msra.mxu0 0
        %5177 = vmatprep.subr.bf16.mxu0 0
        %5178 = vmatpush1.bf16.msra.mxu0 0
        %5179 = vmatprep.mubr.bf16.mxu0 0
        %5180 = vmatmul.mubr.bf16.gmra.mrb[0].mxu0 %v3071
        %v5181 = vpop.f32.mrb[0].mxu0
        %v5182 = vadd.f32 0.0, %v5181
        %v5183 = vpop.f32.mrb[0].mxu0
        %v5184 = vpop.f32.mrb[0].mxu0
        %v5185 = vpop.f32.mrb[0].mxu0
        %5186 = vdwg.mxu0
        %v5187 = vpack.c.bf16 %v5182, %v5182
        %5188 = vmatprep.subr.bf16.mxu0 0
        %5189 = vmatpush1.bf16.msra.mxu0 %v3150
        %5190 = vmatprep.subr.bf16.mxu0 0
        %5191 = vmatpush1.bf16.msra.mxu0 %v3151
        %5192 = vmatprep.subr.bf16.mxu0 0
        %5193 = vmatpush1.bf16.msra.mxu0 %v3152
        %5194 = vmatprep.subr.bf16.mxu0 0
        %5195 = vmatpush1.bf16.msra.mxu0 %v3153
        %5196 = vmatprep.subr.bf16.mxu0 0
        %5197 = vmatpush1.bf16.msra.mxu0 %v3154
        %5198 = vmatprep.subr.bf16.mxu0 0
        %5199 = vmatpush1.bf16.msra.mxu0 %v3155
        %5200 = vmatprep.subr.bf16.mxu0 0
        %5201 = vmatpush1.bf16.msra.mxu0 %v3156
        %5202 = vmatprep.subr.bf16.mxu0 0
        %5203 = vmatpush1.bf16.msra.mxu0 %v3157
        %5204 = vmatprep.subr.bf16.mxu0 0
        %5205 = vmatpush1.bf16.msra.mxu0 0
        %5206 = vmatprep.subr.bf16.mxu0 0
        %5207 = vmatpush1.bf16.msra.mxu0 0
        %5208 = vmatprep.subr.bf16.mxu0 0
        %5209 = vmatpush1.bf16.msra.mxu0 0
        %5210 = vmatprep.subr.bf16.mxu0 0
        %5211 = vmatpush1.bf16.msra.mxu0 0
        %5212 = vmatprep.subr.bf16.mxu0 0
        %5213 = vmatpush1.bf16.msra.mxu0 0
        %5214 = vmatprep.subr.bf16.mxu0 0
        %5215 = vmatpush1.bf16.msra.mxu0 0
        %5216 = vmatprep.subr.bf16.mxu0 0
        %5217 = vmatpush1.bf16.msra.mxu0 0
        %5218 = vmatprep.subr.bf16.mxu0 0
        %5219 = vmatpush1.bf16.msra.mxu0 0
        %5220 = vmatprep.mubr.bf16.mxu0 0
        %5221 = vmatmul.mubr.bf16.gmra.mrb[0].mxu0 %v5187
        %v5222 = vpop.f32.mrb[0].mxu0
        %v5223 = vadd.f32 0.0, %v5222
        %v5224 = vpop.f32.mrb[0].mxu0
        %v5225 = vpop.f32.mrb[0].mxu0
        %v5226 = vpop.f32.mrb[0].mxu0
        %5227 = vdwg.mxu0
        %v5228 = vsub.f32 %v5138, %v5223
        %v5229 = vmul.f32 %v5228, %v5228
        %v5230 = vpack.c.bf16 %v5229, %v5229
        %v5232 = vsel %vm3073, %v5230, 0
        %5234 = vmatprep.subr.bf16.mxu0 0
        %5235 = vmatpush1.bf16.msra.mxu0 %v5232
        %5236 = vmatprep.subr.bf16.mxu0 0
        %5237 = vmatpush1.bf16.msra.mxu0 0
        %5238 = vmatprep.subr.bf16.mxu0 0
        %5239 = vmatpush1.bf16.msra.mxu0 0
        %5240 = vmatprep.subr.bf16.mxu0 0
        %5241 = vmatpush1.bf16.msra.mxu0 0
        %5242 = vmatprep.subr.bf16.mxu0 0
        %5243 = vmatpush1.bf16.msra.mxu0 0
        %5244 = vmatprep.subr.bf16.mxu0 0
        %5245 = vmatpush1.bf16.msra.mxu0 0
        %5246 = vmatprep.subr.bf16.mxu0 0
        %5247 = vmatpush1.bf16.msra.mxu0 0
        %5248 = vmatprep.subr.bf16.mxu0 0
        %5249 = vmatpush1.bf16.msra.mxu0 0
        %5250 = vmatprep.subr.bf16.mxu0 0
        %5251 = vmatpush1.bf16.msra.mxu0 0
        %5252 = vmatprep.subr.bf16.mxu0 0
        %5253 = vmatpush1.bf16.msra.mxu0 0
        %5254 = vmatprep.subr.bf16.mxu0 0
        %5255 = vmatpush1.bf16.msra.mxu0 0
        %5256 = vmatprep.subr.bf16.mxu0 0
        %5257 = vmatpush1.bf16.msra.mxu0 0
        %5258 = vmatprep.subr.bf16.mxu0 0
        %5259 = vmatpush1.bf16.msra.mxu0 0
        %5260 = vmatprep.subr.bf16.mxu0 0
        %5261 = vmatpush1.bf16.msra.mxu0 0
        %5262 = vmatprep.subr.bf16.mxu0 0
        %5263 = vmatpush1.bf16.msra.mxu0 0
        %5264 = vmatprep.subr.bf16.mxu0 0
        %5265 = vmatpush1.bf16.msra.mxu0 0
        %5266 = vmatprep.mubr.bf16.mxu0 0
        %5267 = vmatmul.mubr.bf16.gmra.mrb[0].mxu0 %v3071
        %v5268 = vpop.f32.mrb[0].mxu0
        %v5269 = vadd.f32 0.0, %v5268
        %v5270 = vpop.f32.mrb[0].mxu0
        %v5271 = vpop.f32.mrb[0].mxu0
        %v5272 = vpop.f32.mrb[0].mxu0
        %5273 = vdwg.mxu0
        %v5274 = vpack.c.bf16 %v5269, %v5269
        %5275 = vmatprep.subr.bf16.mxu0 0
        %5276 = vmatpush1.bf16.msra.mxu0 %v3150
        %5277 = vmatprep.subr.bf16.mxu0 0
        %5278 = vmatpush1.bf16.msra.mxu0 %v3151
        %5279 = vmatprep.subr.bf16.mxu0 0
        %5280 = vmatpush1.bf16.msra.mxu0 %v3152
        %5281 = vmatprep.subr.bf16.mxu0 0
        %5282 = vmatpush1.bf16.msra.mxu0 %v3153
        %5283 = vmatprep.subr.bf16.mxu0 0
        %5284 = vmatpush1.bf16.msra.mxu0 %v3154
        %5285 = vmatprep.subr.bf16.mxu0 0
        %5286 = vmatpush1.bf16.msra.mxu0 %v3155
        %5287 = vmatprep.subr.bf16.mxu0 0
        %5288 = vmatpush1.bf16.msra.mxu0 %v3156
        %5289 = vmatprep.subr.bf16.mxu0 0
        %5290 = vmatpush1.bf16.msra.mxu0 %v3157
        %5291 = vmatprep.subr.bf16.mxu0 0
        %5292 = vmatpush1.bf16.msra.mxu0 0
        %5293 = vmatprep.subr.bf16.mxu0 0
        %5294 = vmatpush1.bf16.msra.mxu0 0
        %5295 = vmatprep.subr.bf16.mxu0 0
        %5296 = vmatpush1.bf16.msra.mxu0 0
        %5297 = vmatprep.subr.bf16.mxu0 0
        %5298 = vmatpush1.bf16.msra.mxu0 0
        %5299 = vmatprep.subr.bf16.mxu0 0
        %5300 = vmatpush1.bf16.msra.mxu0 0
        %5301 = vmatprep.subr.bf16.mxu0 0
        %5302 = vmatpush1.bf16.msra.mxu0 0
        %5303 = vmatprep.subr.bf16.mxu0 0
        %5304 = vmatpush1.bf16.msra.mxu0 0
        %5305 = vmatprep.subr.bf16.mxu0 0
        %5306 = vmatpush1.bf16.msra.mxu0 0
        %5307 = vmatprep.mubr.bf16.mxu0 0
        %5308 = vmatmul.mubr.bf16.gmra.mrb[0].mxu0 %v5274
        %v5309 = vpop.f32.mrb[0].mxu0
        %v5310 = vadd.f32 1e-05, %v5309
        %v5311 = vpop.f32.mrb[0].mxu0
        %v5312 = vpop.f32.mrb[0].mxu0
        %v5313 = vpop.f32.mrb[0].mxu0
        %5314 = vdwg.mxu0
        %v5315 = vrsqrt.pop %v5310
        %v5316 = vmul.f32 %v5228, %v5315
        %v5317 = vadd.f32 %v4311, %v5316
        %v5318 = vpack.c.bf16 %v5317, %v5317
        %v5320 = vsel %vm3073, %v5318, 0
        %5322 = vmatprep.subr.bf16.mxu0 0
        %5323 = vmatpush1.bf16.msra.mxu0 %v5320
        %5324 = vmatprep.subr.bf16.mxu0 0
        %5325 = vmatpush1.bf16.msra.mxu0 0
        %5326 = vmatprep.subr.bf16.mxu0 0
        %5327 = vmatpush1.bf16.msra.mxu0 0
        %5328 = vmatprep.subr.bf16.mxu0 0
        %5329 = vmatpush1.bf16.msra.mxu0 0
        %5330 = vmatprep.subr.bf16.mxu0 0
        %5331 = vmatpush1.bf16.msra.mxu0 0
        %5332 = vmatprep.subr.bf16.mxu0 0
        %5333 = vmatpush1.bf16.msra.mxu0 0
        %5334 = vmatprep.subr.bf16.mxu0 0
        %5335 = vmatpush1.bf16.msra.mxu0 0
        %5336 = vmatprep.subr.bf16.mxu0 0
        %5337 = vmatpush1.bf16.msra.mxu0 0
        %5338 = vmatprep.subr.bf16.mxu0 0
        %5339 = vmatpush1.bf16.msra.mxu0 0
        %5340 = vmatprep.subr.bf16.mxu0 0
        %5341 = vmatpush1.bf16.msra.mxu0 0
        %5342 = vmatprep.subr.bf16.mxu0 0
        %5343 = vmatpush1.bf16.msra.mxu0 0
        %5344 = vmatprep.subr.bf16.mxu0 0
        %5345 = vmatpush1.bf16.msra.mxu0 0
        %5346 = vmatprep.subr.bf16.mxu0 0
        %5347 = vmatpush1.bf16.msra.mxu0 0
        %5348 = vmatprep.subr.bf16.mxu0 0
        %5349 = vmatpush1.bf16.msra.mxu0 0
        %5350 = vmatprep.subr.bf16.mxu0 0
        %5351 = vmatpush1.bf16.msra.mxu0 0
        %5352 = vmatprep.subr.bf16.mxu0 0
        %5353 = vmatpush1.bf16.msra.mxu0 0
        %5354 = vmatprep.mubr.bf16.mxu0 0
        %5355 = vmatmul.mubr.bf16.gmra.mrb[0].mxu0 %v3305
        %v5356 = vpop.f32.mrb[0].mxu0
        %v5357 = vadd.f32 0.0, %v5356
        %v5358 = vpop.f32.mrb[0].mxu0
        %v5359 = vpop.f32.mrb[0].mxu0
        %v5360 = vadd.f32 0.0, %v5359
        %v5361 = vpop.f32.mrb[0].mxu0
        %5362 = vdwg.mxu0
        %v5363 = vpack.c.bf16 %v5360, %v5357
        %v5365 = vrot.slane %v5363, 4
        %v5367 = vld [vmem:[%s51] sm:$0xf]
        %v5368 = vld [vmem:[%s51 + $0x4] sm:$0xf]
        %v5369 = vld [vmem:[%s51 + $0x8] sm:$0xf]
        %v5370 = vld [vmem:[%s51 + $0xc] sm:$0xf]
        %v5371 = vld [vmem:[%s51 + $0x10] sm:$0xf]
        %v5372 = vld [vmem:[%s51 + $0x14] sm:$0xf]
        %v5373 = vld [vmem:[%s51 + $0x18] sm:$0xf]
        %v5374 = vld [vmem:[%s51 + $0x1c] sm:$0xf]
        %v5375 = vld [vmem:[%s51 + $0x20] sm:$0xf]
        %v5376 = vld [vmem:[%s51 + $0x24] sm:$0xf]
        %v5377 = vld [vmem:[%s51 + $0x28] sm:$0xf]
        %v5378 = vld [vmem:[%s51 + $0x2c] sm:$0xf]
        %v5379 = vld [vmem:[%s51 + $0x30] sm:$0xf]
        %v5380 = vld [vmem:[%s51 + $0x34] sm:$0xf]
        %v5381 = vld [vmem:[%s51 + $0x38] sm:$0xf]
        %v5382 = vld [vmem:[%s51 + $0x3c] sm:$0xf]
        %v5383 = vld [vmem:[%s51 + $0x40] sm:$0xf]
        %v5384 = vld [vmem:[%s51 + $0x44] sm:$0xf]
        %v5385 = vld [vmem:[%s51 + $0x48] sm:$0xf]
        %v5386 = vld [vmem:[%s51 + $0x4c] sm:$0xf]
        %v5387 = vld [vmem:[%s51 + $0x50] sm:$0xf]
        %v5388 = vld [vmem:[%s51 + $0x54] sm:$0xf]
        %v5389 = vld [vmem:[%s51 + $0x58] sm:$0xf]
        %v5390 = vld [vmem:[%s51 + $0x5c] sm:$0xf]
        %v5391 = vld [vmem:[%s51 + $0x60] sm:$0xf]
        %v5392 = vld [vmem:[%s51 + $0x64] sm:$0xf]
        %v5393 = vld [vmem:[%s51 + $0x68] sm:$0xf]
        %v5394 = vld [vmem:[%s51 + $0x6c] sm:$0xf]
        %v5395 = vld [vmem:[%s51 + $0x70] sm:$0xf]
        %v5396 = vld [vmem:[%s51 + $0x74] sm:$0xf]
        %v5397 = vld [vmem:[%s51 + $0x78] sm:$0xf]
        %v5398 = vld [vmem:[%s51 + $0x7c] sm:$0xf]
        %v5399 = vld [vmem:[%s51 + $0x80] sm:$0xf]
        %v5400 = vld [vmem:[%s51 + $0x84] sm:$0xf]
        %v5401 = vld [vmem:[%s51 + $0x88] sm:$0xf]
        %v5402 = vld [vmem:[%s51 + $0x8c] sm:$0xf]
        %v5403 = vld [vmem:[%s51 + $0x90] sm:$0xf]
        %v5404 = vld [vmem:[%s51 + $0x94] sm:$0xf]
        %v5405 = vld [vmem:[%s51 + $0x98] sm:$0xf]
        %v5406 = vld [vmem:[%s51 + $0x9c] sm:$0xf]
        %v5407 = vld [vmem:[%s51 + $0xa0] sm:$0xf]
        %v5408 = vld [vmem:[%s51 + $0xa4] sm:$0xf]
        %v5409 = vld [vmem:[%s51 + $0xa8] sm:$0xf]
        %v5410 = vld [vmem:[%s51 + $0xac] sm:$0xf]
        %v5411 = vld [vmem:[%s51 + $0xb0] sm:$0xf]
        %v5412 = vld [vmem:[%s51 + $0xb4] sm:$0xf]
        %v5413 = vld [vmem:[%s51 + $0xb8] sm:$0xf]
        %v5414 = vld [vmem:[%s51 + $0xbc] sm:$0xf]
        %v5415 = vld [vmem:[#allocation33] sm:$0x1]
        %v5417 = vlaneseq
        %v5418 = vshrl.u32 %v5417, 7
        %v5419 = vsub.s32 0, %v5418
        %v5420 = vrot.slane %v5415, %v5419
        %v5470 = vunpack.c.l.b16 %v5367
        %v5471 = vunpack.c.l.b16 %v5368
        %v5472 = vunpack.c.l.b16 %v5369
        %v5473 = vunpack.c.l.b16 %v5370
        %v5474 = vunpack.c.l.b16 %v5371
        %v5475 = vunpack.c.l.b16 %v5372
        %v5476 = vunpack.c.l.b16 %v5373
        %v5477 = vunpack.c.l.b16 %v5374
        %v5478 = vunpack.c.l.b16 %v5375
        %v5479 = vunpack.c.l.b16 %v5376
        %v5480 = vunpack.c.l.b16 %v5377
        %v5481 = vunpack.c.l.b16 %v5378
        %v5482 = vunpack.c.l.b16 %v5379
        %v5483 = vunpack.c.l.b16 %v5380
        %v5484 = vunpack.c.l.b16 %v5381
        %v5485 = vunpack.c.l.b16 %v5382
        %v5486 = vunpack.c.l.b16 %v5383
        %v5487 = vunpack.c.l.b16 %v5384
        %v5488 = vunpack.c.l.b16 %v5385
        %v5489 = vunpack.c.l.b16 %v5386
        %v5490 = vunpack.c.l.b16 %v5387
        %v5491 = vunpack.c.l.b16 %v5388
        %v5492 = vunpack.c.l.b16 %v5389
        %v5493 = vunpack.c.l.b16 %v5390
        %v5494 = vunpack.c.l.b16 %v5391
        %v5495 = vunpack.c.l.b16 %v5392
        %v5496 = vunpack.c.l.b16 %v5393
        %v5497 = vunpack.c.l.b16 %v5394
        %v5498 = vunpack.c.l.b16 %v5395
        %v5499 = vunpack.c.l.b16 %v5396
        %v5500 = vunpack.c.l.b16 %v5397
        %v5501 = vunpack.c.l.b16 %v5398
        %v5502 = vunpack.c.l.b16 %v5399
        %v5503 = vunpack.c.l.b16 %v5400
        %v5504 = vunpack.c.l.b16 %v5401
        %v5505 = vunpack.c.l.b16 %v5402
        %v5506 = vunpack.c.l.b16 %v5403
        %v5507 = vunpack.c.l.b16 %v5404
        %v5508 = vunpack.c.l.b16 %v5405
        %v5509 = vunpack.c.l.b16 %v5406
        %v5510 = vunpack.c.l.b16 %v5407
        %v5511 = vunpack.c.l.b16 %v5408
        %v5512 = vunpack.c.l.b16 %v5409
        %v5513 = vunpack.c.l.b16 %v5410
        %v5514 = vunpack.c.l.b16 %v5411
        %v5515 = vunpack.c.l.b16 %v5412
        %v5516 = vunpack.c.l.b16 %v5413
        %v5517 = vunpack.c.l.b16 %v5414
        %v5518 = vpack.c.b16 %v5471, %v5470
        %v5519 = vpack.c.b16 %v5473, %v5472
        %v5520 = vpack.c.b16 %v5475, %v5474
        %v5521 = vpack.c.b16 %v5477, %v5476
        %v5522 = vpack.c.b16 %v5479, %v5478
        %v5523 = vpack.c.b16 %v5481, %v5480
        %v5524 = vpack.c.b16 %v5483, %v5482
        %v5525 = vpack.c.b16 %v5485, %v5484
        %v5526 = vpack.c.b16 %v5487, %v5486
        %v5527 = vpack.c.b16 %v5489, %v5488
        %v5528 = vpack.c.b16 %v5491, %v5490
        %v5529 = vpack.c.b16 %v5493, %v5492
        %v5530 = vpack.c.b16 %v5495, %v5494
        %v5531 = vpack.c.b16 %v5497, %v5496
        %v5532 = vpack.c.b16 %v5499, %v5498
        %v5533 = vpack.c.b16 %v5501, %v5500
        %v5534 = vpack.c.b16 %v5503, %v5502
        %v5535 = vpack.c.b16 %v5505, %v5504
        %v5536 = vpack.c.b16 %v5507, %v5506
        %v5537 = vpack.c.b16 %v5509, %v5508
        %v5538 = vpack.c.b16 %v5511, %v5510
        %v5539 = vpack.c.b16 %v5513, %v5512
        %v5540 = vpack.c.b16 %v5515, %v5514
        %v5541 = vpack.c.b16 %v5517, %v5516
        %5566 = vmatprep.subr.bf16.mxu0 0
        %5567 = vmatpush1.bf16.msra.mxu0 %v5518
        %5568 = vmatprep.subr.bf16.mxu0 0
        %5569 = vmatpush1.bf16.msra.mxu0 %v5519
        %5570 = vmatprep.subr.bf16.mxu0 0
        %5571 = vmatpush1.bf16.msra.mxu0 %v5520
        %5572 = vmatprep.subr.bf16.mxu0 0
        %5573 = vmatpush1.bf16.msra.mxu0 %v5521
        %5574 = vmatprep.subr.bf16.mxu0 0
        %5575 = vmatpush1.bf16.msra.mxu0 %v5522
        %5576 = vmatprep.subr.bf16.mxu0 0
        %5577 = vmatpush1.bf16.msra.mxu0 %v5523
        %5578 = vmatprep.subr.bf16.mxu0 0
        %5579 = vmatpush1.bf16.msra.mxu0 %v5524
        %5580 = vmatprep.subr.bf16.mxu0 0
        %5581 = vmatpush1.bf16.msra.mxu0 %v5525
        %5582 = vmatprep.subr.bf16.mxu0 0
        %5583 = vmatpush1.bf16.msra.mxu0 %v5526
        %5584 = vmatprep.subr.bf16.mxu0 0
        %5585 = vmatpush1.bf16.msra.mxu0 %v5527
        %5586 = vmatprep.subr.bf16.mxu0 0
        %5587 = vmatpush1.bf16.msra.mxu0 %v5528
        %5588 = vmatprep.subr.bf16.mxu0 0
        %5589 = vmatpush1.bf16.msra.mxu0 %v5529
        %5590 = vmatprep.subr.bf16.mxu0 0
        %5591 = vmatpush1.bf16.msra.mxu0 %v5530
        %5592 = vmatprep.subr.bf16.mxu0 0
        %5593 = vmatpush1.bf16.msra.mxu0 %v5531
        %5594 = vmatprep.subr.bf16.mxu0 0
        %5595 = vmatpush1.bf16.msra.mxu0 %v5532
        %5596 = vmatprep.subr.bf16.mxu0 0
        %5597 = vmatpush1.bf16.msra.mxu0 %v5533
        %5598 = vmatprep.mubr.bf16.mxu0 %v5318
        %5599 = vmatmul.mubr.bf16.gmra.mrb[0].mxu0 %v5363
        %v5600 = vpop.f32.mrb[0].mxu0
        %v5601 = vadd.f32 %v5420, %v5600
        %v5602 = vpop.f32.mrb[0].mxu0
        %v5603 = vpop.f32.mrb[0].mxu0
        %v5604 = vpop.f32.mrb[0].mxu0
        %5605 = vdwg.mxu0
        %5606 = vmatprep.subr.bf16.mxu0 0
        %5607 = vmatpush1.bf16.msra.mxu0 %v5534
        %5608 = vmatprep.subr.bf16.mxu0 0
        %5609 = vmatpush1.bf16.msra.mxu0 %v5535
        %5610 = vmatprep.subr.bf16.mxu0 0
        %5611 = vmatpush1.bf16.msra.mxu0 %v5536
        %5612 = vmatprep.subr.bf16.mxu0 0
        %5613 = vmatpush1.bf16.msra.mxu0 %v5537
        %5614 = vmatprep.subr.bf16.mxu0 0
        %5615 = vmatpush1.bf16.msra.mxu0 %v5538
        %5616 = vmatprep.subr.bf16.mxu0 0
        %5617 = vmatpush1.bf16.msra.mxu0 %v5539
        %5618 = vmatprep.subr.bf16.mxu0 0
        %5619 = vmatpush1.bf16.msra.mxu0 %v5540
        %5620 = vmatprep.subr.bf16.mxu0 0
        %5621 = vmatpush1.bf16.msra.mxu0 %v5541
        %5622 = vmatprep.subr.bf16.mxu0 0
        %5623 = vmatpush1.bf16.msra.mxu0 0
        %5624 = vmatprep.subr.bf16.mxu0 0
        %5625 = vmatpush1.bf16.msra.mxu0 0
        %5626 = vmatprep.subr.bf16.mxu0 0
        %5627 = vmatpush1.bf16.msra.mxu0 0
        %5628 = vmatprep.subr.bf16.mxu0 0
        %5629 = vmatpush1.bf16.msra.mxu0 0
        %5630 = vmatprep.subr.bf16.mxu0 0
        %5631 = vmatpush1.bf16.msra.mxu0 0
        %5632 = vmatprep.subr.bf16.mxu0 0
        %5633 = vmatpush1.bf16.msra.mxu0 0
        %5634 = vmatprep.subr.bf16.mxu0 0
        %5635 = vmatpush1.bf16.msra.mxu0 0
        %5636 = vmatprep.subr.bf16.mxu0 0
        %5637 = vmatpush1.bf16.msra.mxu0 0
        %5638 = vmatprep.mubr.bf16.mxu0 0
        %5639 = vmatmul.mubr.bf16.gmra.mrb[0].mxu0 %v5365
        %v5640 = vpop.f32.mrb[0].mxu0
        %v5641 = vadd.f32 %v5601, %v5640
        %v5642 = vpop.f32.mrb[0].mxu0
        %v5643 = vpop.f32.mrb[0].mxu0
        %v5644 = vpop.f32.mrb[0].mxu0
        %5645 = vdwg.mxu0
        %v5646 = vpack.c.bf16 %v5641, %v5641
        %v5648 = vsel %vm3073, %v5646, 0
        %5650 = vmatprep.subr.bf16.mxu0 0
        %5651 = vmatpush1.bf16.msra.mxu0 %v5648
        %5652 = vmatprep.subr.bf16.mxu0 0
        %5653 = vmatpush1.bf16.msra.mxu0 0
        %5654 = vmatprep.subr.bf16.mxu0 0
        %5655 = vmatpush1.bf16.msra.mxu0 0
        %5656 = vmatprep.subr.bf16.mxu0 0
        %5657 = vmatpush1.bf16.msra.mxu0 0
        %5658 = vmatprep.subr.bf16.mxu0 0
        %5659 = vmatpush1.bf16.msra.mxu0 0
        %5660 = vmatprep.subr.bf16.mxu0 0
        %5661 = vmatpush1.bf16.msra.mxu0 0
        %5662 = vmatprep.subr.bf16.mxu0 0
        %5663 = vmatpush1.bf16.msra.mxu0 0
        %5664 = vmatprep.subr.bf16.mxu0 0
        %5665 = vmatpush1.bf16.msra.mxu0 0
        %5666 = vmatprep.subr.bf16.mxu0 0
        %5667 = vmatpush1.bf16.msra.mxu0 0
        %5668 = vmatprep.subr.bf16.mxu0 0
        %5669 = vmatpush1.bf16.msra.mxu0 0
        %5670 = vmatprep.subr.bf16.mxu0 0
        %5671 = vmatpush1.bf16.msra.mxu0 0
        %5672 = vmatprep.subr.bf16.mxu0 0
        %5673 = vmatpush1.bf16.msra.mxu0 0
        %5674 = vmatprep.subr.bf16.mxu0 0
        %5675 = vmatpush1.bf16.msra.mxu0 0
        %5676 = vmatprep.subr.bf16.mxu0 0
        %5677 = vmatpush1.bf16.msra.mxu0 0
        %5678 = vmatprep.subr.bf16.mxu0 0
        %5679 = vmatpush1.bf16.msra.mxu0 0
        %5680 = vmatprep.subr.bf16.mxu0 0
        %5681 = vmatpush1.bf16.msra.mxu0 0
        %5682 = vmatprep.mubr.bf16.mxu0 0
        %5683 = vmatmul.mubr.bf16.gmra.mrb[0].mxu0 %v3071
        %v5684 = vpop.f32.mrb[0].mxu0
        %v5685 = vadd.f32 0.0, %v5684
        %v5686 = vpop.f32.mrb[0].mxu0
        %v5687 = vpop.f32.mrb[0].mxu0
        %v5688 = vpop.f32.mrb[0].mxu0
        %5689 = vdwg.mxu0
        %v5690 = vpack.c.bf16 %v5685, %v5685
        %5691 = vmatprep.subr.bf16.mxu0 0
        %5692 = vmatpush1.bf16.msra.mxu0 %v3150
        %5693 = vmatprep.subr.bf16.mxu0 0
        %5694 = vmatpush1.bf16.msra.mxu0 %v3151
        %5695 = vmatprep.subr.bf16.mxu0 0
        %5696 = vmatpush1.bf16.msra.mxu0 %v3152
        %5697 = vmatprep.subr.bf16.mxu0 0
        %5698 = vmatpush1.bf16.msra.mxu0 %v3153
        %5699 = vmatprep.subr.bf16.mxu0 0
        %5700 = vmatpush1.bf16.msra.mxu0 %v3154
        %5701 = vmatprep.subr.bf16.mxu0 0
        %5702 = vmatpush1.bf16.msra.mxu0 %v3155
        %5703 = vmatprep.subr.bf16.mxu0 0
        %5704 = vmatpush1.bf16.msra.mxu0 %v3156
        %5705 = vmatprep.subr.bf16.mxu0 0
        %5706 = vmatpush1.bf16.msra.mxu0 %v3157
        %5707 = vmatprep.subr.bf16.mxu0 0
        %5708 = vmatpush1.bf16.msra.mxu0 0
        %5709 = vmatprep.subr.bf16.mxu0 0
        %5710 = vmatpush1.bf16.msra.mxu0 0
        %5711 = vmatprep.subr.bf16.mxu0 0
        %5712 = vmatpush1.bf16.msra.mxu0 0
        %5713 = vmatprep.subr.bf16.mxu0 0
        %5714 = vmatpush1.bf16.msra.mxu0 0
        %5715 = vmatprep.subr.bf16.mxu0 0
        %5716 = vmatpush1.bf16.msra.mxu0 0
        %5717 = vmatprep.subr.bf16.mxu0 0
        %5718 = vmatpush1.bf16.msra.mxu0 0
        %5719 = vmatprep.subr.bf16.mxu0 0
        %5720 = vmatpush1.bf16.msra.mxu0 0
        %5721 = vmatprep.subr.bf16.mxu0 0
        %5722 = vmatpush1.bf16.msra.mxu0 0
        %5723 = vmatprep.mubr.bf16.mxu0 0
        %5724 = vmatmul.mubr.bf16.gmra.mrb[0].mxu0 %v5690
        %v5725 = vpop.f32.mrb[0].mxu0
        %v5726 = vadd.f32 0.0, %v5725
        %v5727 = vpop.f32.mrb[0].mxu0
        %v5728 = vpop.f32.mrb[0].mxu0
        %v5729 = vpop.f32.mrb[0].mxu0
        %5730 = vdwg.mxu0
        %v5731 = vsub.f32 %v5641, %v5726
        %v5732 = vmul.f32 %v5731, %v5731
        %v5733 = vpack.c.bf16 %v5732, %v5732
        %v5735 = vsel %vm3073, %v5733, 0
        %5737 = vmatprep.subr.bf16.mxu0 0
        %5738 = vmatpush1.bf16.msra.mxu0 %v5735
        %5739 = vmatprep.subr.bf16.mxu0 0
        %5740 = vmatpush1.bf16.msra.mxu0 0
        %5741 = vmatprep.subr.bf16.mxu0 0
        %5742 = vmatpush1.bf16.msra.mxu0 0
        %5743 = vmatprep.subr.bf16.mxu0 0
        %5744 = vmatpush1.bf16.msra.mxu0 0
        %5745 = vmatprep.subr.bf16.mxu0 0
        %5746 = vmatpush1.bf16.msra.mxu0 0
        %5747 = vmatprep.subr.bf16.mxu0 0
        %5748 = vmatpush1.bf16.msra.mxu0 0
        %5749 = vmatprep.subr.bf16.mxu0 0
        %5750 = vmatpush1.bf16.msra.mxu0 0
        %5751 = vmatprep.subr.bf16.mxu0 0
        %5752 = vmatpush1.bf16.msra.mxu0 0
        %5753 = vmatprep.subr.bf16.mxu0 0
        %5754 = vmatpush1.bf16.msra.mxu0 0
        %5755 = vmatprep.subr.bf16.mxu0 0
        %5756 = vmatpush1.bf16.msra.mxu0 0
        %5757 = vmatprep.subr.bf16.mxu0 0
        %5758 = vmatpush1.bf16.msra.mxu0 0
        %5759 = vmatprep.subr.bf16.mxu0 0
        %5760 = vmatpush1.bf16.msra.mxu0 0
        %5761 = vmatprep.subr.bf16.mxu0 0
        %5762 = vmatpush1.bf16.msra.mxu0 0
        %5763 = vmatprep.subr.bf16.mxu0 0
        %5764 = vmatpush1.bf16.msra.mxu0 0
        %5765 = vmatprep.subr.bf16.mxu0 0
        %5766 = vmatpush1.bf16.msra.mxu0 0
        %5767 = vmatprep.subr.bf16.mxu0 0
        %5768 = vmatpush1.bf16.msra.mxu0 0
        %5769 = vmatprep.mubr.bf16.mxu0 0
        %5770 = vmatmul.mubr.bf16.gmra.mrb[0].mxu0 %v3071
        %v5771 = vpop.f32.mrb[0].mxu0
        %v5772 = vadd.f32 0.0, %v5771
        %v5773 = vpop.f32.mrb[0].mxu0
        %v5774 = vpop.f32.mrb[0].mxu0
        %v5775 = vpop.f32.mrb[0].mxu0
        %5776 = vdwg.mxu0
        %v5777 = vpack.c.bf16 %v5772, %v5772
        %5778 = vmatprep.subr.bf16.mxu0 0
        %5779 = vmatpush1.bf16.msra.mxu0 %v3150
        %5780 = vmatprep.subr.bf16.mxu0 0
        %5781 = vmatpush1.bf16.msra.mxu0 %v3151
        %5782 = vmatprep.subr.bf16.mxu0 0
        %5783 = vmatpush1.bf16.msra.mxu0 %v3152
        %5784 = vmatprep.subr.bf16.mxu0 0
        %5785 = vmatpush1.bf16.msra.mxu0 %v3153
        %5786 = vmatprep.subr.bf16.mxu0 0
        %5787 = vmatpush1.bf16.msra.mxu0 %v3154
        %5788 = vmatprep.subr.bf16.mxu0 0
        %5789 = vmatpush1.bf16.msra.mxu0 %v3155
        %5790 = vmatprep.subr.bf16.mxu0 0
        %5791 = vmatpush1.bf16.msra.mxu0 %v3156
        %5792 = vmatprep.subr.bf16.mxu0 0
        %5793 = vmatpush1.bf16.msra.mxu0 %v3157
        %5794 = vmatprep.subr.bf16.mxu0 0
        %5795 = vmatpush1.bf16.msra.mxu0 0
        %5796 = vmatprep.subr.bf16.mxu0 0
        %5797 = vmatpush1.bf16.msra.mxu0 0
        %5798 = vmatprep.subr.bf16.mxu0 0
        %5799 = vmatpush1.bf16.msra.mxu0 0
        %5800 = vmatprep.subr.bf16.mxu0 0
        %5801 = vmatpush1.bf16.msra.mxu0 0
        %5802 = vmatprep.subr.bf16.mxu0 0
        %5803 = vmatpush1.bf16.msra.mxu0 0
        %5804 = vmatprep.subr.bf16.mxu0 0
        %5805 = vmatpush1.bf16.msra.mxu0 0
        %5806 = vmatprep.subr.bf16.mxu0 0
        %5807 = vmatpush1.bf16.msra.mxu0 0
        %5808 = vmatprep.subr.bf16.mxu0 0
        %5809 = vmatpush1.bf16.msra.mxu0 0
        %5810 = vmatprep.mubr.bf16.mxu0 0
        %5811 = vmatmul.mubr.bf16.gmra.mrb[0].mxu0 %v5777
        %v5812 = vpop.f32.mrb[0].mxu0
        %v5813 = vadd.f32 1e-05, %v5812
        %v5814 = vpop.f32.mrb[0].mxu0
        %v5815 = vpop.f32.mrb[0].mxu0
        %v5816 = vpop.f32.mrb[0].mxu0
        %5817 = vdwg.mxu0
        %v5818 = vrsqrt.pop %v5813
        %v5819 = vmul.f32 %v5731, %v5818
        %v5820 = vmax.f32 %v5819, 0.0
        %v5821 = vpack.c.bf16 %v5820, %v5820
        %v5823 = vsel %vm3073, %v5821, 0
        %5825 = vmatprep.subr.bf16.mxu0 0
        %5826 = vmatpush1.bf16.msra.mxu0 %v5823
        %5827 = vmatprep.subr.bf16.mxu0 0
        %5828 = vmatpush1.bf16.msra.mxu0 0
        %5829 = vmatprep.subr.bf16.mxu0 0
        %5830 = vmatpush1.bf16.msra.mxu0 0
        %5831 = vmatprep.subr.bf16.mxu0 0
        %5832 = vmatpush1.bf16.msra.mxu0 0
        %5833 = vmatprep.subr.bf16.mxu0 0
        %5834 = vmatpush1.bf16.msra.mxu0 0
        %5835 = vmatprep.subr.bf16.mxu0 0
        %5836 = vmatpush1.bf16.msra.mxu0 0
        %5837 = vmatprep.subr.bf16.mxu0 0
        %5838 = vmatpush1.bf16.msra.mxu0 0
        %5839 = vmatprep.subr.bf16.mxu0 0
        %5840 = vmatpush1.bf16.msra.mxu0 0
        %5841 = vmatprep.subr.bf16.mxu0 0
        %5842 = vmatpush1.bf16.msra.mxu0 0
        %5843 = vmatprep.subr.bf16.mxu0 0
        %5844 = vmatpush1.bf16.msra.mxu0 0
        %5845 = vmatprep.subr.bf16.mxu0 0
        %5846 = vmatpush1.bf16.msra.mxu0 0
        %5847 = vmatprep.subr.bf16.mxu0 0
        %5848 = vmatpush1.bf16.msra.mxu0 0
        %5849 = vmatprep.subr.bf16.mxu0 0
        %5850 = vmatpush1.bf16.msra.mxu0 0
        %5851 = vmatprep.subr.bf16.mxu0 0
        %5852 = vmatpush1.bf16.msra.mxu0 0
        %5853 = vmatprep.subr.bf16.mxu0 0
        %5854 = vmatpush1.bf16.msra.mxu0 0
        %5855 = vmatprep.subr.bf16.mxu0 0
        %5856 = vmatpush1.bf16.msra.mxu0 0
        %5857 = vmatprep.mubr.bf16.mxu0 0
        %5858 = vmatmul.mubr.bf16.gmra.mrb[0].mxu0 %v3305
        %v5859 = vpop.f32.mrb[0].mxu0
        %v5860 = vadd.f32 0.0, %v5859
        %v5861 = vpop.f32.mrb[0].mxu0
        %v5862 = vpop.f32.mrb[0].mxu0
        %v5863 = vadd.f32 0.0, %v5862
        %v5864 = vpop.f32.mrb[0].mxu0
        %5865 = vdwg.mxu0
        %v5866 = vpack.c.bf16 %v5863, %v5860
        %v5868 = vrot.slane %v5866, 4
        %v5870 = vld [vmem:[%s55] sm:$0xf]
        %v5871 = vld [vmem:[%s55 + $0x4] sm:$0xf]
        %v5872 = vld [vmem:[%s55 + $0x8] sm:$0xf]
        %v5873 = vld [vmem:[%s55 + $0xc] sm:$0xf]
        %v5874 = vld [vmem:[%s55 + $0x10] sm:$0xf]
        %v5875 = vld [vmem:[%s55 + $0x14] sm:$0xf]
        %v5876 = vld [vmem:[%s55 + $0x18] sm:$0xf]
        %v5877 = vld [vmem:[%s55 + $0x1c] sm:$0xf]
        %v5878 = vld [vmem:[%s55 + $0x20] sm:$0xf]
        %v5879 = vld [vmem:[%s55 + $0x24] sm:$0xf]
        %v5880 = vld [vmem:[%s55 + $0x28] sm:$0xf]
        %v5881 = vld [vmem:[%s55 + $0x2c] sm:$0xf]
        %v5882 = vld [vmem:[%s55 + $0x30] sm:$0xf]
        %v5883 = vld [vmem:[%s55 + $0x34] sm:$0xf]
        %v5884 = vld [vmem:[%s55 + $0x38] sm:$0xf]
        %v5885 = vld [vmem:[%s55 + $0x3c] sm:$0xf]
        %v5886 = vld [vmem:[%s55 + $0x40] sm:$0xf]
        %v5887 = vld [vmem:[%s55 + $0x44] sm:$0xf]
        %v5888 = vld [vmem:[%s55 + $0x48] sm:$0xf]
        %v5889 = vld [vmem:[%s55 + $0x4c] sm:$0xf]
        %v5890 = vld [vmem:[%s55 + $0x50] sm:$0xf]
        %v5891 = vld [vmem:[%s55 + $0x54] sm:$0xf]
        %v5892 = vld [vmem:[%s55 + $0x58] sm:$0xf]
        %v5893 = vld [vmem:[%s55 + $0x5c] sm:$0xf]
        %v5894 = vld [vmem:[%s55 + $0x60] sm:$0xf]
        %v5895 = vld [vmem:[%s55 + $0x64] sm:$0xf]
        %v5896 = vld [vmem:[%s55 + $0x68] sm:$0xf]
        %v5897 = vld [vmem:[%s55 + $0x6c] sm:$0xf]
        %v5898 = vld [vmem:[%s55 + $0x70] sm:$0xf]
        %v5899 = vld [vmem:[%s55 + $0x74] sm:$0xf]
        %v5900 = vld [vmem:[%s55 + $0x78] sm:$0xf]
        %v5901 = vld [vmem:[%s55 + $0x7c] sm:$0xf]
        %v5902 = vld [vmem:[%s55 + $0x80] sm:$0xf]
        %v5903 = vld [vmem:[%s55 + $0x84] sm:$0xf]
        %v5904 = vld [vmem:[%s55 + $0x88] sm:$0xf]
        %v5905 = vld [vmem:[%s55 + $0x8c] sm:$0xf]
        %v5906 = vld [vmem:[%s55 + $0x90] sm:$0xf]
        %v5907 = vld [vmem:[%s55 + $0x94] sm:$0xf]
        %v5908 = vld [vmem:[%s55 + $0x98] sm:$0xf]
        %v5909 = vld [vmem:[%s55 + $0x9c] sm:$0xf]
        %v5910 = vld [vmem:[%s55 + $0xa0] sm:$0xf]
        %v5911 = vld [vmem:[%s55 + $0xa4] sm:$0xf]
        %v5912 = vld [vmem:[%s55 + $0xa8] sm:$0xf]
        %v5913 = vld [vmem:[%s55 + $0xac] sm:$0xf]
        %v5914 = vld [vmem:[%s55 + $0xb0] sm:$0xf]
        %v5915 = vld [vmem:[%s55 + $0xb4] sm:$0xf]
        %v5916 = vld [vmem:[%s55 + $0xb8] sm:$0xf]
        %v5917 = vld [vmem:[%s55 + $0xbc] sm:$0xf]
        %v5918 = vld [vmem:[#allocation34] sm:$0x1]
        %v5920 = vlaneseq
        %v5921 = vshrl.u32 %v5920, 7
        %v5922 = vsub.s32 0, %v5921
        %v5923 = vrot.slane %v5918, %v5922
        %v5973 = vunpack.c.l.b16 %v5870
        %v5974 = vunpack.c.l.b16 %v5871
        %v5975 = vunpack.c.l.b16 %v5872
        %v5976 = vunpack.c.l.b16 %v5873
        %v5977 = vunpack.c.l.b16 %v5874
        %v5978 = vunpack.c.l.b16 %v5875
        %v5979 = vunpack.c.l.b16 %v5876
        %v5980 = vunpack.c.l.b16 %v5877
        %v5981 = vunpack.c.l.b16 %v5878
        %v5982 = vunpack.c.l.b16 %v5879
        %v5983 = vunpack.c.l.b16 %v5880
        %v5984 = vunpack.c.l.b16 %v5881
        %v5985 = vunpack.c.l.b16 %v5882
        %v5986 = vunpack.c.l.b16 %v5883
        %v5987 = vunpack.c.l.b16 %v5884
        %v5988 = vunpack.c.l.b16 %v5885
        %v5989 = vunpack.c.l.b16 %v5886
        %v5990 = vunpack.c.l.b16 %v5887
        %v5991 = vunpack.c.l.b16 %v5888
        %v5992 = vunpack.c.l.b16 %v5889
        %v5993 = vunpack.c.l.b16 %v5890
        %v5994 = vunpack.c.l.b16 %v5891
        %v5995 = vunpack.c.l.b16 %v5892
        %v5996 = vunpack.c.l.b16 %v5893
        %v5997 = vunpack.c.l.b16 %v5894
        %v5998 = vunpack.c.l.b16 %v5895
        %v5999 = vunpack.c.l.b16 %v5896
        %v6000 = vunpack.c.l.b16 %v5897
        %v6001 = vunpack.c.l.b16 %v5898
        %v6002 = vunpack.c.l.b16 %v5899
        %v6003 = vunpack.c.l.b16 %v5900
        %v6004 = vunpack.c.l.b16 %v5901
        %v6005 = vunpack.c.l.b16 %v5902
        %v6006 = vunpack.c.l.b16 %v5903
        %v6007 = vunpack.c.l.b16 %v5904
        %v6008 = vunpack.c.l.b16 %v5905
        %v6009 = vunpack.c.l.b16 %v5906
        %v6010 = vunpack.c.l.b16 %v5907
        %v6011 = vunpack.c.l.b16 %v5908
        %v6012 = vunpack.c.l.b16 %v5909
        %v6013 = vunpack.c.l.b16 %v5910
        %v6014 = vunpack.c.l.b16 %v5911
        %v6015 = vunpack.c.l.b16 %v5912
        %v6016 = vunpack.c.l.b16 %v5913
        %v6017 = vunpack.c.l.b16 %v5914
        %v6018 = vunpack.c.l.b16 %v5915
        %v6019 = vunpack.c.l.b16 %v5916
        %v6020 = vunpack.c.l.b16 %v5917
        %v6021 = vpack.c.b16 %v5974, %v5973
        %v6022 = vpack.c.b16 %v5976, %v5975
        %v6023 = vpack.c.b16 %v5978, %v5977
        %v6024 = vpack.c.b16 %v5980, %v5979
        %v6025 = vpack.c.b16 %v5982, %v5981
        %v6026 = vpack.c.b16 %v5984, %v5983
        %v6027 = vpack.c.b16 %v5986, %v5985
        %v6028 = vpack.c.b16 %v5988, %v5987
        %v6029 = vpack.c.b16 %v5990, %v5989
        %v6030 = vpack.c.b16 %v5992, %v5991
        %v6031 = vpack.c.b16 %v5994, %v5993
        %v6032 = vpack.c.b16 %v5996, %v5995
        %v6033 = vpack.c.b16 %v5998, %v5997
        %v6034 = vpack.c.b16 %v6000, %v5999
        %v6035 = vpack.c.b16 %v6002, %v6001
        %v6036 = vpack.c.b16 %v6004, %v6003
        %v6037 = vpack.c.b16 %v6006, %v6005
        %v6038 = vpack.c.b16 %v6008, %v6007
        %v6039 = vpack.c.b16 %v6010, %v6009
        %v6040 = vpack.c.b16 %v6012, %v6011
        %v6041 = vpack.c.b16 %v6014, %v6013
        %v6042 = vpack.c.b16 %v6016, %v6015
        %v6043 = vpack.c.b16 %v6018, %v6017
        %v6044 = vpack.c.b16 %v6020, %v6019
        %6069 = vmatprep.subr.bf16.mxu0 0
        %6070 = vmatpush1.bf16.msra.mxu0 %v6021
        %6071 = vmatprep.subr.bf16.mxu0 0
        %6072 = vmatpush1.bf16.msra.mxu0 %v6022
        %6073 = vmatprep.subr.bf16.mxu0 0
        %6074 = vmatpush1.bf16.msra.mxu0 %v6023
        %6075 = vmatprep.subr.bf16.mxu0 0
        %6076 = vmatpush1.bf16.msra.mxu0 %v6024
        %6077 = vmatprep.subr.bf16.mxu0 0
        %6078 = vmatpush1.bf16.msra.mxu0 %v6025
        %6079 = vmatprep.subr.bf16.mxu0 0
        %6080 = vmatpush1.bf16.msra.mxu0 %v6026
        %6081 = vmatprep.subr.bf16.mxu0 0
        %6082 = vmatpush1.bf16.msra.mxu0 %v6027
        %6083 = vmatprep.subr.bf16.mxu0 0
        %6084 = vmatpush1.bf16.msra.mxu0 %v6028
        %6085 = vmatprep.subr.bf16.mxu0 0
        %6086 = vmatpush1.bf16.msra.mxu0 %v6029
        %6087 = vmatprep.subr.bf16.mxu0 0
        %6088 = vmatpush1.bf16.msra.mxu0 %v6030
        %6089 = vmatprep.subr.bf16.mxu0 0
        %6090 = vmatpush1.bf16.msra.mxu0 %v6031
        %6091 = vmatprep.subr.bf16.mxu0 0
        %6092 = vmatpush1.bf16.msra.mxu0 %v6032
        %6093 = vmatprep.subr.bf16.mxu0 0
        %6094 = vmatpush1.bf16.msra.mxu0 %v6033
        %6095 = vmatprep.subr.bf16.mxu0 0
        %6096 = vmatpush1.bf16.msra.mxu0 %v6034
        %6097 = vmatprep.subr.bf16.mxu0 0
        %6098 = vmatpush1.bf16.msra.mxu0 %v6035
        %6099 = vmatprep.subr.bf16.mxu0 0
        %6100 = vmatpush1.bf16.msra.mxu0 %v6036
        %6101 = vmatprep.mubr.bf16.mxu0 %v5821
        %6102 = vmatmul.mubr.bf16.gmra.mrb[0].mxu0 %v5866
        %v6103 = vpop.f32.mrb[0].mxu0
        %v6104 = vadd.f32 %v5923, %v6103
        %v6105 = vpop.f32.mrb[0].mxu0
        %v6106 = vpop.f32.mrb[0].mxu0
        %v6107 = vpop.f32.mrb[0].mxu0
        %6108 = vdwg.mxu0
        %6109 = vmatprep.subr.bf16.mxu0 0
        %6110 = vmatpush1.bf16.msra.mxu0 %v6037
        %6111 = vmatprep.subr.bf16.mxu0 0
        %6112 = vmatpush1.bf16.msra.mxu0 %v6038
        %6113 = vmatprep.subr.bf16.mxu0 0
        %6114 = vmatpush1.bf16.msra.mxu0 %v6039
        %6115 = vmatprep.subr.bf16.mxu0 0
        %6116 = vmatpush1.bf16.msra.mxu0 %v6040
        %6117 = vmatprep.subr.bf16.mxu0 0
        %6118 = vmatpush1.bf16.msra.mxu0 %v6041
        %6119 = vmatprep.subr.bf16.mxu0 0
        %6120 = vmatpush1.bf16.msra.mxu0 %v6042
        %6121 = vmatprep.subr.bf16.mxu0 0
        %6122 = vmatpush1.bf16.msra.mxu0 %v6043
        %6123 = vmatprep.subr.bf16.mxu0 0
        %6124 = vmatpush1.bf16.msra.mxu0 %v6044
        %6125 = vmatprep.subr.bf16.mxu0 0
        %6126 = vmatpush1.bf16.msra.mxu0 0
        %6127 = vmatprep.subr.bf16.mxu0 0
        %6128 = vmatpush1.bf16.msra.mxu0 0
        %6129 = vmatprep.subr.bf16.mxu0 0
        %6130 = vmatpush1.bf16.msra.mxu0 0
        %6131 = vmatprep.subr.bf16.mxu0 0
        %6132 = vmatpush1.bf16.msra.mxu0 0
        %6133 = vmatprep.subr.bf16.mxu0 0
        %6134 = vmatpush1.bf16.msra.mxu0 0
        %6135 = vmatprep.subr.bf16.mxu0 0
        %6136 = vmatpush1.bf16.msra.mxu0 0
        %6137 = vmatprep.subr.bf16.mxu0 0
        %6138 = vmatpush1.bf16.msra.mxu0 0
        %6139 = vmatprep.subr.bf16.mxu0 0
        %6140 = vmatpush1.bf16.msra.mxu0 0
        %6141 = vmatprep.mubr.bf16.mxu0 0
        %6142 = vmatmul.mubr.bf16.gmra.mrb[0].mxu0 %v5868
        %v6143 = vpop.f32.mrb[0].mxu0
        %v6144 = vadd.f32 %v6104, %v6143
        %v6145 = vpop.f32.mrb[0].mxu0
        %v6146 = vpop.f32.mrb[0].mxu0
        %v6147 = vpop.f32.mrb[0].mxu0
        %6148 = vdwg.mxu0
        %v6149 = vpack.c.bf16 %v6144, %v6144
        %v6151 = vsel %vm3073, %v6149, 0
        %6153 = vmatprep.subr.bf16.mxu0 0
        %6154 = vmatpush1.bf16.msra.mxu0 %v6151
        %6155 = vmatprep.subr.bf16.mxu0 0
        %6156 = vmatpush1.bf16.msra.mxu0 0
        %6157 = vmatprep.subr.bf16.mxu0 0
        %6158 = vmatpush1.bf16.msra.mxu0 0
        %6159 = vmatprep.subr.bf16.mxu0 0
        %6160 = vmatpush1.bf16.msra.mxu0 0
        %6161 = vmatprep.subr.bf16.mxu0 0
        %6162 = vmatpush1.bf16.msra.mxu0 0
        %6163 = vmatprep.subr.bf16.mxu0 0
        %6164 = vmatpush1.bf16.msra.mxu0 0
        %6165 = vmatprep.subr.bf16.mxu0 0
        %6166 = vmatpush1.bf16.msra.mxu0 0
        %6167 = vmatprep.subr.bf16.mxu0 0
        %6168 = vmatpush1.bf16.msra.mxu0 0
        %6169 = vmatprep.subr.bf16.mxu0 0
        %6170 = vmatpush1.bf16.msra.mxu0 0
        %6171 = vmatprep.subr.bf16.mxu0 0
        %6172 = vmatpush1.bf16.msra.mxu0 0
        %6173 = vmatprep.subr.bf16.mxu0 0
        %6174 = vmatpush1.bf16.msra.mxu0 0
        %6175 = vmatprep.subr.bf16.mxu0 0
        %6176 = vmatpush1.bf16.msra.mxu0 0
        %6177 = vmatprep.subr.bf16.mxu0 0
        %6178 = vmatpush1.bf16.msra.mxu0 0
        %6179 = vmatprep.subr.bf16.mxu0 0
        %6180 = vmatpush1.bf16.msra.mxu0 0
        %6181 = vmatprep.subr.bf16.mxu0 0
        %6182 = vmatpush1.bf16.msra.mxu0 0
        %6183 = vmatprep.subr.bf16.mxu0 0
        %6184 = vmatpush1.bf16.msra.mxu0 0
        %6185 = vmatprep.mubr.bf16.mxu0 0
        %6186 = vmatmul.mubr.bf16.gmra.mrb[0].mxu0 %v3071
        %v6187 = vpop.f32.mrb[0].mxu0
        %v6188 = vadd.f32 0.0, %v6187
        %v6189 = vpop.f32.mrb[0].mxu0
        %v6190 = vpop.f32.mrb[0].mxu0
        %v6191 = vpop.f32.mrb[0].mxu0
        %6192 = vdwg.mxu0
        %v6193 = vpack.c.bf16 %v6188, %v6188
        %6194 = vmatprep.subr.bf16.mxu0 0
        %6195 = vmatpush1.bf16.msra.mxu0 %v3150
        %6196 = vmatprep.subr.bf16.mxu0 0
        %6197 = vmatpush1.bf16.msra.mxu0 %v3151
        %6198 = vmatprep.subr.bf16.mxu0 0
        %6199 = vmatpush1.bf16.msra.mxu0 %v3152
        %6200 = vmatprep.subr.bf16.mxu0 0
        %6201 = vmatpush1.bf16.msra.mxu0 %v3153
        %6202 = vmatprep.subr.bf16.mxu0 0
        %6203 = vmatpush1.bf16.msra.mxu0 %v3154
        %6204 = vmatprep.subr.bf16.mxu0 0
        %6205 = vmatpush1.bf16.msra.mxu0 %v3155
        %6206 = vmatprep.subr.bf16.mxu0 0
        %6207 = vmatpush1.bf16.msra.mxu0 %v3156
        %6208 = vmatprep.subr.bf16.mxu0 0
        %6209 = vmatpush1.bf16.msra.mxu0 %v3157
        %6210 = vmatprep.subr.bf16.mxu0 0
        %6211 = vmatpush1.bf16.msra.mxu0 0
        %6212 = vmatprep.subr.bf16.mxu0 0
        %6213 = vmatpush1.bf16.msra.mxu0 0
        %6214 = vmatprep.subr.bf16.mxu0 0
        %6215 = vmatpush1.bf16.msra.mxu0 0
        %6216 = vmatprep.subr.bf16.mxu0 0
        %6217 = vmatpush1.bf16.msra.mxu0 0
        %6218 = vmatprep.subr.bf16.mxu0 0
        %6219 = vmatpush1.bf16.msra.mxu0 0
        %6220 = vmatprep.subr.bf16.mxu0 0
        %6221 = vmatpush1.bf16.msra.mxu0 0
        %6222 = vmatprep.subr.bf16.mxu0 0
        %6223 = vmatpush1.bf16.msra.mxu0 0
        %6224 = vmatprep.subr.bf16.mxu0 0
        %6225 = vmatpush1.bf16.msra.mxu0 0
        %6226 = vmatprep.mubr.bf16.mxu0 0
        %6227 = vmatmul.mubr.bf16.gmra.mrb[0].mxu0 %v6193
        %v6228 = vpop.f32.mrb[0].mxu0
        %v6229 = vadd.f32 0.0, %v6228
        %v6230 = vpop.f32.mrb[0].mxu0
        %v6231 = vpop.f32.mrb[0].mxu0
        %v6232 = vpop.f32.mrb[0].mxu0
        %6233 = vdwg.mxu0
        %v6234 = vsub.f32 %v6144, %v6229
        %v6235 = vmul.f32 %v6234, %v6234
        %v6236 = vpack.c.bf16 %v6235, %v6235
        %v6238 = vsel %vm3073, %v6236, 0
        %6240 = vmatprep.subr.bf16.mxu0 0
        %6241 = vmatpush1.bf16.msra.mxu0 %v6238
        %6242 = vmatprep.subr.bf16.mxu0 0
        %6243 = vmatpush1.bf16.msra.mxu0 0
        %6244 = vmatprep.subr.bf16.mxu0 0
        %6245 = vmatpush1.bf16.msra.mxu0 0
        %6246 = vmatprep.subr.bf16.mxu0 0
        %6247 = vmatpush1.bf16.msra.mxu0 0
        %6248 = vmatprep.subr.bf16.mxu0 0
        %6249 = vmatpush1.bf16.msra.mxu0 0
        %6250 = vmatprep.subr.bf16.mxu0 0
        %6251 = vmatpush1.bf16.msra.mxu0 0
        %6252 = vmatprep.subr.bf16.mxu0 0
        %6253 = vmatpush1.bf16.msra.mxu0 0
        %6254 = vmatprep.subr.bf16.mxu0 0
        %6255 = vmatpush1.bf16.msra.mxu0 0
        %6256 = vmatprep.subr.bf16.mxu0 0
        %6257 = vmatpush1.bf16.msra.mxu0 0
        %6258 = vmatprep.subr.bf16.mxu0 0
        %6259 = vmatpush1.bf16.msra.mxu0 0
        %6260 = vmatprep.subr.bf16.mxu0 0
        %6261 = vmatpush1.bf16.msra.mxu0 0
        %6262 = vmatprep.subr.bf16.mxu0 0
        %6263 = vmatpush1.bf16.msra.mxu0 0
        %6264 = vmatprep.subr.bf16.mxu0 0
        %6265 = vmatpush1.bf16.msra.mxu0 0
        %6266 = vmatprep.subr.bf16.mxu0 0
        %6267 = vmatpush1.bf16.msra.mxu0 0
        %6268 = vmatprep.subr.bf16.mxu0 0
        %6269 = vmatpush1.bf16.msra.mxu0 0
        %6270 = vmatprep.subr.bf16.mxu0 0
        %6271 = vmatpush1.bf16.msra.mxu0 0
        %6272 = vmatprep.mubr.bf16.mxu0 0
        %6273 = vmatmul.mubr.bf16.gmra.mrb[0].mxu0 %v3071
        %v6274 = vpop.f32.mrb[0].mxu0
        %v6275 = vadd.f32 0.0, %v6274
        %v6276 = vpop.f32.mrb[0].mxu0
        %v6277 = vpop.f32.mrb[0].mxu0
        %v6278 = vpop.f32.mrb[0].mxu0
        %6279 = vdwg.mxu0
        %v6280 = vpack.c.bf16 %v6275, %v6275
        %6281 = vmatprep.subr.bf16.mxu0 0
        %6282 = vmatpush1.bf16.msra.mxu0 %v3150
        %6283 = vmatprep.subr.bf16.mxu0 0
        %6284 = vmatpush1.bf16.msra.mxu0 %v3151
        %6285 = vmatprep.subr.bf16.mxu0 0
        %6286 = vmatpush1.bf16.msra.mxu0 %v3152
        %6287 = vmatprep.subr.bf16.mxu0 0
        %6288 = vmatpush1.bf16.msra.mxu0 %v3153
        %6289 = vmatprep.subr.bf16.mxu0 0
        %6290 = vmatpush1.bf16.msra.mxu0 %v3154
        %6291 = vmatprep.subr.bf16.mxu0 0
        %6292 = vmatpush1.bf16.msra.mxu0 %v3155
        %6293 = vmatprep.subr.bf16.mxu0 0
        %6294 = vmatpush1.bf16.msra.mxu0 %v3156
        %6295 = vmatprep.subr.bf16.mxu0 0
        %6296 = vmatpush1.bf16.msra.mxu0 %v3157
        %6297 = vmatprep.subr.bf16.mxu0 0
        %6298 = vmatpush1.bf16.msra.mxu0 0
        %6299 = vmatprep.subr.bf16.mxu0 0
        %6300 = vmatpush1.bf16.msra.mxu0 0
        %6301 = vmatprep.subr.bf16.mxu0 0
        %6302 = vmatpush1.bf16.msra.mxu0 0
        %6303 = vmatprep.subr.bf16.mxu0 0
        %6304 = vmatpush1.bf16.msra.mxu0 0
        %6305 = vmatprep.subr.bf16.mxu0 0
        %6306 = vmatpush1.bf16.msra.mxu0 0
        %6307 = vmatprep.subr.bf16.mxu0 0
        %6308 = vmatpush1.bf16.msra.mxu0 0
        %6309 = vmatprep.subr.bf16.mxu0 0
        %6310 = vmatpush1.bf16.msra.mxu0 0
        %6311 = vmatprep.subr.bf16.mxu0 0
        %6312 = vmatpush1.bf16.msra.mxu0 0
        %6313 = vmatprep.mubr.bf16.mxu0 0
        %6314 = vmatmul.mubr.bf16.gmra.mrb[0].mxu0 %v6280
        %v6315 = vpop.f32.mrb[0].mxu0
        %v6316 = vadd.f32 1e-05, %v6315
        %v6317 = vpop.f32.mrb[0].mxu0
        %v6318 = vpop.f32.mrb[0].mxu0
        %v6319 = vpop.f32.mrb[0].mxu0
        %6320 = vdwg.mxu0
        %v6321 = vrsqrt.pop %v6316
        %v6322 = vmul.f32 %v6234, %v6321
        %v6323 = vadd.f32 %v5317, %v6322
        %v6324 = vpack.c.bf16 %v6323, %v6323
        %v6326 = vsel %vm3073, %v6324, 0
        %6328 = vmatprep.subr.bf16.mxu0 0
        %6329 = vmatpush1.bf16.msra.mxu0 %v6326
        %6330 = vmatprep.subr.bf16.mxu0 0
        %6331 = vmatpush1.bf16.msra.mxu0 0
        %6332 = vmatprep.subr.bf16.mxu0 0
        %6333 = vmatpush1.bf16.msra.mxu0 0
        %6334 = vmatprep.subr.bf16.mxu0 0
        %6335 = vmatpush1.bf16.msra.mxu0 0
        %6336 = vmatprep.subr.bf16.mxu0 0
        %6337 = vmatpush1.bf16.msra.mxu0 0
        %6338 = vmatprep.subr.bf16.mxu0 0
        %6339 = vmatpush1.bf16.msra.mxu0 0
        %6340 = vmatprep.subr.bf16.mxu0 0
        %6341 = vmatpush1.bf16.msra.mxu0 0
        %6342 = vmatprep.subr.bf16.mxu0 0
        %6343 = vmatpush1.bf16.msra.mxu0 0
        %6344 = vmatprep.subr.bf16.mxu0 0
        %6345 = vmatpush1.bf16.msra.mxu0 0
        %6346 = vmatprep.subr.bf16.mxu0 0
        %6347 = vmatpush1.bf16.msra.mxu0 0
        %6348 = vmatprep.subr.bf16.mxu0 0
        %6349 = vmatpush1.bf16.msra.mxu0 0
        %6350 = vmatprep.subr.bf16.mxu0 0
        %6351 = vmatpush1.bf16.msra.mxu0 0
        %6352 = vmatprep.subr.bf16.mxu0 0
        %6353 = vmatpush1.bf16.msra.mxu0 0
        %6354 = vmatprep.subr.bf16.mxu0 0
        %6355 = vmatpush1.bf16.msra.mxu0 0
        %6356 = vmatprep.subr.bf16.mxu0 0
        %6357 = vmatpush1.bf16.msra.mxu0 0
        %6358 = vmatprep.subr.bf16.mxu0 0
        %6359 = vmatpush1.bf16.msra.mxu0 0
        %6360 = vmatprep.mubr.bf16.mxu0 0
        %6361 = vmatmul.mubr.bf16.gmra.mrb[0].mxu0 %v3305
        %v6362 = vpop.f32.mrb[0].mxu0
        %v6363 = vadd.f32 0.0, %v6362
        %v6364 = vpop.f32.mrb[0].mxu0
        %v6365 = vpop.f32.mrb[0].mxu0
        %v6366 = vadd.f32 0.0, %v6365
        %v6367 = vpop.f32.mrb[0].mxu0
        %6368 = vdwg.mxu0
        %v6369 = vpack.c.bf16 %v6366, %v6363
        %v6371 = vrot.slane %v6369, 4
        %v6373 = vld [vmem:[%s59] sm:$0xf]
        %v6374 = vld [vmem:[%s59 + $0x4] sm:$0xf]
        %v6375 = vld [vmem:[%s59 + $0x8] sm:$0xf]
        %v6376 = vld [vmem:[%s59 + $0xc] sm:$0xf]
        %v6377 = vld [vmem:[%s59 + $0x10] sm:$0xf]
        %v6378 = vld [vmem:[%s59 + $0x14] sm:$0xf]
        %v6379 = vld [vmem:[%s59 + $0x18] sm:$0xf]
        %v6380 = vld [vmem:[%s59 + $0x1c] sm:$0xf]
        %v6381 = vld [vmem:[%s59 + $0x20] sm:$0xf]
        %v6382 = vld [vmem:[%s59 + $0x24] sm:$0xf]
        %v6383 = vld [vmem:[%s59 + $0x28] sm:$0xf]
        %v6384 = vld [vmem:[%s59 + $0x2c] sm:$0xf]
        %v6385 = vld [vmem:[%s59 + $0x30] sm:$0xf]
        %v6386 = vld [vmem:[%s59 + $0x34] sm:$0xf]
        %v6387 = vld [vmem:[%s59 + $0x38] sm:$0xf]
        %v6388 = vld [vmem:[%s59 + $0x3c] sm:$0xf]
        %v6389 = vld [vmem:[%s59 + $0x40] sm:$0xf]
        %v6390 = vld [vmem:[%s59 + $0x44] sm:$0xf]
        %v6391 = vld [vmem:[%s59 + $0x48] sm:$0xf]
        %v6392 = vld [vmem:[%s59 + $0x4c] sm:$0xf]
        %v6393 = vld [vmem:[%s59 + $0x50] sm:$0xf]
        %v6394 = vld [vmem:[%s59 + $0x54] sm:$0xf]
        %v6395 = vld [vmem:[%s59 + $0x58] sm:$0xf]
        %v6396 = vld [vmem:[%s59 + $0x5c] sm:$0xf]
        %v6397 = vld [vmem:[%s59 + $0x60] sm:$0xf]
        %v6398 = vld [vmem:[%s59 + $0x64] sm:$0xf]
        %v6399 = vld [vmem:[%s59 + $0x68] sm:$0xf]
        %v6400 = vld [vmem:[%s59 + $0x6c] sm:$0xf]
        %v6401 = vld [vmem:[%s59 + $0x70] sm:$0xf]
        %v6402 = vld [vmem:[%s59 + $0x74] sm:$0xf]
        %v6403 = vld [vmem:[%s59 + $0x78] sm:$0xf]
        %v6404 = vld [vmem:[%s59 + $0x7c] sm:$0xf]
        %v6405 = vld [vmem:[%s59 + $0x80] sm:$0xf]
        %v6406 = vld [vmem:[%s59 + $0x84] sm:$0xf]
        %v6407 = vld [vmem:[%s59 + $0x88] sm:$0xf]
        %v6408 = vld [vmem:[%s59 + $0x8c] sm:$0xf]
        %v6409 = vld [vmem:[%s59 + $0x90] sm:$0xf]
        %v6410 = vld [vmem:[%s59 + $0x94] sm:$0xf]
        %v6411 = vld [vmem:[%s59 + $0x98] sm:$0xf]
        %v6412 = vld [vmem:[%s59 + $0x9c] sm:$0xf]
        %v6413 = vld [vmem:[%s59 + $0xa0] sm:$0xf]
        %v6414 = vld [vmem:[%s59 + $0xa4] sm:$0xf]
        %v6415 = vld [vmem:[%s59 + $0xa8] sm:$0xf]
        %v6416 = vld [vmem:[%s59 + $0xac] sm:$0xf]
        %v6417 = vld [vmem:[%s59 + $0xb0] sm:$0xf]
        %v6418 = vld [vmem:[%s59 + $0xb4] sm:$0xf]
        %v6419 = vld [vmem:[%s59 + $0xb8] sm:$0xf]
        %v6420 = vld [vmem:[%s59 + $0xbc] sm:$0xf]
        %v6421 = vld [vmem:[#allocation36] sm:$0x1]
        %v6423 = vlaneseq
        %v6424 = vshrl.u32 %v6423, 7
        %v6425 = vsub.s32 0, %v6424
        %v6426 = vrot.slane %v6421, %v6425
        %v6476 = vunpack.c.l.b16 %v6373
        %v6477 = vunpack.c.l.b16 %v6374
        %v6478 = vunpack.c.l.b16 %v6375
        %v6479 = vunpack.c.l.b16 %v6376
        %v6480 = vunpack.c.l.b16 %v6377
        %v6481 = vunpack.c.l.b16 %v6378
        %v6482 = vunpack.c.l.b16 %v6379
        %v6483 = vunpack.c.l.b16 %v6380
        %v6484 = vunpack.c.l.b16 %v6381
        %v6485 = vunpack.c.l.b16 %v6382
        %v6486 = vunpack.c.l.b16 %v6383
        %v6487 = vunpack.c.l.b16 %v6384
        %v6488 = vunpack.c.l.b16 %v6385
        %v6489 = vunpack.c.l.b16 %v6386
        %v6490 = vunpack.c.l.b16 %v6387
        %v6491 = vunpack.c.l.b16 %v6388
        %v6492 = vunpack.c.l.b16 %v6389
        %v6493 = vunpack.c.l.b16 %v6390
        %v6494 = vunpack.c.l.b16 %v6391
        %v6495 = vunpack.c.l.b16 %v6392
        %v6496 = vunpack.c.l.b16 %v6393
        %v6497 = vunpack.c.l.b16 %v6394
        %v6498 = vunpack.c.l.b16 %v6395
        %v6499 = vunpack.c.l.b16 %v6396
        %v6500 = vunpack.c.l.b16 %v6397
        %v6501 = vunpack.c.l.b16 %v6398
        %v6502 = vunpack.c.l.b16 %v6399
        %v6503 = vunpack.c.l.b16 %v6400
        %v6504 = vunpack.c.l.b16 %v6401
        %v6505 = vunpack.c.l.b16 %v6402
        %v6506 = vunpack.c.l.b16 %v6403
        %v6507 = vunpack.c.l.b16 %v6404
        %v6508 = vunpack.c.l.b16 %v6405
        %v6509 = vunpack.c.l.b16 %v6406
        %v6510 = vunpack.c.l.b16 %v6407
        %v6511 = vunpack.c.l.b16 %v6408
        %v6512 = vunpack.c.l.b16 %v6409
        %v6513 = vunpack.c.l.b16 %v6410
        %v6514 = vunpack.c.l.b16 %v6411
        %v6515 = vunpack.c.l.b16 %v6412
        %v6516 = vunpack.c.l.b16 %v6413
        %v6517 = vunpack.c.l.b16 %v6414
        %v6518 = vunpack.c.l.b16 %v6415
        %v6519 = vunpack.c.l.b16 %v6416
        %v6520 = vunpack.c.l.b16 %v6417
        %v6521 = vunpack.c.l.b16 %v6418
        %v6522 = vunpack.c.l.b16 %v6419
        %v6523 = vunpack.c.l.b16 %v6420
        %v6524 = vpack.c.b16 %v6477, %v6476
        %v6525 = vpack.c.b16 %v6479, %v6478
        %v6526 = vpack.c.b16 %v6481, %v6480
        %v6527 = vpack.c.b16 %v6483, %v6482
        %v6528 = vpack.c.b16 %v6485, %v6484
        %v6529 = vpack.c.b16 %v6487, %v6486
        %v6530 = vpack.c.b16 %v6489, %v6488
        %v6531 = vpack.c.b16 %v6491, %v6490
        %v6532 = vpack.c.b16 %v6493, %v6492
        %v6533 = vpack.c.b16 %v6495, %v6494
        %v6534 = vpack.c.b16 %v6497, %v6496
        %v6535 = vpack.c.b16 %v6499, %v6498
        %v6536 = vpack.c.b16 %v6501, %v6500
        %v6537 = vpack.c.b16 %v6503, %v6502
        %v6538 = vpack.c.b16 %v6505, %v6504
        %v6539 = vpack.c.b16 %v6507, %v6506
        %v6540 = vpack.c.b16 %v6509, %v6508
        %v6541 = vpack.c.b16 %v6511, %v6510
        %v6542 = vpack.c.b16 %v6513, %v6512
        %v6543 = vpack.c.b16 %v6515, %v6514
        %v6544 = vpack.c.b16 %v6517, %v6516
        %v6545 = vpack.c.b16 %v6519, %v6518
        %v6546 = vpack.c.b16 %v6521, %v6520
        %v6547 = vpack.c.b16 %v6523, %v6522
        %6572 = vmatprep.subr.bf16.mxu0 0
        %6573 = vmatpush1.bf16.msra.mxu0 %v6524
        %6574 = vmatprep.subr.bf16.mxu0 0
        %6575 = vmatpush1.bf16.msra.mxu0 %v6525
        %6576 = vmatprep.subr.bf16.mxu0 0
        %6577 = vmatpush1.bf16.msra.mxu0 %v6526
        %6578 = vmatprep.subr.bf16.mxu0 0
        %6579 = vmatpush1.bf16.msra.mxu0 %v6527
        %6580 = vmatprep.subr.bf16.mxu0 0
        %6581 = vmatpush1.bf16.msra.mxu0 %v6528
        %6582 = vmatprep.subr.bf16.mxu0 0
        %6583 = vmatpush1.bf16.msra.mxu0 %v6529
        %6584 = vmatprep.subr.bf16.mxu0 0
        %6585 = vmatpush1.bf16.msra.mxu0 %v6530
        %6586 = vmatprep.subr.bf16.mxu0 0
        %6587 = vmatpush1.bf16.msra.mxu0 %v6531
        %6588 = vmatprep.subr.bf16.mxu0 0
        %6589 = vmatpush1.bf16.msra.mxu0 %v6532
        %6590 = vmatprep.subr.bf16.mxu0 0
        %6591 = vmatpush1.bf16.msra.mxu0 %v6533
        %6592 = vmatprep.subr.bf16.mxu0 0
        %6593 = vmatpush1.bf16.msra.mxu0 %v6534
        %6594 = vmatprep.subr.bf16.mxu0 0
        %6595 = vmatpush1.bf16.msra.mxu0 %v6535
        %6596 = vmatprep.subr.bf16.mxu0 0
        %6597 = vmatpush1.bf16.msra.mxu0 %v6536
        %6598 = vmatprep.subr.bf16.mxu0 0
        %6599 = vmatpush1.bf16.msra.mxu0 %v6537
        %6600 = vmatprep.subr.bf16.mxu0 0
        %6601 = vmatpush1.bf16.msra.mxu0 %v6538
        %6602 = vmatprep.subr.bf16.mxu0 0
        %6603 = vmatpush1.bf16.msra.mxu0 %v6539
        %6604 = vmatprep.mubr.bf16.mxu0 %v6324
        %6605 = vmatmul.mubr.bf16.gmra.mrb[0].mxu0 %v6369
        %v6606 = vpop.f32.mrb[0].mxu0
        %v6607 = vadd.f32 %v6426, %v6606
        %v6608 = vpop.f32.mrb[0].mxu0
        %v6609 = vpop.f32.mrb[0].mxu0
        %v6610 = vpop.f32.mrb[0].mxu0
        %6611 = vdwg.mxu0
        %6612 = vmatprep.subr.bf16.mxu0 0
        %6613 = vmatpush1.bf16.msra.mxu0 %v6540
        %6614 = vmatprep.subr.bf16.mxu0 0
        %6615 = vmatpush1.bf16.msra.mxu0 %v6541
        %6616 = vmatprep.subr.bf16.mxu0 0
        %6617 = vmatpush1.bf16.msra.mxu0 %v6542
        %6618 = vmatprep.subr.bf16.mxu0 0
        %6619 = vmatpush1.bf16.msra.mxu0 %v6543
        %6620 = vmatprep.subr.bf16.mxu0 0
        %6621 = vmatpush1.bf16.msra.mxu0 %v6544
        %6622 = vmatprep.subr.bf16.mxu0 0
        %6623 = vmatpush1.bf16.msra.mxu0 %v6545
        %6624 = vmatprep.subr.bf16.mxu0 0
        %6625 = vmatpush1.bf16.msra.mxu0 %v6546
        %6626 = vmatprep.subr.bf16.mxu0 0
        %6627 = vmatpush1.bf16.msra.mxu0 %v6547
        %6628 = vmatprep.subr.bf16.mxu0 0
        %6629 = vmatpush1.bf16.msra.mxu0 0
        %6630 = vmatprep.subr.bf16.mxu0 0
        %6631 = vmatpush1.bf16.msra.mxu0 0
        %6632 = vmatprep.subr.bf16.mxu0 0
        %6633 = vmatpush1.bf16.msra.mxu0 0
        %6634 = vmatprep.subr.bf16.mxu0 0
        %6635 = vmatpush1.bf16.msra.mxu0 0
        %6636 = vmatprep.subr.bf16.mxu0 0
        %6637 = vmatpush1.bf16.msra.mxu0 0
        %6638 = vmatprep.subr.bf16.mxu0 0
        %6639 = vmatpush1.bf16.msra.mxu0 0
        %6640 = vmatprep.subr.bf16.mxu0 0
        %6641 = vmatpush1.bf16.msra.mxu0 0
        %6642 = vmatprep.subr.bf16.mxu0 0
        %6643 = vmatpush1.bf16.msra.mxu0 0
        %6644 = vmatprep.mubr.bf16.mxu0 0
        %6645 = vmatmul.mubr.bf16.gmra.mrb[0].mxu0 %v6371
        %v6646 = vpop.f32.mrb[0].mxu0
        %v6647 = vadd.f32 %v6607, %v6646
        %v6648 = vpop.f32.mrb[0].mxu0
        %v6649 = vpop.f32.mrb[0].mxu0
        %v6650 = vpop.f32.mrb[0].mxu0
        %6651 = vdwg.mxu0
        %v6652 = vpack.c.bf16 %v6647, %v6647
        %v6654 = vsel %vm3073, %v6652, 0
        %6656 = vmatprep.subr.bf16.mxu0 0
        %6657 = vmatpush1.bf16.msra.mxu0 %v6654
        %6658 = vmatprep.subr.bf16.mxu0 0
        %6659 = vmatpush1.bf16.msra.mxu0 0
        %6660 = vmatprep.subr.bf16.mxu0 0
        %6661 = vmatpush1.bf16.msra.mxu0 0
        %6662 = vmatprep.subr.bf16.mxu0 0
        %6663 = vmatpush1.bf16.msra.mxu0 0
        %6664 = vmatprep.subr.bf16.mxu0 0
        %6665 = vmatpush1.bf16.msra.mxu0 0
        %6666 = vmatprep.subr.bf16.mxu0 0
        %6667 = vmatpush1.bf16.msra.mxu0 0
        %6668 = vmatprep.subr.bf16.mxu0 0
        %6669 = vmatpush1.bf16.msra.mxu0 0
        %6670 = vmatprep.subr.bf16.mxu0 0
        %6671 = vmatpush1.bf16.msra.mxu0 0
        %6672 = vmatprep.subr.bf16.mxu0 0
        %6673 = vmatpush1.bf16.msra.mxu0 0
        %6674 = vmatprep.subr.bf16.mxu0 0
        %6675 = vmatpush1.bf16.msra.mxu0 0
        %6676 = vmatprep.subr.bf16.mxu0 0
        %6677 = vmatpush1.bf16.msra.mxu0 0
        %6678 = vmatprep.subr.bf16.mxu0 0
        %6679 = vmatpush1.bf16.msra.mxu0 0
        %6680 = vmatprep.subr.bf16.mxu0 0
        %6681 = vmatpush1.bf16.msra.mxu0 0
        %6682 = vmatprep.subr.bf16.mxu0 0
        %6683 = vmatpush1.bf16.msra.mxu0 0
        %6684 = vmatprep.subr.bf16.mxu0 0
        %6685 = vmatpush1.bf16.msra.mxu0 0
        %6686 = vmatprep.subr.bf16.mxu0 0
        %6687 = vmatpush1.bf16.msra.mxu0 0
        %6688 = vmatprep.mubr.bf16.mxu0 0
        %6689 = vmatmul.mubr.bf16.gmra.mrb[0].mxu0 %v3071
        %v6690 = vpop.f32.mrb[0].mxu0
        %v6691 = vadd.f32 0.0, %v6690
        %v6692 = vpop.f32.mrb[0].mxu0
        %v6693 = vpop.f32.mrb[0].mxu0
        %v6694 = vpop.f32.mrb[0].mxu0
        %6695 = vdwg.mxu0
        %v6696 = vpack.c.bf16 %v6691, %v6691
        %6697 = vmatprep.subr.bf16.mxu0 0
        %6698 = vmatpush1.bf16.msra.mxu0 %v3150
        %6699 = vmatprep.subr.bf16.mxu0 0
        %6700 = vmatpush1.bf16.msra.mxu0 %v3151
        %6701 = vmatprep.subr.bf16.mxu0 0
        %6702 = vmatpush1.bf16.msra.mxu0 %v3152
        %6703 = vmatprep.subr.bf16.mxu0 0
        %6704 = vmatpush1.bf16.msra.mxu0 %v3153
        %6705 = vmatprep.subr.bf16.mxu0 0
        %6706 = vmatpush1.bf16.msra.mxu0 %v3154
        %6707 = vmatprep.subr.bf16.mxu0 0
        %6708 = vmatpush1.bf16.msra.mxu0 %v3155
        %6709 = vmatprep.subr.bf16.mxu0 0
        %6710 = vmatpush1.bf16.msra.mxu0 %v3156
        %6711 = vmatprep.subr.bf16.mxu0 0
        %6712 = vmatpush1.bf16.msra.mxu0 %v3157
        %6713 = vmatprep.subr.bf16.mxu0 0
        %6714 = vmatpush1.bf16.msra.mxu0 0
        %6715 = vmatprep.subr.bf16.mxu0 0
        %6716 = vmatpush1.bf16.msra.mxu0 0
        %6717 = vmatprep.subr.bf16.mxu0 0
        %6718 = vmatpush1.bf16.msra.mxu0 0
        %6719 = vmatprep.subr.bf16.mxu0 0
        %6720 = vmatpush1.bf16.msra.mxu0 0
        %6721 = vmatprep.subr.bf16.mxu0 0
        %6722 = vmatpush1.bf16.msra.mxu0 0
        %6723 = vmatprep.subr.bf16.mxu0 0
        %6724 = vmatpush1.bf16.msra.mxu0 0
        %6725 = vmatprep.subr.bf16.mxu0 0
        %6726 = vmatpush1.bf16.msra.mxu0 0
        %6727 = vmatprep.subr.bf16.mxu0 0
        %6728 = vmatpush1.bf16.msra.mxu0 0
        %6729 = vmatprep.mubr.bf16.mxu0 0
        %6730 = vmatmul.mubr.bf16.gmra.mrb[0].mxu0 %v6696
        %v6731 = vpop.f32.mrb[0].mxu0
        %v6732 = vadd.f32 0.0, %v6731
        %v6733 = vpop.f32.mrb[0].mxu0
        %v6734 = vpop.f32.mrb[0].mxu0
        %v6735 = vpop.f32.mrb[0].mxu0
        %6736 = vdwg.mxu0
        %v6737 = vsub.f32 %v6647, %v6732
        %v6738 = vmul.f32 %v6737, %v6737
        %v6739 = vpack.c.bf16 %v6738, %v6738
        %v6741 = vsel %vm3073, %v6739, 0
        %6743 = vmatprep.subr.bf16.mxu0 0
        %6744 = vmatpush1.bf16.msra.mxu0 %v6741
        %6745 = vmatprep.subr.bf16.mxu0 0
        %6746 = vmatpush1.bf16.msra.mxu0 0
        %6747 = vmatprep.subr.bf16.mxu0 0
        %6748 = vmatpush1.bf16.msra.mxu0 0
        %6749 = vmatprep.subr.bf16.mxu0 0
        %6750 = vmatpush1.bf16.msra.mxu0 0
        %6751 = vmatprep.subr.bf16.mxu0 0
        %6752 = vmatpush1.bf16.msra.mxu0 0
        %6753 = vmatprep.subr.bf16.mxu0 0
        %6754 = vmatpush1.bf16.msra.mxu0 0
        %6755 = vmatprep.subr.bf16.mxu0 0
        %6756 = vmatpush1.bf16.msra.mxu0 0
        %6757 = vmatprep.subr.bf16.mxu0 0
        %6758 = vmatpush1.bf16.msra.mxu0 0
        %6759 = vmatprep.subr.bf16.mxu0 0
        %6760 = vmatpush1.bf16.msra.mxu0 0
        %6761 = vmatprep.subr.bf16.mxu0 0
        %6762 = vmatpush1.bf16.msra.mxu0 0
        %6763 = vmatprep.subr.bf16.mxu0 0
        %6764 = vmatpush1.bf16.msra.mxu0 0
        %6765 = vmatprep.subr.bf16.mxu0 0
        %6766 = vmatpush1.bf16.msra.mxu0 0
        %6767 = vmatprep.subr.bf16.mxu0 0
        %6768 = vmatpush1.bf16.msra.mxu0 0
        %6769 = vmatprep.subr.bf16.mxu0 0
        %6770 = vmatpush1.bf16.msra.mxu0 0
        %6771 = vmatprep.subr.bf16.mxu0 0
        %6772 = vmatpush1.bf16.msra.mxu0 0
        %6773 = vmatprep.subr.bf16.mxu0 0
        %6774 = vmatpush1.bf16.msra.mxu0 0
        %6775 = vmatprep.mubr.bf16.mxu0 0
        %6776 = vmatmul.mubr.bf16.gmra.mrb[0].mxu0 %v3071
        %v6777 = vpop.f32.mrb[0].mxu0
        %v6778 = vadd.f32 0.0, %v6777
        %v6779 = vpop.f32.mrb[0].mxu0
        %v6780 = vpop.f32.mrb[0].mxu0
        %v6781 = vpop.f32.mrb[0].mxu0
        %6782 = vdwg.mxu0
        %v6783 = vpack.c.bf16 %v6778, %v6778
        %6784 = vmatprep.subr.bf16.mxu0 0
        %6785 = vmatpush1.bf16.msra.mxu0 %v3150
        %6786 = vmatprep.subr.bf16.mxu0 0
        %6787 = vmatpush1.bf16.msra.mxu0 %v3151
        %6788 = vmatprep.subr.bf16.mxu0 0
        %6789 = vmatpush1.bf16.msra.mxu0 %v3152
        %6790 = vmatprep.subr.bf16.mxu0 0
        %6791 = vmatpush1.bf16.msra.mxu0 %v3153
        %6792 = vmatprep.subr.bf16.mxu0 0
        %6793 = vmatpush1.bf16.msra.mxu0 %v3154
        %6794 = vmatprep.subr.bf16.mxu0 0
        %6795 = vmatpush1.bf16.msra.mxu0 %v3155
        %6796 = vmatprep.subr.bf16.mxu0 0
        %6797 = vmatpush1.bf16.msra.mxu0 %v3156
        %6798 = vmatprep.subr.bf16.mxu0 0
        %6799 = vmatpush1.bf16.msra.mxu0 %v3157
        %6800 = vmatprep.subr.bf16.mxu0 0
        %6801 = vmatpush1.bf16.msra.mxu0 0
        %6802 = vmatprep.subr.bf16.mxu0 0
        %6803 = vmatpush1.bf16.msra.mxu0 0
        %6804 = vmatprep.subr.bf16.mxu0 0
        %6805 = vmatpush1.bf16.msra.mxu0 0
        %6806 = vmatprep.subr.bf16.mxu0 0
        %6807 = vmatpush1.bf16.msra.mxu0 0
        %6808 = vmatprep.subr.bf16.mxu0 0
        %6809 = vmatpush1.bf16.msra.mxu0 0
        %6810 = vmatprep.subr.bf16.mxu0 0
        %6811 = vmatpush1.bf16.msra.mxu0 0
        %6812 = vmatprep.subr.bf16.mxu0 0
        %6813 = vmatpush1.bf16.msra.mxu0 0
        %6814 = vmatprep.subr.bf16.mxu0 0
        %6815 = vmatpush1.bf16.msra.mxu0 0
        %6816 = vmatprep.mubr.bf16.mxu0 0
        %6817 = vmatmul.mubr.bf16.gmra.mrb[0].mxu0 %v6783
        %v6818 = vpop.f32.mrb[0].mxu0
        %v6819 = vadd.f32 1e-05, %v6818
        %v6820 = vpop.f32.mrb[0].mxu0
        %v6821 = vpop.f32.mrb[0].mxu0
        %v6822 = vpop.f32.mrb[0].mxu0
        %6823 = vdwg.mxu0
        %v6824 = vrsqrt.pop %v6819
        %v6825 = vmul.f32 %v6737, %v6824
        %v6826 = vmax.f32 %v6825, 0.0
        %v6827 = vpack.c.bf16 %v6826, %v6826
        %v6829 = vsel %vm3073, %v6827, 0
        %6831 = vmatprep.subr.bf16.mxu0 0
        %6832 = vmatpush1.bf16.msra.mxu0 %v6829
        %6833 = vmatprep.subr.bf16.mxu0 0
        %6834 = vmatpush1.bf16.msra.mxu0 0
        %6835 = vmatprep.subr.bf16.mxu0 0
        %6836 = vmatpush1.bf16.msra.mxu0 0
        %6837 = vmatprep.subr.bf16.mxu0 0
        %6838 = vmatpush1.bf16.msra.mxu0 0
        %6839 = vmatprep.subr.bf16.mxu0 0
        %6840 = vmatpush1.bf16.msra.mxu0 0
        %6841 = vmatprep.subr.bf16.mxu0 0
        %6842 = vmatpush1.bf16.msra.mxu0 0
        %6843 = vmatprep.subr.bf16.mxu0 0
        %6844 = vmatpush1.bf16.msra.mxu0 0
        %6845 = vmatprep.subr.bf16.mxu0 0
        %6846 = vmatpush1.bf16.msra.mxu0 0
        %6847 = vmatprep.subr.bf16.mxu0 0
        %6848 = vmatpush1.bf16.msra.mxu0 0
        %6849 = vmatprep.subr.bf16.mxu0 0
        %6850 = vmatpush1.bf16.msra.mxu0 0
        %6851 = vmatprep.subr.bf16.mxu0 0
        %6852 = vmatpush1.bf16.msra.mxu0 0
        %6853 = vmatprep.subr.bf16.mxu0 0
        %6854 = vmatpush1.bf16.msra.mxu0 0
        %6855 = vmatprep.subr.bf16.mxu0 0
        %6856 = vmatpush1.bf16.msra.mxu0 0
        %6857 = vmatprep.subr.bf16.mxu0 0
        %6858 = vmatpush1.bf16.msra.mxu0 0
        %6859 = vmatprep.subr.bf16.mxu0 0
        %6860 = vmatpush1.bf16.msra.mxu0 0
        %6861 = vmatprep.subr.bf16.mxu0 0
        %6862 = vmatpush1.bf16.msra.mxu0 0
        %6863 = vmatprep.mubr.bf16.mxu0 0
        %6864 = vmatmul.mubr.bf16.gmra.mrb[0].mxu0 %v3305
        %v6865 = vpop.f32.mrb[0].mxu0
        %v6866 = vadd.f32 0.0, %v6865
        %v6867 = vpop.f32.mrb[0].mxu0
        %v6868 = vpop.f32.mrb[0].mxu0
        %v6869 = vadd.f32 0.0, %v6868
        %v6870 = vpop.f32.mrb[0].mxu0
        %6871 = vdwg.mxu0
        %v6872 = vpack.c.bf16 %v6869, %v6866
        %v6874 = vrot.slane %v6872, 4
        %v6876 = vld [vmem:[%s63] sm:$0xf]
        %v6877 = vld [vmem:[%s63 + $0x4] sm:$0xf]
        %v6878 = vld [vmem:[%s63 + $0x8] sm:$0xf]
        %v6879 = vld [vmem:[%s63 + $0xc] sm:$0xf]
        %v6880 = vld [vmem:[%s63 + $0x10] sm:$0xf]
        %v6881 = vld [vmem:[%s63 + $0x14] sm:$0xf]
        %v6882 = vld [vmem:[%s63 + $0x18] sm:$0xf]
        %v6883 = vld [vmem:[%s63 + $0x1c] sm:$0xf]
        %v6884 = vld [vmem:[%s63 + $0x20] sm:$0xf]
        %v6885 = vld [vmem:[%s63 + $0x24] sm:$0xf]
        %v6886 = vld [vmem:[%s63 + $0x28] sm:$0xf]
        %v6887 = vld [vmem:[%s63 + $0x2c] sm:$0xf]
        %v6888 = vld [vmem:[%s63 + $0x30] sm:$0xf]
        %v6889 = vld [vmem:[%s63 + $0x34] sm:$0xf]
        %v6890 = vld [vmem:[%s63 + $0x38] sm:$0xf]
        %v6891 = vld [vmem:[%s63 + $0x3c] sm:$0xf]
        %v6892 = vld [vmem:[%s63 + $0x40] sm:$0xf]
        %v6893 = vld [vmem:[%s63 + $0x44] sm:$0xf]
        %v6894 = vld [vmem:[%s63 + $0x48] sm:$0xf]
        %v6895 = vld [vmem:[%s63 + $0x4c] sm:$0xf]
        %v6896 = vld [vmem:[%s63 + $0x50] sm:$0xf]
        %v6897 = vld [vmem:[%s63 + $0x54] sm:$0xf]
        %v6898 = vld [vmem:[%s63 + $0x58] sm:$0xf]
        %v6899 = vld [vmem:[%s63 + $0x5c] sm:$0xf]
        %v6900 = vld [vmem:[%s63 + $0x60] sm:$0xf]
        %v6901 = vld [vmem:[%s63 + $0x64] sm:$0xf]
        %v6902 = vld [vmem:[%s63 + $0x68] sm:$0xf]
        %v6903 = vld [vmem:[%s63 + $0x6c] sm:$0xf]
        %v6904 = vld [vmem:[%s63 + $0x70] sm:$0xf]
        %v6905 = vld [vmem:[%s63 + $0x74] sm:$0xf]
        %v6906 = vld [vmem:[%s63 + $0x78] sm:$0xf]
        %v6907 = vld [vmem:[%s63 + $0x7c] sm:$0xf]
        %v6908 = vld [vmem:[%s63 + $0x80] sm:$0xf]
        %v6909 = vld [vmem:[%s63 + $0x84] sm:$0xf]
        %v6910 = vld [vmem:[%s63 + $0x88] sm:$0xf]
        %v6911 = vld [vmem:[%s63 + $0x8c] sm:$0xf]
        %v6912 = vld [vmem:[%s63 + $0x90] sm:$0xf]
        %v6913 = vld [vmem:[%s63 + $0x94] sm:$0xf]
        %v6914 = vld [vmem:[%s63 + $0x98] sm:$0xf]
        %v6915 = vld [vmem:[%s63 + $0x9c] sm:$0xf]
        %v6916 = vld [vmem:[%s63 + $0xa0] sm:$0xf]
        %v6917 = vld [vmem:[%s63 + $0xa4] sm:$0xf]
        %v6918 = vld [vmem:[%s63 + $0xa8] sm:$0xf]
        %v6919 = vld [vmem:[%s63 + $0xac] sm:$0xf]
        %v6920 = vld [vmem:[%s63 + $0xb0] sm:$0xf]
        %v6921 = vld [vmem:[%s63 + $0xb4] sm:$0xf]
        %v6922 = vld [vmem:[%s63 + $0xb8] sm:$0xf]
        %v6923 = vld [vmem:[%s63 + $0xbc] sm:$0xf]
        %v6924 = vld [vmem:[#allocation37] sm:$0x1]
        %v6926 = vlaneseq
        %v6927 = vshrl.u32 %v6926, 7
        %v6928 = vsub.s32 0, %v6927
        %v6929 = vrot.slane %v6924, %v6928
        %v6979 = vunpack.c.l.b16 %v6876
        %v6980 = vunpack.c.l.b16 %v6877
        %v6981 = vunpack.c.l.b16 %v6878
        %v6982 = vunpack.c.l.b16 %v6879
        %v6983 = vunpack.c.l.b16 %v6880
        %v6984 = vunpack.c.l.b16 %v6881
        %v6985 = vunpack.c.l.b16 %v6882
        %v6986 = vunpack.c.l.b16 %v6883
        %v6987 = vunpack.c.l.b16 %v6884
        %v6988 = vunpack.c.l.b16 %v6885
        %v6989 = vunpack.c.l.b16 %v6886
        %v6990 = vunpack.c.l.b16 %v6887
        %v6991 = vunpack.c.l.b16 %v6888
        %v6992 = vunpack.c.l.b16 %v6889
        %v6993 = vunpack.c.l.b16 %v6890
        %v6994 = vunpack.c.l.b16 %v6891
        %v6995 = vunpack.c.l.b16 %v6892
        %v6996 = vunpack.c.l.b16 %v6893
        %v6997 = vunpack.c.l.b16 %v6894
        %v6998 = vunpack.c.l.b16 %v6895
        %v6999 = vunpack.c.l.b16 %v6896
        %v7000 = vunpack.c.l.b16 %v6897
        %v7001 = vunpack.c.l.b16 %v6898
        %v7002 = vunpack.c.l.b16 %v6899
        %v7003 = vunpack.c.l.b16 %v6900
        %v7004 = vunpack.c.l.b16 %v6901
        %v7005 = vunpack.c.l.b16 %v6902
        %v7006 = vunpack.c.l.b16 %v6903
        %v7007 = vunpack.c.l.b16 %v6904
        %v7008 = vunpack.c.l.b16 %v6905
        %v7009 = vunpack.c.l.b16 %v6906
        %v7010 = vunpack.c.l.b16 %v6907
        %v7011 = vunpack.c.l.b16 %v6908
        %v7012 = vunpack.c.l.b16 %v6909
        %v7013 = vunpack.c.l.b16 %v6910
        %v7014 = vunpack.c.l.b16 %v6911
        %v7015 = vunpack.c.l.b16 %v6912
        %v7016 = vunpack.c.l.b16 %v6913
        %v7017 = vunpack.c.l.b16 %v6914
        %v7018 = vunpack.c.l.b16 %v6915
        %v7019 = vunpack.c.l.b16 %v6916
        %v7020 = vunpack.c.l.b16 %v6917
        %v7021 = vunpack.c.l.b16 %v6918
        %v7022 = vunpack.c.l.b16 %v6919
        %v7023 = vunpack.c.l.b16 %v6920
        %v7024 = vunpack.c.l.b16 %v6921
        %v7025 = vunpack.c.l.b16 %v6922
        %v7026 = vunpack.c.l.b16 %v6923
        %v7027 = vpack.c.b16 %v6980, %v6979
        %v7028 = vpack.c.b16 %v6982, %v6981
        %v7029 = vpack.c.b16 %v6984, %v6983
        %v7030 = vpack.c.b16 %v6986, %v6985
        %v7031 = vpack.c.b16 %v6988, %v6987
        %v7032 = vpack.c.b16 %v6990, %v6989
        %v7033 = vpack.c.b16 %v6992, %v6991
        %v7034 = vpack.c.b16 %v6994, %v6993
        %v7035 = vpack.c.b16 %v6996, %v6995
        %v7036 = vpack.c.b16 %v6998, %v6997
        %v7037 = vpack.c.b16 %v7000, %v6999
        %v7038 = vpack.c.b16 %v7002, %v7001
        %v7039 = vpack.c.b16 %v7004, %v7003
        %v7040 = vpack.c.b16 %v7006, %v7005
        %v7041 = vpack.c.b16 %v7008, %v7007
        %v7042 = vpack.c.b16 %v7010, %v7009
        %v7043 = vpack.c.b16 %v7012, %v7011
        %v7044 = vpack.c.b16 %v7014, %v7013
        %v7045 = vpack.c.b16 %v7016, %v7015
        %v7046 = vpack.c.b16 %v7018, %v7017
        %v7047 = vpack.c.b16 %v7020, %v7019
        %v7048 = vpack.c.b16 %v7022, %v7021
        %v7049 = vpack.c.b16 %v7024, %v7023
        %v7050 = vpack.c.b16 %v7026, %v7025
        %7075 = vmatprep.subr.bf16.mxu0 0
        %7076 = vmatpush1.bf16.msra.mxu0 %v7027
        %7077 = vmatprep.subr.bf16.mxu0 0
        %7078 = vmatpush1.bf16.msra.mxu0 %v7028
        %7079 = vmatprep.subr.bf16.mxu0 0
        %7080 = vmatpush1.bf16.msra.mxu0 %v7029
        %7081 = vmatprep.subr.bf16.mxu0 0
        %7082 = vmatpush1.bf16.msra.mxu0 %v7030
        %7083 = vmatprep.subr.bf16.mxu0 0
        %7084 = vmatpush1.bf16.msra.mxu0 %v7031
        %7085 = vmatprep.subr.bf16.mxu0 0
        %7086 = vmatpush1.bf16.msra.mxu0 %v7032
        %7087 = vmatprep.subr.bf16.mxu0 0
        %7088 = vmatpush1.bf16.msra.mxu0 %v7033
        %7089 = vmatprep.subr.bf16.mxu0 0
        %7090 = vmatpush1.bf16.msra.mxu0 %v7034
        %7091 = vmatprep.subr.bf16.mxu0 0
        %7092 = vmatpush1.bf16.msra.mxu0 %v7035
        %7093 = vmatprep.subr.bf16.mxu0 0
        %7094 = vmatpush1.bf16.msra.mxu0 %v7036
        %7095 = vmatprep.subr.bf16.mxu0 0
        %7096 = vmatpush1.bf16.msra.mxu0 %v7037
        %7097 = vmatprep.subr.bf16.mxu0 0
        %7098 = vmatpush1.bf16.msra.mxu0 %v7038
        %7099 = vmatprep.subr.bf16.mxu0 0
        %7100 = vmatpush1.bf16.msra.mxu0 %v7039
        %7101 = vmatprep.subr.bf16.mxu0 0
        %7102 = vmatpush1.bf16.msra.mxu0 %v7040
        %7103 = vmatprep.subr.bf16.mxu0 0
        %7104 = vmatpush1.bf16.msra.mxu0 %v7041
        %7105 = vmatprep.subr.bf16.mxu0 0
        %7106 = vmatpush1.bf16.msra.mxu0 %v7042
        %7107 = vmatprep.mubr.bf16.mxu0 %v6827
        %7108 = vmatmul.mubr.bf16.gmra.mrb[0].mxu0 %v6872
        %v7109 = vpop.f32.mrb[0].mxu0
        %v7110 = vadd.f32 %v6929, %v7109
        %v7111 = vpop.f32.mrb[0].mxu0
        %v7112 = vpop.f32.mrb[0].mxu0
        %v7113 = vpop.f32.mrb[0].mxu0
        %7114 = vdwg.mxu0
        %7115 = vmatprep.subr.bf16.mxu0 0
        %7116 = vmatpush1.bf16.msra.mxu0 %v7043
        %7117 = vmatprep.subr.bf16.mxu0 0
        %7118 = vmatpush1.bf16.msra.mxu0 %v7044
        %7119 = vmatprep.subr.bf16.mxu0 0
        %7120 = vmatpush1.bf16.msra.mxu0 %v7045
        %7121 = vmatprep.subr.bf16.mxu0 0
        %7122 = vmatpush1.bf16.msra.mxu0 %v7046
        %7123 = vmatprep.subr.bf16.mxu0 0
        %7124 = vmatpush1.bf16.msra.mxu0 %v7047
        %7125 = vmatprep.subr.bf16.mxu0 0
        %7126 = vmatpush1.bf16.msra.mxu0 %v7048
        %7127 = vmatprep.subr.bf16.mxu0 0
        %7128 = vmatpush1.bf16.msra.mxu0 %v7049
        %7129 = vmatprep.subr.bf16.mxu0 0
        %7130 = vmatpush1.bf16.msra.mxu0 %v7050
        %7131 = vmatprep.subr.bf16.mxu0 0
        %7132 = vmatpush1.bf16.msra.mxu0 0
        %7133 = vmatprep.subr.bf16.mxu0 0
        %7134 = vmatpush1.bf16.msra.mxu0 0
        %7135 = vmatprep.subr.bf16.mxu0 0
        %7136 = vmatpush1.bf16.msra.mxu0 0
        %7137 = vmatprep.subr.bf16.mxu0 0
        %7138 = vmatpush1.bf16.msra.mxu0 0
        %7139 = vmatprep.subr.bf16.mxu0 0
        %7140 = vmatpush1.bf16.msra.mxu0 0
        %7141 = vmatprep.subr.bf16.mxu0 0
        %7142 = vmatpush1.bf16.msra.mxu0 0
        %7143 = vmatprep.subr.bf16.mxu0 0
        %7144 = vmatpush1.bf16.msra.mxu0 0
        %7145 = vmatprep.subr.bf16.mxu0 0
        %7146 = vmatpush1.bf16.msra.mxu0 0
        %7147 = vmatprep.mubr.bf16.mxu0 0
        %7148 = vmatmul.mubr.bf16.gmra.mrb[0].mxu0 %v6874
        %v7149 = vpop.f32.mrb[0].mxu0
        %v7150 = vadd.f32 %v7110, %v7149
        %v7151 = vpop.f32.mrb[0].mxu0
        %v7152 = vpop.f32.mrb[0].mxu0
        %v7153 = vpop.f32.mrb[0].mxu0
        %7154 = vdwg.mxu0
        %v7155 = vpack.c.bf16 %v7150, %v7150
        %v7157 = vsel %vm3073, %v7155, 0
        %7159 = vmatprep.subr.bf16.mxu0 0
        %7160 = vmatpush1.bf16.msra.mxu0 %v7157
        %7161 = vmatprep.subr.bf16.mxu0 0
        %7162 = vmatpush1.bf16.msra.mxu0 0
        %7163 = vmatprep.subr.bf16.mxu0 0
        %7164 = vmatpush1.bf16.msra.mxu0 0
        %7165 = vmatprep.subr.bf16.mxu0 0
        %7166 = vmatpush1.bf16.msra.mxu0 0
        %7167 = vmatprep.subr.bf16.mxu0 0
        %7168 = vmatpush1.bf16.msra.mxu0 0
        %7169 = vmatprep.subr.bf16.mxu0 0
        %7170 = vmatpush1.bf16.msra.mxu0 0
        %7171 = vmatprep.subr.bf16.mxu0 0
        %7172 = vmatpush1.bf16.msra.mxu0 0
        %7173 = vmatprep.subr.bf16.mxu0 0
        %7174 = vmatpush1.bf16.msra.mxu0 0
        %7175 = vmatprep.subr.bf16.mxu0 0
        %7176 = vmatpush1.bf16.msra.mxu0 0
        %7177 = vmatprep.subr.bf16.mxu0 0
        %7178 = vmatpush1.bf16.msra.mxu0 0
        %7179 = vmatprep.subr.bf16.mxu0 0
        %7180 = vmatpush1.bf16.msra.mxu0 0
        %7181 = vmatprep.subr.bf16.mxu0 0
        %7182 = vmatpush1.bf16.msra.mxu0 0
        %7183 = vmatprep.subr.bf16.mxu0 0
        %7184 = vmatpush1.bf16.msra.mxu0 0
        %7185 = vmatprep.subr.bf16.mxu0 0
        %7186 = vmatpush1.bf16.msra.mxu0 0
        %7187 = vmatprep.subr.bf16.mxu0 0
        %7188 = vmatpush1.bf16.msra.mxu0 0
        %7189 = vmatprep.subr.bf16.mxu0 0
        %7190 = vmatpush1.bf16.msra.mxu0 0
        %7191 = vmatprep.mubr.bf16.mxu0 0
        %7192 = vmatmul.mubr.bf16.gmra.mrb[0].mxu0 %v3071
        %v7193 = vpop.f32.mrb[0].mxu0
        %v7194 = vadd.f32 0.0, %v7193
        %v7195 = vpop.f32.mrb[0].mxu0
        %v7196 = vpop.f32.mrb[0].mxu0
        %v7197 = vpop.f32.mrb[0].mxu0
        %7198 = vdwg.mxu0
        %v7199 = vpack.c.bf16 %v7194, %v7194
        %7200 = vmatprep.subr.bf16.mxu0 0
        %7201 = vmatpush1.bf16.msra.mxu0 %v3150
        %7202 = vmatprep.subr.bf16.mxu0 0
        %7203 = vmatpush1.bf16.msra.mxu0 %v3151
        %7204 = vmatprep.subr.bf16.mxu0 0
        %7205 = vmatpush1.bf16.msra.mxu0 %v3152
        %7206 = vmatprep.subr.bf16.mxu0 0
        %7207 = vmatpush1.bf16.msra.mxu0 %v3153
        %7208 = vmatprep.subr.bf16.mxu0 0
        %7209 = vmatpush1.bf16.msra.mxu0 %v3154
        %7210 = vmatprep.subr.bf16.mxu0 0
        %7211 = vmatpush1.bf16.msra.mxu0 %v3155
        %7212 = vmatprep.subr.bf16.mxu0 0
        %7213 = vmatpush1.bf16.msra.mxu0 %v3156
        %7214 = vmatprep.subr.bf16.mxu0 0
        %7215 = vmatpush1.bf16.msra.mxu0 %v3157
        %7216 = vmatprep.subr.bf16.mxu0 0
        %7217 = vmatpush1.bf16.msra.mxu0 0
        %7218 = vmatprep.subr.bf16.mxu0 0
        %7219 = vmatpush1.bf16.msra.mxu0 0
        %7220 = vmatprep.subr.bf16.mxu0 0
        %7221 = vmatpush1.bf16.msra.mxu0 0
        %7222 = vmatprep.subr.bf16.mxu0 0
        %7223 = vmatpush1.bf16.msra.mxu0 0
        %7224 = vmatprep.subr.bf16.mxu0 0
        %7225 = vmatpush1.bf16.msra.mxu0 0
        %7226 = vmatprep.subr.bf16.mxu0 0
        %7227 = vmatpush1.bf16.msra.mxu0 0
        %7228 = vmatprep.subr.bf16.mxu0 0
        %7229 = vmatpush1.bf16.msra.mxu0 0
        %7230 = vmatprep.subr.bf16.mxu0 0
        %7231 = vmatpush1.bf16.msra.mxu0 0
        %7232 = vmatprep.mubr.bf16.mxu0 0
        %7233 = vmatmul.mubr.bf16.gmra.mrb[0].mxu0 %v7199
        %v7234 = vpop.f32.mrb[0].mxu0
        %v7235 = vadd.f32 0.0, %v7234
        %v7236 = vpop.f32.mrb[0].mxu0
        %v7237 = vpop.f32.mrb[0].mxu0
        %v7238 = vpop.f32.mrb[0].mxu0
        %7239 = vdwg.mxu0
        %v7240 = vsub.f32 %v7150, %v7235
        %v7241 = vmul.f32 %v7240, %v7240
        %v7242 = vpack.c.bf16 %v7241, %v7241
        %v7244 = vsel %vm3073, %v7242, 0
        %7246 = vmatprep.subr.bf16.mxu0 0
        %7247 = vmatpush1.bf16.msra.mxu0 %v7244
        %7248 = vmatprep.subr.bf16.mxu0 0
        %7249 = vmatpush1.bf16.msra.mxu0 0
        %7250 = vmatprep.subr.bf16.mxu0 0
        %7251 = vmatpush1.bf16.msra.mxu0 0
        %7252 = vmatprep.subr.bf16.mxu0 0
        %7253 = vmatpush1.bf16.msra.mxu0 0
        %7254 = vmatprep.subr.bf16.mxu0 0
        %7255 = vmatpush1.bf16.msra.mxu0 0
        %7256 = vmatprep.subr.bf16.mxu0 0
        %7257 = vmatpush1.bf16.msra.mxu0 0
        %7258 = vmatprep.subr.bf16.mxu0 0
        %7259 = vmatpush1.bf16.msra.mxu0 0
        %7260 = vmatprep.subr.bf16.mxu0 0
        %7261 = vmatpush1.bf16.msra.mxu0 0
        %7262 = vmatprep.subr.bf16.mxu0 0
        %7263 = vmatpush1.bf16.msra.mxu0 0
        %7264 = vmatprep.subr.bf16.mxu0 0
        %7265 = vmatpush1.bf16.msra.mxu0 0
        %7266 = vmatprep.subr.bf16.mxu0 0
        %7267 = vmatpush1.bf16.msra.mxu0 0
        %7268 = vmatprep.subr.bf16.mxu0 0
        %7269 = vmatpush1.bf16.msra.mxu0 0
        %7270 = vmatprep.subr.bf16.mxu0 0
        %7271 = vmatpush1.bf16.msra.mxu0 0
        %7272 = vmatprep.subr.bf16.mxu0 0
        %7273 = vmatpush1.bf16.msra.mxu0 0
        %7274 = vmatprep.subr.bf16.mxu0 0
        %7275 = vmatpush1.bf16.msra.mxu0 0
        %7276 = vmatprep.subr.bf16.mxu0 0
        %7277 = vmatpush1.bf16.msra.mxu0 0
        %7278 = vmatprep.mubr.bf16.mxu0 0
        %7279 = vmatmul.mubr.bf16.gmra.mrb[0].mxu0 %v3071
        %v7280 = vpop.f32.mrb[0].mxu0
        %v7281 = vadd.f32 0.0, %v7280
        %v7282 = vpop.f32.mrb[0].mxu0
        %v7283 = vpop.f32.mrb[0].mxu0
        %v7284 = vpop.f32.mrb[0].mxu0
        %7285 = vdwg.mxu0
        %v7286 = vpack.c.bf16 %v7281, %v7281
        %7287 = vmatprep.subr.bf16.mxu0 0
        %7288 = vmatpush1.bf16.msra.mxu0 %v3150
        %7289 = vmatprep.subr.bf16.mxu0 0
        %7290 = vmatpush1.bf16.msra.mxu0 %v3151
        %7291 = vmatprep.subr.bf16.mxu0 0
        %7292 = vmatpush1.bf16.msra.mxu0 %v3152
        %7293 = vmatprep.subr.bf16.mxu0 0
        %7294 = vmatpush1.bf16.msra.mxu0 %v3153
        %7295 = vmatprep.subr.bf16.mxu0 0
        %7296 = vmatpush1.bf16.msra.mxu0 %v3154
        %7297 = vmatprep.subr.bf16.mxu0 0
        %7298 = vmatpush1.bf16.msra.mxu0 %v3155
        %7299 = vmatprep.subr.bf16.mxu0 0
        %7300 = vmatpush1.bf16.msra.mxu0 %v3156
        %7301 = vmatprep.subr.bf16.mxu0 0
        %7302 = vmatpush1.bf16.msra.mxu0 %v3157
        %7303 = vmatprep.subr.bf16.mxu0 0
        %7304 = vmatpush1.bf16.msra.mxu0 0
        %7305 = vmatprep.subr.bf16.mxu0 0
        %7306 = vmatpush1.bf16.msra.mxu0 0
        %7307 = vmatprep.subr.bf16.mxu0 0
        %7308 = vmatpush1.bf16.msra.mxu0 0
        %7309 = vmatprep.subr.bf16.mxu0 0
        %7310 = vmatpush1.bf16.msra.mxu0 0
        %7311 = vmatprep.subr.bf16.mxu0 0
        %7312 = vmatpush1.bf16.msra.mxu0 0
        %7313 = vmatprep.subr.bf16.mxu0 0
        %7314 = vmatpush1.bf16.msra.mxu0 0
        %7315 = vmatprep.subr.bf16.mxu0 0
        %7316 = vmatpush1.bf16.msra.mxu0 0
        %7317 = vmatprep.subr.bf16.mxu0 0
        %7318 = vmatpush1.bf16.msra.mxu0 0
        %7319 = vmatprep.mubr.bf16.mxu0 0
        %7320 = vmatmul.mubr.bf16.gmra.mrb[0].mxu0 %v7286
        %v7321 = vpop.f32.mrb[0].mxu0
        %v7322 = vadd.f32 1e-05, %v7321
        %v7323 = vpop.f32.mrb[0].mxu0
        %v7324 = vpop.f32.mrb[0].mxu0
        %v7325 = vpop.f32.mrb[0].mxu0
        %7326 = vdwg.mxu0
        %v7327 = vrsqrt.pop %v7322
        %v7328 = vmul.f32 %v7240, %v7327
        %v7329 = vadd.f32 %v6323, %v7328
        %v7330 = vpack.c.bf16 %v7329, %v7329
        %v7332 = vsel %vm3073, %v7330, 0
        %7334 = vmatprep.subr.bf16.mxu0 0
        %7335 = vmatpush1.bf16.msra.mxu0 %v7332
        %7336 = vmatprep.subr.bf16.mxu0 0
        %7337 = vmatpush1.bf16.msra.mxu0 0
        %7338 = vmatprep.subr.bf16.mxu0 0
        %7339 = vmatpush1.bf16.msra.mxu0 0
        %7340 = vmatprep.subr.bf16.mxu0 0
        %7341 = vmatpush1.bf16.msra.mxu0 0
        %7342 = vmatprep.subr.bf16.mxu0 0
        %7343 = vmatpush1.bf16.msra.mxu0 0
        %7344 = vmatprep.subr.bf16.mxu0 0
        %7345 = vmatpush1.bf16.msra.mxu0 0
        %7346 = vmatprep.subr.bf16.mxu0 0
        %7347 = vmatpush1.bf16.msra.mxu0 0
        %7348 = vmatprep.subr.bf16.mxu0 0
        %7349 = vmatpush1.bf16.msra.mxu0 0
        %7350 = vmatprep.subr.bf16.mxu0 0
        %7351 = vmatpush1.bf16.msra.mxu0 0
        %7352 = vmatprep.subr.bf16.mxu0 0
        %7353 = vmatpush1.bf16.msra.mxu0 0
        %7354 = vmatprep.subr.bf16.mxu0 0
        %7355 = vmatpush1.bf16.msra.mxu0 0
        %7356 = vmatprep.subr.bf16.mxu0 0
        %7357 = vmatpush1.bf16.msra.mxu0 0
        %7358 = vmatprep.subr.bf16.mxu0 0
        %7359 = vmatpush1.bf16.msra.mxu0 0
        %7360 = vmatprep.subr.bf16.mxu0 0
        %7361 = vmatpush1.bf16.msra.mxu0 0
        %7362 = vmatprep.subr.bf16.mxu0 0
        %7363 = vmatpush1.bf16.msra.mxu0 0
        %7364 = vmatprep.subr.bf16.mxu0 0
        %7365 = vmatpush1.bf16.msra.mxu0 0
        %7366 = vmatprep.mubr.bf16.mxu0 0
        %7367 = vmatmul.mubr.bf16.gmra.mrb[0].mxu0 %v3305
        %v7368 = vpop.f32.mrb[0].mxu0
        %v7369 = vadd.f32 0.0, %v7368
        %v7370 = vpop.f32.mrb[0].mxu0
        %v7371 = vpop.f32.mrb[0].mxu0
        %v7372 = vadd.f32 0.0, %v7371
        %v7373 = vpop.f32.mrb[0].mxu0
        %7374 = vdwg.mxu0
        %v7375 = vpack.c.bf16 %v7372, %v7369
        %v7377 = vrot.slane %v7375, 4
        %v7379 = vld [vmem:[%s67] sm:$0xf]
        %v7380 = vld [vmem:[%s67 + $0x4] sm:$0xf]
        %v7381 = vld [vmem:[%s67 + $0x8] sm:$0xf]
        %v7382 = vld [vmem:[%s67 + $0xc] sm:$0xf]
        %v7383 = vld [vmem:[%s67 + $0x10] sm:$0xf]
        %v7384 = vld [vmem:[%s67 + $0x14] sm:$0xf]
        %v7385 = vld [vmem:[%s67 + $0x18] sm:$0xf]
        %v7386 = vld [vmem:[%s67 + $0x1c] sm:$0xf]
        %v7387 = vld [vmem:[%s67 + $0x20] sm:$0xf]
        %v7388 = vld [vmem:[%s67 + $0x24] sm:$0xf]
        %v7389 = vld [vmem:[%s67 + $0x28] sm:$0xf]
        %v7390 = vld [vmem:[%s67 + $0x2c] sm:$0xf]
        %v7391 = vld [vmem:[%s67 + $0x30] sm:$0xf]
        %v7392 = vld [vmem:[%s67 + $0x34] sm:$0xf]
        %v7393 = vld [vmem:[%s67 + $0x38] sm:$0xf]
        %v7394 = vld [vmem:[%s67 + $0x3c] sm:$0xf]
        %v7395 = vld [vmem:[%s67 + $0x40] sm:$0xf]
        %v7396 = vld [vmem:[%s67 + $0x44] sm:$0xf]
        %v7397 = vld [vmem:[%s67 + $0x48] sm:$0xf]
        %v7398 = vld [vmem:[%s67 + $0x4c] sm:$0xf]
        %v7399 = vld [vmem:[%s67 + $0x50] sm:$0xf]
        %v7400 = vld [vmem:[%s67 + $0x54] sm:$0xf]
        %v7401 = vld [vmem:[%s67 + $0x58] sm:$0xf]
        %v7402 = vld [vmem:[%s67 + $0x5c] sm:$0xf]
        %v7403 = vld [vmem:[%s67 + $0x60] sm:$0xf]
        %v7404 = vld [vmem:[%s67 + $0x64] sm:$0xf]
        %v7405 = vld [vmem:[%s67 + $0x68] sm:$0xf]
        %v7406 = vld [vmem:[%s67 + $0x6c] sm:$0xf]
        %v7407 = vld [vmem:[%s67 + $0x70] sm:$0xf]
        %v7408 = vld [vmem:[%s67 + $0x74] sm:$0xf]
        %v7409 = vld [vmem:[%s67 + $0x78] sm:$0xf]
        %v7410 = vld [vmem:[%s67 + $0x7c] sm:$0xf]
        %v7411 = vld [vmem:[%s67 + $0x80] sm:$0xf]
        %v7412 = vld [vmem:[%s67 + $0x84] sm:$0xf]
        %v7413 = vld [vmem:[%s67 + $0x88] sm:$0xf]
        %v7414 = vld [vmem:[%s67 + $0x8c] sm:$0xf]
        %v7415 = vld [vmem:[%s67 + $0x90] sm:$0xf]
        %v7416 = vld [vmem:[%s67 + $0x94] sm:$0xf]
        %v7417 = vld [vmem:[%s67 + $0x98] sm:$0xf]
        %v7418 = vld [vmem:[%s67 + $0x9c] sm:$0xf]
        %v7419 = vld [vmem:[%s67 + $0xa0] sm:$0xf]
        %v7420 = vld [vmem:[%s67 + $0xa4] sm:$0xf]
        %v7421 = vld [vmem:[%s67 + $0xa8] sm:$0xf]
        %v7422 = vld [vmem:[%s67 + $0xac] sm:$0xf]
        %v7423 = vld [vmem:[%s67 + $0xb0] sm:$0xf]
        %v7424 = vld [vmem:[%s67 + $0xb4] sm:$0xf]
        %v7425 = vld [vmem:[%s67 + $0xb8] sm:$0xf]
        %v7426 = vld [vmem:[%s67 + $0xbc] sm:$0xf]
        %v7427 = vld [vmem:[#allocation39] sm:$0x1]
        %v7429 = vlaneseq
        %v7430 = vshrl.u32 %v7429, 7
        %v7431 = vsub.s32 0, %v7430
        %v7432 = vrot.slane %v7427, %v7431
        %v7482 = vunpack.c.l.b16 %v7379
        %v7483 = vunpack.c.l.b16 %v7380
        %v7484 = vunpack.c.l.b16 %v7381
        %v7485 = vunpack.c.l.b16 %v7382
        %v7486 = vunpack.c.l.b16 %v7383
        %v7487 = vunpack.c.l.b16 %v7384
        %v7488 = vunpack.c.l.b16 %v7385
        %v7489 = vunpack.c.l.b16 %v7386
        %v7490 = vunpack.c.l.b16 %v7387
        %v7491 = vunpack.c.l.b16 %v7388
        %v7492 = vunpack.c.l.b16 %v7389
        %v7493 = vunpack.c.l.b16 %v7390
        %v7494 = vunpack.c.l.b16 %v7391
        %v7495 = vunpack.c.l.b16 %v7392
        %v7496 = vunpack.c.l.b16 %v7393
        %v7497 = vunpack.c.l.b16 %v7394
        %v7498 = vunpack.c.l.b16 %v7395
        %v7499 = vunpack.c.l.b16 %v7396
        %v7500 = vunpack.c.l.b16 %v7397
        %v7501 = vunpack.c.l.b16 %v7398
        %v7502 = vunpack.c.l.b16 %v7399
        %v7503 = vunpack.c.l.b16 %v7400
        %v7504 = vunpack.c.l.b16 %v7401
        %v7505 = vunpack.c.l.b16 %v7402
        %v7506 = vunpack.c.l.b16 %v7403
        %v7507 = vunpack.c.l.b16 %v7404
        %v7508 = vunpack.c.l.b16 %v7405
        %v7509 = vunpack.c.l.b16 %v7406
        %v7510 = vunpack.c.l.b16 %v7407
        %v7511 = vunpack.c.l.b16 %v7408
        %v7512 = vunpack.c.l.b16 %v7409
        %v7513 = vunpack.c.l.b16 %v7410
        %v7514 = vunpack.c.l.b16 %v7411
        %v7515 = vunpack.c.l.b16 %v7412
        %v7516 = vunpack.c.l.b16 %v7413
        %v7517 = vunpack.c.l.b16 %v7414
        %v7518 = vunpack.c.l.b16 %v7415
        %v7519 = vunpack.c.l.b16 %v7416
        %v7520 = vunpack.c.l.b16 %v7417
        %v7521 = vunpack.c.l.b16 %v7418
        %v7522 = vunpack.c.l.b16 %v7419
        %v7523 = vunpack.c.l.b16 %v7420
        %v7524 = vunpack.c.l.b16 %v7421
        %v7525 = vunpack.c.l.b16 %v7422
        %v7526 = vunpack.c.l.b16 %v7423
        %v7527 = vunpack.c.l.b16 %v7424
        %v7528 = vunpack.c.l.b16 %v7425
        %v7529 = vunpack.c.l.b16 %v7426
        %v7530 = vpack.c.b16 %v7483, %v7482
        %v7531 = vpack.c.b16 %v7485, %v7484
        %v7532 = vpack.c.b16 %v7487, %v7486
        %v7533 = vpack.c.b16 %v7489, %v7488
        %v7534 = vpack.c.b16 %v7491, %v7490
        %v7535 = vpack.c.b16 %v7493, %v7492
        %v7536 = vpack.c.b16 %v7495, %v7494
        %v7537 = vpack.c.b16 %v7497, %v7496
        %v7538 = vpack.c.b16 %v7499, %v7498
        %v7539 = vpack.c.b16 %v7501, %v7500
        %v7540 = vpack.c.b16 %v7503, %v7502
        %v7541 = vpack.c.b16 %v7505, %v7504
        %v7542 = vpack.c.b16 %v7507, %v7506
        %v7543 = vpack.c.b16 %v7509, %v7508
        %v7544 = vpack.c.b16 %v7511, %v7510
        %v7545 = vpack.c.b16 %v7513, %v7512
        %v7546 = vpack.c.b16 %v7515, %v7514
        %v7547 = vpack.c.b16 %v7517, %v7516
        %v7548 = vpack.c.b16 %v7519, %v7518
        %v7549 = vpack.c.b16 %v7521, %v7520
        %v7550 = vpack.c.b16 %v7523, %v7522
        %v7551 = vpack.c.b16 %v7525, %v7524
        %v7552 = vpack.c.b16 %v7527, %v7526
        %v7553 = vpack.c.b16 %v7529, %v7528
        %7578 = vmatprep.subr.bf16.mxu0 0
        %7579 = vmatpush1.bf16.msra.mxu0 %v7530
        %7580 = vmatprep.subr.bf16.mxu0 0
        %7581 = vmatpush1.bf16.msra.mxu0 %v7531
        %7582 = vmatprep.subr.bf16.mxu0 0
        %7583 = vmatpush1.bf16.msra.mxu0 %v7532
        %7584 = vmatprep.subr.bf16.mxu0 0
        %7585 = vmatpush1.bf16.msra.mxu0 %v7533
        %7586 = vmatprep.subr.bf16.mxu0 0
        %7587 = vmatpush1.bf16.msra.mxu0 %v7534
        %7588 = vmatprep.subr.bf16.mxu0 0
        %7589 = vmatpush1.bf16.msra.mxu0 %v7535
        %7590 = vmatprep.subr.bf16.mxu0 0
        %7591 = vmatpush1.bf16.msra.mxu0 %v7536
        %7592 = vmatprep.subr.bf16.mxu0 0
        %7593 = vmatpush1.bf16.msra.mxu0 %v7537
        %7594 = vmatprep.subr.bf16.mxu0 0
        %7595 = vmatpush1.bf16.msra.mxu0 %v7538
        %7596 = vmatprep.subr.bf16.mxu0 0
        %7597 = vmatpush1.bf16.msra.mxu0 %v7539
        %7598 = vmatprep.subr.bf16.mxu0 0
        %7599 = vmatpush1.bf16.msra.mxu0 %v7540
        %7600 = vmatprep.subr.bf16.mxu0 0
        %7601 = vmatpush1.bf16.msra.mxu0 %v7541
        %7602 = vmatprep.subr.bf16.mxu0 0
        %7603 = vmatpush1.bf16.msra.mxu0 %v7542
        %7604 = vmatprep.subr.bf16.mxu0 0
        %7605 = vmatpush1.bf16.msra.mxu0 %v7543
        %7606 = vmatprep.subr.bf16.mxu0 0
        %7607 = vmatpush1.bf16.msra.mxu0 %v7544
        %7608 = vmatprep.subr.bf16.mxu0 0
        %7609 = vmatpush1.bf16.msra.mxu0 %v7545
        %7610 = vmatprep.mubr.bf16.mxu0 %v7330
        %7611 = vmatmul.mubr.bf16.gmra.mrb[0].mxu0 %v7375
        %v7612 = vpop.f32.mrb[0].mxu0
        %v7613 = vadd.f32 %v7432, %v7612
        %v7614 = vpop.f32.mrb[0].mxu0
        %v7615 = vpop.f32.mrb[0].mxu0
        %v7616 = vpop.f32.mrb[0].mxu0
        %7617 = vdwg.mxu0
        %7618 = vmatprep.subr.bf16.mxu0 0
        %7619 = vmatpush1.bf16.msra.mxu0 %v7546
        %7620 = vmatprep.subr.bf16.mxu0 0
        %7621 = vmatpush1.bf16.msra.mxu0 %v7547
        %7622 = vmatprep.subr.bf16.mxu0 0
        %7623 = vmatpush1.bf16.msra.mxu0 %v7548
        %7624 = vmatprep.subr.bf16.mxu0 0
        %7625 = vmatpush1.bf16.msra.mxu0 %v7549
        %7626 = vmatprep.subr.bf16.mxu0 0
        %7627 = vmatpush1.bf16.msra.mxu0 %v7550
        %7628 = vmatprep.subr.bf16.mxu0 0
        %7629 = vmatpush1.bf16.msra.mxu0 %v7551
        %7630 = vmatprep.subr.bf16.mxu0 0
        %7631 = vmatpush1.bf16.msra.mxu0 %v7552
        %7632 = vmatprep.subr.bf16.mxu0 0
        %7633 = vmatpush1.bf16.msra.mxu0 %v7553
        %7634 = vmatprep.subr.bf16.mxu0 0
        %7635 = vmatpush1.bf16.msra.mxu0 0
        %7636 = vmatprep.subr.bf16.mxu0 0
        %7637 = vmatpush1.bf16.msra.mxu0 0
        %7638 = vmatprep.subr.bf16.mxu0 0
        %7639 = vmatpush1.bf16.msra.mxu0 0
        %7640 = vmatprep.subr.bf16.mxu0 0
        %7641 = vmatpush1.bf16.msra.mxu0 0
        %7642 = vmatprep.subr.bf16.mxu0 0
        %7643 = vmatpush1.bf16.msra.mxu0 0
        %7644 = vmatprep.subr.bf16.mxu0 0
        %7645 = vmatpush1.bf16.msra.mxu0 0
        %7646 = vmatprep.subr.bf16.mxu0 0
        %7647 = vmatpush1.bf16.msra.mxu0 0
        %7648 = vmatprep.subr.bf16.mxu0 0
        %7649 = vmatpush1.bf16.msra.mxu0 0
        %7650 = vmatprep.mubr.bf16.mxu0 0
        %7651 = vmatmul.mubr.bf16.gmra.mrb[0].mxu0 %v7377
        %v7652 = vpop.f32.mrb[0].mxu0
        %v7653 = vadd.f32 %v7613, %v7652
        %v7654 = vpop.f32.mrb[0].mxu0
        %v7655 = vpop.f32.mrb[0].mxu0
        %v7656 = vpop.f32.mrb[0].mxu0
        %7657 = vdwg.mxu0
        %v7658 = vmul.f32 %v7653, 0.18215
        %v7660 = vrot.slane %v7658, 4
        %v7662 = vsub.f32 %v7658, %v7660
        %v7663 = vmul.f32 %v7662, %v7662
        %v7664 = vld [vmem:[#allocation40] sm:$0xff]
        %v7666 = vsel %vm3069, %v7663, 0
        %7668 = vmatprep.subr.mxu0 0.0
        %7669 = vmatpush1.msra.mxu0 %v7664
        %7670 = vmatprep.subr.mxu0 0.0
        %7671 = vmatpush1.msra.mxu0 0.0
        %7672 = vmatprep.subr.mxu0 0.0
        %7673 = vmatpush1.msra.mxu0 0.0
        %7674 = vmatprep.subr.mxu0 0.0
        %7675 = vmatpush1.msra.mxu0 0.0
        %7676 = vmatprep.subr.mxu0 0.0
        %7677 = vmatpush1.msra.mxu0 0.0
        %7678 = vmatprep.subr.mxu0 0.0
        %7679 = vmatpush1.msra.mxu0 0.0
        %7680 = vmatprep.subr.mxu0 0.0
        %7681 = vmatpush1.msra.mxu0 0.0
        %7682 = vmatprep.subr.mxu0 0.0
        %7683 = vmatpush1.msra.mxu0 0.0
        %7684 = vmatprep.subr.mxu0 0.0
        %7685 = vmatpush1.msra.mxu0 0.0
        %7686 = vmatprep.subr.mxu0 0.0
        %7687 = vmatpush1.msra.mxu0 0.0
        %7688 = vmatprep.subr.mxu0 0.0
        %7689 = vmatpush1.msra.mxu0 0.0
        %7690 = vmatprep.subr.mxu0 0.0
        %7691 = vmatpush1.msra.mxu0 0.0
        %7692 = vmatprep.subr.mxu0 0.0
        %7693 = vmatpush1.msra.mxu0 0.0
        %7694 = vmatprep.subr.mxu0 0.0
        %7695 = vmatpush1.msra.mxu0 0.0
        %7696 = vmatprep.subr.mxu0 0.0
        %7697 = vmatpush1.msra.mxu0 0.0
        %7698 = vmatprep.subr.mxu0 0.0
        %7699 = vmatpush1.msra.mxu0 0.0
        %7700 = vmatprep.subr.mxu0 0.0
        %7701 = vmatpush1.msra.mxu0 0.0
        %7702 = vmatprep.subr.mxu0 0.0
        %7703 = vmatpush1.msra.mxu0 0.0
        %7704 = vmatprep.subr.mxu0 0.0
        %7705 = vmatpush1.msra.mxu0 0.0
        %7706 = vmatprep.subr.mxu0 0.0
        %7707 = vmatpush1.msra.mxu0 0.0
        %7708 = vmatprep.subr.mxu0 0.0
        %7709 = vmatpush1.msra.mxu0 0.0
        %7710 = vmatprep.subr.mxu0 0.0
        %7711 = vmatpush1.msra.mxu0 0.0
        %7712 = vmatprep.subr.mxu0 0.0
        %7713 = vmatpush1.msra.mxu0 0.0
        %7714 = vmatprep.subr.mxu0 0.0
        %7715 = vmatpush1.msra.mxu0 0.0
        %7716 = vmatprep.subr.mxu0 0.0
        %7717 = vmatpush1.msra.mxu0 0.0
        %7718 = vmatprep.subr.mxu0 0.0
        %7719 = vmatpush1.msra.mxu0 0.0
        %7720 = vmatprep.subr.mxu0 0.0
        %7721 = vmatpush1.msra.mxu0 0.0
        %7722 = vmatprep.subr.mxu0 0.0
        %7723 = vmatpush1.msra.mxu0 0.0
        %7724 = vmatprep.subr.mxu0 0.0
        %7725 = vmatpush1.msra.mxu0 0.0
        %7726 = vmatprep.subr.mxu0 0.0
        %7727 = vmatpush1.msra.mxu0 0.0
        %7728 = vmatprep.subr.mxu0 0.0
        %7729 = vmatpush1.msra.mxu0 0.0
        %7730 = vmatprep.subr.mxu0 0.0
        %7731 = vmatpush1.msra.mxu0 0.0
        %7732 = vmatprep.mubr.f32.mxu0 0.0
        %7733 = vmatmul.mubr.f32.gmra.mrb[0].mxu0 %v7666
        %v7734 = vpop.f32.mrb[0].mxu0
        %v7735 = vadd.f32 0.0, %v7734
        %v7736 = vpop.f32.mrb[0].mxu0
        %7737 = vdwg.mxu0
        %v7738 = vrsqrt.pop %v7735
        %v7739 = vmul.f32 %v7735, %v7738
        %vm7740 = vcmp.eq.f32.partialorder %v7735, inf
        %v7741 = vsel %vm7740, %v7735, %v7739
        %vm7742 = vcmp.eq.f32.partialorder %v7735, 0.0
        %v7743 = vand.u32 %v7735, 2147483648
        %v7744 = vsel %vm7742, %v7743, %v7741
        %vm7745 = vcmask 11264
        %v7746 = vsel %vm7745, %v7744, 0.0
        %7747 = vadd.xlane.f32.xlu0 %v7746
        %v7748 = vpop.xlane.xlu0 %7747
        %v7749 = vrot.slane %v7748, 4
        %v7750 = vadd.f32 %v7748, %v7749
        %v7751 = vrot.slane %v7750, 2
        %v7752 = vadd.f32 %v7750, %v7751
        %v7753 = vrot.slane %v7752, 1
        %v7754 = vadd.f32 %v7752, %v7753
        %s7755 = vtos %v7754
        %v7756 = vstv %s7755
        %7757 = vst [vmem:[%s1446] sm:$0xff] %v7756
        %p7758 = scmp.lt.s32.totalorder %s98, 1
        %s7759 = scalar_select %p7758, %s98, 1
        %s7760 = smul.addr %s7759, 8
        %s7761 = scalar_lea.vmem %s73, %s7760
        // Predicated region
        $region269: #{forward.1} parent=163 // pred_check
          %p7762 = pneg %p877
        $region270: #{forward.1} parent=163 // pred_check_branch
          %7764 = sbr.rel (%p7762) target = $region272
        $region271: #{forward.1} parent=163 // pred_region
          _
        $region272: #{forward.1} parent=163 // pred_fallthru
          _
      $region164: #{forward.1} parent=5 // pred_fallthru
        _
      %p7765 = scmp.le.s32.totalorder 2, %s93
      // Predicated region
      $region273: #{forward.1} parent=5 // pred_check
        %p7766 = pneg %p7765
      $region274: #{forward.1} parent=5 // pred_check_branch
        %7768 = sbr.rel (%p7766) target = $region276
      $region275: #{forward.1} parent=5 // pred_region
        %s7769 = ssub.s32 %s93, 2
        // Predicated region
        $region277: #{forward.1} parent=275 // pred_check
          %p7770 = pneg %p883
        $region278: #{forward.1} parent=275 // pred_check_branch
          %7772 = sbr.rel (%p7770) target = $region280
        $region279: #{forward.1} parent=275 // pred_region
          %p7773 = scmp.lt.s32.totalorder %s99, 1
          %s7774 = scalar_select %p7773, %s99, 1
          %s7775 = smul.addr %s7774, 8
          %s7776 = scalar_lea.vmem %s73, %s7775
        $region280: #{forward.1} parent=275 // pred_fallthru
          _
      $region276: #{forward.1} parent=5 // pred_fallthru
        _
    $region6: #{forward.1} parent=1 // loop_footer
      %s97 = sadd.s32 1, %s93
    $region7: #{forward.1} parent=1 // loop_footer_branch
      %92 = sbr.rel target = $region3
    $region8: #{forward.1} parent=1 // loop_exit
      _
    %7777 = vsyncpa [#allocation3], 1
    %s7778 = scalar_lea.sflag [#allocation3], 1
    %7779 = vsyncpa %s7778, 1
    %7780 = vsyncpa [#allocation5], 1
    %7781 = vsyncpa [#allocation8], 1
    %7782 = vsyncpa [#allocation11], 1
    %7783 = vsyncpa [#allocation14], 1
    %7784 = vsyncpa [#allocation17], 1
    %7785 = vsyncpa [#allocation20], 1
    %7786 = vsyncpa [#allocation23], 1
    %7787 = vsyncpa [#allocation26], 1
    %7788 = vsyncpa [#allocation29], 1
    %7789 = vsyncpa [#allocation32], 1
    %7790 = vsyncpa [#allocation35], 1
    %7791 = vsyncpa [#allocation38], 1
    %7792 = vsyncpa [#allocation41], 1

</llo_original>
